<compile_context>
chip_gen: v5e
topology: v5e:2x2
jax: 0.10.0
libtpu: 0.0.40
codegen_flags: <defaults>
</compile_context>

<pallas_src>
import functools

import jax
import jax.numpy as jnp
from jax.experimental import pallas as pl
from jax.experimental.pallas import tpu as pltpu

EPS = 1e-5      # nn.BatchNorm2d default eps
LW = 8          # left W-halo width (sublane-aligned interior; only col LW-1 is used)


def _residual_kernel(x_ref, w1_ref, w2_ref, w3_ref, b3_ref,
                     g1_ref, be1_ref, g2_ref, be2_ref,
                     out_ref, xpad_ref, *, N, H, W, Cin, C):
    """Fully fused residual block.

    x_ref:   (N, H, W, Cin)            NHWC input
    w1_ref:  (9*C, C)   conv1 weights, taps folded into K (rows for channels
                        >= Cin are zero so the shared C-wide im2col is exact)
    w2_ref:  (9*C, C)   conv2 weights, taps folded into K
    w3_ref:  (Cin, C)   1x1 shortcut conv weights
    b3_ref:  (1, C)     shortcut bias   (conv1/conv2 biases are dropped: BN
                        mean-subtraction cancels them exactly)
    g*/be*:  (1, C)     BatchNorm affine params
    out_ref: (N*H*W, C)
    xpad_ref:(N, H+2, LW+W+1, C) VMEM scratch holding the halo-padded activation
    """
    M = N * H * W

    # Zero-fill the padded scratch once: the halo border and the zero-extended
    # input channels [Cin, C) stay zero for the whole kernel.
    xpad_ref[...] = jnp.zeros_like(xpad_ref)
    # Stage-0 interior: the input (sublane-aligned W offset -> unmasked store).
    xpad_ref[:, 1:H + 1, LW:LW + W, :Cin] = x_ref[...]

    def im2col():
        # (M, 9*C) patch matrix from the current padded activation.
        cols = [
            xpad_ref[:, dh:dh + H, LW - 1 + dw:LW - 1 + dw + W, :].reshape(M, C)
            for dh in range(3) for dw in range(3)
        ]
        return jnp.concatenate(cols, axis=-1)

    def conv3x3_bn(w_ref_, g_ref_, be_ref_, relu):
        # One MXU matmul per conv stage (9 taps folded into K = 9*C).
        acc = jnp.dot(im2col(), w_ref_[...], preferred_element_type=jnp.float32)
        # BatchNorm2d (training mode): per-channel batch statistics over (N,H,W).
        mean = jnp.mean(acc, axis=0, keepdims=True)
        diff = acc - mean
        var = jnp.mean(diff * diff, axis=0, keepdims=True)   # biased, as PyTorch
        y = diff * jax.lax.rsqrt(var + EPS) * g_ref_[...] + be_ref_[...]
        if relu:
            y = jnp.maximum(y, 0.0)
        return y

    # Y = relu(bn1(conv1(X)))   -- stays in VMEM, written back into the padded scratch
    y = conv3x3_bn(w1_ref, g1_ref, be1_ref, relu=True)
    xpad_ref[:, 1:H + 1, LW:LW + W, :] = y.reshape(N, H, W, C)
    # Y = bn2(conv2(Y))
    y = conv3x3_bn(w2_ref, g2_ref, be2_ref, relu=False)
    xpad_ref[:, 1:H + 1, LW:LW + W, :] = y.reshape(N, H, W, C)
    # Y = bn2(conv2(Y))   (conv2/bn2 applied a second time, as written in forward())
    y = conv3x3_bn(w2_ref, g2_ref, be2_ref, relu=False)

    # Shortcut: X = conv3(X); out = relu(Y + X)   (fused epilogue, no HBM roundtrip)
    sc = jnp.dot(x_ref[...].reshape(M, Cin), w3_ref[...],
                 preferred_element_type=jnp.float32) + b3_ref[...]
    out_ref[...] = jnp.maximum(y + sc, 0.0)


def init_params(key, input_channels, num_channels):
    k1, k2, k3, k4, k5, k6 = jax.random.split(key, 6)
    return {
        # conv weights in HWIO
        "w1": jax.random.normal(k1, (3, 3, input_channels, num_channels), jnp.float32) * 0.1,
        "b1": jax.random.normal(k2, (num_channels,), jnp.float32) * 0.1,
        "w2": jax.random.normal(k3, (3, 3, num_channels, num_channels), jnp.float32) * 0.1,
        "b2": jax.random.normal(k4, (num_channels,), jnp.float32) * 0.1,
        "w3": jax.random.normal(k5, (input_channels, num_channels), jnp.float32) * 0.1,  # 1x1 conv
        "b3": jax.random.normal(k6, (num_channels,), jnp.float32) * 0.1,
        # BatchNorm affine params as in nn.BatchNorm2d.__init__: gamma=1, beta=0
        "g1": jnp.ones((num_channels,), jnp.float32),
        "be1": jnp.zeros((num_channels,), jnp.float32),
        "g2": jnp.ones((num_channels,), jnp.float32),
        "be2": jnp.zeros((num_channels,), jnp.float32),
    }


def residual_forward(x_nchw, p):
    """Pallas implementation of Residual.forward (stride=1, use_1x1conv=True)."""
    x = jnp.transpose(x_nchw, (0, 2, 3, 1)).astype(jnp.float32)  # NCHW -> NHWC
    N, H, W, Cin = x.shape
    C = p["w1"].shape[-1]
    M = N * H * W

    def row(v):  # (C,) -> (1, C)
        return v.reshape(1, -1)

    # Fold taps into K. conv1's input channels are zero-extended to C (the padded
    # scratch keeps those channels zero, and these extra weight rows are zero, so
    # all three conv stages share one exact (M, 9*C) im2col shape).
    w1p = jnp.zeros((3, 3, C, C), jnp.float32).at[:, :, :Cin, :].set(p["w1"]).reshape(9 * C, C)
    w2p = p["w2"].reshape(9 * C, C)
    # Note: b1/b2 are intentionally NOT passed -- BN mean-subtraction cancels them.

    kern = functools.partial(_residual_kernel, N=N, H=H, W=W, Cin=Cin, C=C)
    vmem = pl.BlockSpec(memory_space=pltpu.MemorySpace.VMEM)
    out = pl.pallas_call(
        kern,
        out_shape=jax.ShapeDtypeStruct((M, C), jnp.float32),
        in_specs=[vmem] * 9,
        out_specs=vmem,
        scratch_shapes=[pltpu.VMEM((N, H + 2, LW + W + 1, C), jnp.float32)],
        compiler_params=pltpu.CompilerParams(vmem_limit_bytes=32 * 1024 * 1024),
    )(x, w1p, w2p, p["w3"], row(p["b3"]),
      row(p["g1"]), row(p["be1"]), row(p["g2"]), row(p["be2"]))

    out = out.reshape(N, H, W, C)
    return jnp.transpose(out, (0, 3, 1, 2))  # NHWC -> NCHW (PyTorch output layout)


def reference_forward(x_nchw, p):
    """Pure-JAX reference (lax.conv) replicating the PyTorch forward, biases included."""
    x = jnp.transpose(x_nchw, (0, 2, 3, 1)).astype(jnp.float32)

    def conv(t, w, b):
        y = jax.lax.conv_general_dilated(
            t, w, window_strides=(1, 1), padding="SAME",
            dimension_numbers=("NHWC", "HWIO", "NHWC"))
        return y + b.reshape(1, 1, 1, -1)

    def bn(t, g, be):
        mu = t.mean(axis=(0, 1, 2), keepdims=True)
        var = ((t - mu) ** 2).mean(axis=(0, 1, 2), keepdims=True)
        return (t - mu) * jax.lax.rsqrt(var + EPS) * g.reshape(1, 1, 1, -1) \
            + be.reshape(1, 1, 1, -1)

    y = jax.nn.relu(bn(conv(x, p["w1"], p["b1"]), p["g1"], p["be1"]))
    y = bn(conv(y, p["w2"], p["b2"]), p["g2"], p["be2"])
    y = bn(conv(y, p["w2"], p["b2"]), p["g2"], p["be2"])
    sc = jnp.einsum("nhwc,cd->nhwd", x, p["w3"]) + p["b3"].reshape(1, 1, 1, -1)
    y = jax.nn.relu(y + sc)
    return jnp.transpose(y, (0, 3, 1, 2))


if __name__ == "__main__":
    key = jax.random.PRNGKey(0)
    kx, kp = jax.random.split(key)
    input_channels, num_channels = 4, 8
    # PyTorch-style NCHW input
    x = jax.random.normal(kx, (2, input_channels, 16, 16), jnp.float32)
    params = init_params(kp, input_channels, num_channels)

    out = jax.block_until_ready(residual_forward(x, params))
    ref = jax.block_until_ready(reference_forward(x, params))

    assert out.shape == (2, num_channels, 16, 16), out.shape
    max_err = float(jnp.max(jnp.abs(out - ref)))
    assert jnp.allclose(out, ref, atol=1e-3, rtol=1e-3), max_err
    print("KERNEL_OK")
</pallas_src>

<mosaic_0001>
module attributes {stable_mosaic.version = 11 : i64} {
  func.func @_residual_kernel(%arg0: memref<2x16x16x4xf32, #tpu.memory_space<vmem>>, %arg1: memref<72x8xf32, #tpu.memory_space<vmem>>, %arg2: memref<72x8xf32, #tpu.memory_space<vmem>>, %arg3: memref<4x8xf32, #tpu.memory_space<vmem>>, %arg4: memref<1x8xf32, #tpu.memory_space<vmem>>, %arg5: memref<1x8xf32, #tpu.memory_space<vmem>>, %arg6: memref<1x8xf32, #tpu.memory_space<vmem>>, %arg7: memref<1x8xf32, #tpu.memory_space<vmem>>, %arg8: memref<1x8xf32, #tpu.memory_space<vmem>>, %arg9: memref<512x8xf32, #tpu.memory_space<vmem>>, %arg10: memref<2x18x25x8xf32, #tpu.memory_space<vmem>>) attributes {dimension_semantics = [], scalar_prefetch = 0 : i64, scratch_operands = 1 : i64, tpu.core_type = #tpu.core_type<tc>} {
    %cst = arith.constant 0.000000e+00 : f32
    %0 = vector.broadcast %cst : f32 to vector<2x18x25x8xf32>
    %c0 = arith.constant 0 : index
    %c0_0 = arith.constant 0 : index
    %c0_1 = arith.constant 0 : index
    %c0_2 = arith.constant 0 : index
    %1 = vector.load %arg10[%c0, %c0_0, %c0_1, %c0_2] : memref<2x18x25x8xf32, #tpu.memory_space<vmem>>, vector<2x18x25x8xf32>
    tpu.vector_store %arg10[%c0, %c0_0, %c0_1, %c0_2], %0 {strides = array<i32>} : memref<2x18x25x8xf32, #tpu.memory_space<vmem>>, vector<2x18x25x8xf32>,
    %c0_3 = arith.constant 0 : index
    %c0_4 = arith.constant 0 : index
    %c0_5 = arith.constant 0 : index
    %c0_6 = arith.constant 0 : index
    %2 = vector.load %arg0[%c0_3, %c0_4, %c0_5, %c0_6] : memref<2x16x16x4xf32, #tpu.memory_space<vmem>>, vector<2x16x16x4xf32>
    %c0_7 = arith.constant 0 : index
    %c1 = arith.constant 1 : index
    %c8 = arith.constant 8 : index
    %c0_8 = arith.constant 0 : index
    %3 = vector.load %arg10[%c0_7, %c1, %c8, %c0_8] : memref<2x18x25x8xf32, #tpu.memory_space<vmem>>, vector<2x16x16x4xf32>
    tpu.vector_store %arg10[%c0_7, %c1, %c8, %c0_8], %2 {strides = array<i32>} : memref<2x18x25x8xf32, #tpu.memory_space<vmem>>, vector<2x16x16x4xf32>,
    %c0_9 = arith.constant 0 : index
    %c0_10 = arith.constant 0 : index
    %c7 = arith.constant 7 : index
    %c0_11 = arith.constant 0 : index
    %4 = vector.load %arg10[%c0_9, %c0_10, %c7, %c0_11] : memref<2x18x25x8xf32, #tpu.memory_space<vmem>>, vector<2x16x16x8xf32>
    %5 = vector.shape_cast %4 : vector<2x16x16x8xf32> to vector<512x8xf32>
    %c0_12 = arith.constant 0 : index
    %c0_13 = arith.constant 0 : index
    %c8_14 = arith.constant 8 : index
    %c0_15 = arith.constant 0 : index
    %6 = vector.load %arg10[%c0_12, %c0_13, %c8_14, %c0_15] : memref<2x18x25x8xf32, #tpu.memory_space<vmem>>, vector<2x16x16x8xf32>
    %7 = vector.shape_cast %6 : vector<2x16x16x8xf32> to vector<512x8xf32>
    %c0_16 = arith.constant 0 : index
    %c0_17 = arith.constant 0 : index
    %c9 = arith.constant 9 : index
    %c0_18 = arith.constant 0 : index
    %8 = vector.load %arg10[%c0_16, %c0_17, %c9, %c0_18] : memref<2x18x25x8xf32, #tpu.memory_space<vmem>>, vector<2x16x16x8xf32>
    %9 = vector.shape_cast %8 : vector<2x16x16x8xf32> to vector<512x8xf32>
    %c0_19 = arith.constant 0 : index
    %c1_20 = arith.constant 1 : index
    %c7_21 = arith.constant 7 : index
    %c0_22 = arith.constant 0 : index
    %10 = vector.load %arg10[%c0_19, %c1_20, %c7_21, %c0_22] : memref<2x18x25x8xf32, #tpu.memory_space<vmem>>, vector<2x16x16x8xf32>
    %11 = vector.shape_cast %10 : vector<2x16x16x8xf32> to vector<512x8xf32>
    %c0_23 = arith.constant 0 : index
    %c1_24 = arith.constant 1 : index
    %c8_25 = arith.constant 8 : index
    %c0_26 = arith.constant 0 : index
    %12 = vector.load %arg10[%c0_23, %c1_24, %c8_25, %c0_26] : memref<2x18x25x8xf32, #tpu.memory_space<vmem>>, vector<2x16x16x8xf32>
    %13 = vector.shape_cast %12 : vector<2x16x16x8xf32> to vector<512x8xf32>
    %c0_27 = arith.constant 0 : index
    %c1_28 = arith.constant 1 : index
    %c9_29 = arith.constant 9 : index
    %c0_30 = arith.constant 0 : index
    %14 = vector.load %arg10[%c0_27, %c1_28, %c9_29, %c0_30] : memref<2x18x25x8xf32, #tpu.memory_space<vmem>>, vector<2x16x16x8xf32>
    %15 = vector.shape_cast %14 : vector<2x16x16x8xf32> to vector<512x8xf32>
    %c0_31 = arith.constant 0 : index
    %c2 = arith.constant 2 : index
    %c7_32 = arith.constant 7 : index
    %c0_33 = arith.constant 0 : index
    %16 = vector.load %arg10[%c0_31, %c2, %c7_32, %c0_33] : memref<2x18x25x8xf32, #tpu.memory_space<vmem>>, vector<2x16x16x8xf32>
    %17 = vector.shape_cast %16 : vector<2x16x16x8xf32> to vector<512x8xf32>
    %c0_34 = arith.constant 0 : index
    %c2_35 = arith.constant 2 : index
    %c8_36 = arith.constant 8 : index
    %c0_37 = arith.constant 0 : index
    %18 = vector.load %arg10[%c0_34, %c2_35, %c8_36, %c0_37] : memref<2x18x25x8xf32, #tpu.memory_space<vmem>>, vector<2x16x16x8xf32>
    %19 = vector.shape_cast %18 : vector<2x16x16x8xf32> to vector<512x8xf32>
    %c0_38 = arith.constant 0 : index
    %c2_39 = arith.constant 2 : index
    %c9_40 = arith.constant 9 : index
    %c0_41 = arith.constant 0 : index
    %20 = vector.load %arg10[%c0_38, %c2_39, %c9_40, %c0_41] : memref<2x18x25x8xf32, #tpu.memory_space<vmem>>, vector<2x16x16x8xf32>
    %21 = vector.shape_cast %20 : vector<2x16x16x8xf32> to vector<512x8xf32>
    %22 = tpu.concatenate %5, %7, %9, %11, %13, %15, %17, %19, %21 in 1 : vector<512x8xf32>, vector<512x8xf32>, vector<512x8xf32>, vector<512x8xf32>, vector<512x8xf32>, vector<512x8xf32>, vector<512x8xf32>, vector<512x8xf32>, vector<512x8xf32> -> vector<512x72xf32>
    %c0_42 = arith.constant 0 : index
    %c0_43 = arith.constant 0 : index
    %23 = vector.load %arg1[%c0_42, %c0_43] : memref<72x8xf32, #tpu.memory_space<vmem>>, vector<72x8xf32>
    %cst_44 = arith.constant dense<0.000000e+00> : vector<512x8xf32>
    %24 = tpu.matmul %22, %23, %cst_44 {dimension_numbers = #tpu.dot_dimension_numbers<[1], [0], [0], [1], [0, 0, 1, 1], [], []>} : vector<512x72xf32>, vector<72x8xf32>, vector<512x8xf32> -> vector<512x8xf32>
    %cst_45 = arith.constant dense<0.000000e+00> : vector<8xf32>
    %25 = vector.multi_reduction <add>, %24, %cst_45 [0] : vector<512x8xf32> to vector<8xf32>
    %26 = vector.shape_cast %25 : vector<8xf32> to vector<1x8xf32>
    %cst_46 = arith.constant 5.120000e+02 : f32
    %27 = vector.broadcast %cst_46 : f32 to vector<1x8xf32>
    %28 = arith.divf %26, %27 : vector<1x8xf32>
    %29 = vector.broadcast %28 : vector<1x8xf32> to vector<512x8xf32>
    %30 = arith.subf %24, %29 : vector<512x8xf32>
    %31 = arith.mulf %30, %30 : vector<512x8xf32>
    %cst_47 = arith.constant dense<0.000000e+00> : vector<8xf32>
    %32 = vector.multi_reduction <add>, %31, %cst_47 [0] : vector<512x8xf32> to vector<8xf32>
    %33 = vector.shape_cast %32 : vector<8xf32> to vector<1x8xf32>
    %cst_48 = arith.constant 5.120000e+02 : f32
    %34 = vector.broadcast %cst_48 : f32 to vector<1x8xf32>
    %35 = arith.divf %33, %34 : vector<1x8xf32>
    %cst_49 = arith.constant 9.99999974E-6 : f32
    %36 = vector.broadcast %cst_49 : f32 to vector<1x8xf32>
    %37 = arith.addf %35, %36 : vector<1x8xf32>
    %38 = math.rsqrt %37 : vector<1x8xf32>
    %39 = vector.broadcast %38 : vector<1x8xf32> to vector<512x8xf32>
    %40 = arith.mulf %30, %39 : vector<512x8xf32>
    %c0_50 = arith.constant 0 : index
    %c0_51 = arith.constant 0 : index
    %41 = vector.load %arg5[%c0_50, %c0_51] : memref<1x8xf32, #tpu.memory_space<vmem>>, vector<1x8xf32>
    %42 = vector.broadcast %41 : vector<1x8xf32> to vector<512x8xf32>
    %43 = arith.mulf %40, %42 : vector<512x8xf32>
    %c0_52 = arith.constant 0 : index
    %c0_53 = arith.constant 0 : index
    %44 = vector.load %arg6[%c0_52, %c0_53] : memref<1x8xf32, #tpu.memory_space<vmem>>, vector<1x8xf32>
    %45 = vector.broadcast %44 : vector<1x8xf32> to vector<512x8xf32>
    %46 = arith.addf %43, %45 : vector<512x8xf32>
    %cst_54 = arith.constant 0.000000e+00 : f32
    %47 = vector.broadcast %cst_54 : f32 to vector<512x8xf32>
    %48 = arith.maximumf %46, %47 : vector<512x8xf32>
    %49 = vector.shape_cast %48 : vector<512x8xf32> to vector<2x16x16x8xf32>
    %c0_55 = arith.constant 0 : index
    %c1_56 = arith.constant 1 : index
    %c8_57 = arith.constant 8 : index
    %c0_58 = arith.constant 0 : index
    %50 = vector.load %arg10[%c0_55, %c1_56, %c8_57, %c0_58] : memref<2x18x25x8xf32, #tpu.memory_space<vmem>>, vector<2x16x16x8xf32>
    tpu.vector_store %arg10[%c0_55, %c1_56, %c8_57, %c0_58], %49 {strides = array<i32>} : memref<2x18x25x8xf32, #tpu.memory_space<vmem>>, vector<2x16x16x8xf32>,
    %c0_59 = arith.constant 0 : index
    %c0_60 = arith.constant 0 : index
    %c7_61 = arith.constant 7 : index
    %c0_62 = arith.constant 0 : index
    %51 = vector.load %arg10[%c0_59, %c0_60, %c7_61, %c0_62] : memref<2x18x25x8xf32, #tpu.memory_space<vmem>>, vector<2x16x16x8xf32>
    %52 = vector.shape_cast %51 : vector<2x16x16x8xf32> to vector<512x8xf32>
    %c0_63 = arith.constant 0 : index
    %c0_64 = arith.constant 0 : index
    %c8_65 = arith.constant 8 : index
    %c0_66 = arith.constant 0 : index
    %53 = vector.load %arg10[%c0_63, %c0_64, %c8_65, %c0_66] : memref<2x18x25x8xf32, #tpu.memory_space<vmem>>, vector<2x16x16x8xf32>
    %54 = vector.shape_cast %53 : vector<2x16x16x8xf32> to vector<512x8xf32>
    %c0_67 = arith.constant 0 : index
    %c0_68 = arith.constant 0 : index
    %c9_69 = arith.constant 9 : index
    %c0_70 = arith.constant 0 : index
    %55 = vector.load %arg10[%c0_67, %c0_68, %c9_69, %c0_70] : memref<2x18x25x8xf32, #tpu.memory_space<vmem>>, vector<2x16x16x8xf32>
    %56 = vector.shape_cast %55 : vector<2x16x16x8xf32> to vector<512x8xf32>
    %c0_71 = arith.constant 0 : index
    %c1_72 = arith.constant 1 : index
    %c7_73 = arith.constant 7 : index
    %c0_74 = arith.constant 0 : index
    %57 = vector.load %arg10[%c0_71, %c1_72, %c7_73, %c0_74] : memref<2x18x25x8xf32, #tpu.memory_space<vmem>>, vector<2x16x16x8xf32>
    %58 = vector.shape_cast %57 : vector<2x16x16x8xf32> to vector<512x8xf32>
    %c0_75 = arith.constant 0 : index
    %c1_76 = arith.constant 1 : index
    %c8_77 = arith.constant 8 : index
    %c0_78 = arith.constant 0 : index
    %59 = vector.load %arg10[%c0_75, %c1_76, %c8_77, %c0_78] : memref<2x18x25x8xf32, #tpu.memory_space<vmem>>, vector<2x16x16x8xf32>
    %60 = vector.shape_cast %59 : vector<2x16x16x8xf32> to vector<512x8xf32>
    %c0_79 = arith.constant 0 : index
    %c1_80 = arith.constant 1 : index
    %c9_81 = arith.constant 9 : index
    %c0_82 = arith.constant 0 : index
    %61 = vector.load %arg10[%c0_79, %c1_80, %c9_81, %c0_82] : memref<2x18x25x8xf32, #tpu.memory_space<vmem>>, vector<2x16x16x8xf32>
    %62 = vector.shape_cast %61 : vector<2x16x16x8xf32> to vector<512x8xf32>
    %c0_83 = arith.constant 0 : index
    %c2_84 = arith.constant 2 : index
    %c7_85 = arith.constant 7 : index
    %c0_86 = arith.constant 0 : index
    %63 = vector.load %arg10[%c0_83, %c2_84, %c7_85, %c0_86] : memref<2x18x25x8xf32, #tpu.memory_space<vmem>>, vector<2x16x16x8xf32>
    %64 = vector.shape_cast %63 : vector<2x16x16x8xf32> to vector<512x8xf32>
    %c0_87 = arith.constant 0 : index
    %c2_88 = arith.constant 2 : index
    %c8_89 = arith.constant 8 : index
    %c0_90 = arith.constant 0 : index
    %65 = vector.load %arg10[%c0_87, %c2_88, %c8_89, %c0_90] : memref<2x18x25x8xf32, #tpu.memory_space<vmem>>, vector<2x16x16x8xf32>
    %66 = vector.shape_cast %65 : vector<2x16x16x8xf32> to vector<512x8xf32>
    %c0_91 = arith.constant 0 : index
    %c2_92 = arith.constant 2 : index
    %c9_93 = arith.constant 9 : index
    %c0_94 = arith.constant 0 : index
    %67 = vector.load %arg10[%c0_91, %c2_92, %c9_93, %c0_94] : memref<2x18x25x8xf32, #tpu.memory_space<vmem>>, vector<2x16x16x8xf32>
    %68 = vector.shape_cast %67 : vector<2x16x16x8xf32> to vector<512x8xf32>
    %69 = tpu.concatenate %52, %54, %56, %58, %60, %62, %64, %66, %68 in 1 : vector<512x8xf32>, vector<512x8xf32>, vector<512x8xf32>, vector<512x8xf32>, vector<512x8xf32>, vector<512x8xf32>, vector<512x8xf32>, vector<512x8xf32>, vector<512x8xf32> -> vector<512x72xf32>
    %c0_95 = arith.constant 0 : index
    %c0_96 = arith.constant 0 : index
    %70 = vector.load %arg2[%c0_95, %c0_96] : memref<72x8xf32, #tpu.memory_space<vmem>>, vector<72x8xf32>
    %cst_97 = arith.constant dense<0.000000e+00> : vector<512x8xf32>
    %71 = tpu.matmul %69, %70, %cst_97 {dimension_numbers = #tpu.dot_dimension_numbers<[1], [0], [0], [1], [0, 0, 1, 1], [], []>} : vector<512x72xf32>, vector<72x8xf32>, vector<512x8xf32> -> vector<512x8xf32>
    %cst_98 = arith.constant dense<0.000000e+00> : vector<8xf32>
    %72 = vector.multi_reduction <add>, %71, %cst_98 [0] : vector<512x8xf32> to vector<8xf32>
    %73 = vector.shape_cast %72 : vector<8xf32> to vector<1x8xf32>
    %cst_99 = arith.constant 5.120000e+02 : f32
    %74 = vector.broadcast %cst_99 : f32 to vector<1x8xf32>
    %75 = arith.divf %73, %74 : vector<1x8xf32>
    %76 = vector.broadcast %75 : vector<1x8xf32> to vector<512x8xf32>
    %77 = arith.subf %71, %76 : vector<512x8xf32>
    %78 = arith.mulf %77, %77 : vector<512x8xf32>
    %cst_100 = arith.constant dense<0.000000e+00> : vector<8xf32>
    %79 = vector.multi_reduction <add>, %78, %cst_100 [0] : vector<512x8xf32> to vector<8xf32>
    %80 = vector.shape_cast %79 : vector<8xf32> to vector<1x8xf32>
    %cst_101 = arith.constant 5.120000e+02 : f32
    %81 = vector.broadcast %cst_101 : f32 to vector<1x8xf32>
    %82 = arith.divf %80, %81 : vector<1x8xf32>
    %cst_102 = arith.constant 9.99999974E-6 : f32
    %83 = vector.broadcast %cst_102 : f32 to vector<1x8xf32>
    %84 = arith.addf %82, %83 : vector<1x8xf32>
    %85 = math.rsqrt %84 : vector<1x8xf32>
    %86 = vector.broadcast %85 : vector<1x8xf32> to vector<512x8xf32>
    %87 = arith.mulf %77, %86 : vector<512x8xf32>
    %c0_103 = arith.constant 0 : index
    %c0_104 = arith.constant 0 : index
    %88 = vector.load %arg7[%c0_103, %c0_104] : memref<1x8xf32, #tpu.memory_space<vmem>>, vector<1x8xf32>
    %89 = vector.broadcast %88 : vector<1x8xf32> to vector<512x8xf32>
    %90 = arith.mulf %87, %89 : vector<512x8xf32>
    %c0_105 = arith.constant 0 : index
    %c0_106 = arith.constant 0 : index
    %91 = vector.load %arg8[%c0_105, %c0_106] : memref<1x8xf32, #tpu.memory_space<vmem>>, vector<1x8xf32>
    %92 = vector.broadcast %91 : vector<1x8xf32> to vector<512x8xf32>
    %93 = arith.addf %90, %92 : vector<512x8xf32>
    %94 = vector.shape_cast %93 : vector<512x8xf32> to vector<2x16x16x8xf32>
    %c0_107 = arith.constant 0 : index
    %c1_108 = arith.constant 1 : index
    %c8_109 = arith.constant 8 : index
    %c0_110 = arith.constant 0 : index
    %95 = vector.load %arg10[%c0_107, %c1_108, %c8_109, %c0_110] : memref<2x18x25x8xf32, #tpu.memory_space<vmem>>, vector<2x16x16x8xf32>
    tpu.vector_store %arg10[%c0_107, %c1_108, %c8_109, %c0_110], %94 {strides = array<i32>} : memref<2x18x25x8xf32, #tpu.memory_space<vmem>>, vector<2x16x16x8xf32>,
    %c0_111 = arith.constant 0 : index
    %c0_112 = arith.constant 0 : index
    %c7_113 = arith.constant 7 : index
    %c0_114 = arith.constant 0 : index
    %96 = vector.load %arg10[%c0_111, %c0_112, %c7_113, %c0_114] : memref<2x18x25x8xf32, #tpu.memory_space<vmem>>, vector<2x16x16x8xf32>
    %97 = vector.shape_cast %96 : vector<2x16x16x8xf32> to vector<512x8xf32>
    %c0_115 = arith.constant 0 : index
    %c0_116 = arith.constant 0 : index
    %c8_117 = arith.constant 8 : index
    %c0_118 = arith.constant 0 : index
    %98 = vector.load %arg10[%c0_115, %c0_116, %c8_117, %c0_118] : memref<2x18x25x8xf32, #tpu.memory_space<vmem>>, vector<2x16x16x8xf32>
    %99 = vector.shape_cast %98 : vector<2x16x16x8xf32> to vector<512x8xf32>
    %c0_119 = arith.constant 0 : index
    %c0_120 = arith.constant 0 : index
    %c9_121 = arith.constant 9 : index
    %c0_122 = arith.constant 0 : index
    %100 = vector.load %arg10[%c0_119, %c0_120, %c9_121, %c0_122] : memref<2x18x25x8xf32, #tpu.memory_space<vmem>>, vector<2x16x16x8xf32>
    %101 = vector.shape_cast %100 : vector<2x16x16x8xf32> to vector<512x8xf32>
    %c0_123 = arith.constant 0 : index
    %c1_124 = arith.constant 1 : index
    %c7_125 = arith.constant 7 : index
    %c0_126 = arith.constant 0 : index
    %102 = vector.load %arg10[%c0_123, %c1_124, %c7_125, %c0_126] : memref<2x18x25x8xf32, #tpu.memory_space<vmem>>, vector<2x16x16x8xf32>
    %103 = vector.shape_cast %102 : vector<2x16x16x8xf32> to vector<512x8xf32>
    %c0_127 = arith.constant 0 : index
    %c1_128 = arith.constant 1 : index
    %c8_129 = arith.constant 8 : index
    %c0_130 = arith.constant 0 : index
    %104 = vector.load %arg10[%c0_127, %c1_128, %c8_129, %c0_130] : memref<2x18x25x8xf32, #tpu.memory_space<vmem>>, vector<2x16x16x8xf32>
    %105 = vector.shape_cast %104 : vector<2x16x16x8xf32> to vector<512x8xf32>
    %c0_131 = arith.constant 0 : index
    %c1_132 = arith.constant 1 : index
    %c9_133 = arith.constant 9 : index
    %c0_134 = arith.constant 0 : index
    %106 = vector.load %arg10[%c0_131, %c1_132, %c9_133, %c0_134] : memref<2x18x25x8xf32, #tpu.memory_space<vmem>>, vector<2x16x16x8xf32>
    %107 = vector.shape_cast %106 : vector<2x16x16x8xf32> to vector<512x8xf32>
    %c0_135 = arith.constant 0 : index
    %c2_136 = arith.constant 2 : index
    %c7_137 = arith.constant 7 : index
    %c0_138 = arith.constant 0 : index
    %108 = vector.load %arg10[%c0_135, %c2_136, %c7_137, %c0_138] : memref<2x18x25x8xf32, #tpu.memory_space<vmem>>, vector<2x16x16x8xf32>
    %109 = vector.shape_cast %108 : vector<2x16x16x8xf32> to vector<512x8xf32>
    %c0_139 = arith.constant 0 : index
    %c2_140 = arith.constant 2 : index
    %c8_141 = arith.constant 8 : index
    %c0_142 = arith.constant 0 : index
    %110 = vector.load %arg10[%c0_139, %c2_140, %c8_141, %c0_142] : memref<2x18x25x8xf32, #tpu.memory_space<vmem>>, vector<2x16x16x8xf32>
    %111 = vector.shape_cast %110 : vector<2x16x16x8xf32> to vector<512x8xf32>
    %c0_143 = arith.constant 0 : index
    %c2_144 = arith.constant 2 : index
    %c9_145 = arith.constant 9 : index
    %c0_146 = arith.constant 0 : index
    %112 = vector.load %arg10[%c0_143, %c2_144, %c9_145, %c0_146] : memref<2x18x25x8xf32, #tpu.memory_space<vmem>>, vector<2x16x16x8xf32>
    %113 = vector.shape_cast %112 : vector<2x16x16x8xf32> to vector<512x8xf32>
    %114 = tpu.concatenate %97, %99, %101, %103, %105, %107, %109, %111, %113 in 1 : vector<512x8xf32>, vector<512x8xf32>, vector<512x8xf32>, vector<512x8xf32>, vector<512x8xf32>, vector<512x8xf32>, vector<512x8xf32>, vector<512x8xf32>, vector<512x8xf32> -> vector<512x72xf32>
    %c0_147 = arith.constant 0 : index
    %c0_148 = arith.constant 0 : index
    %115 = vector.load %arg2[%c0_147, %c0_148] : memref<72x8xf32, #tpu.memory_space<vmem>>, vector<72x8xf32>
    %cst_149 = arith.constant dense<0.000000e+00> : vector<512x8xf32>
    %116 = tpu.matmul %114, %115, %cst_149 {dimension_numbers = #tpu.dot_dimension_numbers<[1], [0], [0], [1], [0, 0, 1, 1], [], []>} : vector<512x72xf32>, vector<72x8xf32>, vector<512x8xf32> -> vector<512x8xf32>
    %cst_150 = arith.constant dense<0.000000e+00> : vector<8xf32>
    %117 = vector.multi_reduction <add>, %116, %cst_150 [0] : vector<512x8xf32> to vector<8xf32>
    %118 = vector.shape_cast %117 : vector<8xf32> to vector<1x8xf32>
    %cst_151 = arith.constant 5.120000e+02 : f32
    %119 = vector.broadcast %cst_151 : f32 to vector<1x8xf32>
    %120 = arith.divf %118, %119 : vector<1x8xf32>
    %121 = vector.broadcast %120 : vector<1x8xf32> to vector<512x8xf32>
    %122 = arith.subf %116, %121 : vector<512x8xf32>
    %123 = arith.mulf %122, %122 : vector<512x8xf32>
    %cst_152 = arith.constant dense<0.000000e+00> : vector<8xf32>
    %124 = vector.multi_reduction <add>, %123, %cst_152 [0] : vector<512x8xf32> to vector<8xf32>
    %125 = vector.shape_cast %124 : vector<8xf32> to vector<1x8xf32>
    %cst_153 = arith.constant 5.120000e+02 : f32
    %126 = vector.broadcast %cst_153 : f32 to vector<1x8xf32>
    %127 = arith.divf %125, %126 : vector<1x8xf32>
    %cst_154 = arith.constant 9.99999974E-6 : f32
    %128 = vector.broadcast %cst_154 : f32 to vector<1x8xf32>
    %129 = arith.addf %127, %128 : vector<1x8xf32>
    %130 = math.rsqrt %129 : vector<1x8xf32>
    %131 = vector.broadcast %130 : vector<1x8xf32> to vector<512x8xf32>
    %132 = arith.mulf %122, %131 : vector<512x8xf32>
    %c0_155 = arith.constant 0 : index
    %c0_156 = arith.constant 0 : index
    %133 = vector.load %arg7[%c0_155, %c0_156] : memref<1x8xf32, #tpu.memory_space<vmem>>, vector<1x8xf32>
    %134 = vector.broadcast %133 : vector<1x8xf32> to vector<512x8xf32>
    %135 = arith.mulf %132, %134 : vector<512x8xf32>
    %c0_157 = arith.constant 0 : index
    %c0_158 = arith.constant 0 : index
    %136 = vector.load %arg8[%c0_157, %c0_158] : memref<1x8xf32, #tpu.memory_space<vmem>>, vector<1x8xf32>
    %137 = vector.broadcast %136 : vector<1x8xf32> to vector<512x8xf32>
    %138 = arith.addf %135, %137 : vector<512x8xf32>
    %c0_159 = arith.constant 0 : index
    %c0_160 = arith.constant 0 : index
    %c0_161 = arith.constant 0 : index
    %c0_162 = arith.constant 0 : index
    %139 = vector.load %arg0[%c0_159, %c0_160, %c0_161, %c0_162] : memref<2x16x16x4xf32, #tpu.memory_space<vmem>>, vector<2x16x16x4xf32>
    %140 = vector.shape_cast %139 : vector<2x16x16x4xf32> to vector<512x4xf32>
    %c0_163 = arith.constant 0 : index
    %c0_164 = arith.constant 0 : index
    %141 = vector.load %arg3[%c0_163, %c0_164] : memref<4x8xf32, #tpu.memory_space<vmem>>, vector<4x8xf32>
    %cst_165 = arith.constant dense<0.000000e+00> : vector<512x8xf32>
    %142 = tpu.matmul %140, %141, %cst_165 {dimension_numbers = #tpu.dot_dimension_numbers<[1], [0], [0], [1], [0, 0, 1, 1], [], []>} : vector<512x4xf32>, vector<4x8xf32>, vector<512x8xf32> -> vector<512x8xf32>
    %c0_166 = arith.constant 0 : index
    %c0_167 = arith.constant 0 : index
    %143 = vector.load %arg4[%c0_166, %c0_167] : memref<1x8xf32, #tpu.memory_space<vmem>>, vector<1x8xf32>
    %144 = vector.broadcast %143 : vector<1x8xf32> to vector<512x8xf32>
    %145 = arith.addf %142, %144 : vector<512x8xf32>
    %146 = arith.addf %138, %145 : vector<512x8xf32>
    %cst_168 = arith.constant 0.000000e+00 : f32
    %147 = vector.broadcast %cst_168 : f32 to vector<512x8xf32>
    %148 = arith.maximumf %146, %147 : vector<512x8xf32>
    %c0_169 = arith.constant 0 : index
    %c0_170 = arith.constant 0 : index
    %149 = vector.load %arg9[%c0_169, %c0_170] : memref<512x8xf32, #tpu.memory_space<vmem>>, vector<512x8xf32>
    tpu.vector_store %arg9[%c0_169, %c0_170], %148 {strides = array<i32>} : memref<512x8xf32, #tpu.memory_space<vmem>>, vector<512x8xf32>,
    return
  }
}

</mosaic_0001>

<llo_original>
// kernel: tpu_custom_call.1
$region0: #{tpu_custom_call.1}
  #allocation0 [shape = 'u32[]', space=smem, size = 0x4, offset = 0x4, fixed_abs, tag = 'smem constant byte address 0x4 - core index']
  #allocation1 [shape = 'u32[72,128]{1,0:T(1,128)}', space=vmem, size = 0x9000, scoped, tag = 'internal scratch']
  #allocation2 [shape = 'f32[2,18,25,8]{3,2,1,0:T(8,128)}', space=vmem, size = 0x90000, scoped, tag = 'scratch operand']
  %s0 = inlined_call_operand.vmem [shape: f32[2,16,16,4], index: 0, kind: input, shape index: {}]
  %s1 = inlined_call_operand.vmem [shape: f32[72,8], index: 1, kind: input, shape index: {}]
  %s2 = inlined_call_operand.vmem [shape: f32[72,8], index: 2, kind: input, shape index: {}]
  %s3 = inlined_call_operand.vmem [shape: f32[4,8], index: 3, kind: input, shape index: {}]
  %s4 = inlined_call_operand.vmem [shape: f32[1,8], index: 4, kind: input, shape index: {}]
  %s5 = inlined_call_operand.vmem [shape: f32[1,8], index: 5, kind: input, shape index: {}]
  %s6 = inlined_call_operand.vmem [shape: f32[1,8], index: 6, kind: input, shape index: {}]
  %s7 = inlined_call_operand.vmem [shape: f32[1,8], index: 7, kind: input, shape index: {}]
  %s8 = inlined_call_operand.vmem [shape: f32[1,8], index: 8, kind: input, shape index: {}]
  %s9 = inlined_call_operand.vmem [shape: f32[512,8], index: 9, kind: output, shape index: {}]
  %s10 = sld [smem:[#allocation0]]
  $region46: #{tpu_custom_call.1} parent=0
    _
  %s12 = ssub.s32 1, %s10
  %s13 = scalar_select 0, %s12, %s10
  // Predicated region
  $region2: #{tpu_custom_call.1} parent=0 // pred_check
    _
  $region3: #{tpu_custom_call.1} parent=0 // pred_check_branch
    %15 = sbr.rel (0) target = $region5
  $region4: #{tpu_custom_call.1} parent=0 // pred_region
    _
  $region5: #{tpu_custom_call.1} parent=0 // pred_fallthru
    _
  // Predicated region
  $region6: #{tpu_custom_call.1} parent=0 // pred_check
    _
  $region7: #{tpu_custom_call.1} parent=0 // pred_check_branch
    %17 = sbr.rel (0) target = $region9
  $region8: #{tpu_custom_call.1} parent=0 // pred_region
    _
  $region9: #{tpu_custom_call.1} parent=0 // pred_fallthru
    _
  // Predicated region
  $region10: #{tpu_custom_call.1} parent=0 // pred_check
    _
  $region11: #{tpu_custom_call.1} parent=0 // pred_check_branch
    %19 = sbr.rel (0) target = $region13
  $region12: #{tpu_custom_call.1} parent=0 // pred_region
    _
  $region13: #{tpu_custom_call.1} parent=0 // pred_fallthru
    _
  // Predicated region
  $region14: #{tpu_custom_call.1} parent=0 // pred_check
    _
  $region15: #{tpu_custom_call.1} parent=0 // pred_check_branch
    %21 = sbr.rel (0) target = $region17
  $region16: #{tpu_custom_call.1} parent=0 // pred_region
    _
  $region17: #{tpu_custom_call.1} parent=0 // pred_fallthru
    _
  // Predicated region
  $region18: #{tpu_custom_call.1} parent=0 // pred_check
    _
  $region19: #{tpu_custom_call.1} parent=0 // pred_check_branch
    %23 = sbr.rel (0) target = $region21
  $region20: #{tpu_custom_call.1} parent=0 // pred_region
    _
  $region21: #{tpu_custom_call.1} parent=0 // pred_fallthru
    _
  // Predicated region
  $region22: #{tpu_custom_call.1} parent=0 // pred_check
    _
  $region23: #{tpu_custom_call.1} parent=0 // pred_check_branch
    %25 = sbr.rel (0) target = $region25
  $region24: #{tpu_custom_call.1} parent=0 // pred_region
    _
  $region25: #{tpu_custom_call.1} parent=0 // pred_fallthru
    _
  // Predicated region
  $region26: #{tpu_custom_call.1} parent=0 // pred_check
    _
  $region27: #{tpu_custom_call.1} parent=0 // pred_check_branch
    %27 = sbr.rel (0) target = $region29
  $region28: #{tpu_custom_call.1} parent=0 // pred_region
    _
  $region29: #{tpu_custom_call.1} parent=0 // pred_fallthru
    _
  // Predicated region
  $region30: #{tpu_custom_call.1} parent=0 // pred_check
    _
  $region31: #{tpu_custom_call.1} parent=0 // pred_check_branch
    %29 = sbr.rel (0) target = $region33
  $region32: #{tpu_custom_call.1} parent=0 // pred_region
    _
  $region33: #{tpu_custom_call.1} parent=0 // pred_fallthru
    _
  // Predicated region
  $region34: #{tpu_custom_call.1} parent=0 // pred_check
    _
  $region35: #{tpu_custom_call.1} parent=0 // pred_check_branch
    %31 = sbr.rel (0) target = $region37
  $region36: #{tpu_custom_call.1} parent=0 // pred_region
    _
  $region37: #{tpu_custom_call.1} parent=0 // pred_fallthru
    _
  %vm32 = vcmask 64512
  %33 = vst.msk [vmem:[#allocation2] sm:$0xff] %vm32, 0.0
  %34 = vst.msk [vmem:[#allocation2 + $0x8] sm:$0xff] %vm32, 0.0
  %35 = vst.msk [vmem:[#allocation2 + $0x10] sm:$0xff] %vm32, 0.0
  %vm36 = vcmask 57344
  %37 = vst.msk [vmem:[#allocation2 + $0x18] sm:$0x1] %vm36, 0.0
  %38 = vst.msk [vmem:[#allocation2 + $0x20] sm:$0xff] %vm32, 0.0
  %39 = vst.msk [vmem:[#allocation2 + $0x28] sm:$0xff] %vm32, 0.0
  %40 = vst.msk [vmem:[#allocation2 + $0x30] sm:$0xff] %vm32, 0.0
  %41 = vst.msk [vmem:[#allocation2 + $0x38] sm:$0x1] %vm36, 0.0
  %42 = vst.msk [vmem:[#allocation2 + $0x40] sm:$0xff] %vm32, 0.0
  %43 = vst.msk [vmem:[#allocation2 + $0x48] sm:$0xff] %vm32, 0.0
  %44 = vst.msk [vmem:[#allocation2 + $0x50] sm:$0xff] %vm32, 0.0
  %45 = vst.msk [vmem:[#allocation2 + $0x58] sm:$0x1] %vm36, 0.0
  %46 = vst.msk [vmem:[#allocation2 + $0x60] sm:$0xff] %vm32, 0.0
  %47 = vst.msk [vmem:[#allocation2 + $0x68] sm:$0xff] %vm32, 0.0
  %48 = vst.msk [vmem:[#allocation2 + $0x70] sm:$0xff] %vm32, 0.0
  %49 = vst.msk [vmem:[#allocation2 + $0x78] sm:$0x1] %vm36, 0.0
  %50 = vst.msk [vmem:[#allocation2 + $0x80] sm:$0xff] %vm32, 0.0
  %51 = vst.msk [vmem:[#allocation2 + $0x88] sm:$0xff] %vm32, 0.0
  %52 = vst.msk [vmem:[#allocation2 + $0x90] sm:$0xff] %vm32, 0.0
  %53 = vst.msk [vmem:[#allocation2 + $0x98] sm:$0x1] %vm36, 0.0
  %54 = vst.msk [vmem:[#allocation2 + $0xa0] sm:$0xff] %vm32, 0.0
  %55 = vst.msk [vmem:[#allocation2 + $0xa8] sm:$0xff] %vm32, 0.0
  %56 = vst.msk [vmem:[#allocation2 + $0xb0] sm:$0xff] %vm32, 0.0
  %57 = vst.msk [vmem:[#allocation2 + $0xb8] sm:$0x1] %vm36, 0.0
  %58 = vst.msk [vmem:[#allocation2 + $0xc0] sm:$0xff] %vm32, 0.0
  %59 = vst.msk [vmem:[#allocation2 + $0xc8] sm:$0xff] %vm32, 0.0
  %60 = vst.msk [vmem:[#allocation2 + $0xd0] sm:$0xff] %vm32, 0.0
  %61 = vst.msk [vmem:[#allocation2 + $0xd8] sm:$0x1] %vm36, 0.0
  %62 = vst.msk [vmem:[#allocation2 + $0xe0] sm:$0xff] %vm32, 0.0
  %63 = vst.msk [vmem:[#allocation2 + $0xe8] sm:$0xff] %vm32, 0.0
  %64 = vst.msk [vmem:[#allocation2 + $0xf0] sm:$0xff] %vm32, 0.0
  %65 = vst.msk [vmem:[#allocation2 + $0xf8] sm:$0x1] %vm36, 0.0
  %66 = vst.msk [vmem:[#allocation2 + $0x100] sm:$0xff] %vm32, 0.0
  %67 = vst.msk [vmem:[#allocation2 + $0x108] sm:$0xff] %vm32, 0.0
  %68 = vst.msk [vmem:[#allocation2 + $0x110] sm:$0xff] %vm32, 0.0
  %69 = vst.msk [vmem:[#allocation2 + $0x118] sm:$0x1] %vm36, 0.0
  %70 = vst.msk [vmem:[#allocation2 + $0x120] sm:$0xff] %vm32, 0.0
  %71 = vst.msk [vmem:[#allocation2 + $0x128] sm:$0xff] %vm32, 0.0
  %72 = vst.msk [vmem:[#allocation2 + $0x130] sm:$0xff] %vm32, 0.0
  %73 = vst.msk [vmem:[#allocation2 + $0x138] sm:$0x1] %vm36, 0.0
  %74 = vst.msk [vmem:[#allocation2 + $0x140] sm:$0xff] %vm32, 0.0
  %75 = vst.msk [vmem:[#allocation2 + $0x148] sm:$0xff] %vm32, 0.0
  %76 = vst.msk [vmem:[#allocation2 + $0x150] sm:$0xff] %vm32, 0.0
  %77 = vst.msk [vmem:[#allocation2 + $0x158] sm:$0x1] %vm36, 0.0
  %78 = vst.msk [vmem:[#allocation2 + $0x160] sm:$0xff] %vm32, 0.0
  %79 = vst.msk [vmem:[#allocation2 + $0x168] sm:$0xff] %vm32, 0.0
  %80 = vst.msk [vmem:[#allocation2 + $0x170] sm:$0xff] %vm32, 0.0
  %81 = vst.msk [vmem:[#allocation2 + $0x178] sm:$0x1] %vm36, 0.0
  %82 = vst.msk [vmem:[#allocation2 + $0x180] sm:$0xff] %vm32, 0.0
  %83 = vst.msk [vmem:[#allocation2 + $0x188] sm:$0xff] %vm32, 0.0
  %84 = vst.msk [vmem:[#allocation2 + $0x190] sm:$0xff] %vm32, 0.0
  %85 = vst.msk [vmem:[#allocation2 + $0x198] sm:$0x1] %vm36, 0.0
  %86 = vst.msk [vmem:[#allocation2 + $0x1a0] sm:$0xff] %vm32, 0.0
  %87 = vst.msk [vmem:[#allocation2 + $0x1a8] sm:$0xff] %vm32, 0.0
  %88 = vst.msk [vmem:[#allocation2 + $0x1b0] sm:$0xff] %vm32, 0.0
  %89 = vst.msk [vmem:[#allocation2 + $0x1b8] sm:$0x1] %vm36, 0.0
  %90 = vst.msk [vmem:[#allocation2 + $0x1c0] sm:$0xff] %vm32, 0.0
  %91 = vst.msk [vmem:[#allocation2 + $0x1c8] sm:$0xff] %vm32, 0.0
  %92 = vst.msk [vmem:[#allocation2 + $0x1d0] sm:$0xff] %vm32, 0.0
  %93 = vst.msk [vmem:[#allocation2 + $0x1d8] sm:$0x1] %vm36, 0.0
  %94 = vst.msk [vmem:[#allocation2 + $0x1e0] sm:$0xff] %vm32, 0.0
  %95 = vst.msk [vmem:[#allocation2 + $0x1e8] sm:$0xff] %vm32, 0.0
  %96 = vst.msk [vmem:[#allocation2 + $0x1f0] sm:$0xff] %vm32, 0.0
  %97 = vst.msk [vmem:[#allocation2 + $0x1f8] sm:$0x1] %vm36, 0.0
  %98 = vst.msk [vmem:[#allocation2 + $0x200] sm:$0xff] %vm32, 0.0
  %99 = vst.msk [vmem:[#allocation2 + $0x208] sm:$0xff] %vm32, 0.0
  %100 = vst.msk [vmem:[#allocation2 + $0x210] sm:$0xff] %vm32, 0.0
  %101 = vst.msk [vmem:[#allocation2 + $0x218] sm:$0x1] %vm36, 0.0
  %102 = vst.msk [vmem:[#allocation2 + $0x220] sm:$0xff] %vm32, 0.0
  %103 = vst.msk [vmem:[#allocation2 + $0x228] sm:$0xff] %vm32, 0.0
  %104 = vst.msk [vmem:[#allocation2 + $0x230] sm:$0xff] %vm32, 0.0
  %105 = vst.msk [vmem:[#allocation2 + $0x238] sm:$0x1] %vm36, 0.0
  %106 = vst.msk [vmem:[#allocation2 + $0x240] sm:$0xff] %vm32, 0.0
  %107 = vst.msk [vmem:[#allocation2 + $0x248] sm:$0xff] %vm32, 0.0
  %108 = vst.msk [vmem:[#allocation2 + $0x250] sm:$0xff] %vm32, 0.0
  %109 = vst.msk [vmem:[#allocation2 + $0x258] sm:$0x1] %vm36, 0.0
  %110 = vst.msk [vmem:[#allocation2 + $0x260] sm:$0xff] %vm32, 0.0
  %111 = vst.msk [vmem:[#allocation2 + $0x268] sm:$0xff] %vm32, 0.0
  %112 = vst.msk [vmem:[#allocation2 + $0x270] sm:$0xff] %vm32, 0.0
  %113 = vst.msk [vmem:[#allocation2 + $0x278] sm:$0x1] %vm36, 0.0
  %114 = vst.msk [vmem:[#allocation2 + $0x280] sm:$0xff] %vm32, 0.0
  %115 = vst.msk [vmem:[#allocation2 + $0x288] sm:$0xff] %vm32, 0.0
  %116 = vst.msk [vmem:[#allocation2 + $0x290] sm:$0xff] %vm32, 0.0
  %117 = vst.msk [vmem:[#allocation2 + $0x298] sm:$0x1] %vm36, 0.0
  %118 = vst.msk [vmem:[#allocation2 + $0x2a0] sm:$0xff] %vm32, 0.0
  %119 = vst.msk [vmem:[#allocation2 + $0x2a8] sm:$0xff] %vm32, 0.0
  %120 = vst.msk [vmem:[#allocation2 + $0x2b0] sm:$0xff] %vm32, 0.0
  %121 = vst.msk [vmem:[#allocation2 + $0x2b8] sm:$0x1] %vm36, 0.0
  %122 = vst.msk [vmem:[#allocation2 + $0x2c0] sm:$0xff] %vm32, 0.0
  %123 = vst.msk [vmem:[#allocation2 + $0x2c8] sm:$0xff] %vm32, 0.0
  %124 = vst.msk [vmem:[#allocation2 + $0x2d0] sm:$0xff] %vm32, 0.0
  %125 = vst.msk [vmem:[#allocation2 + $0x2d8] sm:$0x1] %vm36, 0.0
  %126 = vst.msk [vmem:[#allocation2 + $0x2e0] sm:$0xff] %vm32, 0.0
  %127 = vst.msk [vmem:[#allocation2 + $0x2e8] sm:$0xff] %vm32, 0.0
  %128 = vst.msk [vmem:[#allocation2 + $0x2f0] sm:$0xff] %vm32, 0.0
  %129 = vst.msk [vmem:[#allocation2 + $0x2f8] sm:$0x1] %vm36, 0.0
  %130 = vst.msk [vmem:[#allocation2 + $0x300] sm:$0xff] %vm32, 0.0
  %131 = vst.msk [vmem:[#allocation2 + $0x308] sm:$0xff] %vm32, 0.0
  %132 = vst.msk [vmem:[#allocation2 + $0x310] sm:$0xff] %vm32, 0.0
  %133 = vst.msk [vmem:[#allocation2 + $0x318] sm:$0x1] %vm36, 0.0
  %134 = vst.msk [vmem:[#allocation2 + $0x320] sm:$0xff] %vm32, 0.0
  %135 = vst.msk [vmem:[#allocation2 + $0x328] sm:$0xff] %vm32, 0.0
  %136 = vst.msk [vmem:[#allocation2 + $0x330] sm:$0xff] %vm32, 0.0
  %137 = vst.msk [vmem:[#allocation2 + $0x338] sm:$0x1] %vm36, 0.0
  %138 = vst.msk [vmem:[#allocation2 + $0x340] sm:$0xff] %vm32, 0.0
  %139 = vst.msk [vmem:[#allocation2 + $0x348] sm:$0xff] %vm32, 0.0
  %140 = vst.msk [vmem:[#allocation2 + $0x350] sm:$0xff] %vm32, 0.0
  %141 = vst.msk [vmem:[#allocation2 + $0x358] sm:$0x1] %vm36, 0.0
  %142 = vst.msk [vmem:[#allocation2 + $0x360] sm:$0xff] %vm32, 0.0
  %143 = vst.msk [vmem:[#allocation2 + $0x368] sm:$0xff] %vm32, 0.0
  %144 = vst.msk [vmem:[#allocation2 + $0x370] sm:$0xff] %vm32, 0.0
  %145 = vst.msk [vmem:[#allocation2 + $0x378] sm:$0x1] %vm36, 0.0
  %146 = vst.msk [vmem:[#allocation2 + $0x380] sm:$0xff] %vm32, 0.0
  %147 = vst.msk [vmem:[#allocation2 + $0x388] sm:$0xff] %vm32, 0.0
  %148 = vst.msk [vmem:[#allocation2 + $0x390] sm:$0xff] %vm32, 0.0
  %149 = vst.msk [vmem:[#allocation2 + $0x398] sm:$0x1] %vm36, 0.0
  %150 = vst.msk [vmem:[#allocation2 + $0x3a0] sm:$0xff] %vm32, 0.0
  %151 = vst.msk [vmem:[#allocation2 + $0x3a8] sm:$0xff] %vm32, 0.0
  %152 = vst.msk [vmem:[#allocation2 + $0x3b0] sm:$0xff] %vm32, 0.0
  %153 = vst.msk [vmem:[#allocation2 + $0x3b8] sm:$0x1] %vm36, 0.0
  %154 = vst.msk [vmem:[#allocation2 + $0x3c0] sm:$0xff] %vm32, 0.0
  %155 = vst.msk [vmem:[#allocation2 + $0x3c8] sm:$0xff] %vm32, 0.0
  %156 = vst.msk [vmem:[#allocation2 + $0x3d0] sm:$0xff] %vm32, 0.0
  %157 = vst.msk [vmem:[#allocation2 + $0x3d8] sm:$0x1] %vm36, 0.0
  %158 = vst.msk [vmem:[#allocation2 + $0x3e0] sm:$0xff] %vm32, 0.0
  %159 = vst.msk [vmem:[#allocation2 + $0x3e8] sm:$0xff] %vm32, 0.0
  %160 = vst.msk [vmem:[#allocation2 + $0x3f0] sm:$0xff] %vm32, 0.0
  %161 = vst.msk [vmem:[#allocation2 + $0x3f8] sm:$0x1] %vm36, 0.0
  %162 = vst.msk [vmem:[#allocation2 + $0x400] sm:$0xff] %vm32, 0.0
  %163 = vst.msk [vmem:[#allocation2 + $0x408] sm:$0xff] %vm32, 0.0
  %164 = vst.msk [vmem:[#allocation2 + $0x410] sm:$0xff] %vm32, 0.0
  %165 = vst.msk [vmem:[#allocation2 + $0x418] sm:$0x1] %vm36, 0.0
  %166 = vst.msk [vmem:[#allocation2 + $0x420] sm:$0xff] %vm32, 0.0
  %167 = vst.msk [vmem:[#allocation2 + $0x428] sm:$0xff] %vm32, 0.0
  %168 = vst.msk [vmem:[#allocation2 + $0x430] sm:$0xff] %vm32, 0.0
  %169 = vst.msk [vmem:[#allocation2 + $0x438] sm:$0x1] %vm36, 0.0
  %170 = vst.msk [vmem:[#allocation2 + $0x440] sm:$0xff] %vm32, 0.0
  %171 = vst.msk [vmem:[#allocation2 + $0x448] sm:$0xff] %vm32, 0.0
  %172 = vst.msk [vmem:[#allocation2 + $0x450] sm:$0xff] %vm32, 0.0
  %173 = vst.msk [vmem:[#allocation2 + $0x458] sm:$0x1] %vm36, 0.0
  %174 = vst.msk [vmem:[#allocation2 + $0x460] sm:$0xff] %vm32, 0.0
  %175 = vst.msk [vmem:[#allocation2 + $0x468] sm:$0xff] %vm32, 0.0
  %176 = vst.msk [vmem:[#allocation2 + $0x470] sm:$0xff] %vm32, 0.0
  %177 = vst.msk [vmem:[#allocation2 + $0x478] sm:$0x1] %vm36, 0.0
  %v178 = vld [vmem:[%s0] sm:$0xff]
  %v179 = vld [vmem:[%s0 + $0x8] sm:$0xff]
  %v180 = vld [vmem:[%s0 + $0x10] sm:$0xff]
  %v181 = vld [vmem:[%s0 + $0x18] sm:$0xff]
  %v182 = vld [vmem:[%s0 + $0x20] sm:$0xff]
  %v183 = vld [vmem:[%s0 + $0x28] sm:$0xff]
  %v184 = vld [vmem:[%s0 + $0x30] sm:$0xff]
  %v185 = vld [vmem:[%s0 + $0x38] sm:$0xff]
  %v186 = vld [vmem:[%s0 + $0x40] sm:$0xff]
  %v187 = vld [vmem:[%s0 + $0x48] sm:$0xff]
  %v188 = vld [vmem:[%s0 + $0x50] sm:$0xff]
  %v189 = vld [vmem:[%s0 + $0x58] sm:$0xff]
  %v190 = vld [vmem:[%s0 + $0x60] sm:$0xff]
  %v191 = vld [vmem:[%s0 + $0x68] sm:$0xff]
  %v192 = vld [vmem:[%s0 + $0x70] sm:$0xff]
  %v193 = vld [vmem:[%s0 + $0x78] sm:$0xff]
  %v194 = vld [vmem:[%s0 + $0x80] sm:$0xff]
  %v195 = vld [vmem:[%s0 + $0x88] sm:$0xff]
  %v196 = vld [vmem:[%s0 + $0x90] sm:$0xff]
  %v197 = vld [vmem:[%s0 + $0x98] sm:$0xff]
  %v198 = vld [vmem:[%s0 + $0xa0] sm:$0xff]
  %v199 = vld [vmem:[%s0 + $0xa8] sm:$0xff]
  %v200 = vld [vmem:[%s0 + $0xb0] sm:$0xff]
  %v201 = vld [vmem:[%s0 + $0xb8] sm:$0xff]
  %v202 = vld [vmem:[%s0 + $0xc0] sm:$0xff]
  %v203 = vld [vmem:[%s0 + $0xc8] sm:$0xff]
  %v204 = vld [vmem:[%s0 + $0xd0] sm:$0xff]
  %v205 = vld [vmem:[%s0 + $0xd8] sm:$0xff]
  %v206 = vld [vmem:[%s0 + $0xe0] sm:$0xff]
  %v207 = vld [vmem:[%s0 + $0xe8] sm:$0xff]
  %v208 = vld [vmem:[%s0 + $0xf0] sm:$0xff]
  %v209 = vld [vmem:[%s0 + $0xf8] sm:$0xff]
  %v210 = vld [vmem:[%s0 + $0x100] sm:$0xff]
  %v211 = vld [vmem:[%s0 + $0x108] sm:$0xff]
  %v212 = vld [vmem:[%s0 + $0x110] sm:$0xff]
  %v213 = vld [vmem:[%s0 + $0x118] sm:$0xff]
  %v214 = vld [vmem:[%s0 + $0x120] sm:$0xff]
  %v215 = vld [vmem:[%s0 + $0x128] sm:$0xff]
  %v216 = vld [vmem:[%s0 + $0x130] sm:$0xff]
  %v217 = vld [vmem:[%s0 + $0x138] sm:$0xff]
  %v218 = vld [vmem:[%s0 + $0x140] sm:$0xff]
  %v219 = vld [vmem:[%s0 + $0x148] sm:$0xff]
  %v220 = vld [vmem:[%s0 + $0x150] sm:$0xff]
  %v221 = vld [vmem:[%s0 + $0x158] sm:$0xff]
  %v222 = vld [vmem:[%s0 + $0x160] sm:$0xff]
  %v223 = vld [vmem:[%s0 + $0x168] sm:$0xff]
  %v224 = vld [vmem:[%s0 + $0x170] sm:$0xff]
  %v225 = vld [vmem:[%s0 + $0x178] sm:$0xff]
  %v226 = vld [vmem:[%s0 + $0x180] sm:$0xff]
  %v227 = vld [vmem:[%s0 + $0x188] sm:$0xff]
  %v228 = vld [vmem:[%s0 + $0x190] sm:$0xff]
  %v229 = vld [vmem:[%s0 + $0x198] sm:$0xff]
  %v230 = vld [vmem:[%s0 + $0x1a0] sm:$0xff]
  %v231 = vld [vmem:[%s0 + $0x1a8] sm:$0xff]
  %v232 = vld [vmem:[%s0 + $0x1b0] sm:$0xff]
  %v233 = vld [vmem:[%s0 + $0x1b8] sm:$0xff]
  %v234 = vld [vmem:[%s0 + $0x1c0] sm:$0xff]
  %v235 = vld [vmem:[%s0 + $0x1c8] sm:$0xff]
  %v236 = vld [vmem:[%s0 + $0x1d0] sm:$0xff]
  %v237 = vld [vmem:[%s0 + $0x1d8] sm:$0xff]
  %v238 = vld [vmem:[%s0 + $0x1e0] sm:$0xff]
  %v239 = vld [vmem:[%s0 + $0x1e8] sm:$0xff]
  %v240 = vld [vmem:[%s0 + $0x1f0] sm:$0xff]
  %v241 = vld [vmem:[%s0 + $0x1f8] sm:$0xff]
  %s242 = scalar_lea.vmem [#allocation2], 32
  %vm243 = vcmask 31744
  %244 = vst.msk [vmem:[%s242 + $0x8] sm:$0xff] %vm243, %v178
  %245 = vst.msk [vmem:[%s242 + $0x10] sm:$0xff] %vm243, %v179
  %246 = vst.msk [vmem:[%s242 + $0x28] sm:$0xff] %vm243, %v180
  %247 = vst.msk [vmem:[%s242 + $0x30] sm:$0xff] %vm243, %v181
  %248 = vst.msk [vmem:[%s242 + $0x48] sm:$0xff] %vm243, %v182
  %249 = vst.msk [vmem:[%s242 + $0x50] sm:$0xff] %vm243, %v183
  %250 = vst.msk [vmem:[%s242 + $0x68] sm:$0xff] %vm243, %v184
  %251 = vst.msk [vmem:[%s242 + $0x70] sm:$0xff] %vm243, %v185
  %252 = vst.msk [vmem:[%s242 + $0x88] sm:$0xff] %vm243, %v186
  %253 = vst.msk [vmem:[%s242 + $0x90] sm:$0xff] %vm243, %v187
  %254 = vst.msk [vmem:[%s242 + $0xa8] sm:$0xff] %vm243, %v188
  %255 = vst.msk [vmem:[%s242 + $0xb0] sm:$0xff] %vm243, %v189
  %256 = vst.msk [vmem:[%s242 + $0xc8] sm:$0xff] %vm243, %v190
  %257 = vst.msk [vmem:[%s242 + $0xd0] sm:$0xff] %vm243, %v191
  %258 = vst.msk [vmem:[%s242 + $0xe8] sm:$0xff] %vm243, %v192
  %259 = vst.msk [vmem:[%s242 + $0xf0] sm:$0xff] %vm243, %v193
  %260 = vst.msk [vmem:[%s242 + $0x108] sm:$0xff] %vm243, %v194
  %261 = vst.msk [vmem:[%s242 + $0x110] sm:$0xff] %vm243, %v195
  %262 = vst.msk [vmem:[%s242 + $0x128] sm:$0xff] %vm243, %v196
  %263 = vst.msk [vmem:[%s242 + $0x130] sm:$0xff] %vm243, %v197
  %264 = vst.msk [vmem:[%s242 + $0x148] sm:$0xff] %vm243, %v198
  %265 = vst.msk [vmem:[%s242 + $0x150] sm:$0xff] %vm243, %v199
  %266 = vst.msk [vmem:[%s242 + $0x168] sm:$0xff] %vm243, %v200
  %267 = vst.msk [vmem:[%s242 + $0x170] sm:$0xff] %vm243, %v201
  %268 = vst.msk [vmem:[%s242 + $0x188] sm:$0xff] %vm243, %v202
  %269 = vst.msk [vmem:[%s242 + $0x190] sm:$0xff] %vm243, %v203
  %270 = vst.msk [vmem:[%s242 + $0x1a8] sm:$0xff] %vm243, %v204
  %271 = vst.msk [vmem:[%s242 + $0x1b0] sm:$0xff] %vm243, %v205
  %272 = vst.msk [vmem:[%s242 + $0x1c8] sm:$0xff] %vm243, %v206
  %273 = vst.msk [vmem:[%s242 + $0x1d0] sm:$0xff] %vm243, %v207
  %274 = vst.msk [vmem:[%s242 + $0x1e8] sm:$0xff] %vm243, %v208
  %275 = vst.msk [vmem:[%s242 + $0x1f0] sm:$0xff] %vm243, %v209
  %276 = vst.msk [vmem:[%s242 + $0x248] sm:$0xff] %vm243, %v210
  %277 = vst.msk [vmem:[%s242 + $0x250] sm:$0xff] %vm243, %v211
  %278 = vst.msk [vmem:[%s242 + $0x268] sm:$0xff] %vm243, %v212
  %279 = vst.msk [vmem:[%s242 + $0x270] sm:$0xff] %vm243, %v213
  %280 = vst.msk [vmem:[%s242 + $0x288] sm:$0xff] %vm243, %v214
  %281 = vst.msk [vmem:[%s242 + $0x290] sm:$0xff] %vm243, %v215
  %282 = vst.msk [vmem:[%s242 + $0x2a8] sm:$0xff] %vm243, %v216
  %283 = vst.msk [vmem:[%s242 + $0x2b0] sm:$0xff] %vm243, %v217
  %284 = vst.msk [vmem:[%s242 + $0x2c8] sm:$0xff] %vm243, %v218
  %285 = vst.msk [vmem:[%s242 + $0x2d0] sm:$0xff] %vm243, %v219
  %286 = vst.msk [vmem:[%s242 + $0x2e8] sm:$0xff] %vm243, %v220
  %287 = vst.msk [vmem:[%s242 + $0x2f0] sm:$0xff] %vm243, %v221
  %288 = vst.msk [vmem:[%s242 + $0x308] sm:$0xff] %vm243, %v222
  %289 = vst.msk [vmem:[%s242 + $0x310] sm:$0xff] %vm243, %v223
  %290 = vst.msk [vmem:[%s242 + $0x328] sm:$0xff] %vm243, %v224
  %291 = vst.msk [vmem:[%s242 + $0x330] sm:$0xff] %vm243, %v225
  %292 = vst.msk [vmem:[%s242 + $0x348] sm:$0xff] %vm243, %v226
  %293 = vst.msk [vmem:[%s242 + $0x350] sm:$0xff] %vm243, %v227
  %294 = vst.msk [vmem:[%s242 + $0x368] sm:$0xff] %vm243, %v228
  %295 = vst.msk [vmem:[%s242 + $0x370] sm:$0xff] %vm243, %v229
  %296 = vst.msk [vmem:[%s242 + $0x388] sm:$0xff] %vm243, %v230
  %297 = vst.msk [vmem:[%s242 + $0x390] sm:$0xff] %vm243, %v231
  %298 = vst.msk [vmem:[%s242 + $0x3a8] sm:$0xff] %vm243, %v232
  %299 = vst.msk [vmem:[%s242 + $0x3b0] sm:$0xff] %vm243, %v233
  %300 = vst.msk [vmem:[%s242 + $0x3c8] sm:$0xff] %vm243, %v234
  %301 = vst.msk [vmem:[%s242 + $0x3d0] sm:$0xff] %vm243, %v235
  %302 = vst.msk [vmem:[%s242 + $0x3e8] sm:$0xff] %vm243, %v236
  %303 = vst.msk [vmem:[%s242 + $0x3f0] sm:$0xff] %vm243, %v237
  %304 = vst.msk [vmem:[%s242 + $0x408] sm:$0xff] %vm243, %v238
  %305 = vst.msk [vmem:[%s242 + $0x410] sm:$0xff] %vm243, %v239
  %306 = vst.msk [vmem:[%s242 + $0x428] sm:$0xff] %vm243, %v240
  %307 = vst.msk [vmem:[%s242 + $0x430] sm:$0xff] %vm243, %v241
  %v308 = vld [vmem:[#allocation2 + $0x7] sm:$0xff]
  %v309 = vld [vmem:[#allocation2 + $0xf] sm:$0xff]
  %v310 = vld [vmem:[#allocation2 + $0x27] sm:$0xff]
  %v311 = vld [vmem:[#allocation2 + $0x2f] sm:$0xff]
  %v312 = vld [vmem:[#allocation2 + $0x47] sm:$0xff]
  %v313 = vld [vmem:[#allocation2 + $0x4f] sm:$0xff]
  %v314 = vld [vmem:[#allocation2 + $0x67] sm:$0xff]
  %v315 = vld [vmem:[#allocation2 + $0x6f] sm:$0xff]
  %v316 = vld [vmem:[#allocation2 + $0x87] sm:$0xff]
  %v317 = vld [vmem:[#allocation2 + $0x8f] sm:$0xff]
  %v318 = vld [vmem:[#allocation2 + $0xa7] sm:$0xff]
  %v319 = vld [vmem:[#allocation2 + $0xaf] sm:$0xff]
  %v320 = vld [vmem:[#allocation2 + $0xc7] sm:$0xff]
  %v321 = vld [vmem:[#allocation2 + $0xcf] sm:$0xff]
  %v322 = vld [vmem:[#allocation2 + $0xe7] sm:$0xff]
  %v323 = vld [vmem:[#allocation2 + $0xef] sm:$0xff]
  %v324 = vld [vmem:[#allocation2 + $0x107] sm:$0xff]
  %v325 = vld [vmem:[#allocation2 + $0x10f] sm:$0xff]
  %v326 = vld [vmem:[#allocation2 + $0x127] sm:$0xff]
  %v327 = vld [vmem:[#allocation2 + $0x12f] sm:$0xff]
  %v328 = vld [vmem:[#allocation2 + $0x147] sm:$0xff]
  %v329 = vld [vmem:[#allocation2 + $0x14f] sm:$0xff]
  %v330 = vld [vmem:[#allocation2 + $0x167] sm:$0xff]
  %v331 = vld [vmem:[#allocation2 + $0x16f] sm:$0xff]
  %v332 = vld [vmem:[#allocation2 + $0x187] sm:$0xff]
  %v333 = vld [vmem:[#allocation2 + $0x18f] sm:$0xff]
  %v334 = vld [vmem:[#allocation2 + $0x1a7] sm:$0xff]
  %v335 = vld [vmem:[#allocation2 + $0x1af] sm:$0xff]
  %v336 = vld [vmem:[#allocation2 + $0x1c7] sm:$0xff]
  %v337 = vld [vmem:[#allocation2 + $0x1cf] sm:$0xff]
  %v338 = vld [vmem:[#allocation2 + $0x1e7] sm:$0xff]
  %v339 = vld [vmem:[#allocation2 + $0x1ef] sm:$0xff]
  %v340 = vld [vmem:[#allocation2 + $0x247] sm:$0xff]
  %v341 = vld [vmem:[#allocation2 + $0x24f] sm:$0xff]
  %v342 = vld [vmem:[#allocation2 + $0x267] sm:$0xff]
  %v343 = vld [vmem:[#allocation2 + $0x26f] sm:$0xff]
  %v344 = vld [vmem:[#allocation2 + $0x287] sm:$0xff]
  %v345 = vld [vmem:[#allocation2 + $0x28f] sm:$0xff]
  %v346 = vld [vmem:[#allocation2 + $0x2a7] sm:$0xff]
  %v347 = vld [vmem:[#allocation2 + $0x2af] sm:$0xff]
  %v348 = vld [vmem:[#allocation2 + $0x2c7] sm:$0xff]
  %v349 = vld [vmem:[#allocation2 + $0x2cf] sm:$0xff]
  %v350 = vld [vmem:[#allocation2 + $0x2e7] sm:$0xff]
  %v351 = vld [vmem:[#allocation2 + $0x2ef] sm:$0xff]
  %v352 = vld [vmem:[#allocation2 + $0x307] sm:$0xff]
  %v353 = vld [vmem:[#allocation2 + $0x30f] sm:$0xff]
  %v354 = vld [vmem:[#allocation2 + $0x327] sm:$0xff]
  %v355 = vld [vmem:[#allocation2 + $0x32f] sm:$0xff]
  %v356 = vld [vmem:[#allocation2 + $0x347] sm:$0xff]
  %v357 = vld [vmem:[#allocation2 + $0x34f] sm:$0xff]
  %v358 = vld [vmem:[#allocation2 + $0x367] sm:$0xff]
  %v359 = vld [vmem:[#allocation2 + $0x36f] sm:$0xff]
  %v360 = vld [vmem:[#allocation2 + $0x387] sm:$0xff]
  %v361 = vld [vmem:[#allocation2 + $0x38f] sm:$0xff]
  %v362 = vld [vmem:[#allocation2 + $0x3a7] sm:$0xff]
  %v363 = vld [vmem:[#allocation2 + $0x3af] sm:$0xff]
  %v364 = vld [vmem:[#allocation2 + $0x3c7] sm:$0xff]
  %v365 = vld [vmem:[#allocation2 + $0x3cf] sm:$0xff]
  %v366 = vld [vmem:[#allocation2 + $0x3e7] sm:$0xff]
  %v367 = vld [vmem:[#allocation2 + $0x3ef] sm:$0xff]
  %v368 = vld [vmem:[#allocation2 + $0x407] sm:$0xff]
  %v369 = vld [vmem:[#allocation2 + $0x40f] sm:$0xff]
  %v370 = vld [vmem:[#allocation2 + $0x427] sm:$0xff]
  %v371 = vld [vmem:[#allocation2 + $0x42f] sm:$0xff]
  %v372 = vld [vmem:[#allocation2 + $0x8] sm:$0xff]
  %v373 = vld [vmem:[#allocation2 + $0x10] sm:$0xff]
  %v374 = vld [vmem:[#allocation2 + $0x28] sm:$0xff]
  %v375 = vld [vmem:[#allocation2 + $0x30] sm:$0xff]
  %v376 = vld [vmem:[#allocation2 + $0x48] sm:$0xff]
  %v377 = vld [vmem:[#allocation2 + $0x50] sm:$0xff]
  %v378 = vld [vmem:[#allocation2 + $0x68] sm:$0xff]
  %v379 = vld [vmem:[#allocation2 + $0x70] sm:$0xff]
  %v380 = vld [vmem:[#allocation2 + $0x88] sm:$0xff]
  %v381 = vld [vmem:[#allocation2 + $0x90] sm:$0xff]
  %v382 = vld [vmem:[#allocation2 + $0xa8] sm:$0xff]
  %v383 = vld [vmem:[#allocation2 + $0xb0] sm:$0xff]
  %v384 = vld [vmem:[#allocation2 + $0xc8] sm:$0xff]
  %v385 = vld [vmem:[#allocation2 + $0xd0] sm:$0xff]
  %v386 = vld [vmem:[#allocation2 + $0xe8] sm:$0xff]
  %v387 = vld [vmem:[#allocation2 + $0xf0] sm:$0xff]
  %v388 = vld [vmem:[#allocation2 + $0x108] sm:$0xff]
  %v389 = vld [vmem:[#allocation2 + $0x110] sm:$0xff]
  %v390 = vld [vmem:[#allocation2 + $0x128] sm:$0xff]
  %v391 = vld [vmem:[#allocation2 + $0x130] sm:$0xff]
  %v392 = vld [vmem:[#allocation2 + $0x148] sm:$0xff]
  %v393 = vld [vmem:[#allocation2 + $0x150] sm:$0xff]
  %v394 = vld [vmem:[#allocation2 + $0x168] sm:$0xff]
  %v395 = vld [vmem:[#allocation2 + $0x170] sm:$0xff]
  %v396 = vld [vmem:[#allocation2 + $0x188] sm:$0xff]
  %v397 = vld [vmem:[#allocation2 + $0x190] sm:$0xff]
  %v398 = vld [vmem:[#allocation2 + $0x1a8] sm:$0xff]
  %v399 = vld [vmem:[#allocation2 + $0x1b0] sm:$0xff]
  %v400 = vld [vmem:[#allocation2 + $0x1c8] sm:$0xff]
  %v401 = vld [vmem:[#allocation2 + $0x1d0] sm:$0xff]
  %v402 = vld [vmem:[#allocation2 + $0x1e8] sm:$0xff]
  %v403 = vld [vmem:[#allocation2 + $0x1f0] sm:$0xff]
  %v404 = vld [vmem:[#allocation2 + $0x248] sm:$0xff]
  %v405 = vld [vmem:[#allocation2 + $0x250] sm:$0xff]
  %v406 = vld [vmem:[#allocation2 + $0x268] sm:$0xff]
  %v407 = vld [vmem:[#allocation2 + $0x270] sm:$0xff]
  %v408 = vld [vmem:[#allocation2 + $0x288] sm:$0xff]
  %v409 = vld [vmem:[#allocation2 + $0x290] sm:$0xff]
  %v410 = vld [vmem:[#allocation2 + $0x2a8] sm:$0xff]
  %v411 = vld [vmem:[#allocation2 + $0x2b0] sm:$0xff]
  %v412 = vld [vmem:[#allocation2 + $0x2c8] sm:$0xff]
  %v413 = vld [vmem:[#allocation2 + $0x2d0] sm:$0xff]
  %v414 = vld [vmem:[#allocation2 + $0x2e8] sm:$0xff]
  %v415 = vld [vmem:[#allocation2 + $0x2f0] sm:$0xff]
  %v416 = vld [vmem:[#allocation2 + $0x308] sm:$0xff]
  %v417 = vld [vmem:[#allocation2 + $0x310] sm:$0xff]
  %v418 = vld [vmem:[#allocation2 + $0x328] sm:$0xff]
  %v419 = vld [vmem:[#allocation2 + $0x330] sm:$0xff]
  %v420 = vld [vmem:[#allocation2 + $0x348] sm:$0xff]
  %v421 = vld [vmem:[#allocation2 + $0x350] sm:$0xff]
  %v422 = vld [vmem:[#allocation2 + $0x368] sm:$0xff]
  %v423 = vld [vmem:[#allocation2 + $0x370] sm:$0xff]
  %v424 = vld [vmem:[#allocation2 + $0x388] sm:$0xff]
  %v425 = vld [vmem:[#allocation2 + $0x390] sm:$0xff]
  %v426 = vld [vmem:[#allocation2 + $0x3a8] sm:$0xff]
  %v427 = vld [vmem:[#allocation2 + $0x3b0] sm:$0xff]
  %v428 = vld [vmem:[#allocation2 + $0x3c8] sm:$0xff]
  %v429 = vld [vmem:[#allocation2 + $0x3d0] sm:$0xff]
  %v430 = vld [vmem:[#allocation2 + $0x3e8] sm:$0xff]
  %v431 = vld [vmem:[#allocation2 + $0x3f0] sm:$0xff]
  %v432 = vld [vmem:[#allocation2 + $0x408] sm:$0xff]
  %v433 = vld [vmem:[#allocation2 + $0x410] sm:$0xff]
  %v434 = vld [vmem:[#allocation2 + $0x428] sm:$0xff]
  %v435 = vld [vmem:[#allocation2 + $0x430] sm:$0xff]
  %v436 = vld [vmem:[#allocation2 + $0x9] sm:$0xff]
  %v437 = vld [vmem:[#allocation2 + $0x11] sm:$0xff]
  %v438 = vld [vmem:[#allocation2 + $0x29] sm:$0xff]
  %v439 = vld [vmem:[#allocation2 + $0x31] sm:$0xff]
  %v440 = vld [vmem:[#allocation2 + $0x49] sm:$0xff]
  %v441 = vld [vmem:[#allocation2 + $0x51] sm:$0xff]
  %v442 = vld [vmem:[#allocation2 + $0x69] sm:$0xff]
  %v443 = vld [vmem:[#allocation2 + $0x71] sm:$0xff]
  %v444 = vld [vmem:[#allocation2 + $0x89] sm:$0xff]
  %v445 = vld [vmem:[#allocation2 + $0x91] sm:$0xff]
  %v446 = vld [vmem:[#allocation2 + $0xa9] sm:$0xff]
  %v447 = vld [vmem:[#allocation2 + $0xb1] sm:$0xff]
  %v448 = vld [vmem:[#allocation2 + $0xc9] sm:$0xff]
  %v449 = vld [vmem:[#allocation2 + $0xd1] sm:$0xff]
  %v450 = vld [vmem:[#allocation2 + $0xe9] sm:$0xff]
  %v451 = vld [vmem:[#allocation2 + $0xf1] sm:$0xff]
  %v452 = vld [vmem:[#allocation2 + $0x109] sm:$0xff]
  %v453 = vld [vmem:[#allocation2 + $0x111] sm:$0xff]
  %v454 = vld [vmem:[#allocation2 + $0x129] sm:$0xff]
  %v455 = vld [vmem:[#allocation2 + $0x131] sm:$0xff]
  %v456 = vld [vmem:[#allocation2 + $0x149] sm:$0xff]
  %v457 = vld [vmem:[#allocation2 + $0x151] sm:$0xff]
  %v458 = vld [vmem:[#allocation2 + $0x169] sm:$0xff]
  %v459 = vld [vmem:[#allocation2 + $0x171] sm:$0xff]
  %v460 = vld [vmem:[#allocation2 + $0x189] sm:$0xff]
  %v461 = vld [vmem:[#allocation2 + $0x191] sm:$0xff]
  %v462 = vld [vmem:[#allocation2 + $0x1a9] sm:$0xff]
  %v463 = vld [vmem:[#allocation2 + $0x1b1] sm:$0xff]
  %v464 = vld [vmem:[#allocation2 + $0x1c9] sm:$0xff]
  %v465 = vld [vmem:[#allocation2 + $0x1d1] sm:$0xff]
  %v466 = vld [vmem:[#allocation2 + $0x1e9] sm:$0xff]
  %v467 = vld [vmem:[#allocation2 + $0x1f1] sm:$0xff]
  %v468 = vld [vmem:[#allocation2 + $0x249] sm:$0xff]
  %v469 = vld [vmem:[#allocation2 + $0x251] sm:$0xff]
  %v470 = vld [vmem:[#allocation2 + $0x269] sm:$0xff]
  %v471 = vld [vmem:[#allocation2 + $0x271] sm:$0xff]
  %v472 = vld [vmem:[#allocation2 + $0x289] sm:$0xff]
  %v473 = vld [vmem:[#allocation2 + $0x291] sm:$0xff]
  %v474 = vld [vmem:[#allocation2 + $0x2a9] sm:$0xff]
  %v475 = vld [vmem:[#allocation2 + $0x2b1] sm:$0xff]
  %v476 = vld [vmem:[#allocation2 + $0x2c9] sm:$0xff]
  %v477 = vld [vmem:[#allocation2 + $0x2d1] sm:$0xff]
  %v478 = vld [vmem:[#allocation2 + $0x2e9] sm:$0xff]
  %v479 = vld [vmem:[#allocation2 + $0x2f1] sm:$0xff]
  %v480 = vld [vmem:[#allocation2 + $0x309] sm:$0xff]
  %v481 = vld [vmem:[#allocation2 + $0x311] sm:$0xff]
  %v482 = vld [vmem:[#allocation2 + $0x329] sm:$0xff]
  %v483 = vld [vmem:[#allocation2 + $0x331] sm:$0xff]
  %v484 = vld [vmem:[#allocation2 + $0x349] sm:$0xff]
  %v485 = vld [vmem:[#allocation2 + $0x351] sm:$0xff]
  %v486 = vld [vmem:[#allocation2 + $0x369] sm:$0xff]
  %v487 = vld [vmem:[#allocation2 + $0x371] sm:$0xff]
  %v488 = vld [vmem:[#allocation2 + $0x389] sm:$0xff]
  %v489 = vld [vmem:[#allocation2 + $0x391] sm:$0xff]
  %v490 = vld [vmem:[#allocation2 + $0x3a9] sm:$0xff]
  %v491 = vld [vmem:[#allocation2 + $0x3b1] sm:$0xff]
  %v492 = vld [vmem:[#allocation2 + $0x3c9] sm:$0xff]
  %v493 = vld [vmem:[#allocation2 + $0x3d1] sm:$0xff]
  %v494 = vld [vmem:[#allocation2 + $0x3e9] sm:$0xff]
  %v495 = vld [vmem:[#allocation2 + $0x3f1] sm:$0xff]
  %v496 = vld [vmem:[#allocation2 + $0x409] sm:$0xff]
  %v497 = vld [vmem:[#allocation2 + $0x411] sm:$0xff]
  %v498 = vld [vmem:[#allocation2 + $0x429] sm:$0xff]
  %v499 = vld [vmem:[#allocation2 + $0x431] sm:$0xff]
  %v500 = vld [vmem:[%s242 + $0x7] sm:$0xff]
  %v501 = vld [vmem:[%s242 + $0xf] sm:$0xff]
  %v502 = vld [vmem:[%s242 + $0x27] sm:$0xff]
  %v503 = vld [vmem:[%s242 + $0x2f] sm:$0xff]
  %v504 = vld [vmem:[%s242 + $0x47] sm:$0xff]
  %v505 = vld [vmem:[%s242 + $0x4f] sm:$0xff]
  %v506 = vld [vmem:[%s242 + $0x67] sm:$0xff]
  %v507 = vld [vmem:[%s242 + $0x6f] sm:$0xff]
  %v508 = vld [vmem:[%s242 + $0x87] sm:$0xff]
  %v509 = vld [vmem:[%s242 + $0x8f] sm:$0xff]
  %v510 = vld [vmem:[%s242 + $0xa7] sm:$0xff]
  %v511 = vld [vmem:[%s242 + $0xaf] sm:$0xff]
  %v512 = vld [vmem:[%s242 + $0xc7] sm:$0xff]
  %v513 = vld [vmem:[%s242 + $0xcf] sm:$0xff]
  %v514 = vld [vmem:[%s242 + $0xe7] sm:$0xff]
  %v515 = vld [vmem:[%s242 + $0xef] sm:$0xff]
  %v516 = vld [vmem:[%s242 + $0x107] sm:$0xff]
  %v517 = vld [vmem:[%s242 + $0x10f] sm:$0xff]
  %v518 = vld [vmem:[%s242 + $0x127] sm:$0xff]
  %v519 = vld [vmem:[%s242 + $0x12f] sm:$0xff]
  %v520 = vld [vmem:[%s242 + $0x147] sm:$0xff]
  %v521 = vld [vmem:[%s242 + $0x14f] sm:$0xff]
  %v522 = vld [vmem:[%s242 + $0x167] sm:$0xff]
  %v523 = vld [vmem:[%s242 + $0x16f] sm:$0xff]
  %v524 = vld [vmem:[%s242 + $0x187] sm:$0xff]
  %v525 = vld [vmem:[%s242 + $0x18f] sm:$0xff]
  %v526 = vld [vmem:[%s242 + $0x1a7] sm:$0xff]
  %v527 = vld [vmem:[%s242 + $0x1af] sm:$0xff]
  %v528 = vld [vmem:[%s242 + $0x1c7] sm:$0xff]
  %v529 = vld [vmem:[%s242 + $0x1cf] sm:$0xff]
  %v530 = vld [vmem:[%s242 + $0x1e7] sm:$0xff]
  %v531 = vld [vmem:[%s242 + $0x1ef] sm:$0xff]
  %v532 = vld [vmem:[%s242 + $0x247] sm:$0xff]
  %v533 = vld [vmem:[%s242 + $0x24f] sm:$0xff]
  %v534 = vld [vmem:[%s242 + $0x267] sm:$0xff]
  %v535 = vld [vmem:[%s242 + $0x26f] sm:$0xff]
  %v536 = vld [vmem:[%s242 + $0x287] sm:$0xff]
  %v537 = vld [vmem:[%s242 + $0x28f] sm:$0xff]
  %v538 = vld [vmem:[%s242 + $0x2a7] sm:$0xff]
  %v539 = vld [vmem:[%s242 + $0x2af] sm:$0xff]
  %v540 = vld [vmem:[%s242 + $0x2c7] sm:$0xff]
  %v541 = vld [vmem:[%s242 + $0x2cf] sm:$0xff]
  %v542 = vld [vmem:[%s242 + $0x2e7] sm:$0xff]
  %v543 = vld [vmem:[%s242 + $0x2ef] sm:$0xff]
  %v544 = vld [vmem:[%s242 + $0x307] sm:$0xff]
  %v545 = vld [vmem:[%s242 + $0x30f] sm:$0xff]
  %v546 = vld [vmem:[%s242 + $0x327] sm:$0xff]
  %v547 = vld [vmem:[%s242 + $0x32f] sm:$0xff]
  %v548 = vld [vmem:[%s242 + $0x347] sm:$0xff]
  %v549 = vld [vmem:[%s242 + $0x34f] sm:$0xff]
  %v550 = vld [vmem:[%s242 + $0x367] sm:$0xff]
  %v551 = vld [vmem:[%s242 + $0x36f] sm:$0xff]
  %v552 = vld [vmem:[%s242 + $0x387] sm:$0xff]
  %v553 = vld [vmem:[%s242 + $0x38f] sm:$0xff]
  %v554 = vld [vmem:[%s242 + $0x3a7] sm:$0xff]
  %v555 = vld [vmem:[%s242 + $0x3af] sm:$0xff]
  %v556 = vld [vmem:[%s242 + $0x3c7] sm:$0xff]
  %v557 = vld [vmem:[%s242 + $0x3cf] sm:$0xff]
  %v558 = vld [vmem:[%s242 + $0x3e7] sm:$0xff]
  %v559 = vld [vmem:[%s242 + $0x3ef] sm:$0xff]
  %v560 = vld [vmem:[%s242 + $0x407] sm:$0xff]
  %v561 = vld [vmem:[%s242 + $0x40f] sm:$0xff]
  %v562 = vld [vmem:[%s242 + $0x427] sm:$0xff]
  %v563 = vld [vmem:[%s242 + $0x42f] sm:$0xff]
  %v564 = vld [vmem:[%s242 + $0x8] sm:$0xff]
  %v565 = vld [vmem:[%s242 + $0x10] sm:$0xff]
  %v566 = vld [vmem:[%s242 + $0x28] sm:$0xff]
  %v567 = vld [vmem:[%s242 + $0x30] sm:$0xff]
  %v568 = vld [vmem:[%s242 + $0x48] sm:$0xff]
  %v569 = vld [vmem:[%s242 + $0x50] sm:$0xff]
  %v570 = vld [vmem:[%s242 + $0x68] sm:$0xff]
  %v571 = vld [vmem:[%s242 + $0x70] sm:$0xff]
  %v572 = vld [vmem:[%s242 + $0x88] sm:$0xff]
  %v573 = vld [vmem:[%s242 + $0x90] sm:$0xff]
  %v574 = vld [vmem:[%s242 + $0xa8] sm:$0xff]
  %v575 = vld [vmem:[%s242 + $0xb0] sm:$0xff]
  %v576 = vld [vmem:[%s242 + $0xc8] sm:$0xff]
  %v577 = vld [vmem:[%s242 + $0xd0] sm:$0xff]
  %v578 = vld [vmem:[%s242 + $0xe8] sm:$0xff]
  %v579 = vld [vmem:[%s242 + $0xf0] sm:$0xff]
  %v580 = vld [vmem:[%s242 + $0x108] sm:$0xff]
  %v581 = vld [vmem:[%s242 + $0x110] sm:$0xff]
  %v582 = vld [vmem:[%s242 + $0x128] sm:$0xff]
  %v583 = vld [vmem:[%s242 + $0x130] sm:$0xff]
  %v584 = vld [vmem:[%s242 + $0x148] sm:$0xff]
  %v585 = vld [vmem:[%s242 + $0x150] sm:$0xff]
  %v586 = vld [vmem:[%s242 + $0x168] sm:$0xff]
  %v587 = vld [vmem:[%s242 + $0x170] sm:$0xff]
  %v588 = vld [vmem:[%s242 + $0x188] sm:$0xff]
  %v589 = vld [vmem:[%s242 + $0x190] sm:$0xff]
  %v590 = vld [vmem:[%s242 + $0x1a8] sm:$0xff]
  %v591 = vld [vmem:[%s242 + $0x1b0] sm:$0xff]
  %v592 = vld [vmem:[%s242 + $0x1c8] sm:$0xff]
  %v593 = vld [vmem:[%s242 + $0x1d0] sm:$0xff]
  %v594 = vld [vmem:[%s242 + $0x1e8] sm:$0xff]
  %v595 = vld [vmem:[%s242 + $0x1f0] sm:$0xff]
  %v596 = vld [vmem:[%s242 + $0x248] sm:$0xff]
  %v597 = vld [vmem:[%s242 + $0x250] sm:$0xff]
  %v598 = vld [vmem:[%s242 + $0x268] sm:$0xff]
  %v599 = vld [vmem:[%s242 + $0x270] sm:$0xff]
  %v600 = vld [vmem:[%s242 + $0x288] sm:$0xff]
  %v601 = vld [vmem:[%s242 + $0x290] sm:$0xff]
  %v602 = vld [vmem:[%s242 + $0x2a8] sm:$0xff]
  %v603 = vld [vmem:[%s242 + $0x2b0] sm:$0xff]
  %v604 = vld [vmem:[%s242 + $0x2c8] sm:$0xff]
  %v605 = vld [vmem:[%s242 + $0x2d0] sm:$0xff]
  %v606 = vld [vmem:[%s242 + $0x2e8] sm:$0xff]
  %v607 = vld [vmem:[%s242 + $0x2f0] sm:$0xff]
  %v608 = vld [vmem:[%s242 + $0x308] sm:$0xff]
  %v609 = vld [vmem:[%s242 + $0x310] sm:$0xff]
  %v610 = vld [vmem:[%s242 + $0x328] sm:$0xff]
  %v611 = vld [vmem:[%s242 + $0x330] sm:$0xff]
  %v612 = vld [vmem:[%s242 + $0x348] sm:$0xff]
  %v613 = vld [vmem:[%s242 + $0x350] sm:$0xff]
  %v614 = vld [vmem:[%s242 + $0x368] sm:$0xff]
  %v615 = vld [vmem:[%s242 + $0x370] sm:$0xff]
  %v616 = vld [vmem:[%s242 + $0x388] sm:$0xff]
  %v617 = vld [vmem:[%s242 + $0x390] sm:$0xff]
  %v618 = vld [vmem:[%s242 + $0x3a8] sm:$0xff]
  %v619 = vld [vmem:[%s242 + $0x3b0] sm:$0xff]
  %v620 = vld [vmem:[%s242 + $0x3c8] sm:$0xff]
  %v621 = vld [vmem:[%s242 + $0x3d0] sm:$0xff]
  %v622 = vld [vmem:[%s242 + $0x3e8] sm:$0xff]
  %v623 = vld [vmem:[%s242 + $0x3f0] sm:$0xff]
  %v624 = vld [vmem:[%s242 + $0x408] sm:$0xff]
  %v625 = vld [vmem:[%s242 + $0x410] sm:$0xff]
  %v626 = vld [vmem:[%s242 + $0x428] sm:$0xff]
  %v627 = vld [vmem:[%s242 + $0x430] sm:$0xff]
  %v628 = vld [vmem:[%s242 + $0x9] sm:$0xff]
  %v629 = vld [vmem:[%s242 + $0x11] sm:$0xff]
  %v630 = vld [vmem:[%s242 + $0x29] sm:$0xff]
  %v631 = vld [vmem:[%s242 + $0x31] sm:$0xff]
  %v632 = vld [vmem:[%s242 + $0x49] sm:$0xff]
  %v633 = vld [vmem:[%s242 + $0x51] sm:$0xff]
  %v634 = vld [vmem:[%s242 + $0x69] sm:$0xff]
  %v635 = vld [vmem:[%s242 + $0x71] sm:$0xff]
  %v636 = vld [vmem:[%s242 + $0x89] sm:$0xff]
  %v637 = vld [vmem:[%s242 + $0x91] sm:$0xff]
  %v638 = vld [vmem:[%s242 + $0xa9] sm:$0xff]
  %v639 = vld [vmem:[%s242 + $0xb1] sm:$0xff]
  %v640 = vld [vmem:[%s242 + $0xc9] sm:$0xff]
  %v641 = vld [vmem:[%s242 + $0xd1] sm:$0xff]
  %v642 = vld [vmem:[%s242 + $0xe9] sm:$0xff]
  %v643 = vld [vmem:[%s242 + $0xf1] sm:$0xff]
  %v644 = vld [vmem:[%s242 + $0x109] sm:$0xff]
  %v645 = vld [vmem:[%s242 + $0x111] sm:$0xff]
  %v646 = vld [vmem:[%s242 + $0x129] sm:$0xff]
  %v647 = vld [vmem:[%s242 + $0x131] sm:$0xff]
  %v648 = vld [vmem:[%s242 + $0x149] sm:$0xff]
  %v649 = vld [vmem:[%s242 + $0x151] sm:$0xff]
  %v650 = vld [vmem:[%s242 + $0x169] sm:$0xff]
  %v651 = vld [vmem:[%s242 + $0x171] sm:$0xff]
  %v652 = vld [vmem:[%s242 + $0x189] sm:$0xff]
  %v653 = vld [vmem:[%s242 + $0x191] sm:$0xff]
  %v654 = vld [vmem:[%s242 + $0x1a9] sm:$0xff]
  %v655 = vld [vmem:[%s242 + $0x1b1] sm:$0xff]
  %v656 = vld [vmem:[%s242 + $0x1c9] sm:$0xff]
  %v657 = vld [vmem:[%s242 + $0x1d1] sm:$0xff]
  %v658 = vld [vmem:[%s242 + $0x1e9] sm:$0xff]
  %v659 = vld [vmem:[%s242 + $0x1f1] sm:$0xff]
  %v660 = vld [vmem:[%s242 + $0x249] sm:$0xff]
  %v661 = vld [vmem:[%s242 + $0x251] sm:$0xff]
  %v662 = vld [vmem:[%s242 + $0x269] sm:$0xff]
  %v663 = vld [vmem:[%s242 + $0x271] sm:$0xff]
  %v664 = vld [vmem:[%s242 + $0x289] sm:$0xff]
  %v665 = vld [vmem:[%s242 + $0x291] sm:$0xff]
  %v666 = vld [vmem:[%s242 + $0x2a9] sm:$0xff]
  %v667 = vld [vmem:[%s242 + $0x2b1] sm:$0xff]
  %v668 = vld [vmem:[%s242 + $0x2c9] sm:$0xff]
  %v669 = vld [vmem:[%s242 + $0x2d1] sm:$0xff]
  %v670 = vld [vmem:[%s242 + $0x2e9] sm:$0xff]
  %v671 = vld [vmem:[%s242 + $0x2f1] sm:$0xff]
  %v672 = vld [vmem:[%s242 + $0x309] sm:$0xff]
  %v673 = vld [vmem:[%s242 + $0x311] sm:$0xff]
  %v674 = vld [vmem:[%s242 + $0x329] sm:$0xff]
  %v675 = vld [vmem:[%s242 + $0x331] sm:$0xff]
  %v676 = vld [vmem:[%s242 + $0x349] sm:$0xff]
  %v677 = vld [vmem:[%s242 + $0x351] sm:$0xff]
  %v678 = vld [vmem:[%s242 + $0x369] sm:$0xff]
  %v679 = vld [vmem:[%s242 + $0x371] sm:$0xff]
  %v680 = vld [vmem:[%s242 + $0x389] sm:$0xff]
  %v681 = vld [vmem:[%s242 + $0x391] sm:$0xff]
  %v682 = vld [vmem:[%s242 + $0x3a9] sm:$0xff]
  %v683 = vld [vmem:[%s242 + $0x3b1] sm:$0xff]
  %v684 = vld [vmem:[%s242 + $0x3c9] sm:$0xff]
  %v685 = vld [vmem:[%s242 + $0x3d1] sm:$0xff]
  %v686 = vld [vmem:[%s242 + $0x3e9] sm:$0xff]
  %v687 = vld [vmem:[%s242 + $0x3f1] sm:$0xff]
  %v688 = vld [vmem:[%s242 + $0x409] sm:$0xff]
  %v689 = vld [vmem:[%s242 + $0x411] sm:$0xff]
  %v690 = vld [vmem:[%s242 + $0x429] sm:$0xff]
  %v691 = vld [vmem:[%s242 + $0x431] sm:$0xff]
  %s692 = scalar_lea.vmem [#allocation2], 64
  %v693 = vld [vmem:[%s692 + $0x7] sm:$0xff]
  %v694 = vld [vmem:[%s692 + $0xf] sm:$0xff]
  %v695 = vld [vmem:[%s692 + $0x27] sm:$0xff]
  %v696 = vld [vmem:[%s692 + $0x2f] sm:$0xff]
  %v697 = vld [vmem:[%s692 + $0x47] sm:$0xff]
  %v698 = vld [vmem:[%s692 + $0x4f] sm:$0xff]
  %v699 = vld [vmem:[%s692 + $0x67] sm:$0xff]
  %v700 = vld [vmem:[%s692 + $0x6f] sm:$0xff]
  %v701 = vld [vmem:[%s692 + $0x87] sm:$0xff]
  %v702 = vld [vmem:[%s692 + $0x8f] sm:$0xff]
  %v703 = vld [vmem:[%s692 + $0xa7] sm:$0xff]
  %v704 = vld [vmem:[%s692 + $0xaf] sm:$0xff]
  %v705 = vld [vmem:[%s692 + $0xc7] sm:$0xff]
  %v706 = vld [vmem:[%s692 + $0xcf] sm:$0xff]
  %v707 = vld [vmem:[%s692 + $0xe7] sm:$0xff]
  %v708 = vld [vmem:[%s692 + $0xef] sm:$0xff]
  %v709 = vld [vmem:[%s692 + $0x107] sm:$0xff]
  %v710 = vld [vmem:[%s692 + $0x10f] sm:$0xff]
  %v711 = vld [vmem:[%s692 + $0x127] sm:$0xff]
  %v712 = vld [vmem:[%s692 + $0x12f] sm:$0xff]
  %v713 = vld [vmem:[%s692 + $0x147] sm:$0xff]
  %v714 = vld [vmem:[%s692 + $0x14f] sm:$0xff]
  %v715 = vld [vmem:[%s692 + $0x167] sm:$0xff]
  %v716 = vld [vmem:[%s692 + $0x16f] sm:$0xff]
  %v717 = vld [vmem:[%s692 + $0x187] sm:$0xff]
  %v718 = vld [vmem:[%s692 + $0x18f] sm:$0xff]
  %v719 = vld [vmem:[%s692 + $0x1a7] sm:$0xff]
  %v720 = vld [vmem:[%s692 + $0x1af] sm:$0xff]
  %v721 = vld [vmem:[%s692 + $0x1c7] sm:$0xff]
  %v722 = vld [vmem:[%s692 + $0x1cf] sm:$0xff]
  %v723 = vld [vmem:[%s692 + $0x1e7] sm:$0xff]
  %v724 = vld [vmem:[%s692 + $0x1ef] sm:$0xff]
  %v725 = vld [vmem:[%s692 + $0x247] sm:$0xff]
  %v726 = vld [vmem:[%s692 + $0x24f] sm:$0xff]
  %v727 = vld [vmem:[%s692 + $0x267] sm:$0xff]
  %v728 = vld [vmem:[%s692 + $0x26f] sm:$0xff]
  %v729 = vld [vmem:[%s692 + $0x287] sm:$0xff]
  %v730 = vld [vmem:[%s692 + $0x28f] sm:$0xff]
  %v731 = vld [vmem:[%s692 + $0x2a7] sm:$0xff]
  %v732 = vld [vmem:[%s692 + $0x2af] sm:$0xff]
  %v733 = vld [vmem:[%s692 + $0x2c7] sm:$0xff]
  %v734 = vld [vmem:[%s692 + $0x2cf] sm:$0xff]
  %v735 = vld [vmem:[%s692 + $0x2e7] sm:$0xff]
  %v736 = vld [vmem:[%s692 + $0x2ef] sm:$0xff]
  %v737 = vld [vmem:[%s692 + $0x307] sm:$0xff]
  %v738 = vld [vmem:[%s692 + $0x30f] sm:$0xff]
  %v739 = vld [vmem:[%s692 + $0x327] sm:$0xff]
  %v740 = vld [vmem:[%s692 + $0x32f] sm:$0xff]
  %v741 = vld [vmem:[%s692 + $0x347] sm:$0xff]
  %v742 = vld [vmem:[%s692 + $0x34f] sm:$0xff]
  %v743 = vld [vmem:[%s692 + $0x367] sm:$0xff]
  %v744 = vld [vmem:[%s692 + $0x36f] sm:$0xff]
  %v745 = vld [vmem:[%s692 + $0x387] sm:$0xff]
  %v746 = vld [vmem:[%s692 + $0x38f] sm:$0xff]
  %v747 = vld [vmem:[%s692 + $0x3a7] sm:$0xff]
  %v748 = vld [vmem:[%s692 + $0x3af] sm:$0xff]
  %v749 = vld [vmem:[%s692 + $0x3c7] sm:$0xff]
  %v750 = vld [vmem:[%s692 + $0x3cf] sm:$0xff]
  %v751 = vld [vmem:[%s692 + $0x3e7] sm:$0xff]
  %v752 = vld [vmem:[%s692 + $0x3ef] sm:$0xff]
  %v753 = vld [vmem:[%s692 + $0x407] sm:$0xff]
  %v754 = vld [vmem:[%s692 + $0x40f] sm:$0xff]
  %v755 = vld [vmem:[%s692 + $0x427] sm:$0xff]
  %v756 = vld [vmem:[%s692 + $0x42f] sm:$0xff]
  %v757 = vld [vmem:[%s692 + $0x8] sm:$0xff]
  %v758 = vld [vmem:[%s692 + $0x10] sm:$0xff]
  %v759 = vld [vmem:[%s692 + $0x28] sm:$0xff]
  %v760 = vld [vmem:[%s692 + $0x30] sm:$0xff]
  %v761 = vld [vmem:[%s692 + $0x48] sm:$0xff]
  %v762 = vld [vmem:[%s692 + $0x50] sm:$0xff]
  %v763 = vld [vmem:[%s692 + $0x68] sm:$0xff]
  %v764 = vld [vmem:[%s692 + $0x70] sm:$0xff]
  %v765 = vld [vmem:[%s692 + $0x88] sm:$0xff]
  %v766 = vld [vmem:[%s692 + $0x90] sm:$0xff]
  %v767 = vld [vmem:[%s692 + $0xa8] sm:$0xff]
  %v768 = vld [vmem:[%s692 + $0xb0] sm:$0xff]
  %v769 = vld [vmem:[%s692 + $0xc8] sm:$0xff]
  %v770 = vld [vmem:[%s692 + $0xd0] sm:$0xff]
  %v771 = vld [vmem:[%s692 + $0xe8] sm:$0xff]
  %v772 = vld [vmem:[%s692 + $0xf0] sm:$0xff]
  %v773 = vld [vmem:[%s692 + $0x108] sm:$0xff]
  %v774 = vld [vmem:[%s692 + $0x110] sm:$0xff]
  %v775 = vld [vmem:[%s692 + $0x128] sm:$0xff]
  %v776 = vld [vmem:[%s692 + $0x130] sm:$0xff]
  %v777 = vld [vmem:[%s692 + $0x148] sm:$0xff]
  %v778 = vld [vmem:[%s692 + $0x150] sm:$0xff]
  %v779 = vld [vmem:[%s692 + $0x168] sm:$0xff]
  %v780 = vld [vmem:[%s692 + $0x170] sm:$0xff]
  %v781 = vld [vmem:[%s692 + $0x188] sm:$0xff]
  %v782 = vld [vmem:[%s692 + $0x190] sm:$0xff]
  %v783 = vld [vmem:[%s692 + $0x1a8] sm:$0xff]
  %v784 = vld [vmem:[%s692 + $0x1b0] sm:$0xff]
  %v785 = vld [vmem:[%s692 + $0x1c8] sm:$0xff]
  %v786 = vld [vmem:[%s692 + $0x1d0] sm:$0xff]
  %v787 = vld [vmem:[%s692 + $0x1e8] sm:$0xff]
  %v788 = vld [vmem:[%s692 + $0x1f0] sm:$0xff]
  %v789 = vld [vmem:[%s692 + $0x248] sm:$0xff]
  %v790 = vld [vmem:[%s692 + $0x250] sm:$0xff]
  %v791 = vld [vmem:[%s692 + $0x268] sm:$0xff]
  %v792 = vld [vmem:[%s692 + $0x270] sm:$0xff]
  %v793 = vld [vmem:[%s692 + $0x288] sm:$0xff]
  %v794 = vld [vmem:[%s692 + $0x290] sm:$0xff]
  %v795 = vld [vmem:[%s692 + $0x2a8] sm:$0xff]
  %v796 = vld [vmem:[%s692 + $0x2b0] sm:$0xff]
  %v797 = vld [vmem:[%s692 + $0x2c8] sm:$0xff]
  %v798 = vld [vmem:[%s692 + $0x2d0] sm:$0xff]
  %v799 = vld [vmem:[%s692 + $0x2e8] sm:$0xff]
  %v800 = vld [vmem:[%s692 + $0x2f0] sm:$0xff]
  %v801 = vld [vmem:[%s692 + $0x308] sm:$0xff]
  %v802 = vld [vmem:[%s692 + $0x310] sm:$0xff]
  %v803 = vld [vmem:[%s692 + $0x328] sm:$0xff]
  %v804 = vld [vmem:[%s692 + $0x330] sm:$0xff]
  %v805 = vld [vmem:[%s692 + $0x348] sm:$0xff]
  %v806 = vld [vmem:[%s692 + $0x350] sm:$0xff]
  %v807 = vld [vmem:[%s692 + $0x368] sm:$0xff]
  %v808 = vld [vmem:[%s692 + $0x370] sm:$0xff]
  %v809 = vld [vmem:[%s692 + $0x388] sm:$0xff]
  %v810 = vld [vmem:[%s692 + $0x390] sm:$0xff]
  %v811 = vld [vmem:[%s692 + $0x3a8] sm:$0xff]
  %v812 = vld [vmem:[%s692 + $0x3b0] sm:$0xff]
  %v813 = vld [vmem:[%s692 + $0x3c8] sm:$0xff]
  %v814 = vld [vmem:[%s692 + $0x3d0] sm:$0xff]
  %v815 = vld [vmem:[%s692 + $0x3e8] sm:$0xff]
  %v816 = vld [vmem:[%s692 + $0x3f0] sm:$0xff]
  %v817 = vld [vmem:[%s692 + $0x408] sm:$0xff]
  %v818 = vld [vmem:[%s692 + $0x410] sm:$0xff]
  %v819 = vld [vmem:[%s692 + $0x428] sm:$0xff]
  %v820 = vld [vmem:[%s692 + $0x430] sm:$0xff]
  %v821 = vld [vmem:[%s692 + $0x9] sm:$0xff]
  %v822 = vld [vmem:[%s692 + $0x11] sm:$0xff]
  %v823 = vld [vmem:[%s692 + $0x29] sm:$0xff]
  %v824 = vld [vmem:[%s692 + $0x31] sm:$0xff]
  %v825 = vld [vmem:[%s692 + $0x49] sm:$0xff]
  %v826 = vld [vmem:[%s692 + $0x51] sm:$0xff]
  %v827 = vld [vmem:[%s692 + $0x69] sm:$0xff]
  %v828 = vld [vmem:[%s692 + $0x71] sm:$0xff]
  %v829 = vld [vmem:[%s692 + $0x89] sm:$0xff]
  %v830 = vld [vmem:[%s692 + $0x91] sm:$0xff]
  %v831 = vld [vmem:[%s692 + $0xa9] sm:$0xff]
  %v832 = vld [vmem:[%s692 + $0xb1] sm:$0xff]
  %v833 = vld [vmem:[%s692 + $0xc9] sm:$0xff]
  %v834 = vld [vmem:[%s692 + $0xd1] sm:$0xff]
  %v835 = vld [vmem:[%s692 + $0xe9] sm:$0xff]
  %v836 = vld [vmem:[%s692 + $0xf1] sm:$0xff]
  %v837 = vld [vmem:[%s692 + $0x109] sm:$0xff]
  %v838 = vld [vmem:[%s692 + $0x111] sm:$0xff]
  %v839 = vld [vmem:[%s692 + $0x129] sm:$0xff]
  %v840 = vld [vmem:[%s692 + $0x131] sm:$0xff]
  %v841 = vld [vmem:[%s692 + $0x149] sm:$0xff]
  %v842 = vld [vmem:[%s692 + $0x151] sm:$0xff]
  %v843 = vld [vmem:[%s692 + $0x169] sm:$0xff]
  %v844 = vld [vmem:[%s692 + $0x171] sm:$0xff]
  %v845 = vld [vmem:[%s692 + $0x189] sm:$0xff]
  %v846 = vld [vmem:[%s692 + $0x191] sm:$0xff]
  %v847 = vld [vmem:[%s692 + $0x1a9] sm:$0xff]
  %v848 = vld [vmem:[%s692 + $0x1b1] sm:$0xff]
  %v849 = vld [vmem:[%s692 + $0x1c9] sm:$0xff]
  %v850 = vld [vmem:[%s692 + $0x1d1] sm:$0xff]
  %v851 = vld [vmem:[%s692 + $0x1e9] sm:$0xff]
  %v852 = vld [vmem:[%s692 + $0x1f1] sm:$0xff]
  %v853 = vld [vmem:[%s692 + $0x249] sm:$0xff]
  %v854 = vld [vmem:[%s692 + $0x251] sm:$0xff]
  %v855 = vld [vmem:[%s692 + $0x269] sm:$0xff]
  %v856 = vld [vmem:[%s692 + $0x271] sm:$0xff]
  %v857 = vld [vmem:[%s692 + $0x289] sm:$0xff]
  %v858 = vld [vmem:[%s692 + $0x291] sm:$0xff]
  %v859 = vld [vmem:[%s692 + $0x2a9] sm:$0xff]
  %v860 = vld [vmem:[%s692 + $0x2b1] sm:$0xff]
  %v861 = vld [vmem:[%s692 + $0x2c9] sm:$0xff]
  %v862 = vld [vmem:[%s692 + $0x2d1] sm:$0xff]
  %v863 = vld [vmem:[%s692 + $0x2e9] sm:$0xff]
  %v864 = vld [vmem:[%s692 + $0x2f1] sm:$0xff]
  %v865 = vld [vmem:[%s692 + $0x309] sm:$0xff]
  %v866 = vld [vmem:[%s692 + $0x311] sm:$0xff]
  %v867 = vld [vmem:[%s692 + $0x329] sm:$0xff]
  %v868 = vld [vmem:[%s692 + $0x331] sm:$0xff]
  %v869 = vld [vmem:[%s692 + $0x349] sm:$0xff]
  %v870 = vld [vmem:[%s692 + $0x351] sm:$0xff]
  %v871 = vld [vmem:[%s692 + $0x369] sm:$0xff]
  %v872 = vld [vmem:[%s692 + $0x371] sm:$0xff]
  %v873 = vld [vmem:[%s692 + $0x389] sm:$0xff]
  %v874 = vld [vmem:[%s692 + $0x391] sm:$0xff]
  %v875 = vld [vmem:[%s692 + $0x3a9] sm:$0xff]
  %v876 = vld [vmem:[%s692 + $0x3b1] sm:$0xff]
  %v877 = vld [vmem:[%s692 + $0x3c9] sm:$0xff]
  %v878 = vld [vmem:[%s692 + $0x3d1] sm:$0xff]
  %v879 = vld [vmem:[%s692 + $0x3e9] sm:$0xff]
  %v880 = vld [vmem:[%s692 + $0x3f1] sm:$0xff]
  %v881 = vld [vmem:[%s692 + $0x409] sm:$0xff]
  %v882 = vld [vmem:[%s692 + $0x411] sm:$0xff]
  %v883 = vld [vmem:[%s692 + $0x429] sm:$0xff]
  %v884 = vld [vmem:[%s692 + $0x431] sm:$0xff]
  %949 = vrot.lane.b32.xlu0 %v372, 8
  %v950 = vpop.permute.xlu0 %949
  %951 = vrot.lane.b32.xlu0 %v373, 8
  %v952 = vpop.permute.xlu0 %951
  %953 = vrot.lane.b32.xlu0 %v374, 8
  %v954 = vpop.permute.xlu0 %953
  %955 = vrot.lane.b32.xlu0 %v375, 8
  %v956 = vpop.permute.xlu0 %955
  %957 = vrot.lane.b32.xlu0 %v376, 8
  %v958 = vpop.permute.xlu0 %957
  %959 = vrot.lane.b32.xlu0 %v377, 8
  %v960 = vpop.permute.xlu0 %959
  %961 = vrot.lane.b32.xlu0 %v378, 8
  %v962 = vpop.permute.xlu0 %961
  %963 = vrot.lane.b32.xlu0 %v379, 8
  %v964 = vpop.permute.xlu0 %963
  %965 = vrot.lane.b32.xlu0 %v380, 8
  %v966 = vpop.permute.xlu0 %965
  %967 = vrot.lane.b32.xlu0 %v381, 8
  %v968 = vpop.permute.xlu0 %967
  %969 = vrot.lane.b32.xlu0 %v382, 8
  %v970 = vpop.permute.xlu0 %969
  %971 = vrot.lane.b32.xlu0 %v383, 8
  %v972 = vpop.permute.xlu0 %971
  %973 = vrot.lane.b32.xlu0 %v384, 8
  %v974 = vpop.permute.xlu0 %973
  %975 = vrot.lane.b32.xlu0 %v385, 8
  %v976 = vpop.permute.xlu0 %975
  %977 = vrot.lane.b32.xlu0 %v386, 8
  %v978 = vpop.permute.xlu0 %977
  %979 = vrot.lane.b32.xlu0 %v387, 8
  %v980 = vpop.permute.xlu0 %979
  %981 = vrot.lane.b32.xlu0 %v388, 8
  %v982 = vpop.permute.xlu0 %981
  %983 = vrot.lane.b32.xlu0 %v389, 8
  %v984 = vpop.permute.xlu0 %983
  %985 = vrot.lane.b32.xlu0 %v390, 8
  %v986 = vpop.permute.xlu0 %985
  %987 = vrot.lane.b32.xlu0 %v391, 8
  %v988 = vpop.permute.xlu0 %987
  %989 = vrot.lane.b32.xlu0 %v392, 8
  %v990 = vpop.permute.xlu0 %989
  %991 = vrot.lane.b32.xlu0 %v393, 8
  %v992 = vpop.permute.xlu0 %991
  %993 = vrot.lane.b32.xlu0 %v394, 8
  %v994 = vpop.permute.xlu0 %993
  %995 = vrot.lane.b32.xlu0 %v395, 8
  %v996 = vpop.permute.xlu0 %995
  %997 = vrot.lane.b32.xlu0 %v396, 8
  %v998 = vpop.permute.xlu0 %997
  %999 = vrot.lane.b32.xlu0 %v397, 8
  %v1000 = vpop.permute.xlu0 %999
  %1001 = vrot.lane.b32.xlu0 %v398, 8
  %v1002 = vpop.permute.xlu0 %1001
  %1003 = vrot.lane.b32.xlu0 %v399, 8
  %v1004 = vpop.permute.xlu0 %1003
  %1005 = vrot.lane.b32.xlu0 %v400, 8
  %v1006 = vpop.permute.xlu0 %1005
  %1007 = vrot.lane.b32.xlu0 %v401, 8
  %v1008 = vpop.permute.xlu0 %1007
  %1009 = vrot.lane.b32.xlu0 %v402, 8
  %v1010 = vpop.permute.xlu0 %1009
  %1011 = vrot.lane.b32.xlu0 %v403, 8
  %v1012 = vpop.permute.xlu0 %1011
  %1013 = vrot.lane.b32.xlu0 %v404, 8
  %v1014 = vpop.permute.xlu0 %1013
  %1015 = vrot.lane.b32.xlu0 %v405, 8
  %v1016 = vpop.permute.xlu0 %1015
  %1017 = vrot.lane.b32.xlu0 %v406, 8
  %v1018 = vpop.permute.xlu0 %1017
  %1019 = vrot.lane.b32.xlu0 %v407, 8
  %v1020 = vpop.permute.xlu0 %1019
  %1021 = vrot.lane.b32.xlu0 %v408, 8
  %v1022 = vpop.permute.xlu0 %1021
  %1023 = vrot.lane.b32.xlu0 %v409, 8
  %v1024 = vpop.permute.xlu0 %1023
  %1025 = vrot.lane.b32.xlu0 %v410, 8
  %v1026 = vpop.permute.xlu0 %1025
  %1027 = vrot.lane.b32.xlu0 %v411, 8
  %v1028 = vpop.permute.xlu0 %1027
  %1029 = vrot.lane.b32.xlu0 %v412, 8
  %v1030 = vpop.permute.xlu0 %1029
  %1031 = vrot.lane.b32.xlu0 %v413, 8
  %v1032 = vpop.permute.xlu0 %1031
  %1033 = vrot.lane.b32.xlu0 %v414, 8
  %v1034 = vpop.permute.xlu0 %1033
  %1035 = vrot.lane.b32.xlu0 %v415, 8
  %v1036 = vpop.permute.xlu0 %1035
  %1037 = vrot.lane.b32.xlu0 %v416, 8
  %v1038 = vpop.permute.xlu0 %1037
  %1039 = vrot.lane.b32.xlu0 %v417, 8
  %v1040 = vpop.permute.xlu0 %1039
  %1041 = vrot.lane.b32.xlu0 %v418, 8
  %v1042 = vpop.permute.xlu0 %1041
  %1043 = vrot.lane.b32.xlu0 %v419, 8
  %v1044 = vpop.permute.xlu0 %1043
  %1045 = vrot.lane.b32.xlu0 %v420, 8
  %v1046 = vpop.permute.xlu0 %1045
  %1047 = vrot.lane.b32.xlu0 %v421, 8
  %v1048 = vpop.permute.xlu0 %1047
  %1049 = vrot.lane.b32.xlu0 %v422, 8
  %v1050 = vpop.permute.xlu0 %1049
  %1051 = vrot.lane.b32.xlu0 %v423, 8
  %v1052 = vpop.permute.xlu0 %1051
  %1053 = vrot.lane.b32.xlu0 %v424, 8
  %v1054 = vpop.permute.xlu0 %1053
  %1055 = vrot.lane.b32.xlu0 %v425, 8
  %v1056 = vpop.permute.xlu0 %1055
  %1057 = vrot.lane.b32.xlu0 %v426, 8
  %v1058 = vpop.permute.xlu0 %1057
  %1059 = vrot.lane.b32.xlu0 %v427, 8
  %v1060 = vpop.permute.xlu0 %1059
  %1061 = vrot.lane.b32.xlu0 %v428, 8
  %v1062 = vpop.permute.xlu0 %1061
  %1063 = vrot.lane.b32.xlu0 %v429, 8
  %v1064 = vpop.permute.xlu0 %1063
  %1065 = vrot.lane.b32.xlu0 %v430, 8
  %v1066 = vpop.permute.xlu0 %1065
  %1067 = vrot.lane.b32.xlu0 %v431, 8
  %v1068 = vpop.permute.xlu0 %1067
  %1069 = vrot.lane.b32.xlu0 %v432, 8
  %v1070 = vpop.permute.xlu0 %1069
  %1071 = vrot.lane.b32.xlu0 %v433, 8
  %v1072 = vpop.permute.xlu0 %1071
  %1073 = vrot.lane.b32.xlu0 %v434, 8
  %v1074 = vpop.permute.xlu0 %1073
  %1075 = vrot.lane.b32.xlu0 %v435, 8
  %v1076 = vpop.permute.xlu0 %1075
  %1205 = vrot.lane.b32.xlu0 %v436, 16
  %v1206 = vpop.permute.xlu0 %1205
  %1207 = vrot.lane.b32.xlu0 %v437, 16
  %v1208 = vpop.permute.xlu0 %1207
  %1209 = vrot.lane.b32.xlu0 %v438, 16
  %v1210 = vpop.permute.xlu0 %1209
  %1211 = vrot.lane.b32.xlu0 %v439, 16
  %v1212 = vpop.permute.xlu0 %1211
  %1213 = vrot.lane.b32.xlu0 %v440, 16
  %v1214 = vpop.permute.xlu0 %1213
  %1215 = vrot.lane.b32.xlu0 %v441, 16
  %v1216 = vpop.permute.xlu0 %1215
  %1217 = vrot.lane.b32.xlu0 %v442, 16
  %v1218 = vpop.permute.xlu0 %1217
  %1219 = vrot.lane.b32.xlu0 %v443, 16
  %v1220 = vpop.permute.xlu0 %1219
  %1221 = vrot.lane.b32.xlu0 %v444, 16
  %v1222 = vpop.permute.xlu0 %1221
  %1223 = vrot.lane.b32.xlu0 %v445, 16
  %v1224 = vpop.permute.xlu0 %1223
  %1225 = vrot.lane.b32.xlu0 %v446, 16
  %v1226 = vpop.permute.xlu0 %1225
  %1227 = vrot.lane.b32.xlu0 %v447, 16
  %v1228 = vpop.permute.xlu0 %1227
  %1229 = vrot.lane.b32.xlu0 %v448, 16
  %v1230 = vpop.permute.xlu0 %1229
  %1231 = vrot.lane.b32.xlu0 %v449, 16
  %v1232 = vpop.permute.xlu0 %1231
  %1233 = vrot.lane.b32.xlu0 %v450, 16
  %v1234 = vpop.permute.xlu0 %1233
  %1235 = vrot.lane.b32.xlu0 %v451, 16
  %v1236 = vpop.permute.xlu0 %1235
  %1237 = vrot.lane.b32.xlu0 %v452, 16
  %v1238 = vpop.permute.xlu0 %1237
  %1239 = vrot.lane.b32.xlu0 %v453, 16
  %v1240 = vpop.permute.xlu0 %1239
  %1241 = vrot.lane.b32.xlu0 %v454, 16
  %v1242 = vpop.permute.xlu0 %1241
  %1243 = vrot.lane.b32.xlu0 %v455, 16
  %v1244 = vpop.permute.xlu0 %1243
  %1245 = vrot.lane.b32.xlu0 %v456, 16
  %v1246 = vpop.permute.xlu0 %1245
  %1247 = vrot.lane.b32.xlu0 %v457, 16
  %v1248 = vpop.permute.xlu0 %1247
  %1249 = vrot.lane.b32.xlu0 %v458, 16
  %v1250 = vpop.permute.xlu0 %1249
  %1251 = vrot.lane.b32.xlu0 %v459, 16
  %v1252 = vpop.permute.xlu0 %1251
  %1253 = vrot.lane.b32.xlu0 %v460, 16
  %v1254 = vpop.permute.xlu0 %1253
  %1255 = vrot.lane.b32.xlu0 %v461, 16
  %v1256 = vpop.permute.xlu0 %1255
  %1257 = vrot.lane.b32.xlu0 %v462, 16
  %v1258 = vpop.permute.xlu0 %1257
  %1259 = vrot.lane.b32.xlu0 %v463, 16
  %v1260 = vpop.permute.xlu0 %1259
  %1261 = vrot.lane.b32.xlu0 %v464, 16
  %v1262 = vpop.permute.xlu0 %1261
  %1263 = vrot.lane.b32.xlu0 %v465, 16
  %v1264 = vpop.permute.xlu0 %1263
  %1265 = vrot.lane.b32.xlu0 %v466, 16
  %v1266 = vpop.permute.xlu0 %1265
  %1267 = vrot.lane.b32.xlu0 %v467, 16
  %v1268 = vpop.permute.xlu0 %1267
  %1269 = vrot.lane.b32.xlu0 %v468, 16
  %v1270 = vpop.permute.xlu0 %1269
  %1271 = vrot.lane.b32.xlu0 %v469, 16
  %v1272 = vpop.permute.xlu0 %1271
  %1273 = vrot.lane.b32.xlu0 %v470, 16
  %v1274 = vpop.permute.xlu0 %1273
  %1275 = vrot.lane.b32.xlu0 %v471, 16
  %v1276 = vpop.permute.xlu0 %1275
  %1277 = vrot.lane.b32.xlu0 %v472, 16
  %v1278 = vpop.permute.xlu0 %1277
  %1279 = vrot.lane.b32.xlu0 %v473, 16
  %v1280 = vpop.permute.xlu0 %1279
  %1281 = vrot.lane.b32.xlu0 %v474, 16
  %v1282 = vpop.permute.xlu0 %1281
  %1283 = vrot.lane.b32.xlu0 %v475, 16
  %v1284 = vpop.permute.xlu0 %1283
  %1285 = vrot.lane.b32.xlu0 %v476, 16
  %v1286 = vpop.permute.xlu0 %1285
  %1287 = vrot.lane.b32.xlu0 %v477, 16
  %v1288 = vpop.permute.xlu0 %1287
  %1289 = vrot.lane.b32.xlu0 %v478, 16
  %v1290 = vpop.permute.xlu0 %1289
  %1291 = vrot.lane.b32.xlu0 %v479, 16
  %v1292 = vpop.permute.xlu0 %1291
  %1293 = vrot.lane.b32.xlu0 %v480, 16
  %v1294 = vpop.permute.xlu0 %1293
  %1295 = vrot.lane.b32.xlu0 %v481, 16
  %v1296 = vpop.permute.xlu0 %1295
  %1297 = vrot.lane.b32.xlu0 %v482, 16
  %v1298 = vpop.permute.xlu0 %1297
  %1299 = vrot.lane.b32.xlu0 %v483, 16
  %v1300 = vpop.permute.xlu0 %1299
  %1301 = vrot.lane.b32.xlu0 %v484, 16
  %v1302 = vpop.permute.xlu0 %1301
  %1303 = vrot.lane.b32.xlu0 %v485, 16
  %v1304 = vpop.permute.xlu0 %1303
  %1305 = vrot.lane.b32.xlu0 %v486, 16
  %v1306 = vpop.permute.xlu0 %1305
  %1307 = vrot.lane.b32.xlu0 %v487, 16
  %v1308 = vpop.permute.xlu0 %1307
  %1309 = vrot.lane.b32.xlu0 %v488, 16
  %v1310 = vpop.permute.xlu0 %1309
  %1311 = vrot.lane.b32.xlu0 %v489, 16
  %v1312 = vpop.permute.xlu0 %1311
  %1313 = vrot.lane.b32.xlu0 %v490, 16
  %v1314 = vpop.permute.xlu0 %1313
  %1315 = vrot.lane.b32.xlu0 %v491, 16
  %v1316 = vpop.permute.xlu0 %1315
  %1317 = vrot.lane.b32.xlu0 %v492, 16
  %v1318 = vpop.permute.xlu0 %1317
  %1319 = vrot.lane.b32.xlu0 %v493, 16
  %v1320 = vpop.permute.xlu0 %1319
  %1321 = vrot.lane.b32.xlu0 %v494, 16
  %v1322 = vpop.permute.xlu0 %1321
  %1323 = vrot.lane.b32.xlu0 %v495, 16
  %v1324 = vpop.permute.xlu0 %1323
  %1325 = vrot.lane.b32.xlu0 %v496, 16
  %v1326 = vpop.permute.xlu0 %1325
  %1327 = vrot.lane.b32.xlu0 %v497, 16
  %v1328 = vpop.permute.xlu0 %1327
  %1329 = vrot.lane.b32.xlu0 %v498, 16
  %v1330 = vpop.permute.xlu0 %1329
  %1331 = vrot.lane.b32.xlu0 %v499, 16
  %v1332 = vpop.permute.xlu0 %1331
  %1461 = vrot.lane.b32.xlu0 %v500, 24
  %v1462 = vpop.permute.xlu0 %1461
  %1463 = vrot.lane.b32.xlu0 %v501, 24
  %v1464 = vpop.permute.xlu0 %1463
  %1465 = vrot.lane.b32.xlu0 %v502, 24
  %v1466 = vpop.permute.xlu0 %1465
  %1467 = vrot.lane.b32.xlu0 %v503, 24
  %v1468 = vpop.permute.xlu0 %1467
  %1469 = vrot.lane.b32.xlu0 %v504, 24
  %v1470 = vpop.permute.xlu0 %1469
  %1471 = vrot.lane.b32.xlu0 %v505, 24
  %v1472 = vpop.permute.xlu0 %1471
  %1473 = vrot.lane.b32.xlu0 %v506, 24
  %v1474 = vpop.permute.xlu0 %1473
  %1475 = vrot.lane.b32.xlu0 %v507, 24
  %v1476 = vpop.permute.xlu0 %1475
  %1477 = vrot.lane.b32.xlu0 %v508, 24
  %v1478 = vpop.permute.xlu0 %1477
  %1479 = vrot.lane.b32.xlu0 %v509, 24
  %v1480 = vpop.permute.xlu0 %1479
  %1481 = vrot.lane.b32.xlu0 %v510, 24
  %v1482 = vpop.permute.xlu0 %1481
  %1483 = vrot.lane.b32.xlu0 %v511, 24
  %v1484 = vpop.permute.xlu0 %1483
  %1485 = vrot.lane.b32.xlu0 %v512, 24
  %v1486 = vpop.permute.xlu0 %1485
  %1487 = vrot.lane.b32.xlu0 %v513, 24
  %v1488 = vpop.permute.xlu0 %1487
  %1489 = vrot.lane.b32.xlu0 %v514, 24
  %v1490 = vpop.permute.xlu0 %1489
  %1491 = vrot.lane.b32.xlu0 %v515, 24
  %v1492 = vpop.permute.xlu0 %1491
  %1493 = vrot.lane.b32.xlu0 %v516, 24
  %v1494 = vpop.permute.xlu0 %1493
  %1495 = vrot.lane.b32.xlu0 %v517, 24
  %v1496 = vpop.permute.xlu0 %1495
  %1497 = vrot.lane.b32.xlu0 %v518, 24
  %v1498 = vpop.permute.xlu0 %1497
  %1499 = vrot.lane.b32.xlu0 %v519, 24
  %v1500 = vpop.permute.xlu0 %1499
  %1501 = vrot.lane.b32.xlu0 %v520, 24
  %v1502 = vpop.permute.xlu0 %1501
  %1503 = vrot.lane.b32.xlu0 %v521, 24
  %v1504 = vpop.permute.xlu0 %1503
  %1505 = vrot.lane.b32.xlu0 %v522, 24
  %v1506 = vpop.permute.xlu0 %1505
  %1507 = vrot.lane.b32.xlu0 %v523, 24
  %v1508 = vpop.permute.xlu0 %1507
  %1509 = vrot.lane.b32.xlu0 %v524, 24
  %v1510 = vpop.permute.xlu0 %1509
  %1511 = vrot.lane.b32.xlu0 %v525, 24
  %v1512 = vpop.permute.xlu0 %1511
  %1513 = vrot.lane.b32.xlu0 %v526, 24
  %v1514 = vpop.permute.xlu0 %1513
  %1515 = vrot.lane.b32.xlu0 %v527, 24
  %v1516 = vpop.permute.xlu0 %1515
  %1517 = vrot.lane.b32.xlu0 %v528, 24
  %v1518 = vpop.permute.xlu0 %1517
  %1519 = vrot.lane.b32.xlu0 %v529, 24
  %v1520 = vpop.permute.xlu0 %1519
  %1521 = vrot.lane.b32.xlu0 %v530, 24
  %v1522 = vpop.permute.xlu0 %1521
  %1523 = vrot.lane.b32.xlu0 %v531, 24
  %v1524 = vpop.permute.xlu0 %1523
  %1525 = vrot.lane.b32.xlu0 %v532, 24
  %v1526 = vpop.permute.xlu0 %1525
  %1527 = vrot.lane.b32.xlu0 %v533, 24
  %v1528 = vpop.permute.xlu0 %1527
  %1529 = vrot.lane.b32.xlu0 %v534, 24
  %v1530 = vpop.permute.xlu0 %1529
  %1531 = vrot.lane.b32.xlu0 %v535, 24
  %v1532 = vpop.permute.xlu0 %1531
  %1533 = vrot.lane.b32.xlu0 %v536, 24
  %v1534 = vpop.permute.xlu0 %1533
  %1535 = vrot.lane.b32.xlu0 %v537, 24
  %v1536 = vpop.permute.xlu0 %1535
  %1537 = vrot.lane.b32.xlu0 %v538, 24
  %v1538 = vpop.permute.xlu0 %1537
  %1539 = vrot.lane.b32.xlu0 %v539, 24
  %v1540 = vpop.permute.xlu0 %1539
  %1541 = vrot.lane.b32.xlu0 %v540, 24
  %v1542 = vpop.permute.xlu0 %1541
  %1543 = vrot.lane.b32.xlu0 %v541, 24
  %v1544 = vpop.permute.xlu0 %1543
  %1545 = vrot.lane.b32.xlu0 %v542, 24
  %v1546 = vpop.permute.xlu0 %1545
  %1547 = vrot.lane.b32.xlu0 %v543, 24
  %v1548 = vpop.permute.xlu0 %1547
  %1549 = vrot.lane.b32.xlu0 %v544, 24
  %v1550 = vpop.permute.xlu0 %1549
  %1551 = vrot.lane.b32.xlu0 %v545, 24
  %v1552 = vpop.permute.xlu0 %1551
  %1553 = vrot.lane.b32.xlu0 %v546, 24
  %v1554 = vpop.permute.xlu0 %1553
  %1555 = vrot.lane.b32.xlu0 %v547, 24
  %v1556 = vpop.permute.xlu0 %1555
  %1557 = vrot.lane.b32.xlu0 %v548, 24
  %v1558 = vpop.permute.xlu0 %1557
  %1559 = vrot.lane.b32.xlu0 %v549, 24
  %v1560 = vpop.permute.xlu0 %1559
  %1561 = vrot.lane.b32.xlu0 %v550, 24
  %v1562 = vpop.permute.xlu0 %1561
  %1563 = vrot.lane.b32.xlu0 %v551, 24
  %v1564 = vpop.permute.xlu0 %1563
  %1565 = vrot.lane.b32.xlu0 %v552, 24
  %v1566 = vpop.permute.xlu0 %1565
  %1567 = vrot.lane.b32.xlu0 %v553, 24
  %v1568 = vpop.permute.xlu0 %1567
  %1569 = vrot.lane.b32.xlu0 %v554, 24
  %v1570 = vpop.permute.xlu0 %1569
  %1571 = vrot.lane.b32.xlu0 %v555, 24
  %v1572 = vpop.permute.xlu0 %1571
  %1573 = vrot.lane.b32.xlu0 %v556, 24
  %v1574 = vpop.permute.xlu0 %1573
  %1575 = vrot.lane.b32.xlu0 %v557, 24
  %v1576 = vpop.permute.xlu0 %1575
  %1577 = vrot.lane.b32.xlu0 %v558, 24
  %v1578 = vpop.permute.xlu0 %1577
  %1579 = vrot.lane.b32.xlu0 %v559, 24
  %v1580 = vpop.permute.xlu0 %1579
  %1581 = vrot.lane.b32.xlu0 %v560, 24
  %v1582 = vpop.permute.xlu0 %1581
  %1583 = vrot.lane.b32.xlu0 %v561, 24
  %v1584 = vpop.permute.xlu0 %1583
  %1585 = vrot.lane.b32.xlu0 %v562, 24
  %v1586 = vpop.permute.xlu0 %1585
  %1587 = vrot.lane.b32.xlu0 %v563, 24
  %v1588 = vpop.permute.xlu0 %1587
  %1717 = vrot.lane.b32.xlu0 %v564, 32
  %v1718 = vpop.permute.xlu0 %1717
  %1719 = vrot.lane.b32.xlu0 %v565, 32
  %v1720 = vpop.permute.xlu0 %1719
  %1721 = vrot.lane.b32.xlu0 %v566, 32
  %v1722 = vpop.permute.xlu0 %1721
  %1723 = vrot.lane.b32.xlu0 %v567, 32
  %v1724 = vpop.permute.xlu0 %1723
  %1725 = vrot.lane.b32.xlu0 %v568, 32
  %v1726 = vpop.permute.xlu0 %1725
  %1727 = vrot.lane.b32.xlu0 %v569, 32
  %v1728 = vpop.permute.xlu0 %1727
  %1729 = vrot.lane.b32.xlu0 %v570, 32
  %v1730 = vpop.permute.xlu0 %1729
  %1731 = vrot.lane.b32.xlu0 %v571, 32
  %v1732 = vpop.permute.xlu0 %1731
  %1733 = vrot.lane.b32.xlu0 %v572, 32
  %v1734 = vpop.permute.xlu0 %1733
  %1735 = vrot.lane.b32.xlu0 %v573, 32
  %v1736 = vpop.permute.xlu0 %1735
  %1737 = vrot.lane.b32.xlu0 %v574, 32
  %v1738 = vpop.permute.xlu0 %1737
  %1739 = vrot.lane.b32.xlu0 %v575, 32
  %v1740 = vpop.permute.xlu0 %1739
  %1741 = vrot.lane.b32.xlu0 %v576, 32
  %v1742 = vpop.permute.xlu0 %1741
  %1743 = vrot.lane.b32.xlu0 %v577, 32
  %v1744 = vpop.permute.xlu0 %1743
  %1745 = vrot.lane.b32.xlu0 %v578, 32
  %v1746 = vpop.permute.xlu0 %1745
  %1747 = vrot.lane.b32.xlu0 %v579, 32
  %v1748 = vpop.permute.xlu0 %1747
  %1749 = vrot.lane.b32.xlu0 %v580, 32
  %v1750 = vpop.permute.xlu0 %1749
  %1751 = vrot.lane.b32.xlu0 %v581, 32
  %v1752 = vpop.permute.xlu0 %1751
  %1753 = vrot.lane.b32.xlu0 %v582, 32
  %v1754 = vpop.permute.xlu0 %1753
  %1755 = vrot.lane.b32.xlu0 %v583, 32
  %v1756 = vpop.permute.xlu0 %1755
  %1757 = vrot.lane.b32.xlu0 %v584, 32
  %v1758 = vpop.permute.xlu0 %1757
  %1759 = vrot.lane.b32.xlu0 %v585, 32
  %v1760 = vpop.permute.xlu0 %1759
  %1761 = vrot.lane.b32.xlu0 %v586, 32
  %v1762 = vpop.permute.xlu0 %1761
  %1763 = vrot.lane.b32.xlu0 %v587, 32
  %v1764 = vpop.permute.xlu0 %1763
  %1765 = vrot.lane.b32.xlu0 %v588, 32
  %v1766 = vpop.permute.xlu0 %1765
  %1767 = vrot.lane.b32.xlu0 %v589, 32
  %v1768 = vpop.permute.xlu0 %1767
  %1769 = vrot.lane.b32.xlu0 %v590, 32
  %v1770 = vpop.permute.xlu0 %1769
  %1771 = vrot.lane.b32.xlu0 %v591, 32
  %v1772 = vpop.permute.xlu0 %1771
  %1773 = vrot.lane.b32.xlu0 %v592, 32
  %v1774 = vpop.permute.xlu0 %1773
  %1775 = vrot.lane.b32.xlu0 %v593, 32
  %v1776 = vpop.permute.xlu0 %1775
  %1777 = vrot.lane.b32.xlu0 %v594, 32
  %v1778 = vpop.permute.xlu0 %1777
  %1779 = vrot.lane.b32.xlu0 %v595, 32
  %v1780 = vpop.permute.xlu0 %1779
  %1781 = vrot.lane.b32.xlu0 %v596, 32
  %v1782 = vpop.permute.xlu0 %1781
  %1783 = vrot.lane.b32.xlu0 %v597, 32
  %v1784 = vpop.permute.xlu0 %1783
  %1785 = vrot.lane.b32.xlu0 %v598, 32
  %v1786 = vpop.permute.xlu0 %1785
  %1787 = vrot.lane.b32.xlu0 %v599, 32
  %v1788 = vpop.permute.xlu0 %1787
  %1789 = vrot.lane.b32.xlu0 %v600, 32
  %v1790 = vpop.permute.xlu0 %1789
  %1791 = vrot.lane.b32.xlu0 %v601, 32
  %v1792 = vpop.permute.xlu0 %1791
  %1793 = vrot.lane.b32.xlu0 %v602, 32
  %v1794 = vpop.permute.xlu0 %1793
  %1795 = vrot.lane.b32.xlu0 %v603, 32
  %v1796 = vpop.permute.xlu0 %1795
  %1797 = vrot.lane.b32.xlu0 %v604, 32
  %v1798 = vpop.permute.xlu0 %1797
  %1799 = vrot.lane.b32.xlu0 %v605, 32
  %v1800 = vpop.permute.xlu0 %1799
  %1801 = vrot.lane.b32.xlu0 %v606, 32
  %v1802 = vpop.permute.xlu0 %1801
  %1803 = vrot.lane.b32.xlu0 %v607, 32
  %v1804 = vpop.permute.xlu0 %1803
  %1805 = vrot.lane.b32.xlu0 %v608, 32
  %v1806 = vpop.permute.xlu0 %1805
  %1807 = vrot.lane.b32.xlu0 %v609, 32
  %v1808 = vpop.permute.xlu0 %1807
  %1809 = vrot.lane.b32.xlu0 %v610, 32
  %v1810 = vpop.permute.xlu0 %1809
  %1811 = vrot.lane.b32.xlu0 %v611, 32
  %v1812 = vpop.permute.xlu0 %1811
  %1813 = vrot.lane.b32.xlu0 %v612, 32
  %v1814 = vpop.permute.xlu0 %1813
  %1815 = vrot.lane.b32.xlu0 %v613, 32
  %v1816 = vpop.permute.xlu0 %1815
  %1817 = vrot.lane.b32.xlu0 %v614, 32
  %v1818 = vpop.permute.xlu0 %1817
  %1819 = vrot.lane.b32.xlu0 %v615, 32
  %v1820 = vpop.permute.xlu0 %1819
  %1821 = vrot.lane.b32.xlu0 %v616, 32
  %v1822 = vpop.permute.xlu0 %1821
  %1823 = vrot.lane.b32.xlu0 %v617, 32
  %v1824 = vpop.permute.xlu0 %1823
  %1825 = vrot.lane.b32.xlu0 %v618, 32
  %v1826 = vpop.permute.xlu0 %1825
  %1827 = vrot.lane.b32.xlu0 %v619, 32
  %v1828 = vpop.permute.xlu0 %1827
  %1829 = vrot.lane.b32.xlu0 %v620, 32
  %v1830 = vpop.permute.xlu0 %1829
  %1831 = vrot.lane.b32.xlu0 %v621, 32
  %v1832 = vpop.permute.xlu0 %1831
  %1833 = vrot.lane.b32.xlu0 %v622, 32
  %v1834 = vpop.permute.xlu0 %1833
  %1835 = vrot.lane.b32.xlu0 %v623, 32
  %v1836 = vpop.permute.xlu0 %1835
  %1837 = vrot.lane.b32.xlu0 %v624, 32
  %v1838 = vpop.permute.xlu0 %1837
  %1839 = vrot.lane.b32.xlu0 %v625, 32
  %v1840 = vpop.permute.xlu0 %1839
  %1841 = vrot.lane.b32.xlu0 %v626, 32
  %v1842 = vpop.permute.xlu0 %1841
  %1843 = vrot.lane.b32.xlu0 %v627, 32
  %v1844 = vpop.permute.xlu0 %1843
  %1973 = vrot.lane.b32.xlu0 %v628, 40
  %v1974 = vpop.permute.xlu0 %1973
  %1975 = vrot.lane.b32.xlu0 %v629, 40
  %v1976 = vpop.permute.xlu0 %1975
  %1977 = vrot.lane.b32.xlu0 %v630, 40
  %v1978 = vpop.permute.xlu0 %1977
  %1979 = vrot.lane.b32.xlu0 %v631, 40
  %v1980 = vpop.permute.xlu0 %1979
  %1981 = vrot.lane.b32.xlu0 %v632, 40
  %v1982 = vpop.permute.xlu0 %1981
  %1983 = vrot.lane.b32.xlu0 %v633, 40
  %v1984 = vpop.permute.xlu0 %1983
  %1985 = vrot.lane.b32.xlu0 %v634, 40
  %v1986 = vpop.permute.xlu0 %1985
  %1987 = vrot.lane.b32.xlu0 %v635, 40
  %v1988 = vpop.permute.xlu0 %1987
  %1989 = vrot.lane.b32.xlu0 %v636, 40
  %v1990 = vpop.permute.xlu0 %1989
  %1991 = vrot.lane.b32.xlu0 %v637, 40
  %v1992 = vpop.permute.xlu0 %1991
  %1993 = vrot.lane.b32.xlu0 %v638, 40
  %v1994 = vpop.permute.xlu0 %1993
  %1995 = vrot.lane.b32.xlu0 %v639, 40
  %v1996 = vpop.permute.xlu0 %1995
  %1997 = vrot.lane.b32.xlu0 %v640, 40
  %v1998 = vpop.permute.xlu0 %1997
  %1999 = vrot.lane.b32.xlu0 %v641, 40
  %v2000 = vpop.permute.xlu0 %1999
  %2001 = vrot.lane.b32.xlu0 %v642, 40
  %v2002 = vpop.permute.xlu0 %2001
  %2003 = vrot.lane.b32.xlu0 %v643, 40
  %v2004 = vpop.permute.xlu0 %2003
  %2005 = vrot.lane.b32.xlu0 %v644, 40
  %v2006 = vpop.permute.xlu0 %2005
  %2007 = vrot.lane.b32.xlu0 %v645, 40
  %v2008 = vpop.permute.xlu0 %2007
  %2009 = vrot.lane.b32.xlu0 %v646, 40
  %v2010 = vpop.permute.xlu0 %2009
  %2011 = vrot.lane.b32.xlu0 %v647, 40
  %v2012 = vpop.permute.xlu0 %2011
  %2013 = vrot.lane.b32.xlu0 %v648, 40
  %v2014 = vpop.permute.xlu0 %2013
  %2015 = vrot.lane.b32.xlu0 %v649, 40
  %v2016 = vpop.permute.xlu0 %2015
  %2017 = vrot.lane.b32.xlu0 %v650, 40
  %v2018 = vpop.permute.xlu0 %2017
  %2019 = vrot.lane.b32.xlu0 %v651, 40
  %v2020 = vpop.permute.xlu0 %2019
  %2021 = vrot.lane.b32.xlu0 %v652, 40
  %v2022 = vpop.permute.xlu0 %2021
  %2023 = vrot.lane.b32.xlu0 %v653, 40
  %v2024 = vpop.permute.xlu0 %2023
  %2025 = vrot.lane.b32.xlu0 %v654, 40
  %v2026 = vpop.permute.xlu0 %2025
  %2027 = vrot.lane.b32.xlu0 %v655, 40
  %v2028 = vpop.permute.xlu0 %2027
  %2029 = vrot.lane.b32.xlu0 %v656, 40
  %v2030 = vpop.permute.xlu0 %2029
  %2031 = vrot.lane.b32.xlu0 %v657, 40
  %v2032 = vpop.permute.xlu0 %2031
  %2033 = vrot.lane.b32.xlu0 %v658, 40
  %v2034 = vpop.permute.xlu0 %2033
  %2035 = vrot.lane.b32.xlu0 %v659, 40
  %v2036 = vpop.permute.xlu0 %2035
  %2037 = vrot.lane.b32.xlu0 %v660, 40
  %v2038 = vpop.permute.xlu0 %2037
  %2039 = vrot.lane.b32.xlu0 %v661, 40
  %v2040 = vpop.permute.xlu0 %2039
  %2041 = vrot.lane.b32.xlu0 %v662, 40
  %v2042 = vpop.permute.xlu0 %2041
  %2043 = vrot.lane.b32.xlu0 %v663, 40
  %v2044 = vpop.permute.xlu0 %2043
  %2045 = vrot.lane.b32.xlu0 %v664, 40
  %v2046 = vpop.permute.xlu0 %2045
  %2047 = vrot.lane.b32.xlu0 %v665, 40
  %v2048 = vpop.permute.xlu0 %2047
  %2049 = vrot.lane.b32.xlu0 %v666, 40
  %v2050 = vpop.permute.xlu0 %2049
  %2051 = vrot.lane.b32.xlu0 %v667, 40
  %v2052 = vpop.permute.xlu0 %2051
  %2053 = vrot.lane.b32.xlu0 %v668, 40
  %v2054 = vpop.permute.xlu0 %2053
  %2055 = vrot.lane.b32.xlu0 %v669, 40
  %v2056 = vpop.permute.xlu0 %2055
  %2057 = vrot.lane.b32.xlu0 %v670, 40
  %v2058 = vpop.permute.xlu0 %2057
  %2059 = vrot.lane.b32.xlu0 %v671, 40
  %v2060 = vpop.permute.xlu0 %2059
  %2061 = vrot.lane.b32.xlu0 %v672, 40
  %v2062 = vpop.permute.xlu0 %2061
  %2063 = vrot.lane.b32.xlu0 %v673, 40
  %v2064 = vpop.permute.xlu0 %2063
  %2065 = vrot.lane.b32.xlu0 %v674, 40
  %v2066 = vpop.permute.xlu0 %2065
  %2067 = vrot.lane.b32.xlu0 %v675, 40
  %v2068 = vpop.permute.xlu0 %2067
  %2069 = vrot.lane.b32.xlu0 %v676, 40
  %v2070 = vpop.permute.xlu0 %2069
  %2071 = vrot.lane.b32.xlu0 %v677, 40
  %v2072 = vpop.permute.xlu0 %2071
  %2073 = vrot.lane.b32.xlu0 %v678, 40
  %v2074 = vpop.permute.xlu0 %2073
  %2075 = vrot.lane.b32.xlu0 %v679, 40
  %v2076 = vpop.permute.xlu0 %2075
  %2077 = vrot.lane.b32.xlu0 %v680, 40
  %v2078 = vpop.permute.xlu0 %2077
  %2079 = vrot.lane.b32.xlu0 %v681, 40
  %v2080 = vpop.permute.xlu0 %2079
  %2081 = vrot.lane.b32.xlu0 %v682, 40
  %v2082 = vpop.permute.xlu0 %2081
  %2083 = vrot.lane.b32.xlu0 %v683, 40
  %v2084 = vpop.permute.xlu0 %2083
  %2085 = vrot.lane.b32.xlu0 %v684, 40
  %v2086 = vpop.permute.xlu0 %2085
  %2087 = vrot.lane.b32.xlu0 %v685, 40
  %v2088 = vpop.permute.xlu0 %2087
  %2089 = vrot.lane.b32.xlu0 %v686, 40
  %v2090 = vpop.permute.xlu0 %2089
  %2091 = vrot.lane.b32.xlu0 %v687, 40
  %v2092 = vpop.permute.xlu0 %2091
  %2093 = vrot.lane.b32.xlu0 %v688, 40
  %v2094 = vpop.permute.xlu0 %2093
  %2095 = vrot.lane.b32.xlu0 %v689, 40
  %v2096 = vpop.permute.xlu0 %2095
  %2097 = vrot.lane.b32.xlu0 %v690, 40
  %v2098 = vpop.permute.xlu0 %2097
  %2099 = vrot.lane.b32.xlu0 %v691, 40
  %v2100 = vpop.permute.xlu0 %2099
  %2229 = vrot.lane.b32.xlu0 %v693, 48
  %v2230 = vpop.permute.xlu0 %2229
  %2231 = vrot.lane.b32.xlu0 %v694, 48
  %v2232 = vpop.permute.xlu0 %2231
  %2233 = vrot.lane.b32.xlu0 %v695, 48
  %v2234 = vpop.permute.xlu0 %2233
  %2235 = vrot.lane.b32.xlu0 %v696, 48
  %v2236 = vpop.permute.xlu0 %2235
  %2237 = vrot.lane.b32.xlu0 %v697, 48
  %v2238 = vpop.permute.xlu0 %2237
  %2239 = vrot.lane.b32.xlu0 %v698, 48
  %v2240 = vpop.permute.xlu0 %2239
  %2241 = vrot.lane.b32.xlu0 %v699, 48
  %v2242 = vpop.permute.xlu0 %2241
  %2243 = vrot.lane.b32.xlu0 %v700, 48
  %v2244 = vpop.permute.xlu0 %2243
  %2245 = vrot.lane.b32.xlu0 %v701, 48
  %v2246 = vpop.permute.xlu0 %2245
  %2247 = vrot.lane.b32.xlu0 %v702, 48
  %v2248 = vpop.permute.xlu0 %2247
  %2249 = vrot.lane.b32.xlu0 %v703, 48
  %v2250 = vpop.permute.xlu0 %2249
  %2251 = vrot.lane.b32.xlu0 %v704, 48
  %v2252 = vpop.permute.xlu0 %2251
  %2253 = vrot.lane.b32.xlu0 %v705, 48
  %v2254 = vpop.permute.xlu0 %2253
  %2255 = vrot.lane.b32.xlu0 %v706, 48
  %v2256 = vpop.permute.xlu0 %2255
  %2257 = vrot.lane.b32.xlu0 %v707, 48
  %v2258 = vpop.permute.xlu0 %2257
  %2259 = vrot.lane.b32.xlu0 %v708, 48
  %v2260 = vpop.permute.xlu0 %2259
  %2261 = vrot.lane.b32.xlu0 %v709, 48
  %v2262 = vpop.permute.xlu0 %2261
  %2263 = vrot.lane.b32.xlu0 %v710, 48
  %v2264 = vpop.permute.xlu0 %2263
  %2265 = vrot.lane.b32.xlu0 %v711, 48
  %v2266 = vpop.permute.xlu0 %2265
  %2267 = vrot.lane.b32.xlu0 %v712, 48
  %v2268 = vpop.permute.xlu0 %2267
  %2269 = vrot.lane.b32.xlu0 %v713, 48
  %v2270 = vpop.permute.xlu0 %2269
  %2271 = vrot.lane.b32.xlu0 %v714, 48
  %v2272 = vpop.permute.xlu0 %2271
  %2273 = vrot.lane.b32.xlu0 %v715, 48
  %v2274 = vpop.permute.xlu0 %2273
  %2275 = vrot.lane.b32.xlu0 %v716, 48
  %v2276 = vpop.permute.xlu0 %2275
  %2277 = vrot.lane.b32.xlu0 %v717, 48
  %v2278 = vpop.permute.xlu0 %2277
  %2279 = vrot.lane.b32.xlu0 %v718, 48
  %v2280 = vpop.permute.xlu0 %2279
  %2281 = vrot.lane.b32.xlu0 %v719, 48
  %v2282 = vpop.permute.xlu0 %2281
  %2283 = vrot.lane.b32.xlu0 %v720, 48
  %v2284 = vpop.permute.xlu0 %2283
  %2285 = vrot.lane.b32.xlu0 %v721, 48
  %v2286 = vpop.permute.xlu0 %2285
  %2287 = vrot.lane.b32.xlu0 %v722, 48
  %v2288 = vpop.permute.xlu0 %2287
  %2289 = vrot.lane.b32.xlu0 %v723, 48
  %v2290 = vpop.permute.xlu0 %2289
  %2291 = vrot.lane.b32.xlu0 %v724, 48
  %v2292 = vpop.permute.xlu0 %2291
  %2293 = vrot.lane.b32.xlu0 %v725, 48
  %v2294 = vpop.permute.xlu0 %2293
  %2295 = vrot.lane.b32.xlu0 %v726, 48
  %v2296 = vpop.permute.xlu0 %2295
  %2297 = vrot.lane.b32.xlu0 %v727, 48
  %v2298 = vpop.permute.xlu0 %2297
  %2299 = vrot.lane.b32.xlu0 %v728, 48
  %v2300 = vpop.permute.xlu0 %2299
  %2301 = vrot.lane.b32.xlu0 %v729, 48
  %v2302 = vpop.permute.xlu0 %2301
  %2303 = vrot.lane.b32.xlu0 %v730, 48
  %v2304 = vpop.permute.xlu0 %2303
  %2305 = vrot.lane.b32.xlu0 %v731, 48
  %v2306 = vpop.permute.xlu0 %2305
  %2307 = vrot.lane.b32.xlu0 %v732, 48
  %v2308 = vpop.permute.xlu0 %2307
  %2309 = vrot.lane.b32.xlu0 %v733, 48
  %v2310 = vpop.permute.xlu0 %2309
  %2311 = vrot.lane.b32.xlu0 %v734, 48
  %v2312 = vpop.permute.xlu0 %2311
  %2313 = vrot.lane.b32.xlu0 %v735, 48
  %v2314 = vpop.permute.xlu0 %2313
  %2315 = vrot.lane.b32.xlu0 %v736, 48
  %v2316 = vpop.permute.xlu0 %2315
  %2317 = vrot.lane.b32.xlu0 %v737, 48
  %v2318 = vpop.permute.xlu0 %2317
  %2319 = vrot.lane.b32.xlu0 %v738, 48
  %v2320 = vpop.permute.xlu0 %2319
  %2321 = vrot.lane.b32.xlu0 %v739, 48
  %v2322 = vpop.permute.xlu0 %2321
  %2323 = vrot.lane.b32.xlu0 %v740, 48
  %v2324 = vpop.permute.xlu0 %2323
  %2325 = vrot.lane.b32.xlu0 %v741, 48
  %v2326 = vpop.permute.xlu0 %2325
  %2327 = vrot.lane.b32.xlu0 %v742, 48
  %v2328 = vpop.permute.xlu0 %2327
  %2329 = vrot.lane.b32.xlu0 %v743, 48
  %v2330 = vpop.permute.xlu0 %2329
  %2331 = vrot.lane.b32.xlu0 %v744, 48
  %v2332 = vpop.permute.xlu0 %2331
  %2333 = vrot.lane.b32.xlu0 %v745, 48
  %v2334 = vpop.permute.xlu0 %2333
  %2335 = vrot.lane.b32.xlu0 %v746, 48
  %v2336 = vpop.permute.xlu0 %2335
  %2337 = vrot.lane.b32.xlu0 %v747, 48
  %v2338 = vpop.permute.xlu0 %2337
  %2339 = vrot.lane.b32.xlu0 %v748, 48
  %v2340 = vpop.permute.xlu0 %2339
  %2341 = vrot.lane.b32.xlu0 %v749, 48
  %v2342 = vpop.permute.xlu0 %2341
  %2343 = vrot.lane.b32.xlu0 %v750, 48
  %v2344 = vpop.permute.xlu0 %2343
  %2345 = vrot.lane.b32.xlu0 %v751, 48
  %v2346 = vpop.permute.xlu0 %2345
  %2347 = vrot.lane.b32.xlu0 %v752, 48
  %v2348 = vpop.permute.xlu0 %2347
  %2349 = vrot.lane.b32.xlu0 %v753, 48
  %v2350 = vpop.permute.xlu0 %2349
  %2351 = vrot.lane.b32.xlu0 %v754, 48
  %v2352 = vpop.permute.xlu0 %2351
  %2353 = vrot.lane.b32.xlu0 %v755, 48
  %v2354 = vpop.permute.xlu0 %2353
  %2355 = vrot.lane.b32.xlu0 %v756, 48
  %v2356 = vpop.permute.xlu0 %2355
  %2485 = vrot.lane.b32.xlu0 %v757, 56
  %v2486 = vpop.permute.xlu0 %2485
  %2487 = vrot.lane.b32.xlu0 %v758, 56
  %v2488 = vpop.permute.xlu0 %2487
  %2489 = vrot.lane.b32.xlu0 %v759, 56
  %v2490 = vpop.permute.xlu0 %2489
  %2491 = vrot.lane.b32.xlu0 %v760, 56
  %v2492 = vpop.permute.xlu0 %2491
  %2493 = vrot.lane.b32.xlu0 %v761, 56
  %v2494 = vpop.permute.xlu0 %2493
  %2495 = vrot.lane.b32.xlu0 %v762, 56
  %v2496 = vpop.permute.xlu0 %2495
  %2497 = vrot.lane.b32.xlu0 %v763, 56
  %v2498 = vpop.permute.xlu0 %2497
  %2499 = vrot.lane.b32.xlu0 %v764, 56
  %v2500 = vpop.permute.xlu0 %2499
  %2501 = vrot.lane.b32.xlu0 %v765, 56
  %v2502 = vpop.permute.xlu0 %2501
  %2503 = vrot.lane.b32.xlu0 %v766, 56
  %v2504 = vpop.permute.xlu0 %2503
  %2505 = vrot.lane.b32.xlu0 %v767, 56
  %v2506 = vpop.permute.xlu0 %2505
  %2507 = vrot.lane.b32.xlu0 %v768, 56
  %v2508 = vpop.permute.xlu0 %2507
  %2509 = vrot.lane.b32.xlu0 %v769, 56
  %v2510 = vpop.permute.xlu0 %2509
  %2511 = vrot.lane.b32.xlu0 %v770, 56
  %v2512 = vpop.permute.xlu0 %2511
  %2513 = vrot.lane.b32.xlu0 %v771, 56
  %v2514 = vpop.permute.xlu0 %2513
  %2515 = vrot.lane.b32.xlu0 %v772, 56
  %v2516 = vpop.permute.xlu0 %2515
  %2517 = vrot.lane.b32.xlu0 %v773, 56
  %v2518 = vpop.permute.xlu0 %2517
  %2519 = vrot.lane.b32.xlu0 %v774, 56
  %v2520 = vpop.permute.xlu0 %2519
  %2521 = vrot.lane.b32.xlu0 %v775, 56
  %v2522 = vpop.permute.xlu0 %2521
  %2523 = vrot.lane.b32.xlu0 %v776, 56
  %v2524 = vpop.permute.xlu0 %2523
  %2525 = vrot.lane.b32.xlu0 %v777, 56
  %v2526 = vpop.permute.xlu0 %2525
  %2527 = vrot.lane.b32.xlu0 %v778, 56
  %v2528 = vpop.permute.xlu0 %2527
  %2529 = vrot.lane.b32.xlu0 %v779, 56
  %v2530 = vpop.permute.xlu0 %2529
  %2531 = vrot.lane.b32.xlu0 %v780, 56
  %v2532 = vpop.permute.xlu0 %2531
  %2533 = vrot.lane.b32.xlu0 %v781, 56
  %v2534 = vpop.permute.xlu0 %2533
  %2535 = vrot.lane.b32.xlu0 %v782, 56
  %v2536 = vpop.permute.xlu0 %2535
  %2537 = vrot.lane.b32.xlu0 %v783, 56
  %v2538 = vpop.permute.xlu0 %2537
  %2539 = vrot.lane.b32.xlu0 %v784, 56
  %v2540 = vpop.permute.xlu0 %2539
  %2541 = vrot.lane.b32.xlu0 %v785, 56
  %v2542 = vpop.permute.xlu0 %2541
  %2543 = vrot.lane.b32.xlu0 %v786, 56
  %v2544 = vpop.permute.xlu0 %2543
  %2545 = vrot.lane.b32.xlu0 %v787, 56
  %v2546 = vpop.permute.xlu0 %2545
  %2547 = vrot.lane.b32.xlu0 %v788, 56
  %v2548 = vpop.permute.xlu0 %2547
  %2549 = vrot.lane.b32.xlu0 %v789, 56
  %v2550 = vpop.permute.xlu0 %2549
  %2551 = vrot.lane.b32.xlu0 %v790, 56
  %v2552 = vpop.permute.xlu0 %2551
  %2553 = vrot.lane.b32.xlu0 %v791, 56
  %v2554 = vpop.permute.xlu0 %2553
  %2555 = vrot.lane.b32.xlu0 %v792, 56
  %v2556 = vpop.permute.xlu0 %2555
  %2557 = vrot.lane.b32.xlu0 %v793, 56
  %v2558 = vpop.permute.xlu0 %2557
  %2559 = vrot.lane.b32.xlu0 %v794, 56
  %v2560 = vpop.permute.xlu0 %2559
  %2561 = vrot.lane.b32.xlu0 %v795, 56
  %v2562 = vpop.permute.xlu0 %2561
  %2563 = vrot.lane.b32.xlu0 %v796, 56
  %v2564 = vpop.permute.xlu0 %2563
  %2565 = vrot.lane.b32.xlu0 %v797, 56
  %v2566 = vpop.permute.xlu0 %2565
  %2567 = vrot.lane.b32.xlu0 %v798, 56
  %v2568 = vpop.permute.xlu0 %2567
  %2569 = vrot.lane.b32.xlu0 %v799, 56
  %v2570 = vpop.permute.xlu0 %2569
  %2571 = vrot.lane.b32.xlu0 %v800, 56
  %v2572 = vpop.permute.xlu0 %2571
  %2573 = vrot.lane.b32.xlu0 %v801, 56
  %v2574 = vpop.permute.xlu0 %2573
  %2575 = vrot.lane.b32.xlu0 %v802, 56
  %v2576 = vpop.permute.xlu0 %2575
  %2577 = vrot.lane.b32.xlu0 %v803, 56
  %v2578 = vpop.permute.xlu0 %2577
  %2579 = vrot.lane.b32.xlu0 %v804, 56
  %v2580 = vpop.permute.xlu0 %2579
  %2581 = vrot.lane.b32.xlu0 %v805, 56
  %v2582 = vpop.permute.xlu0 %2581
  %2583 = vrot.lane.b32.xlu0 %v806, 56
  %v2584 = vpop.permute.xlu0 %2583
  %2585 = vrot.lane.b32.xlu0 %v807, 56
  %v2586 = vpop.permute.xlu0 %2585
  %2587 = vrot.lane.b32.xlu0 %v808, 56
  %v2588 = vpop.permute.xlu0 %2587
  %2589 = vrot.lane.b32.xlu0 %v809, 56
  %v2590 = vpop.permute.xlu0 %2589
  %2591 = vrot.lane.b32.xlu0 %v810, 56
  %v2592 = vpop.permute.xlu0 %2591
  %2593 = vrot.lane.b32.xlu0 %v811, 56
  %v2594 = vpop.permute.xlu0 %2593
  %2595 = vrot.lane.b32.xlu0 %v812, 56
  %v2596 = vpop.permute.xlu0 %2595
  %2597 = vrot.lane.b32.xlu0 %v813, 56
  %v2598 = vpop.permute.xlu0 %2597
  %2599 = vrot.lane.b32.xlu0 %v814, 56
  %v2600 = vpop.permute.xlu0 %2599
  %2601 = vrot.lane.b32.xlu0 %v815, 56
  %v2602 = vpop.permute.xlu0 %2601
  %2603 = vrot.lane.b32.xlu0 %v816, 56
  %v2604 = vpop.permute.xlu0 %2603
  %2605 = vrot.lane.b32.xlu0 %v817, 56
  %v2606 = vpop.permute.xlu0 %2605
  %2607 = vrot.lane.b32.xlu0 %v818, 56
  %v2608 = vpop.permute.xlu0 %2607
  %2609 = vrot.lane.b32.xlu0 %v819, 56
  %v2610 = vpop.permute.xlu0 %2609
  %2611 = vrot.lane.b32.xlu0 %v820, 56
  %v2612 = vpop.permute.xlu0 %2611
  %2741 = vrot.lane.b32.xlu0 %v821, 64
  %v2742 = vpop.permute.xlu0 %2741
  %2743 = vrot.lane.b32.xlu0 %v822, 64
  %v2744 = vpop.permute.xlu0 %2743
  %2745 = vrot.lane.b32.xlu0 %v823, 64
  %v2746 = vpop.permute.xlu0 %2745
  %2747 = vrot.lane.b32.xlu0 %v824, 64
  %v2748 = vpop.permute.xlu0 %2747
  %2749 = vrot.lane.b32.xlu0 %v825, 64
  %v2750 = vpop.permute.xlu0 %2749
  %2751 = vrot.lane.b32.xlu0 %v826, 64
  %v2752 = vpop.permute.xlu0 %2751
  %2753 = vrot.lane.b32.xlu0 %v827, 64
  %v2754 = vpop.permute.xlu0 %2753
  %2755 = vrot.lane.b32.xlu0 %v828, 64
  %v2756 = vpop.permute.xlu0 %2755
  %2757 = vrot.lane.b32.xlu0 %v829, 64
  %v2758 = vpop.permute.xlu0 %2757
  %2759 = vrot.lane.b32.xlu0 %v830, 64
  %v2760 = vpop.permute.xlu0 %2759
  %2761 = vrot.lane.b32.xlu0 %v831, 64
  %v2762 = vpop.permute.xlu0 %2761
  %2763 = vrot.lane.b32.xlu0 %v832, 64
  %v2764 = vpop.permute.xlu0 %2763
  %2765 = vrot.lane.b32.xlu0 %v833, 64
  %v2766 = vpop.permute.xlu0 %2765
  %2767 = vrot.lane.b32.xlu0 %v834, 64
  %v2768 = vpop.permute.xlu0 %2767
  %2769 = vrot.lane.b32.xlu0 %v835, 64
  %v2770 = vpop.permute.xlu0 %2769
  %2771 = vrot.lane.b32.xlu0 %v836, 64
  %v2772 = vpop.permute.xlu0 %2771
  %2773 = vrot.lane.b32.xlu0 %v837, 64
  %v2774 = vpop.permute.xlu0 %2773
  %2775 = vrot.lane.b32.xlu0 %v838, 64
  %v2776 = vpop.permute.xlu0 %2775
  %2777 = vrot.lane.b32.xlu0 %v839, 64
  %v2778 = vpop.permute.xlu0 %2777
  %2779 = vrot.lane.b32.xlu0 %v840, 64
  %v2780 = vpop.permute.xlu0 %2779
  %2781 = vrot.lane.b32.xlu0 %v841, 64
  %v2782 = vpop.permute.xlu0 %2781
  %2783 = vrot.lane.b32.xlu0 %v842, 64
  %v2784 = vpop.permute.xlu0 %2783
  %2785 = vrot.lane.b32.xlu0 %v843, 64
  %v2786 = vpop.permute.xlu0 %2785
  %2787 = vrot.lane.b32.xlu0 %v844, 64
  %v2788 = vpop.permute.xlu0 %2787
  %2789 = vrot.lane.b32.xlu0 %v845, 64
  %v2790 = vpop.permute.xlu0 %2789
  %2791 = vrot.lane.b32.xlu0 %v846, 64
  %v2792 = vpop.permute.xlu0 %2791
  %2793 = vrot.lane.b32.xlu0 %v847, 64
  %v2794 = vpop.permute.xlu0 %2793
  %2795 = vrot.lane.b32.xlu0 %v848, 64
  %v2796 = vpop.permute.xlu0 %2795
  %2797 = vrot.lane.b32.xlu0 %v849, 64
  %v2798 = vpop.permute.xlu0 %2797
  %2799 = vrot.lane.b32.xlu0 %v850, 64
  %v2800 = vpop.permute.xlu0 %2799
  %2801 = vrot.lane.b32.xlu0 %v851, 64
  %v2802 = vpop.permute.xlu0 %2801
  %2803 = vrot.lane.b32.xlu0 %v852, 64
  %v2804 = vpop.permute.xlu0 %2803
  %2805 = vrot.lane.b32.xlu0 %v853, 64
  %v2806 = vpop.permute.xlu0 %2805
  %2807 = vrot.lane.b32.xlu0 %v854, 64
  %v2808 = vpop.permute.xlu0 %2807
  %2809 = vrot.lane.b32.xlu0 %v855, 64
  %v2810 = vpop.permute.xlu0 %2809
  %2811 = vrot.lane.b32.xlu0 %v856, 64
  %v2812 = vpop.permute.xlu0 %2811
  %2813 = vrot.lane.b32.xlu0 %v857, 64
  %v2814 = vpop.permute.xlu0 %2813
  %2815 = vrot.lane.b32.xlu0 %v858, 64
  %v2816 = vpop.permute.xlu0 %2815
  %2817 = vrot.lane.b32.xlu0 %v859, 64
  %v2818 = vpop.permute.xlu0 %2817
  %2819 = vrot.lane.b32.xlu0 %v860, 64
  %v2820 = vpop.permute.xlu0 %2819
  %2821 = vrot.lane.b32.xlu0 %v861, 64
  %v2822 = vpop.permute.xlu0 %2821
  %2823 = vrot.lane.b32.xlu0 %v862, 64
  %v2824 = vpop.permute.xlu0 %2823
  %2825 = vrot.lane.b32.xlu0 %v863, 64
  %v2826 = vpop.permute.xlu0 %2825
  %2827 = vrot.lane.b32.xlu0 %v864, 64
  %v2828 = vpop.permute.xlu0 %2827
  %2829 = vrot.lane.b32.xlu0 %v865, 64
  %v2830 = vpop.permute.xlu0 %2829
  %2831 = vrot.lane.b32.xlu0 %v866, 64
  %v2832 = vpop.permute.xlu0 %2831
  %2833 = vrot.lane.b32.xlu0 %v867, 64
  %v2834 = vpop.permute.xlu0 %2833
  %2835 = vrot.lane.b32.xlu0 %v868, 64
  %v2836 = vpop.permute.xlu0 %2835
  %2837 = vrot.lane.b32.xlu0 %v869, 64
  %v2838 = vpop.permute.xlu0 %2837
  %2839 = vrot.lane.b32.xlu0 %v870, 64
  %v2840 = vpop.permute.xlu0 %2839
  %2841 = vrot.lane.b32.xlu0 %v871, 64
  %v2842 = vpop.permute.xlu0 %2841
  %2843 = vrot.lane.b32.xlu0 %v872, 64
  %v2844 = vpop.permute.xlu0 %2843
  %2845 = vrot.lane.b32.xlu0 %v873, 64
  %v2846 = vpop.permute.xlu0 %2845
  %2847 = vrot.lane.b32.xlu0 %v874, 64
  %v2848 = vpop.permute.xlu0 %2847
  %2849 = vrot.lane.b32.xlu0 %v875, 64
  %v2850 = vpop.permute.xlu0 %2849
  %2851 = vrot.lane.b32.xlu0 %v876, 64
  %v2852 = vpop.permute.xlu0 %2851
  %2853 = vrot.lane.b32.xlu0 %v877, 64
  %v2854 = vpop.permute.xlu0 %2853
  %2855 = vrot.lane.b32.xlu0 %v878, 64
  %v2856 = vpop.permute.xlu0 %2855
  %2857 = vrot.lane.b32.xlu0 %v879, 64
  %v2858 = vpop.permute.xlu0 %2857
  %2859 = vrot.lane.b32.xlu0 %v880, 64
  %v2860 = vpop.permute.xlu0 %2859
  %2861 = vrot.lane.b32.xlu0 %v881, 64
  %v2862 = vpop.permute.xlu0 %2861
  %2863 = vrot.lane.b32.xlu0 %v882, 64
  %v2864 = vpop.permute.xlu0 %2863
  %2865 = vrot.lane.b32.xlu0 %v883, 64
  %v2866 = vpop.permute.xlu0 %2865
  %2867 = vrot.lane.b32.xlu0 %v884, 64
  %v2868 = vpop.permute.xlu0 %2867
  %v2933 = vsel %vm32, %v308, %v950
  %v2934 = vsel %vm32, %v309, %v952
  %v2935 = vsel %vm32, %v310, %v954
  %v2936 = vsel %vm32, %v311, %v956
  %v2937 = vsel %vm32, %v312, %v958
  %v2938 = vsel %vm32, %v313, %v960
  %v2939 = vsel %vm32, %v314, %v962
  %v2940 = vsel %vm32, %v315, %v964
  %v2941 = vsel %vm32, %v316, %v966
  %v2942 = vsel %vm32, %v317, %v968
  %v2943 = vsel %vm32, %v318, %v970
  %v2944 = vsel %vm32, %v319, %v972
  %v2945 = vsel %vm32, %v320, %v974
  %v2946 = vsel %vm32, %v321, %v976
  %v2947 = vsel %vm32, %v322, %v978
  %v2948 = vsel %vm32, %v323, %v980
  %v2949 = vsel %vm32, %v324, %v982
  %v2950 = vsel %vm32, %v325, %v984
  %v2951 = vsel %vm32, %v326, %v986
  %v2952 = vsel %vm32, %v327, %v988
  %v2953 = vsel %vm32, %v328, %v990
  %v2954 = vsel %vm32, %v329, %v992
  %v2955 = vsel %vm32, %v330, %v994
  %v2956 = vsel %vm32, %v331, %v996
  %v2957 = vsel %vm32, %v332, %v998
  %v2958 = vsel %vm32, %v333, %v1000
  %v2959 = vsel %vm32, %v334, %v1002
  %v2960 = vsel %vm32, %v335, %v1004
  %v2961 = vsel %vm32, %v336, %v1006
  %v2962 = vsel %vm32, %v337, %v1008
  %v2963 = vsel %vm32, %v338, %v1010
  %v2964 = vsel %vm32, %v339, %v1012
  %v2965 = vsel %vm32, %v340, %v1014
  %v2966 = vsel %vm32, %v341, %v1016
  %v2967 = vsel %vm32, %v342, %v1018
  %v2968 = vsel %vm32, %v343, %v1020
  %v2969 = vsel %vm32, %v344, %v1022
  %v2970 = vsel %vm32, %v345, %v1024
  %v2971 = vsel %vm32, %v346, %v1026
  %v2972 = vsel %vm32, %v347, %v1028
  %v2973 = vsel %vm32, %v348, %v1030
  %v2974 = vsel %vm32, %v349, %v1032
  %v2975 = vsel %vm32, %v350, %v1034
  %v2976 = vsel %vm32, %v351, %v1036
  %v2977 = vsel %vm32, %v352, %v1038
  %v2978 = vsel %vm32, %v353, %v1040
  %v2979 = vsel %vm32, %v354, %v1042
  %v2980 = vsel %vm32, %v355, %v1044
  %v2981 = vsel %vm32, %v356, %v1046
  %v2982 = vsel %vm32, %v357, %v1048
  %v2983 = vsel %vm32, %v358, %v1050
  %v2984 = vsel %vm32, %v359, %v1052
  %v2985 = vsel %vm32, %v360, %v1054
  %v2986 = vsel %vm32, %v361, %v1056
  %v2987 = vsel %vm32, %v362, %v1058
  %v2988 = vsel %vm32, %v363, %v1060
  %v2989 = vsel %vm32, %v364, %v1062
  %v2990 = vsel %vm32, %v365, %v1064
  %v2991 = vsel %vm32, %v366, %v1066
  %v2992 = vsel %vm32, %v367, %v1068
  %v2993 = vsel %vm32, %v368, %v1070
  %v2994 = vsel %vm32, %v369, %v1072
  %v2995 = vsel %vm32, %v370, %v1074
  %v2996 = vsel %vm32, %v371, %v1076
  %vm2997 = vcmask 130048
  %v2998 = vsel %vm2997, %v2933, %v1206
  %v2999 = vsel %vm2997, %v2934, %v1208
  %v3000 = vsel %vm2997, %v2935, %v1210
  %v3001 = vsel %vm2997, %v2936, %v1212
  %v3002 = vsel %vm2997, %v2937, %v1214
  %v3003 = vsel %vm2997, %v2938, %v1216
  %v3004 = vsel %vm2997, %v2939, %v1218
  %v3005 = vsel %vm2997, %v2940, %v1220
  %v3006 = vsel %vm2997, %v2941, %v1222
  %v3007 = vsel %vm2997, %v2942, %v1224
  %v3008 = vsel %vm2997, %v2943, %v1226
  %v3009 = vsel %vm2997, %v2944, %v1228
  %v3010 = vsel %vm2997, %v2945, %v1230
  %v3011 = vsel %vm2997, %v2946, %v1232
  %v3012 = vsel %vm2997, %v2947, %v1234
  %v3013 = vsel %vm2997, %v2948, %v1236
  %v3014 = vsel %vm2997, %v2949, %v1238
  %v3015 = vsel %vm2997, %v2950, %v1240
  %v3016 = vsel %vm2997, %v2951, %v1242
  %v3017 = vsel %vm2997, %v2952, %v1244
  %v3018 = vsel %vm2997, %v2953, %v1246
  %v3019 = vsel %vm2997, %v2954, %v1248
  %v3020 = vsel %vm2997, %v2955, %v1250
  %v3021 = vsel %vm2997, %v2956, %v1252
  %v3022 = vsel %vm2997, %v2957, %v1254
  %v3023 = vsel %vm2997, %v2958, %v1256
  %v3024 = vsel %vm2997, %v2959, %v1258
  %v3025 = vsel %vm2997, %v2960, %v1260
  %v3026 = vsel %vm2997, %v2961, %v1262
  %v3027 = vsel %vm2997, %v2962, %v1264
  %v3028 = vsel %vm2997, %v2963, %v1266
  %v3029 = vsel %vm2997, %v2964, %v1268
  %v3030 = vsel %vm2997, %v2965, %v1270
  %v3031 = vsel %vm2997, %v2966, %v1272
  %v3032 = vsel %vm2997, %v2967, %v1274
  %v3033 = vsel %vm2997, %v2968, %v1276
  %v3034 = vsel %vm2997, %v2969, %v1278
  %v3035 = vsel %vm2997, %v2970, %v1280
  %v3036 = vsel %vm2997, %v2971, %v1282
  %v3037 = vsel %vm2997, %v2972, %v1284
  %v3038 = vsel %vm2997, %v2973, %v1286
  %v3039 = vsel %vm2997, %v2974, %v1288
  %v3040 = vsel %vm2997, %v2975, %v1290
  %v3041 = vsel %vm2997, %v2976, %v1292
  %v3042 = vsel %vm2997, %v2977, %v1294
  %v3043 = vsel %vm2997, %v2978, %v1296
  %v3044 = vsel %vm2997, %v2979, %v1298
  %v3045 = vsel %vm2997, %v2980, %v1300
  %v3046 = vsel %vm2997, %v2981, %v1302
  %v3047 = vsel %vm2997, %v2982, %v1304
  %v3048 = vsel %vm2997, %v2983, %v1306
  %v3049 = vsel %vm2997, %v2984, %v1308
  %v3050 = vsel %vm2997, %v2985, %v1310
  %v3051 = vsel %vm2997, %v2986, %v1312
  %v3052 = vsel %vm2997, %v2987, %v1314
  %v3053 = vsel %vm2997, %v2988, %v1316
  %v3054 = vsel %vm2997, %v2989, %v1318
  %v3055 = vsel %vm2997, %v2990, %v1320
  %v3056 = vsel %vm2997, %v2991, %v1322
  %v3057 = vsel %vm2997, %v2992, %v1324
  %v3058 = vsel %vm2997, %v2993, %v1326
  %v3059 = vsel %vm2997, %v2994, %v1328
  %v3060 = vsel %vm2997, %v2995, %v1330
  %v3061 = vsel %vm2997, %v2996, %v1332
  %vm3062 = vcmask 195584
  %v3063 = vsel %vm3062, %v2998, %v1462
  %v3064 = vsel %vm3062, %v2999, %v1464
  %v3065 = vsel %vm3062, %v3000, %v1466
  %v3066 = vsel %vm3062, %v3001, %v1468
  %v3067 = vsel %vm3062, %v3002, %v1470
  %v3068 = vsel %vm3062, %v3003, %v1472
  %v3069 = vsel %vm3062, %v3004, %v1474
  %v3070 = vsel %vm3062, %v3005, %v1476
  %v3071 = vsel %vm3062, %v3006, %v1478
  %v3072 = vsel %vm3062, %v3007, %v1480
  %v3073 = vsel %vm3062, %v3008, %v1482
  %v3074 = vsel %vm3062, %v3009, %v1484
  %v3075 = vsel %vm3062, %v3010, %v1486
  %v3076 = vsel %vm3062, %v3011, %v1488
  %v3077 = vsel %vm3062, %v3012, %v1490
  %v3078 = vsel %vm3062, %v3013, %v1492
  %v3079 = vsel %vm3062, %v3014, %v1494
  %v3080 = vsel %vm3062, %v3015, %v1496
  %v3081 = vsel %vm3062, %v3016, %v1498
  %v3082 = vsel %vm3062, %v3017, %v1500
  %v3083 = vsel %vm3062, %v3018, %v1502
  %v3084 = vsel %vm3062, %v3019, %v1504
  %v3085 = vsel %vm3062, %v3020, %v1506
  %v3086 = vsel %vm3062, %v3021, %v1508
  %v3087 = vsel %vm3062, %v3022, %v1510
  %v3088 = vsel %vm3062, %v3023, %v1512
  %v3089 = vsel %vm3062, %v3024, %v1514
  %v3090 = vsel %vm3062, %v3025, %v1516
  %v3091 = vsel %vm3062, %v3026, %v1518
  %v3092 = vsel %vm3062, %v3027, %v1520
  %v3093 = vsel %vm3062, %v3028, %v1522
  %v3094 = vsel %vm3062, %v3029, %v1524
  %v3095 = vsel %vm3062, %v3030, %v1526
  %v3096 = vsel %vm3062, %v3031, %v1528
  %v3097 = vsel %vm3062, %v3032, %v1530
  %v3098 = vsel %vm3062, %v3033, %v1532
  %v3099 = vsel %vm3062, %v3034, %v1534
  %v3100 = vsel %vm3062, %v3035, %v1536
  %v3101 = vsel %vm3062, %v3036, %v1538
  %v3102 = vsel %vm3062, %v3037, %v1540
  %v3103 = vsel %vm3062, %v3038, %v1542
  %v3104 = vsel %vm3062, %v3039, %v1544
  %v3105 = vsel %vm3062, %v3040, %v1546
  %v3106 = vsel %vm3062, %v3041, %v1548
  %v3107 = vsel %vm3062, %v3042, %v1550
  %v3108 = vsel %vm3062, %v3043, %v1552
  %v3109 = vsel %vm3062, %v3044, %v1554
  %v3110 = vsel %vm3062, %v3045, %v1556
  %v3111 = vsel %vm3062, %v3046, %v1558
  %v3112 = vsel %vm3062, %v3047, %v1560
  %v3113 = vsel %vm3062, %v3048, %v1562
  %v3114 = vsel %vm3062, %v3049, %v1564
  %v3115 = vsel %vm3062, %v3050, %v1566
  %v3116 = vsel %vm3062, %v3051, %v1568
  %v3117 = vsel %vm3062, %v3052, %v1570
  %v3118 = vsel %vm3062, %v3053, %v1572
  %v3119 = vsel %vm3062, %v3054, %v1574
  %v3120 = vsel %vm3062, %v3055, %v1576
  %v3121 = vsel %vm3062, %v3056, %v1578
  %v3122 = vsel %vm3062, %v3057, %v1580
  %v3123 = vsel %vm3062, %v3058, %v1582
  %v3124 = vsel %vm3062, %v3059, %v1584
  %v3125 = vsel %vm3062, %v3060, %v1586
  %v3126 = vsel %vm3062, %v3061, %v1588
  %vm3127 = vcmask 261120
  %v3128 = vsel %vm3127, %v3063, %v1718
  %v3129 = vsel %vm3127, %v3064, %v1720
  %v3130 = vsel %vm3127, %v3065, %v1722
  %v3131 = vsel %vm3127, %v3066, %v1724
  %v3132 = vsel %vm3127, %v3067, %v1726
  %v3133 = vsel %vm3127, %v3068, %v1728
  %v3134 = vsel %vm3127, %v3069, %v1730
  %v3135 = vsel %vm3127, %v3070, %v1732
  %v3136 = vsel %vm3127, %v3071, %v1734
  %v3137 = vsel %vm3127, %v3072, %v1736
  %v3138 = vsel %vm3127, %v3073, %v1738
  %v3139 = vsel %vm3127, %v3074, %v1740
  %v3140 = vsel %vm3127, %v3075, %v1742
  %v3141 = vsel %vm3127, %v3076, %v1744
  %v3142 = vsel %vm3127, %v3077, %v1746
  %v3143 = vsel %vm3127, %v3078, %v1748
  %v3144 = vsel %vm3127, %v3079, %v1750
  %v3145 = vsel %vm3127, %v3080, %v1752
  %v3146 = vsel %vm3127, %v3081, %v1754
  %v3147 = vsel %vm3127, %v3082, %v1756
  %v3148 = vsel %vm3127, %v3083, %v1758
  %v3149 = vsel %vm3127, %v3084, %v1760
  %v3150 = vsel %vm3127, %v3085, %v1762
  %v3151 = vsel %vm3127, %v3086, %v1764
  %v3152 = vsel %vm3127, %v3087, %v1766
  %v3153 = vsel %vm3127, %v3088, %v1768
  %v3154 = vsel %vm3127, %v3089, %v1770
  %v3155 = vsel %vm3127, %v3090, %v1772
  %v3156 = vsel %vm3127, %v3091, %v1774
  %v3157 = vsel %vm3127, %v3092, %v1776
  %v3158 = vsel %vm3127, %v3093, %v1778
  %v3159 = vsel %vm3127, %v3094, %v1780
  %v3160 = vsel %vm3127, %v3095, %v1782
  %v3161 = vsel %vm3127, %v3096, %v1784
  %v3162 = vsel %vm3127, %v3097, %v1786
  %v3163 = vsel %vm3127, %v3098, %v1788
  %v3164 = vsel %vm3127, %v3099, %v1790
  %v3165 = vsel %vm3127, %v3100, %v1792
  %v3166 = vsel %vm3127, %v3101, %v1794
  %v3167 = vsel %vm3127, %v3102, %v1796
  %v3168 = vsel %vm3127, %v3103, %v1798
  %v3169 = vsel %vm3127, %v3104, %v1800
  %v3170 = vsel %vm3127, %v3105, %v1802
  %v3171 = vsel %vm3127, %v3106, %v1804
  %v3172 = vsel %vm3127, %v3107, %v1806
  %v3173 = vsel %vm3127, %v3108, %v1808
  %v3174 = vsel %vm3127, %v3109, %v1810
  %v3175 = vsel %vm3127, %v3110, %v1812
  %v3176 = vsel %vm3127, %v3111, %v1814
  %v3177 = vsel %vm3127, %v3112, %v1816
  %v3178 = vsel %vm3127, %v3113, %v1818
  %v3179 = vsel %vm3127, %v3114, %v1820
  %v3180 = vsel %vm3127, %v3115, %v1822
  %v3181 = vsel %vm3127, %v3116, %v1824
  %v3182 = vsel %vm3127, %v3117, %v1826
  %v3183 = vsel %vm3127, %v3118, %v1828
  %v3184 = vsel %vm3127, %v3119, %v1830
  %v3185 = vsel %vm3127, %v3120, %v1832
  %v3186 = vsel %vm3127, %v3121, %v1834
  %v3187 = vsel %vm3127, %v3122, %v1836
  %v3188 = vsel %vm3127, %v3123, %v1838
  %v3189 = vsel %vm3127, %v3124, %v1840
  %v3190 = vsel %vm3127, %v3125, %v1842
  %v3191 = vsel %vm3127, %v3126, %v1844
  %vm3192 = vcmask 326656
  %v3193 = vsel %vm3192, %v3128, %v1974
  %v3194 = vsel %vm3192, %v3129, %v1976
  %v3195 = vsel %vm3192, %v3130, %v1978
  %v3196 = vsel %vm3192, %v3131, %v1980
  %v3197 = vsel %vm3192, %v3132, %v1982
  %v3198 = vsel %vm3192, %v3133, %v1984
  %v3199 = vsel %vm3192, %v3134, %v1986
  %v3200 = vsel %vm3192, %v3135, %v1988
  %v3201 = vsel %vm3192, %v3136, %v1990
  %v3202 = vsel %vm3192, %v3137, %v1992
  %v3203 = vsel %vm3192, %v3138, %v1994
  %v3204 = vsel %vm3192, %v3139, %v1996
  %v3205 = vsel %vm3192, %v3140, %v1998
  %v3206 = vsel %vm3192, %v3141, %v2000
  %v3207 = vsel %vm3192, %v3142, %v2002
  %v3208 = vsel %vm3192, %v3143, %v2004
  %v3209 = vsel %vm3192, %v3144, %v2006
  %v3210 = vsel %vm3192, %v3145, %v2008
  %v3211 = vsel %vm3192, %v3146, %v2010
  %v3212 = vsel %vm3192, %v3147, %v2012
  %v3213 = vsel %vm3192, %v3148, %v2014
  %v3214 = vsel %vm3192, %v3149, %v2016
  %v3215 = vsel %vm3192, %v3150, %v2018
  %v3216 = vsel %vm3192, %v3151, %v2020
  %v3217 = vsel %vm3192, %v3152, %v2022
  %v3218 = vsel %vm3192, %v3153, %v2024
  %v3219 = vsel %vm3192, %v3154, %v2026
  %v3220 = vsel %vm3192, %v3155, %v2028
  %v3221 = vsel %vm3192, %v3156, %v2030
  %v3222 = vsel %vm3192, %v3157, %v2032
  %v3223 = vsel %vm3192, %v3158, %v2034
  %v3224 = vsel %vm3192, %v3159, %v2036
  %v3225 = vsel %vm3192, %v3160, %v2038
  %v3226 = vsel %vm3192, %v3161, %v2040
  %v3227 = vsel %vm3192, %v3162, %v2042
  %v3228 = vsel %vm3192, %v3163, %v2044
  %v3229 = vsel %vm3192, %v3164, %v2046
  %v3230 = vsel %vm3192, %v3165, %v2048
  %v3231 = vsel %vm3192, %v3166, %v2050
  %v3232 = vsel %vm3192, %v3167, %v2052
  %v3233 = vsel %vm3192, %v3168, %v2054
  %v3234 = vsel %vm3192, %v3169, %v2056
  %v3235 = vsel %vm3192, %v3170, %v2058
  %v3236 = vsel %vm3192, %v3171, %v2060
  %v3237 = vsel %vm3192, %v3172, %v2062
  %v3238 = vsel %vm3192, %v3173, %v2064
  %v3239 = vsel %vm3192, %v3174, %v2066
  %v3240 = vsel %vm3192, %v3175, %v2068
  %v3241 = vsel %vm3192, %v3176, %v2070
  %v3242 = vsel %vm3192, %v3177, %v2072
  %v3243 = vsel %vm3192, %v3178, %v2074
  %v3244 = vsel %vm3192, %v3179, %v2076
  %v3245 = vsel %vm3192, %v3180, %v2078
  %v3246 = vsel %vm3192, %v3181, %v2080
  %v3247 = vsel %vm3192, %v3182, %v2082
  %v3248 = vsel %vm3192, %v3183, %v2084
  %v3249 = vsel %vm3192, %v3184, %v2086
  %v3250 = vsel %vm3192, %v3185, %v2088
  %v3251 = vsel %vm3192, %v3186, %v2090
  %v3252 = vsel %vm3192, %v3187, %v2092
  %v3253 = vsel %vm3192, %v3188, %v2094
  %v3254 = vsel %vm3192, %v3189, %v2096
  %v3255 = vsel %vm3192, %v3190, %v2098
  %v3256 = vsel %vm3192, %v3191, %v2100
  %vm3257 = vcmask 392192
  %v3258 = vsel %vm3257, %v3193, %v2230
  %v3259 = vsel %vm3257, %v3194, %v2232
  %v3260 = vsel %vm3257, %v3195, %v2234
  %v3261 = vsel %vm3257, %v3196, %v2236
  %v3262 = vsel %vm3257, %v3197, %v2238
  %v3263 = vsel %vm3257, %v3198, %v2240
  %v3264 = vsel %vm3257, %v3199, %v2242
  %v3265 = vsel %vm3257, %v3200, %v2244
  %v3266 = vsel %vm3257, %v3201, %v2246
  %v3267 = vsel %vm3257, %v3202, %v2248
  %v3268 = vsel %vm3257, %v3203, %v2250
  %v3269 = vsel %vm3257, %v3204, %v2252
  %v3270 = vsel %vm3257, %v3205, %v2254
  %v3271 = vsel %vm3257, %v3206, %v2256
  %v3272 = vsel %vm3257, %v3207, %v2258
  %v3273 = vsel %vm3257, %v3208, %v2260
  %v3274 = vsel %vm3257, %v3209, %v2262
  %v3275 = vsel %vm3257, %v3210, %v2264
  %v3276 = vsel %vm3257, %v3211, %v2266
  %v3277 = vsel %vm3257, %v3212, %v2268
  %v3278 = vsel %vm3257, %v3213, %v2270
  %v3279 = vsel %vm3257, %v3214, %v2272
  %v3280 = vsel %vm3257, %v3215, %v2274
  %v3281 = vsel %vm3257, %v3216, %v2276
  %v3282 = vsel %vm3257, %v3217, %v2278
  %v3283 = vsel %vm3257, %v3218, %v2280
  %v3284 = vsel %vm3257, %v3219, %v2282
  %v3285 = vsel %vm3257, %v3220, %v2284
  %v3286 = vsel %vm3257, %v3221, %v2286
  %v3287 = vsel %vm3257, %v3222, %v2288
  %v3288 = vsel %vm3257, %v3223, %v2290
  %v3289 = vsel %vm3257, %v3224, %v2292
  %v3290 = vsel %vm3257, %v3225, %v2294
  %v3291 = vsel %vm3257, %v3226, %v2296
  %v3292 = vsel %vm3257, %v3227, %v2298
  %v3293 = vsel %vm3257, %v3228, %v2300
  %v3294 = vsel %vm3257, %v3229, %v2302
  %v3295 = vsel %vm3257, %v3230, %v2304
  %v3296 = vsel %vm3257, %v3231, %v2306
  %v3297 = vsel %vm3257, %v3232, %v2308
  %v3298 = vsel %vm3257, %v3233, %v2310
  %v3299 = vsel %vm3257, %v3234, %v2312
  %v3300 = vsel %vm3257, %v3235, %v2314
  %v3301 = vsel %vm3257, %v3236, %v2316
  %v3302 = vsel %vm3257, %v3237, %v2318
  %v3303 = vsel %vm3257, %v3238, %v2320
  %v3304 = vsel %vm3257, %v3239, %v2322
  %v3305 = vsel %vm3257, %v3240, %v2324
  %v3306 = vsel %vm3257, %v3241, %v2326
  %v3307 = vsel %vm3257, %v3242, %v2328
  %v3308 = vsel %vm3257, %v3243, %v2330
  %v3309 = vsel %vm3257, %v3244, %v2332
  %v3310 = vsel %vm3257, %v3245, %v2334
  %v3311 = vsel %vm3257, %v3246, %v2336
  %v3312 = vsel %vm3257, %v3247, %v2338
  %v3313 = vsel %vm3257, %v3248, %v2340
  %v3314 = vsel %vm3257, %v3249, %v2342
  %v3315 = vsel %vm3257, %v3250, %v2344
  %v3316 = vsel %vm3257, %v3251, %v2346
  %v3317 = vsel %vm3257, %v3252, %v2348
  %v3318 = vsel %vm3257, %v3253, %v2350
  %v3319 = vsel %vm3257, %v3254, %v2352
  %v3320 = vsel %vm3257, %v3255, %v2354
  %v3321 = vsel %vm3257, %v3256, %v2356
  %vm3322 = vcmask 457728
  %v3323 = vsel %vm3322, %v3258, %v2486
  %v3324 = vsel %vm3322, %v3259, %v2488
  %v3325 = vsel %vm3322, %v3260, %v2490
  %v3326 = vsel %vm3322, %v3261, %v2492
  %v3327 = vsel %vm3322, %v3262, %v2494
  %v3328 = vsel %vm3322, %v3263, %v2496
  %v3329 = vsel %vm3322, %v3264, %v2498
  %v3330 = vsel %vm3322, %v3265, %v2500
  %v3331 = vsel %vm3322, %v3266, %v2502
  %v3332 = vsel %vm3322, %v3267, %v2504
  %v3333 = vsel %vm3322, %v3268, %v2506
  %v3334 = vsel %vm3322, %v3269, %v2508
  %v3335 = vsel %vm3322, %v3270, %v2510
  %v3336 = vsel %vm3322, %v3271, %v2512
  %v3337 = vsel %vm3322, %v3272, %v2514
  %v3338 = vsel %vm3322, %v3273, %v2516
  %v3339 = vsel %vm3322, %v3274, %v2518
  %v3340 = vsel %vm3322, %v3275, %v2520
  %v3341 = vsel %vm3322, %v3276, %v2522
  %v3342 = vsel %vm3322, %v3277, %v2524
  %v3343 = vsel %vm3322, %v3278, %v2526
  %v3344 = vsel %vm3322, %v3279, %v2528
  %v3345 = vsel %vm3322, %v3280, %v2530
  %v3346 = vsel %vm3322, %v3281, %v2532
  %v3347 = vsel %vm3322, %v3282, %v2534
  %v3348 = vsel %vm3322, %v3283, %v2536
  %v3349 = vsel %vm3322, %v3284, %v2538
  %v3350 = vsel %vm3322, %v3285, %v2540
  %v3351 = vsel %vm3322, %v3286, %v2542
  %v3352 = vsel %vm3322, %v3287, %v2544
  %v3353 = vsel %vm3322, %v3288, %v2546
  %v3354 = vsel %vm3322, %v3289, %v2548
  %v3355 = vsel %vm3322, %v3290, %v2550
  %v3356 = vsel %vm3322, %v3291, %v2552
  %v3357 = vsel %vm3322, %v3292, %v2554
  %v3358 = vsel %vm3322, %v3293, %v2556
  %v3359 = vsel %vm3322, %v3294, %v2558
  %v3360 = vsel %vm3322, %v3295, %v2560
  %v3361 = vsel %vm3322, %v3296, %v2562
  %v3362 = vsel %vm3322, %v3297, %v2564
  %v3363 = vsel %vm3322, %v3298, %v2566
  %v3364 = vsel %vm3322, %v3299, %v2568
  %v3365 = vsel %vm3322, %v3300, %v2570
  %v3366 = vsel %vm3322, %v3301, %v2572
  %v3367 = vsel %vm3322, %v3302, %v2574
  %v3368 = vsel %vm3322, %v3303, %v2576
  %v3369 = vsel %vm3322, %v3304, %v2578
  %v3370 = vsel %vm3322, %v3305, %v2580
  %v3371 = vsel %vm3322, %v3306, %v2582
  %v3372 = vsel %vm3322, %v3307, %v2584
  %v3373 = vsel %vm3322, %v3308, %v2586
  %v3374 = vsel %vm3322, %v3309, %v2588
  %v3375 = vsel %vm3322, %v3310, %v2590
  %v3376 = vsel %vm3322, %v3311, %v2592
  %v3377 = vsel %vm3322, %v3312, %v2594
  %v3378 = vsel %vm3322, %v3313, %v2596
  %v3379 = vsel %vm3322, %v3314, %v2598
  %v3380 = vsel %vm3322, %v3315, %v2600
  %v3381 = vsel %vm3322, %v3316, %v2602
  %v3382 = vsel %vm3322, %v3317, %v2604
  %v3383 = vsel %vm3322, %v3318, %v2606
  %v3384 = vsel %vm3322, %v3319, %v2608
  %v3385 = vsel %vm3322, %v3320, %v2610
  %v3386 = vsel %vm3322, %v3321, %v2612
  %vm3387 = vcmask 523264
  %v3388 = vsel %vm3387, %v3323, %v2742
  %v3389 = vsel %vm3387, %v3324, %v2744
  %v3390 = vsel %vm3387, %v3325, %v2746
  %v3391 = vsel %vm3387, %v3326, %v2748
  %v3392 = vsel %vm3387, %v3327, %v2750
  %v3393 = vsel %vm3387, %v3328, %v2752
  %v3394 = vsel %vm3387, %v3329, %v2754
  %v3395 = vsel %vm3387, %v3330, %v2756
  %v3396 = vsel %vm3387, %v3331, %v2758
  %v3397 = vsel %vm3387, %v3332, %v2760
  %v3398 = vsel %vm3387, %v3333, %v2762
  %v3399 = vsel %vm3387, %v3334, %v2764
  %v3400 = vsel %vm3387, %v3335, %v2766
  %v3401 = vsel %vm3387, %v3336, %v2768
  %v3402 = vsel %vm3387, %v3337, %v2770
  %v3403 = vsel %vm3387, %v3338, %v2772
  %v3404 = vsel %vm3387, %v3339, %v2774
  %v3405 = vsel %vm3387, %v3340, %v2776
  %v3406 = vsel %vm3387, %v3341, %v2778
  %v3407 = vsel %vm3387, %v3342, %v2780
  %v3408 = vsel %vm3387, %v3343, %v2782
  %v3409 = vsel %vm3387, %v3344, %v2784
  %v3410 = vsel %vm3387, %v3345, %v2786
  %v3411 = vsel %vm3387, %v3346, %v2788
  %v3412 = vsel %vm3387, %v3347, %v2790
  %v3413 = vsel %vm3387, %v3348, %v2792
  %v3414 = vsel %vm3387, %v3349, %v2794
  %v3415 = vsel %vm3387, %v3350, %v2796
  %v3416 = vsel %vm3387, %v3351, %v2798
  %v3417 = vsel %vm3387, %v3352, %v2800
  %v3418 = vsel %vm3387, %v3353, %v2802
  %v3419 = vsel %vm3387, %v3354, %v2804
  %v3420 = vsel %vm3387, %v3355, %v2806
  %v3421 = vsel %vm3387, %v3356, %v2808
  %v3422 = vsel %vm3387, %v3357, %v2810
  %v3423 = vsel %vm3387, %v3358, %v2812
  %v3424 = vsel %vm3387, %v3359, %v2814
  %v3425 = vsel %vm3387, %v3360, %v2816
  %v3426 = vsel %vm3387, %v3361, %v2818
  %v3427 = vsel %vm3387, %v3362, %v2820
  %v3428 = vsel %vm3387, %v3363, %v2822
  %v3429 = vsel %vm3387, %v3364, %v2824
  %v3430 = vsel %vm3387, %v3365, %v2826
  %v3431 = vsel %vm3387, %v3366, %v2828
  %v3432 = vsel %vm3387, %v3367, %v2830
  %v3433 = vsel %vm3387, %v3368, %v2832
  %v3434 = vsel %vm3387, %v3369, %v2834
  %v3435 = vsel %vm3387, %v3370, %v2836
  %v3436 = vsel %vm3387, %v3371, %v2838
  %v3437 = vsel %vm3387, %v3372, %v2840
  %v3438 = vsel %vm3387, %v3373, %v2842
  %v3439 = vsel %vm3387, %v3374, %v2844
  %v3440 = vsel %vm3387, %v3375, %v2846
  %v3441 = vsel %vm3387, %v3376, %v2848
  %v3442 = vsel %vm3387, %v3377, %v2850
  %v3443 = vsel %vm3387, %v3378, %v2852
  %v3444 = vsel %vm3387, %v3379, %v2854
  %v3445 = vsel %vm3387, %v3380, %v2856
  %v3446 = vsel %vm3387, %v3381, %v2858
  %v3447 = vsel %vm3387, %v3382, %v2860
  %v3448 = vsel %vm3387, %v3383, %v2862
  %v3449 = vsel %vm3387, %v3384, %v2864
  %v3450 = vsel %vm3387, %v3385, %v2866
  %v3451 = vsel %vm3387, %v3386, %v2868
  %v3452 = vld [vmem:[%s1] sm:$0xff]
  %v3453 = vld [vmem:[%s1 + $0x8] sm:$0xff]
  %v3454 = vld [vmem:[%s1 + $0x10] sm:$0xff]
  %v3455 = vld [vmem:[%s1 + $0x18] sm:$0xff]
  %v3456 = vld [vmem:[%s1 + $0x20] sm:$0xff]
  %v3457 = vld [vmem:[%s1 + $0x28] sm:$0xff]
  %v3458 = vld [vmem:[%s1 + $0x30] sm:$0xff]
  %v3459 = vld [vmem:[%s1 + $0x38] sm:$0xff]
  %v3460 = vld [vmem:[%s1 + $0x40] sm:$0xff]
  %vm3461 = vcmask 588800
  %v3463 = vsel %vm3461, %v3388, 0
  %v3466 = vsel %vm3461, %v3389, 0
  %v3469 = vsel %vm3461, %v3390, 0
  %v3472 = vsel %vm3461, %v3391, 0
  %v3475 = vsel %vm3461, %v3392, 0
  %v3478 = vsel %vm3461, %v3393, 0
  %v3481 = vsel %vm3461, %v3394, 0
  %v3484 = vsel %vm3461, %v3395, 0
  %v3487 = vsel %vm3461, %v3396, 0
  %v3490 = vsel %vm3461, %v3397, 0
  %v3493 = vsel %vm3461, %v3398, 0
  %v3496 = vsel %vm3461, %v3399, 0
  %v3499 = vsel %vm3461, %v3400, 0
  %v3502 = vsel %vm3461, %v3401, 0
  %v3505 = vsel %vm3461, %v3402, 0
  %v3508 = vsel %vm3461, %v3403, 0
  %v3511 = vsel %vm3461, %v3404, 0
  %v3514 = vsel %vm3461, %v3405, 0
  %v3517 = vsel %vm3461, %v3406, 0
  %v3520 = vsel %vm3461, %v3407, 0
  %v3523 = vsel %vm3461, %v3408, 0
  %v3526 = vsel %vm3461, %v3409, 0
  %v3529 = vsel %vm3461, %v3410, 0
  %v3532 = vsel %vm3461, %v3411, 0
  %v3535 = vsel %vm3461, %v3412, 0
  %v3538 = vsel %vm3461, %v3413, 0
  %v3541 = vsel %vm3461, %v3414, 0
  %v3544 = vsel %vm3461, %v3415, 0
  %v3547 = vsel %vm3461, %v3416, 0
  %v3550 = vsel %vm3461, %v3417, 0
  %v3553 = vsel %vm3461, %v3418, 0
  %v3556 = vsel %vm3461, %v3419, 0
  %v3559 = vsel %vm3461, %v3420, 0
  %v3562 = vsel %vm3461, %v3421, 0
  %v3565 = vsel %vm3461, %v3422, 0
  %v3568 = vsel %vm3461, %v3423, 0
  %v3571 = vsel %vm3461, %v3424, 0
  %v3574 = vsel %vm3461, %v3425, 0
  %v3577 = vsel %vm3461, %v3426, 0
  %v3580 = vsel %vm3461, %v3427, 0
  %v3583 = vsel %vm3461, %v3428, 0
  %v3586 = vsel %vm3461, %v3429, 0
  %v3589 = vsel %vm3461, %v3430, 0
  %v3592 = vsel %vm3461, %v3431, 0
  %v3595 = vsel %vm3461, %v3432, 0
  %v3598 = vsel %vm3461, %v3433, 0
  %v3601 = vsel %vm3461, %v3434, 0
  %v3604 = vsel %vm3461, %v3435, 0
  %v3607 = vsel %vm3461, %v3436, 0
  %v3610 = vsel %vm3461, %v3437, 0
  %v3613 = vsel %vm3461, %v3438, 0
  %v3616 = vsel %vm3461, %v3439, 0
  %v3619 = vsel %vm3461, %v3440, 0
  %v3622 = vsel %vm3461, %v3441, 0
  %v3625 = vsel %vm3461, %v3442, 0
  %v3628 = vsel %vm3461, %v3443, 0
  %v3631 = vsel %vm3461, %v3444, 0
  %v3634 = vsel %vm3461, %v3445, 0
  %v3637 = vsel %vm3461, %v3446, 0
  %v3640 = vsel %vm3461, %v3447, 0
  %v3643 = vsel %vm3461, %v3448, 0
  %v3646 = vsel %vm3461, %v3449, 0
  %v3649 = vsel %vm3461, %v3450, 0
  %v3652 = vsel %vm3461, %v3451, 0
  %3654 = vmatpush.msra.mxu0 0.0
  %3655 = vmatpush.msra.mxu0 0.0
  %3656 = vmatpush.msra.mxu0 0.0
  %3657 = vmatpush.msra.mxu0 0.0
  %3658 = vmatpush.msra.mxu0 0.0
  %3659 = vmatpush.msra.mxu0 0.0
  %3660 = vmatpush.msra.mxu0 0.0
  %3661 = vmatpush.msra.mxu0 %v3460
  %3662 = vmatpush.msra.mxu0 %v3459
  %3663 = vmatpush.msra.mxu0 %v3458
  %3664 = vmatpush.msra.mxu0 %v3457
  %3665 = vmatpush.msra.mxu0 %v3456
  %3666 = vmatpush.msra.mxu0 %v3455
  %3667 = vmatpush.msra.mxu0 %v3454
  %3668 = vmatpush.msra.mxu0 %v3453
  %3669 = vmatpush.msra.mxu0 %v3452
  %3670 = vmatmul.f32.gmra.mxu0 %v3463
  %v3671 = vpop.f32.mrf.mxu0
  %v3672 = vadd.f32 0.0, %v3671
  %3673 = vmatmul.f32.gmra.mxu0 %v3466
  %v3674 = vpop.f32.mrf.mxu0
  %v3675 = vadd.f32 0.0, %v3674
  %3676 = vmatmul.f32.gmra.mxu0 %v3469
  %v3677 = vpop.f32.mrf.mxu0
  %v3678 = vadd.f32 0.0, %v3677
  %3679 = vmatmul.f32.gmra.mxu0 %v3472
  %v3680 = vpop.f32.mrf.mxu0
  %v3681 = vadd.f32 0.0, %v3680
  %3682 = vmatmul.f32.gmra.mxu0 %v3475
  %v3683 = vpop.f32.mrf.mxu0
  %v3684 = vadd.f32 0.0, %v3683
  %3685 = vmatmul.f32.gmra.mxu0 %v3478
  %v3686 = vpop.f32.mrf.mxu0
  %v3687 = vadd.f32 0.0, %v3686
  %3688 = vmatmul.f32.gmra.mxu0 %v3481
  %v3689 = vpop.f32.mrf.mxu0
  %v3690 = vadd.f32 0.0, %v3689
  %3691 = vmatmul.f32.gmra.mxu0 %v3484
  %v3692 = vpop.f32.mrf.mxu0
  %v3693 = vadd.f32 0.0, %v3692
  %3694 = vmatmul.f32.gmra.mxu0 %v3487
  %v3695 = vpop.f32.mrf.mxu0
  %v3696 = vadd.f32 0.0, %v3695
  %3697 = vmatmul.f32.gmra.mxu0 %v3490
  %v3698 = vpop.f32.mrf.mxu0
  %v3699 = vadd.f32 0.0, %v3698
  %3700 = vmatmul.f32.gmra.mxu0 %v3493
  %v3701 = vpop.f32.mrf.mxu0
  %v3702 = vadd.f32 0.0, %v3701
  %3703 = vmatmul.f32.gmra.mxu0 %v3496
  %v3704 = vpop.f32.mrf.mxu0
  %v3705 = vadd.f32 0.0, %v3704
  %3706 = vmatmul.f32.gmra.mxu0 %v3499
  %v3707 = vpop.f32.mrf.mxu0
  %v3708 = vadd.f32 0.0, %v3707
  %3709 = vmatmul.f32.gmra.mxu0 %v3502
  %v3710 = vpop.f32.mrf.mxu0
  %v3711 = vadd.f32 0.0, %v3710
  %3712 = vmatmul.f32.gmra.mxu0 %v3505
  %v3713 = vpop.f32.mrf.mxu0
  %v3714 = vadd.f32 0.0, %v3713
  %3715 = vmatmul.f32.gmra.mxu0 %v3508
  %v3716 = vpop.f32.mrf.mxu0
  %v3717 = vadd.f32 0.0, %v3716
  %3718 = vmatmul.f32.gmra.mxu0 %v3511
  %v3719 = vpop.f32.mrf.mxu0
  %v3720 = vadd.f32 0.0, %v3719
  %3721 = vmatmul.f32.gmra.mxu0 %v3514
  %v3722 = vpop.f32.mrf.mxu0
  %v3723 = vadd.f32 0.0, %v3722
  %3724 = vmatmul.f32.gmra.mxu0 %v3517
  %v3725 = vpop.f32.mrf.mxu0
  %v3726 = vadd.f32 0.0, %v3725
  %3727 = vmatmul.f32.gmra.mxu0 %v3520
  %v3728 = vpop.f32.mrf.mxu0
  %v3729 = vadd.f32 0.0, %v3728
  %3730 = vmatmul.f32.gmra.mxu0 %v3523
  %v3731 = vpop.f32.mrf.mxu0
  %v3732 = vadd.f32 0.0, %v3731
  %3733 = vmatmul.f32.gmra.mxu0 %v3526
  %v3734 = vpop.f32.mrf.mxu0
  %v3735 = vadd.f32 0.0, %v3734
  %3736 = vmatmul.f32.gmra.mxu0 %v3529
  %v3737 = vpop.f32.mrf.mxu0
  %v3738 = vadd.f32 0.0, %v3737
  %3739 = vmatmul.f32.gmra.mxu0 %v3532
  %v3740 = vpop.f32.mrf.mxu0
  %v3741 = vadd.f32 0.0, %v3740
  %3742 = vmatmul.f32.gmra.mxu0 %v3535
  %v3743 = vpop.f32.mrf.mxu0
  %v3744 = vadd.f32 0.0, %v3743
  %3745 = vmatmul.f32.gmra.mxu0 %v3538
  %v3746 = vpop.f32.mrf.mxu0
  %v3747 = vadd.f32 0.0, %v3746
  %3748 = vmatmul.f32.gmra.mxu0 %v3541
  %v3749 = vpop.f32.mrf.mxu0
  %v3750 = vadd.f32 0.0, %v3749
  %3751 = vmatmul.f32.gmra.mxu0 %v3544
  %v3752 = vpop.f32.mrf.mxu0
  %v3753 = vadd.f32 0.0, %v3752
  %3754 = vmatmul.f32.gmra.mxu0 %v3547
  %v3755 = vpop.f32.mrf.mxu0
  %v3756 = vadd.f32 0.0, %v3755
  %3757 = vmatmul.f32.gmra.mxu0 %v3550
  %v3758 = vpop.f32.mrf.mxu0
  %v3759 = vadd.f32 0.0, %v3758
  %3760 = vmatmul.f32.gmra.mxu0 %v3553
  %v3761 = vpop.f32.mrf.mxu0
  %v3762 = vadd.f32 0.0, %v3761
  %3763 = vmatmul.f32.gmra.mxu0 %v3556
  %v3764 = vpop.f32.mrf.mxu0
  %v3765 = vadd.f32 0.0, %v3764
  %3766 = vmatmul.f32.gmra.mxu0 %v3559
  %v3767 = vpop.f32.mrf.mxu0
  %v3768 = vadd.f32 0.0, %v3767
  %3769 = vmatmul.f32.gmra.mxu0 %v3562
  %v3770 = vpop.f32.mrf.mxu0
  %v3771 = vadd.f32 0.0, %v3770
  %3772 = vmatmul.f32.gmra.mxu0 %v3565
  %v3773 = vpop.f32.mrf.mxu0
  %v3774 = vadd.f32 0.0, %v3773
  %3775 = vmatmul.f32.gmra.mxu0 %v3568
  %v3776 = vpop.f32.mrf.mxu0
  %v3777 = vadd.f32 0.0, %v3776
  %3778 = vmatmul.f32.gmra.mxu0 %v3571
  %v3779 = vpop.f32.mrf.mxu0
  %v3780 = vadd.f32 0.0, %v3779
  %3781 = vmatmul.f32.gmra.mxu0 %v3574
  %v3782 = vpop.f32.mrf.mxu0
  %v3783 = vadd.f32 0.0, %v3782
  %3784 = vmatmul.f32.gmra.mxu0 %v3577
  %v3785 = vpop.f32.mrf.mxu0
  %v3786 = vadd.f32 0.0, %v3785
  %3787 = vmatmul.f32.gmra.mxu0 %v3580
  %v3788 = vpop.f32.mrf.mxu0
  %v3789 = vadd.f32 0.0, %v3788
  %3790 = vmatmul.f32.gmra.mxu0 %v3583
  %v3791 = vpop.f32.mrf.mxu0
  %v3792 = vadd.f32 0.0, %v3791
  %3793 = vmatmul.f32.gmra.mxu0 %v3586
  %v3794 = vpop.f32.mrf.mxu0
  %v3795 = vadd.f32 0.0, %v3794
  %3796 = vmatmul.f32.gmra.mxu0 %v3589
  %v3797 = vpop.f32.mrf.mxu0
  %v3798 = vadd.f32 0.0, %v3797
  %3799 = vmatmul.f32.gmra.mxu0 %v3592
  %v3800 = vpop.f32.mrf.mxu0
  %v3801 = vadd.f32 0.0, %v3800
  %3802 = vmatmul.f32.gmra.mxu0 %v3595
  %v3803 = vpop.f32.mrf.mxu0
  %v3804 = vadd.f32 0.0, %v3803
  %3805 = vmatmul.f32.gmra.mxu0 %v3598
  %v3806 = vpop.f32.mrf.mxu0
  %v3807 = vadd.f32 0.0, %v3806
  %3808 = vmatmul.f32.gmra.mxu0 %v3601
  %v3809 = vpop.f32.mrf.mxu0
  %v3810 = vadd.f32 0.0, %v3809
  %3811 = vmatmul.f32.gmra.mxu0 %v3604
  %v3812 = vpop.f32.mrf.mxu0
  %v3813 = vadd.f32 0.0, %v3812
  %3814 = vmatmul.f32.gmra.mxu0 %v3607
  %v3815 = vpop.f32.mrf.mxu0
  %v3816 = vadd.f32 0.0, %v3815
  %3817 = vmatmul.f32.gmra.mxu0 %v3610
  %v3818 = vpop.f32.mrf.mxu0
  %v3819 = vadd.f32 0.0, %v3818
  %3820 = vmatmul.f32.gmra.mxu0 %v3613
  %v3821 = vpop.f32.mrf.mxu0
  %v3822 = vadd.f32 0.0, %v3821
  %3823 = vmatmul.f32.gmra.mxu0 %v3616
  %v3824 = vpop.f32.mrf.mxu0
  %v3825 = vadd.f32 0.0, %v3824
  %3826 = vmatmul.f32.gmra.mxu0 %v3619
  %v3827 = vpop.f32.mrf.mxu0
  %v3828 = vadd.f32 0.0, %v3827
  %3829 = vmatmul.f32.gmra.mxu0 %v3622
  %v3830 = vpop.f32.mrf.mxu0
  %v3831 = vadd.f32 0.0, %v3830
  %3832 = vmatmul.f32.gmra.mxu0 %v3625
  %v3833 = vpop.f32.mrf.mxu0
  %v3834 = vadd.f32 0.0, %v3833
  %3835 = vmatmul.f32.gmra.mxu0 %v3628
  %v3836 = vpop.f32.mrf.mxu0
  %v3837 = vadd.f32 0.0, %v3836
  %3838 = vmatmul.f32.gmra.mxu0 %v3631
  %v3839 = vpop.f32.mrf.mxu0
  %v3840 = vadd.f32 0.0, %v3839
  %3841 = vmatmul.f32.gmra.mxu0 %v3634
  %v3842 = vpop.f32.mrf.mxu0
  %v3843 = vadd.f32 0.0, %v3842
  %3844 = vmatmul.f32.gmra.mxu0 %v3637
  %v3845 = vpop.f32.mrf.mxu0
  %v3846 = vadd.f32 0.0, %v3845
  %3847 = vmatmul.f32.gmra.mxu0 %v3640
  %v3848 = vpop.f32.mrf.mxu0
  %v3849 = vadd.f32 0.0, %v3848
  %3850 = vmatmul.f32.gmra.mxu0 %v3643
  %v3851 = vpop.f32.mrf.mxu0
  %v3852 = vadd.f32 0.0, %v3851
  %3853 = vmatmul.f32.gmra.mxu0 %v3646
  %v3854 = vpop.f32.mrf.mxu0
  %v3855 = vadd.f32 0.0, %v3854
  %3856 = vmatmul.f32.gmra.mxu0 %v3649
  %v3857 = vpop.f32.mrf.mxu0
  %v3858 = vadd.f32 0.0, %v3857
  %3859 = vmatmul.f32.gmra.mxu0 %v3652
  %v3860 = vpop.f32.mrf.mxu0
  %v3861 = vadd.f32 0.0, %v3860
  %3862 = vdwg.mxu0
  %v3863 = vsel %vm32, %v3672, 0.0
  %v3864 = vsel %vm32, %v3675, 0.0
  %v3865 = vadd.f32 %v3863, %v3864
  %v3866 = vsel %vm32, %v3678, 0.0
  %v3867 = vadd.f32 %v3865, %v3866
  %v3868 = vsel %vm32, %v3681, 0.0
  %v3869 = vadd.f32 %v3867, %v3868
  %v3870 = vsel %vm32, %v3684, 0.0
  %v3871 = vadd.f32 %v3869, %v3870
  %v3872 = vsel %vm32, %v3687, 0.0
  %v3873 = vadd.f32 %v3871, %v3872
  %v3874 = vsel %vm32, %v3690, 0.0
  %v3875 = vadd.f32 %v3873, %v3874
  %v3876 = vsel %vm32, %v3693, 0.0
  %v3877 = vadd.f32 %v3875, %v3876
  %v3878 = vsel %vm32, %v3696, 0.0
  %v3879 = vadd.f32 %v3877, %v3878
  %v3880 = vsel %vm32, %v3699, 0.0
  %v3881 = vadd.f32 %v3879, %v3880
  %v3882 = vsel %vm32, %v3702, 0.0
  %v3883 = vadd.f32 %v3881, %v3882
  %v3884 = vsel %vm32, %v3705, 0.0
  %v3885 = vadd.f32 %v3883, %v3884
  %v3886 = vsel %vm32, %v3708, 0.0
  %v3887 = vadd.f32 %v3885, %v3886
  %v3888 = vsel %vm32, %v3711, 0.0
  %v3889 = vadd.f32 %v3887, %v3888
  %v3890 = vsel %vm32, %v3714, 0.0
  %v3891 = vadd.f32 %v3889, %v3890
  %v3892 = vsel %vm32, %v3717, 0.0
  %v3893 = vadd.f32 %v3891, %v3892
  %v3894 = vsel %vm32, %v3720, 0.0
  %v3895 = vadd.f32 %v3893, %v3894
  %v3896 = vsel %vm32, %v3723, 0.0
  %v3897 = vadd.f32 %v3895, %v3896
  %v3898 = vsel %vm32, %v3726, 0.0
  %v3899 = vadd.f32 %v3897, %v3898
  %v3900 = vsel %vm32, %v3729, 0.0
  %v3901 = vadd.f32 %v3899, %v3900
  %v3902 = vsel %vm32, %v3732, 0.0
  %v3903 = vadd.f32 %v3901, %v3902
  %v3904 = vsel %vm32, %v3735, 0.0
  %v3905 = vadd.f32 %v3903, %v3904
  %v3906 = vsel %vm32, %v3738, 0.0
  %v3907 = vadd.f32 %v3905, %v3906
  %v3908 = vsel %vm32, %v3741, 0.0
  %v3909 = vadd.f32 %v3907, %v3908
  %v3910 = vsel %vm32, %v3744, 0.0
  %v3911 = vadd.f32 %v3909, %v3910
  %v3912 = vsel %vm32, %v3747, 0.0
  %v3913 = vadd.f32 %v3911, %v3912
  %v3914 = vsel %vm32, %v3750, 0.0
  %v3915 = vadd.f32 %v3913, %v3914
  %v3916 = vsel %vm32, %v3753, 0.0
  %v3917 = vadd.f32 %v3915, %v3916
  %v3918 = vsel %vm32, %v3756, 0.0
  %v3919 = vadd.f32 %v3917, %v3918
  %v3920 = vsel %vm32, %v3759, 0.0
  %v3921 = vadd.f32 %v3919, %v3920
  %v3922 = vsel %vm32, %v3762, 0.0
  %v3923 = vadd.f32 %v3921, %v3922
  %v3924 = vsel %vm32, %v3765, 0.0
  %v3925 = vadd.f32 %v3923, %v3924
  %v3926 = vsel %vm32, %v3768, 0.0
  %v3927 = vadd.f32 %v3925, %v3926
  %v3928 = vsel %vm32, %v3771, 0.0
  %v3929 = vadd.f32 %v3927, %v3928
  %v3930 = vsel %vm32, %v3774, 0.0
  %v3931 = vadd.f32 %v3929, %v3930
  %v3932 = vsel %vm32, %v3777, 0.0
  %v3933 = vadd.f32 %v3931, %v3932
  %v3934 = vsel %vm32, %v3780, 0.0
  %v3935 = vadd.f32 %v3933, %v3934
  %v3936 = vsel %vm32, %v3783, 0.0
  %v3937 = vadd.f32 %v3935, %v3936
  %v3938 = vsel %vm32, %v3786, 0.0
  %v3939 = vadd.f32 %v3937, %v3938
  %v3940 = vsel %vm32, %v3789, 0.0
  %v3941 = vadd.f32 %v3939, %v3940
  %v3942 = vsel %vm32, %v3792, 0.0
  %v3943 = vadd.f32 %v3941, %v3942
  %v3944 = vsel %vm32, %v3795, 0.0
  %v3945 = vadd.f32 %v3943, %v3944
  %v3946 = vsel %vm32, %v3798, 0.0
  %v3947 = vadd.f32 %v3945, %v3946
  %v3948 = vsel %vm32, %v3801, 0.0
  %v3949 = vadd.f32 %v3947, %v3948
  %v3950 = vsel %vm32, %v3804, 0.0
  %v3951 = vadd.f32 %v3949, %v3950
  %v3952 = vsel %vm32, %v3807, 0.0
  %v3953 = vadd.f32 %v3951, %v3952
  %v3954 = vsel %vm32, %v3810, 0.0
  %v3955 = vadd.f32 %v3953, %v3954
  %v3956 = vsel %vm32, %v3813, 0.0
  %v3957 = vadd.f32 %v3955, %v3956
  %v3958 = vsel %vm32, %v3816, 0.0
  %v3959 = vadd.f32 %v3957, %v3958
  %v3960 = vsel %vm32, %v3819, 0.0
  %v3961 = vadd.f32 %v3959, %v3960
  %v3962 = vsel %vm32, %v3822, 0.0
  %v3963 = vadd.f32 %v3961, %v3962
  %v3964 = vsel %vm32, %v3825, 0.0
  %v3965 = vadd.f32 %v3963, %v3964
  %v3966 = vsel %vm32, %v3828, 0.0
  %v3967 = vadd.f32 %v3965, %v3966
  %v3968 = vsel %vm32, %v3831, 0.0
  %v3969 = vadd.f32 %v3967, %v3968
  %v3970 = vsel %vm32, %v3834, 0.0
  %v3971 = vadd.f32 %v3969, %v3970
  %v3972 = vsel %vm32, %v3837, 0.0
  %v3973 = vadd.f32 %v3971, %v3972
  %v3974 = vsel %vm32, %v3840, 0.0
  %v3975 = vadd.f32 %v3973, %v3974
  %v3976 = vsel %vm32, %v3843, 0.0
  %v3977 = vadd.f32 %v3975, %v3976
  %v3978 = vsel %vm32, %v3846, 0.0
  %v3979 = vadd.f32 %v3977, %v3978
  %v3980 = vsel %vm32, %v3849, 0.0
  %v3981 = vadd.f32 %v3979, %v3980
  %v3982 = vsel %vm32, %v3852, 0.0
  %v3983 = vadd.f32 %v3981, %v3982
  %v3984 = vsel %vm32, %v3855, 0.0
  %v3985 = vadd.f32 %v3983, %v3984
  %v3986 = vsel %vm32, %v3858, 0.0
  %v3987 = vadd.f32 %v3985, %v3986
  %v3988 = vsel %vm32, %v3861, 0.0
  %v3989 = vadd.f32 %v3987, %v3988
  %v3990 = vrot.slane %v3989, 4
  %v3991 = vadd.f32 %v3989, %v3990
  %v3992 = vrot.slane %v3991, 2
  %v3993 = vadd.f32 %v3991, %v3992
  %v3994 = vrot.slane %v3993, 1
  %v3995 = vadd.f32 %v3993, %v3994
  %v3996 = vrcp.pop 512.0
  %v3997 = vmul.f32 512.0, %v3996
  %v3998 = vsub.f32 1.0, %v3997
  %v3999 = vmul.f32 %v3996, %v3998
  %v4000 = vadd.f32 %v3996, %v3999
  %vm4001 = vweird.f32 %v3996
  %v4002 = vsel %vm4001, %v3996, %v4000
  %v4003 = vmul.f32 %v3995, %v4002
  %v4004 = vsub.f32 %v3672, %v4003
  %v4005 = vsub.f32 %v3675, %v4003
  %v4006 = vsub.f32 %v3678, %v4003
  %v4007 = vsub.f32 %v3681, %v4003
  %v4008 = vsub.f32 %v3684, %v4003
  %v4009 = vsub.f32 %v3687, %v4003
  %v4010 = vsub.f32 %v3690, %v4003
  %v4011 = vsub.f32 %v3693, %v4003
  %v4012 = vsub.f32 %v3696, %v4003
  %v4013 = vsub.f32 %v3699, %v4003
  %v4014 = vsub.f32 %v3702, %v4003
  %v4015 = vsub.f32 %v3705, %v4003
  %v4016 = vsub.f32 %v3708, %v4003
  %v4017 = vsub.f32 %v3711, %v4003
  %v4018 = vsub.f32 %v3714, %v4003
  %v4019 = vsub.f32 %v3717, %v4003
  %v4020 = vsub.f32 %v3720, %v4003
  %v4021 = vsub.f32 %v3723, %v4003
  %v4022 = vsub.f32 %v3726, %v4003
  %v4023 = vsub.f32 %v3729, %v4003
  %v4024 = vsub.f32 %v3732, %v4003
  %v4025 = vsub.f32 %v3735, %v4003
  %v4026 = vsub.f32 %v3738, %v4003
  %v4027 = vsub.f32 %v3741, %v4003
  %v4028 = vsub.f32 %v3744, %v4003
  %v4029 = vsub.f32 %v3747, %v4003
  %v4030 = vsub.f32 %v3750, %v4003
  %v4031 = vsub.f32 %v3753, %v4003
  %v4032 = vsub.f32 %v3756, %v4003
  %v4033 = vsub.f32 %v3759, %v4003
  %v4034 = vsub.f32 %v3762, %v4003
  %v4035 = vsub.f32 %v3765, %v4003
  %v4036 = vsub.f32 %v3768, %v4003
  %v4037 = vsub.f32 %v3771, %v4003
  %v4038 = vsub.f32 %v3774, %v4003
  %v4039 = vsub.f32 %v3777, %v4003
  %v4040 = vsub.f32 %v3780, %v4003
  %v4041 = vsub.f32 %v3783, %v4003
  %v4042 = vsub.f32 %v3786, %v4003
  %v4043 = vsub.f32 %v3789, %v4003
  %v4044 = vsub.f32 %v3792, %v4003
  %v4045 = vsub.f32 %v3795, %v4003
  %v4046 = vsub.f32 %v3798, %v4003
  %v4047 = vsub.f32 %v3801, %v4003
  %v4048 = vsub.f32 %v3804, %v4003
  %v4049 = vsub.f32 %v3807, %v4003
  %v4050 = vsub.f32 %v3810, %v4003
  %v4051 = vsub.f32 %v3813, %v4003
  %v4052 = vsub.f32 %v3816, %v4003
  %v4053 = vsub.f32 %v3819, %v4003
  %v4054 = vsub.f32 %v3822, %v4003
  %v4055 = vsub.f32 %v3825, %v4003
  %v4056 = vsub.f32 %v3828, %v4003
  %v4057 = vsub.f32 %v3831, %v4003
  %v4058 = vsub.f32 %v3834, %v4003
  %v4059 = vsub.f32 %v3837, %v4003
  %v4060 = vsub.f32 %v3840, %v4003
  %v4061 = vsub.f32 %v3843, %v4003
  %v4062 = vsub.f32 %v3846, %v4003
  %v4063 = vsub.f32 %v3849, %v4003
  %v4064 = vsub.f32 %v3852, %v4003
  %v4065 = vsub.f32 %v3855, %v4003
  %v4066 = vsub.f32 %v3858, %v4003
  %v4067 = vsub.f32 %v3861, %v4003
  %v4068 = vmul.f32 %v4004, %v4004
  %v4069 = vmul.f32 %v4005, %v4005
  %v4070 = vmul.f32 %v4006, %v4006
  %v4071 = vmul.f32 %v4007, %v4007
  %v4072 = vmul.f32 %v4008, %v4008
  %v4073 = vmul.f32 %v4009, %v4009
  %v4074 = vmul.f32 %v4010, %v4010
  %v4075 = vmul.f32 %v4011, %v4011
  %v4076 = vmul.f32 %v4012, %v4012
  %v4077 = vmul.f32 %v4013, %v4013
  %v4078 = vmul.f32 %v4014, %v4014
  %v4079 = vmul.f32 %v4015, %v4015
  %v4080 = vmul.f32 %v4016, %v4016
  %v4081 = vmul.f32 %v4017, %v4017
  %v4082 = vmul.f32 %v4018, %v4018
  %v4083 = vmul.f32 %v4019, %v4019
  %v4084 = vmul.f32 %v4020, %v4020
  %v4085 = vmul.f32 %v4021, %v4021
  %v4086 = vmul.f32 %v4022, %v4022
  %v4087 = vmul.f32 %v4023, %v4023
  %v4088 = vmul.f32 %v4024, %v4024
  %v4089 = vmul.f32 %v4025, %v4025
  %v4090 = vmul.f32 %v4026, %v4026
  %v4091 = vmul.f32 %v4027, %v4027
  %v4092 = vmul.f32 %v4028, %v4028
  %v4093 = vmul.f32 %v4029, %v4029
  %v4094 = vmul.f32 %v4030, %v4030
  %v4095 = vmul.f32 %v4031, %v4031
  %v4096 = vmul.f32 %v4032, %v4032
  %v4097 = vmul.f32 %v4033, %v4033
  %v4098 = vmul.f32 %v4034, %v4034
  %v4099 = vmul.f32 %v4035, %v4035
  %v4100 = vmul.f32 %v4036, %v4036
  %v4101 = vmul.f32 %v4037, %v4037
  %v4102 = vmul.f32 %v4038, %v4038
  %v4103 = vmul.f32 %v4039, %v4039
  %v4104 = vmul.f32 %v4040, %v4040
  %v4105 = vmul.f32 %v4041, %v4041
  %v4106 = vmul.f32 %v4042, %v4042
  %v4107 = vmul.f32 %v4043, %v4043
  %v4108 = vmul.f32 %v4044, %v4044
  %v4109 = vmul.f32 %v4045, %v4045
  %v4110 = vmul.f32 %v4046, %v4046
  %v4111 = vmul.f32 %v4047, %v4047
  %v4112 = vmul.f32 %v4048, %v4048
  %v4113 = vmul.f32 %v4049, %v4049
  %v4114 = vmul.f32 %v4050, %v4050
  %v4115 = vmul.f32 %v4051, %v4051
  %v4116 = vmul.f32 %v4052, %v4052
  %v4117 = vmul.f32 %v4053, %v4053
  %v4118 = vmul.f32 %v4054, %v4054
  %v4119 = vmul.f32 %v4055, %v4055
  %v4120 = vmul.f32 %v4056, %v4056
  %v4121 = vmul.f32 %v4057, %v4057
  %v4122 = vmul.f32 %v4058, %v4058
  %v4123 = vmul.f32 %v4059, %v4059
  %v4124 = vmul.f32 %v4060, %v4060
  %v4125 = vmul.f32 %v4061, %v4061
  %v4126 = vmul.f32 %v4062, %v4062
  %v4127 = vmul.f32 %v4063, %v4063
  %v4128 = vmul.f32 %v4064, %v4064
  %v4129 = vmul.f32 %v4065, %v4065
  %v4130 = vmul.f32 %v4066, %v4066
  %v4131 = vmul.f32 %v4067, %v4067
  %v4132 = vsel %vm32, %v4068, 0.0
  %v4133 = vsel %vm32, %v4069, 0.0
  %v4134 = vadd.f32 %v4132, %v4133
  %v4135 = vsel %vm32, %v4070, 0.0
  %v4136 = vadd.f32 %v4134, %v4135
  %v4137 = vsel %vm32, %v4071, 0.0
  %v4138 = vadd.f32 %v4136, %v4137
  %v4139 = vsel %vm32, %v4072, 0.0
  %v4140 = vadd.f32 %v4138, %v4139
  %v4141 = vsel %vm32, %v4073, 0.0
  %v4142 = vadd.f32 %v4140, %v4141
  %v4143 = vsel %vm32, %v4074, 0.0
  %v4144 = vadd.f32 %v4142, %v4143
  %v4145 = vsel %vm32, %v4075, 0.0
  %v4146 = vadd.f32 %v4144, %v4145
  %v4147 = vsel %vm32, %v4076, 0.0
  %v4148 = vadd.f32 %v4146, %v4147
  %v4149 = vsel %vm32, %v4077, 0.0
  %v4150 = vadd.f32 %v4148, %v4149
  %v4151 = vsel %vm32, %v4078, 0.0
  %v4152 = vadd.f32 %v4150, %v4151
  %v4153 = vsel %vm32, %v4079, 0.0
  %v4154 = vadd.f32 %v4152, %v4153
  %v4155 = vsel %vm32, %v4080, 0.0
  %v4156 = vadd.f32 %v4154, %v4155
  %v4157 = vsel %vm32, %v4081, 0.0
  %v4158 = vadd.f32 %v4156, %v4157
  %v4159 = vsel %vm32, %v4082, 0.0
  %v4160 = vadd.f32 %v4158, %v4159
  %v4161 = vsel %vm32, %v4083, 0.0
  %v4162 = vadd.f32 %v4160, %v4161
  %v4163 = vsel %vm32, %v4084, 0.0
  %v4164 = vadd.f32 %v4162, %v4163
  %v4165 = vsel %vm32, %v4085, 0.0
  %v4166 = vadd.f32 %v4164, %v4165
  %v4167 = vsel %vm32, %v4086, 0.0
  %v4168 = vadd.f32 %v4166, %v4167
  %v4169 = vsel %vm32, %v4087, 0.0
  %v4170 = vadd.f32 %v4168, %v4169
  %v4171 = vsel %vm32, %v4088, 0.0
  %v4172 = vadd.f32 %v4170, %v4171
  %v4173 = vsel %vm32, %v4089, 0.0
  %v4174 = vadd.f32 %v4172, %v4173
  %v4175 = vsel %vm32, %v4090, 0.0
  %v4176 = vadd.f32 %v4174, %v4175
  %v4177 = vsel %vm32, %v4091, 0.0
  %v4178 = vadd.f32 %v4176, %v4177
  %v4179 = vsel %vm32, %v4092, 0.0
  %v4180 = vadd.f32 %v4178, %v4179
  %v4181 = vsel %vm32, %v4093, 0.0
  %v4182 = vadd.f32 %v4180, %v4181
  %v4183 = vsel %vm32, %v4094, 0.0
  %v4184 = vadd.f32 %v4182, %v4183
  %v4185 = vsel %vm32, %v4095, 0.0
  %v4186 = vadd.f32 %v4184, %v4185
  %v4187 = vsel %vm32, %v4096, 0.0
  %v4188 = vadd.f32 %v4186, %v4187
  %v4189 = vsel %vm32, %v4097, 0.0
  %v4190 = vadd.f32 %v4188, %v4189
  %v4191 = vsel %vm32, %v4098, 0.0
  %v4192 = vadd.f32 %v4190, %v4191
  %v4193 = vsel %vm32, %v4099, 0.0
  %v4194 = vadd.f32 %v4192, %v4193
  %v4195 = vsel %vm32, %v4100, 0.0
  %v4196 = vadd.f32 %v4194, %v4195
  %v4197 = vsel %vm32, %v4101, 0.0
  %v4198 = vadd.f32 %v4196, %v4197
  %v4199 = vsel %vm32, %v4102, 0.0
  %v4200 = vadd.f32 %v4198, %v4199
  %v4201 = vsel %vm32, %v4103, 0.0
  %v4202 = vadd.f32 %v4200, %v4201
  %v4203 = vsel %vm32, %v4104, 0.0
  %v4204 = vadd.f32 %v4202, %v4203
  %v4205 = vsel %vm32, %v4105, 0.0
  %v4206 = vadd.f32 %v4204, %v4205
  %v4207 = vsel %vm32, %v4106, 0.0
  %v4208 = vadd.f32 %v4206, %v4207
  %v4209 = vsel %vm32, %v4107, 0.0
  %v4210 = vadd.f32 %v4208, %v4209
  %v4211 = vsel %vm32, %v4108, 0.0
  %v4212 = vadd.f32 %v4210, %v4211
  %v4213 = vsel %vm32, %v4109, 0.0
  %v4214 = vadd.f32 %v4212, %v4213
  %v4215 = vsel %vm32, %v4110, 0.0
  %v4216 = vadd.f32 %v4214, %v4215
  %v4217 = vsel %vm32, %v4111, 0.0
  %v4218 = vadd.f32 %v4216, %v4217
  %v4219 = vsel %vm32, %v4112, 0.0
  %v4220 = vadd.f32 %v4218, %v4219
  %v4221 = vsel %vm32, %v4113, 0.0
  %v4222 = vadd.f32 %v4220, %v4221
  %v4223 = vsel %vm32, %v4114, 0.0
  %v4224 = vadd.f32 %v4222, %v4223
  %v4225 = vsel %vm32, %v4115, 0.0
  %v4226 = vadd.f32 %v4224, %v4225
  %v4227 = vsel %vm32, %v4116, 0.0
  %v4228 = vadd.f32 %v4226, %v4227
  %v4229 = vsel %vm32, %v4117, 0.0
  %v4230 = vadd.f32 %v4228, %v4229
  %v4231 = vsel %vm32, %v4118, 0.0
  %v4232 = vadd.f32 %v4230, %v4231
  %v4233 = vsel %vm32, %v4119, 0.0
  %v4234 = vadd.f32 %v4232, %v4233
  %v4235 = vsel %vm32, %v4120, 0.0
  %v4236 = vadd.f32 %v4234, %v4235
  %v4237 = vsel %vm32, %v4121, 0.0
  %v4238 = vadd.f32 %v4236, %v4237
  %v4239 = vsel %vm32, %v4122, 0.0
  %v4240 = vadd.f32 %v4238, %v4239
  %v4241 = vsel %vm32, %v4123, 0.0
  %v4242 = vadd.f32 %v4240, %v4241
  %v4243 = vsel %vm32, %v4124, 0.0
  %v4244 = vadd.f32 %v4242, %v4243
  %v4245 = vsel %vm32, %v4125, 0.0
  %v4246 = vadd.f32 %v4244, %v4245
  %v4247 = vsel %vm32, %v4126, 0.0
  %v4248 = vadd.f32 %v4246, %v4247
  %v4249 = vsel %vm32, %v4127, 0.0
  %v4250 = vadd.f32 %v4248, %v4249
  %v4251 = vsel %vm32, %v4128, 0.0
  %v4252 = vadd.f32 %v4250, %v4251
  %v4253 = vsel %vm32, %v4129, 0.0
  %v4254 = vadd.f32 %v4252, %v4253
  %v4255 = vsel %vm32, %v4130, 0.0
  %v4256 = vadd.f32 %v4254, %v4255
  %v4257 = vsel %vm32, %v4131, 0.0
  %v4258 = vadd.f32 %v4256, %v4257
  %v4259 = vrot.slane %v4258, 4
  %v4260 = vadd.f32 %v4258, %v4259
  %v4261 = vrot.slane %v4260, 2
  %v4262 = vadd.f32 %v4260, %v4261
  %v4263 = vrot.slane %v4262, 1
  %v4264 = vadd.f32 %v4262, %v4263
  %v4265 = vmul.f32 %v4264, %v4002
  %v4266 = vadd.f32 %v4265, 1e-05
  %v4267 = vrsqrt.pop %v4266
  %v4268 = vmul.f32 %v4267, %v4266
  %v4269 = vmul.f32 %v4268, %v4267
  %v4270 = vmul.f32 0.5, %v4269
  %v4271 = vsub.f32 1.5, %v4270
  %v4272 = vmul.f32 %v4267, %v4271
  %vm4273 = vweird.f32 %v4266
  %vm4274 = vweird.f32 %v4267
  %vm4275 = vmor %vm4273, %vm4274
  %v4276 = vsel %vm4275, %v4267, %v4272
  %v4277 = vmul.f32 %v4004, %v4276
  %v4278 = vmul.f32 %v4005, %v4276
  %v4279 = vmul.f32 %v4006, %v4276
  %v4280 = vmul.f32 %v4007, %v4276
  %v4281 = vmul.f32 %v4008, %v4276
  %v4282 = vmul.f32 %v4009, %v4276
  %v4283 = vmul.f32 %v4010, %v4276
  %v4284 = vmul.f32 %v4011, %v4276
  %v4285 = vmul.f32 %v4012, %v4276
  %v4286 = vmul.f32 %v4013, %v4276
  %v4287 = vmul.f32 %v4014, %v4276
  %v4288 = vmul.f32 %v4015, %v4276
  %v4289 = vmul.f32 %v4016, %v4276
  %v4290 = vmul.f32 %v4017, %v4276
  %v4291 = vmul.f32 %v4018, %v4276
  %v4292 = vmul.f32 %v4019, %v4276
  %v4293 = vmul.f32 %v4020, %v4276
  %v4294 = vmul.f32 %v4021, %v4276
  %v4295 = vmul.f32 %v4022, %v4276
  %v4296 = vmul.f32 %v4023, %v4276
  %v4297 = vmul.f32 %v4024, %v4276
  %v4298 = vmul.f32 %v4025, %v4276
  %v4299 = vmul.f32 %v4026, %v4276
  %v4300 = vmul.f32 %v4027, %v4276
  %v4301 = vmul.f32 %v4028, %v4276
  %v4302 = vmul.f32 %v4029, %v4276
  %v4303 = vmul.f32 %v4030, %v4276
  %v4304 = vmul.f32 %v4031, %v4276
  %v4305 = vmul.f32 %v4032, %v4276
  %v4306 = vmul.f32 %v4033, %v4276
  %v4307 = vmul.f32 %v4034, %v4276
  %v4308 = vmul.f32 %v4035, %v4276
  %v4309 = vmul.f32 %v4036, %v4276
  %v4310 = vmul.f32 %v4037, %v4276
  %v4311 = vmul.f32 %v4038, %v4276
  %v4312 = vmul.f32 %v4039, %v4276
  %v4313 = vmul.f32 %v4040, %v4276
  %v4314 = vmul.f32 %v4041, %v4276
  %v4315 = vmul.f32 %v4042, %v4276
  %v4316 = vmul.f32 %v4043, %v4276
  %v4317 = vmul.f32 %v4044, %v4276
  %v4318 = vmul.f32 %v4045, %v4276
  %v4319 = vmul.f32 %v4046, %v4276
  %v4320 = vmul.f32 %v4047, %v4276
  %v4321 = vmul.f32 %v4048, %v4276
  %v4322 = vmul.f32 %v4049, %v4276
  %v4323 = vmul.f32 %v4050, %v4276
  %v4324 = vmul.f32 %v4051, %v4276
  %v4325 = vmul.f32 %v4052, %v4276
  %v4326 = vmul.f32 %v4053, %v4276
  %v4327 = vmul.f32 %v4054, %v4276
  %v4328 = vmul.f32 %v4055, %v4276
  %v4329 = vmul.f32 %v4056, %v4276
  %v4330 = vmul.f32 %v4057, %v4276
  %v4331 = vmul.f32 %v4058, %v4276
  %v4332 = vmul.f32 %v4059, %v4276
  %v4333 = vmul.f32 %v4060, %v4276
  %v4334 = vmul.f32 %v4061, %v4276
  %v4335 = vmul.f32 %v4062, %v4276
  %v4336 = vmul.f32 %v4063, %v4276
  %v4337 = vmul.f32 %v4064, %v4276
  %v4338 = vmul.f32 %v4065, %v4276
  %v4339 = vmul.f32 %v4066, %v4276
  %v4340 = vmul.f32 %v4067, %v4276
  %v4341 = vld [vmem:[%s5] sm:$0x1]
  %v4343 = vperm.slane %v4341, 0
  %v4345 = vmul.f32 %v4277, %v4343
  %v4346 = vmul.f32 %v4278, %v4343
  %v4347 = vmul.f32 %v4279, %v4343
  %v4348 = vmul.f32 %v4280, %v4343
  %v4349 = vmul.f32 %v4281, %v4343
  %v4350 = vmul.f32 %v4282, %v4343
  %v4351 = vmul.f32 %v4283, %v4343
  %v4352 = vmul.f32 %v4284, %v4343
  %v4353 = vmul.f32 %v4285, %v4343
  %v4354 = vmul.f32 %v4286, %v4343
  %v4355 = vmul.f32 %v4287, %v4343
  %v4356 = vmul.f32 %v4288, %v4343
  %v4357 = vmul.f32 %v4289, %v4343
  %v4358 = vmul.f32 %v4290, %v4343
  %v4359 = vmul.f32 %v4291, %v4343
  %v4360 = vmul.f32 %v4292, %v4343
  %v4361 = vmul.f32 %v4293, %v4343
  %v4362 = vmul.f32 %v4294, %v4343
  %v4363 = vmul.f32 %v4295, %v4343
  %v4364 = vmul.f32 %v4296, %v4343
  %v4365 = vmul.f32 %v4297, %v4343
  %v4366 = vmul.f32 %v4298, %v4343
  %v4367 = vmul.f32 %v4299, %v4343
  %v4368 = vmul.f32 %v4300, %v4343
  %v4369 = vmul.f32 %v4301, %v4343
  %v4370 = vmul.f32 %v4302, %v4343
  %v4371 = vmul.f32 %v4303, %v4343
  %v4372 = vmul.f32 %v4304, %v4343
  %v4373 = vmul.f32 %v4305, %v4343
  %v4374 = vmul.f32 %v4306, %v4343
  %v4375 = vmul.f32 %v4307, %v4343
  %v4376 = vmul.f32 %v4308, %v4343
  %v4377 = vmul.f32 %v4309, %v4343
  %v4378 = vmul.f32 %v4310, %v4343
  %v4379 = vmul.f32 %v4311, %v4343
  %v4380 = vmul.f32 %v4312, %v4343
  %v4381 = vmul.f32 %v4313, %v4343
  %v4382 = vmul.f32 %v4314, %v4343
  %v4383 = vmul.f32 %v4315, %v4343
  %v4384 = vmul.f32 %v4316, %v4343
  %v4385 = vmul.f32 %v4317, %v4343
  %v4386 = vmul.f32 %v4318, %v4343
  %v4387 = vmul.f32 %v4319, %v4343
  %v4388 = vmul.f32 %v4320, %v4343
  %v4389 = vmul.f32 %v4321, %v4343
  %v4390 = vmul.f32 %v4322, %v4343
  %v4391 = vmul.f32 %v4323, %v4343
  %v4392 = vmul.f32 %v4324, %v4343
  %v4393 = vmul.f32 %v4325, %v4343
  %v4394 = vmul.f32 %v4326, %v4343
  %v4395 = vmul.f32 %v4327, %v4343
  %v4396 = vmul.f32 %v4328, %v4343
  %v4397 = vmul.f32 %v4329, %v4343
  %v4398 = vmul.f32 %v4330, %v4343
  %v4399 = vmul.f32 %v4331, %v4343
  %v4400 = vmul.f32 %v4332, %v4343
  %v4401 = vmul.f32 %v4333, %v4343
  %v4402 = vmul.f32 %v4334, %v4343
  %v4403 = vmul.f32 %v4335, %v4343
  %v4404 = vmul.f32 %v4336, %v4343
  %v4405 = vmul.f32 %v4337, %v4343
  %v4406 = vmul.f32 %v4338, %v4343
  %v4407 = vmul.f32 %v4339, %v4343
  %v4408 = vmul.f32 %v4340, %v4343
  %v4409 = vld [vmem:[%s6] sm:$0x1]
  %v4411 = vperm.slane %v4409, 0
  %v4413 = vadd.f32 %v4345, %v4411
  %v4414 = vadd.f32 %v4346, %v4411
  %v4415 = vadd.f32 %v4347, %v4411
  %v4416 = vadd.f32 %v4348, %v4411
  %v4417 = vadd.f32 %v4349, %v4411
  %v4418 = vadd.f32 %v4350, %v4411
  %v4419 = vadd.f32 %v4351, %v4411
  %v4420 = vadd.f32 %v4352, %v4411
  %v4421 = vadd.f32 %v4353, %v4411
  %v4422 = vadd.f32 %v4354, %v4411
  %v4423 = vadd.f32 %v4355, %v4411
  %v4424 = vadd.f32 %v4356, %v4411
  %v4425 = vadd.f32 %v4357, %v4411
  %v4426 = vadd.f32 %v4358, %v4411
  %v4427 = vadd.f32 %v4359, %v4411
  %v4428 = vadd.f32 %v4360, %v4411
  %v4429 = vadd.f32 %v4361, %v4411
  %v4430 = vadd.f32 %v4362, %v4411
  %v4431 = vadd.f32 %v4363, %v4411
  %v4432 = vadd.f32 %v4364, %v4411
  %v4433 = vadd.f32 %v4365, %v4411
  %v4434 = vadd.f32 %v4366, %v4411
  %v4435 = vadd.f32 %v4367, %v4411
  %v4436 = vadd.f32 %v4368, %v4411
  %v4437 = vadd.f32 %v4369, %v4411
  %v4438 = vadd.f32 %v4370, %v4411
  %v4439 = vadd.f32 %v4371, %v4411
  %v4440 = vadd.f32 %v4372, %v4411
  %v4441 = vadd.f32 %v4373, %v4411
  %v4442 = vadd.f32 %v4374, %v4411
  %v4443 = vadd.f32 %v4375, %v4411
  %v4444 = vadd.f32 %v4376, %v4411
  %v4445 = vadd.f32 %v4377, %v4411
  %v4446 = vadd.f32 %v4378, %v4411
  %v4447 = vadd.f32 %v4379, %v4411
  %v4448 = vadd.f32 %v4380, %v4411
  %v4449 = vadd.f32 %v4381, %v4411
  %v4450 = vadd.f32 %v4382, %v4411
  %v4451 = vadd.f32 %v4383, %v4411
  %v4452 = vadd.f32 %v4384, %v4411
  %v4453 = vadd.f32 %v4385, %v4411
  %v4454 = vadd.f32 %v4386, %v4411
  %v4455 = vadd.f32 %v4387, %v4411
  %v4456 = vadd.f32 %v4388, %v4411
  %v4457 = vadd.f32 %v4389, %v4411
  %v4458 = vadd.f32 %v4390, %v4411
  %v4459 = vadd.f32 %v4391, %v4411
  %v4460 = vadd.f32 %v4392, %v4411
  %v4461 = vadd.f32 %v4393, %v4411
  %v4462 = vadd.f32 %v4394, %v4411
  %v4463 = vadd.f32 %v4395, %v4411
  %v4464 = vadd.f32 %v4396, %v4411
  %v4465 = vadd.f32 %v4397, %v4411
  %v4466 = vadd.f32 %v4398, %v4411
  %v4467 = vadd.f32 %v4399, %v4411
  %v4468 = vadd.f32 %v4400, %v4411
  %v4469 = vadd.f32 %v4401, %v4411
  %v4470 = vadd.f32 %v4402, %v4411
  %v4471 = vadd.f32 %v4403, %v4411
  %v4472 = vadd.f32 %v4404, %v4411
  %v4473 = vadd.f32 %v4405, %v4411
  %v4474 = vadd.f32 %v4406, %v4411
  %v4475 = vadd.f32 %v4407, %v4411
  %v4476 = vadd.f32 %v4408, %v4411
  %v4477 = vmax.f32 %v4413, 0.0
  %v4478 = vmax.f32 %v4414, 0.0
  %v4479 = vmax.f32 %v4415, 0.0
  %v4480 = vmax.f32 %v4416, 0.0
  %v4481 = vmax.f32 %v4417, 0.0
  %v4482 = vmax.f32 %v4418, 0.0
  %v4483 = vmax.f32 %v4419, 0.0
  %v4484 = vmax.f32 %v4420, 0.0
  %v4485 = vmax.f32 %v4421, 0.0
  %v4486 = vmax.f32 %v4422, 0.0
  %v4487 = vmax.f32 %v4423, 0.0
  %v4488 = vmax.f32 %v4424, 0.0
  %v4489 = vmax.f32 %v4425, 0.0
  %v4490 = vmax.f32 %v4426, 0.0
  %v4491 = vmax.f32 %v4427, 0.0
  %v4492 = vmax.f32 %v4428, 0.0
  %v4493 = vmax.f32 %v4429, 0.0
  %v4494 = vmax.f32 %v4430, 0.0
  %v4495 = vmax.f32 %v4431, 0.0
  %v4496 = vmax.f32 %v4432, 0.0
  %v4497 = vmax.f32 %v4433, 0.0
  %v4498 = vmax.f32 %v4434, 0.0
  %v4499 = vmax.f32 %v4435, 0.0
  %v4500 = vmax.f32 %v4436, 0.0
  %v4501 = vmax.f32 %v4437, 0.0
  %v4502 = vmax.f32 %v4438, 0.0
  %v4503 = vmax.f32 %v4439, 0.0
  %v4504 = vmax.f32 %v4440, 0.0
  %v4505 = vmax.f32 %v4441, 0.0
  %v4506 = vmax.f32 %v4442, 0.0
  %v4507 = vmax.f32 %v4443, 0.0
  %v4508 = vmax.f32 %v4444, 0.0
  %v4509 = vmax.f32 %v4445, 0.0
  %v4510 = vmax.f32 %v4446, 0.0
  %v4511 = vmax.f32 %v4447, 0.0
  %v4512 = vmax.f32 %v4448, 0.0
  %v4513 = vmax.f32 %v4449, 0.0
  %v4514 = vmax.f32 %v4450, 0.0
  %v4515 = vmax.f32 %v4451, 0.0
  %v4516 = vmax.f32 %v4452, 0.0
  %v4517 = vmax.f32 %v4453, 0.0
  %v4518 = vmax.f32 %v4454, 0.0
  %v4519 = vmax.f32 %v4455, 0.0
  %v4520 = vmax.f32 %v4456, 0.0
  %v4521 = vmax.f32 %v4457, 0.0
  %v4522 = vmax.f32 %v4458, 0.0
  %v4523 = vmax.f32 %v4459, 0.0
  %v4524 = vmax.f32 %v4460, 0.0
  %v4525 = vmax.f32 %v4461, 0.0
  %v4526 = vmax.f32 %v4462, 0.0
  %v4527 = vmax.f32 %v4463, 0.0
  %v4528 = vmax.f32 %v4464, 0.0
  %v4529 = vmax.f32 %v4465, 0.0
  %v4530 = vmax.f32 %v4466, 0.0
  %v4531 = vmax.f32 %v4467, 0.0
  %v4532 = vmax.f32 %v4468, 0.0
  %v4533 = vmax.f32 %v4469, 0.0
  %v4534 = vmax.f32 %v4470, 0.0
  %v4535 = vmax.f32 %v4471, 0.0
  %v4536 = vmax.f32 %v4472, 0.0
  %v4537 = vmax.f32 %v4473, 0.0
  %v4538 = vmax.f32 %v4474, 0.0
  %v4539 = vmax.f32 %v4475, 0.0
  %v4540 = vmax.f32 %v4476, 0.0
  %4541 = vst.msk [vmem:[%s242 + $0x8] sm:$0xff] %vm32, %v4477
  %4542 = vst.msk [vmem:[%s242 + $0x10] sm:$0xff] %vm32, %v4478
  %4543 = vst.msk [vmem:[%s242 + $0x28] sm:$0xff] %vm32, %v4479
  %4544 = vst.msk [vmem:[%s242 + $0x30] sm:$0xff] %vm32, %v4480
  %4545 = vst.msk [vmem:[%s242 + $0x48] sm:$0xff] %vm32, %v4481
  %4546 = vst.msk [vmem:[%s242 + $0x50] sm:$0xff] %vm32, %v4482
  %4547 = vst.msk [vmem:[%s242 + $0x68] sm:$0xff] %vm32, %v4483
  %4548 = vst.msk [vmem:[%s242 + $0x70] sm:$0xff] %vm32, %v4484
  %4549 = vst.msk [vmem:[%s242 + $0x88] sm:$0xff] %vm32, %v4485
  %4550 = vst.msk [vmem:[%s242 + $0x90] sm:$0xff] %vm32, %v4486
  %4551 = vst.msk [vmem:[%s242 + $0xa8] sm:$0xff] %vm32, %v4487
  %4552 = vst.msk [vmem:[%s242 + $0xb0] sm:$0xff] %vm32, %v4488
  %4553 = vst.msk [vmem:[%s242 + $0xc8] sm:$0xff] %vm32, %v4489
  %4554 = vst.msk [vmem:[%s242 + $0xd0] sm:$0xff] %vm32, %v4490
  %4555 = vst.msk [vmem:[%s242 + $0xe8] sm:$0xff] %vm32, %v4491
  %4556 = vst.msk [vmem:[%s242 + $0xf0] sm:$0xff] %vm32, %v4492
  %4557 = vst.msk [vmem:[%s242 + $0x108] sm:$0xff] %vm32, %v4493
  %4558 = vst.msk [vmem:[%s242 + $0x110] sm:$0xff] %vm32, %v4494
  %4559 = vst.msk [vmem:[%s242 + $0x128] sm:$0xff] %vm32, %v4495
  %4560 = vst.msk [vmem:[%s242 + $0x130] sm:$0xff] %vm32, %v4496
  %4561 = vst.msk [vmem:[%s242 + $0x148] sm:$0xff] %vm32, %v4497
  %4562 = vst.msk [vmem:[%s242 + $0x150] sm:$0xff] %vm32, %v4498
  %4563 = vst.msk [vmem:[%s242 + $0x168] sm:$0xff] %vm32, %v4499
  %4564 = vst.msk [vmem:[%s242 + $0x170] sm:$0xff] %vm32, %v4500
  %4565 = vst.msk [vmem:[%s242 + $0x188] sm:$0xff] %vm32, %v4501
  %4566 = vst.msk [vmem:[%s242 + $0x190] sm:$0xff] %vm32, %v4502
  %4567 = vst.msk [vmem:[%s242 + $0x1a8] sm:$0xff] %vm32, %v4503
  %4568 = vst.msk [vmem:[%s242 + $0x1b0] sm:$0xff] %vm32, %v4504
  %4569 = vst.msk [vmem:[%s242 + $0x1c8] sm:$0xff] %vm32, %v4505
  %4570 = vst.msk [vmem:[%s242 + $0x1d0] sm:$0xff] %vm32, %v4506
  %4571 = vst.msk [vmem:[%s242 + $0x1e8] sm:$0xff] %vm32, %v4507
  %4572 = vst.msk [vmem:[%s242 + $0x1f0] sm:$0xff] %vm32, %v4508
  %4573 = vst.msk [vmem:[%s242 + $0x248] sm:$0xff] %vm32, %v4509
  %4574 = vst.msk [vmem:[%s242 + $0x250] sm:$0xff] %vm32, %v4510
  %4575 = vst.msk [vmem:[%s242 + $0x268] sm:$0xff] %vm32, %v4511
  %4576 = vst.msk [vmem:[%s242 + $0x270] sm:$0xff] %vm32, %v4512
  %4577 = vst.msk [vmem:[%s242 + $0x288] sm:$0xff] %vm32, %v4513
  %4578 = vst.msk [vmem:[%s242 + $0x290] sm:$0xff] %vm32, %v4514
  %4579 = vst.msk [vmem:[%s242 + $0x2a8] sm:$0xff] %vm32, %v4515
  %4580 = vst.msk [vmem:[%s242 + $0x2b0] sm:$0xff] %vm32, %v4516
  %4581 = vst.msk [vmem:[%s242 + $0x2c8] sm:$0xff] %vm32, %v4517
  %4582 = vst.msk [vmem:[%s242 + $0x2d0] sm:$0xff] %vm32, %v4518
  %4583 = vst.msk [vmem:[%s242 + $0x2e8] sm:$0xff] %vm32, %v4519
  %4584 = vst.msk [vmem:[%s242 + $0x2f0] sm:$0xff] %vm32, %v4520
  %4585 = vst.msk [vmem:[%s242 + $0x308] sm:$0xff] %vm32, %v4521
  %4586 = vst.msk [vmem:[%s242 + $0x310] sm:$0xff] %vm32, %v4522
  %4587 = vst.msk [vmem:[%s242 + $0x328] sm:$0xff] %vm32, %v4523
  %4588 = vst.msk [vmem:[%s242 + $0x330] sm:$0xff] %vm32, %v4524
  %4589 = vst.msk [vmem:[%s242 + $0x348] sm:$0xff] %vm32, %v4525
  %4590 = vst.msk [vmem:[%s242 + $0x350] sm:$0xff] %vm32, %v4526
  %4591 = vst.msk [vmem:[%s242 + $0x368] sm:$0xff] %vm32, %v4527
  %4592 = vst.msk [vmem:[%s242 + $0x370] sm:$0xff] %vm32, %v4528
  %4593 = vst.msk [vmem:[%s242 + $0x388] sm:$0xff] %vm32, %v4529
  %4594 = vst.msk [vmem:[%s242 + $0x390] sm:$0xff] %vm32, %v4530
  %4595 = vst.msk [vmem:[%s242 + $0x3a8] sm:$0xff] %vm32, %v4531
  %4596 = vst.msk [vmem:[%s242 + $0x3b0] sm:$0xff] %vm32, %v4532
  %4597 = vst.msk [vmem:[%s242 + $0x3c8] sm:$0xff] %vm32, %v4533
  %4598 = vst.msk [vmem:[%s242 + $0x3d0] sm:$0xff] %vm32, %v4534
  %4599 = vst.msk [vmem:[%s242 + $0x3e8] sm:$0xff] %vm32, %v4535
  %4600 = vst.msk [vmem:[%s242 + $0x3f0] sm:$0xff] %vm32, %v4536
  %4601 = vst.msk [vmem:[%s242 + $0x408] sm:$0xff] %vm32, %v4537
  %4602 = vst.msk [vmem:[%s242 + $0x410] sm:$0xff] %vm32, %v4538
  %4603 = vst.msk [vmem:[%s242 + $0x428] sm:$0xff] %vm32, %v4539
  %4604 = vst.msk [vmem:[%s242 + $0x430] sm:$0xff] %vm32, %v4540
  %v4605 = vld [vmem:[#allocation2 + $0x7] sm:$0xff]
  %v4606 = vld [vmem:[#allocation2 + $0xf] sm:$0xff]
  %v4607 = vld [vmem:[#allocation2 + $0x27] sm:$0xff]
  %v4608 = vld [vmem:[#allocation2 + $0x2f] sm:$0xff]
  %v4609 = vld [vmem:[#allocation2 + $0x47] sm:$0xff]
  %v4610 = vld [vmem:[#allocation2 + $0x4f] sm:$0xff]
  %v4611 = vld [vmem:[#allocation2 + $0x67] sm:$0xff]
  %v4612 = vld [vmem:[#allocation2 + $0x6f] sm:$0xff]
  %v4613 = vld [vmem:[#allocation2 + $0x87] sm:$0xff]
  %v4614 = vld [vmem:[#allocation2 + $0x8f] sm:$0xff]
  %v4615 = vld [vmem:[#allocation2 + $0xa7] sm:$0xff]
  %v4616 = vld [vmem:[#allocation2 + $0xaf] sm:$0xff]
  %v4617 = vld [vmem:[#allocation2 + $0xc7] sm:$0xff]
  %v4618 = vld [vmem:[#allocation2 + $0xcf] sm:$0xff]
  %v4619 = vld [vmem:[#allocation2 + $0xe7] sm:$0xff]
  %v4620 = vld [vmem:[#allocation2 + $0xef] sm:$0xff]
  %v4621 = vld [vmem:[#allocation2 + $0x107] sm:$0xff]
  %v4622 = vld [vmem:[#allocation2 + $0x10f] sm:$0xff]
  %v4623 = vld [vmem:[#allocation2 + $0x127] sm:$0xff]
  %v4624 = vld [vmem:[#allocation2 + $0x12f] sm:$0xff]
  %v4625 = vld [vmem:[#allocation2 + $0x147] sm:$0xff]
  %v4626 = vld [vmem:[#allocation2 + $0x14f] sm:$0xff]
  %v4627 = vld [vmem:[#allocation2 + $0x167] sm:$0xff]
  %v4628 = vld [vmem:[#allocation2 + $0x16f] sm:$0xff]
  %v4629 = vld [vmem:[#allocation2 + $0x187] sm:$0xff]
  %v4630 = vld [vmem:[#allocation2 + $0x18f] sm:$0xff]
  %v4631 = vld [vmem:[#allocation2 + $0x1a7] sm:$0xff]
  %v4632 = vld [vmem:[#allocation2 + $0x1af] sm:$0xff]
  %v4633 = vld [vmem:[#allocation2 + $0x1c7] sm:$0xff]
  %v4634 = vld [vmem:[#allocation2 + $0x1cf] sm:$0xff]
  %v4635 = vld [vmem:[#allocation2 + $0x1e7] sm:$0xff]
  %v4636 = vld [vmem:[#allocation2 + $0x1ef] sm:$0xff]
  %v4637 = vld [vmem:[#allocation2 + $0x247] sm:$0xff]
  %v4638 = vld [vmem:[#allocation2 + $0x24f] sm:$0xff]
  %v4639 = vld [vmem:[#allocation2 + $0x267] sm:$0xff]
  %v4640 = vld [vmem:[#allocation2 + $0x26f] sm:$0xff]
  %v4641 = vld [vmem:[#allocation2 + $0x287] sm:$0xff]
  %v4642 = vld [vmem:[#allocation2 + $0x28f] sm:$0xff]
  %v4643 = vld [vmem:[#allocation2 + $0x2a7] sm:$0xff]
  %v4644 = vld [vmem:[#allocation2 + $0x2af] sm:$0xff]
  %v4645 = vld [vmem:[#allocation2 + $0x2c7] sm:$0xff]
  %v4646 = vld [vmem:[#allocation2 + $0x2cf] sm:$0xff]
  %v4647 = vld [vmem:[#allocation2 + $0x2e7] sm:$0xff]
  %v4648 = vld [vmem:[#allocation2 + $0x2ef] sm:$0xff]
  %v4649 = vld [vmem:[#allocation2 + $0x307] sm:$0xff]
  %v4650 = vld [vmem:[#allocation2 + $0x30f] sm:$0xff]
  %v4651 = vld [vmem:[#allocation2 + $0x327] sm:$0xff]
  %v4652 = vld [vmem:[#allocation2 + $0x32f] sm:$0xff]
  %v4653 = vld [vmem:[#allocation2 + $0x347] sm:$0xff]
  %v4654 = vld [vmem:[#allocation2 + $0x34f] sm:$0xff]
  %v4655 = vld [vmem:[#allocation2 + $0x367] sm:$0xff]
  %v4656 = vld [vmem:[#allocation2 + $0x36f] sm:$0xff]
  %v4657 = vld [vmem:[#allocation2 + $0x387] sm:$0xff]
  %v4658 = vld [vmem:[#allocation2 + $0x38f] sm:$0xff]
  %v4659 = vld [vmem:[#allocation2 + $0x3a7] sm:$0xff]
  %v4660 = vld [vmem:[#allocation2 + $0x3af] sm:$0xff]
  %v4661 = vld [vmem:[#allocation2 + $0x3c7] sm:$0xff]
  %v4662 = vld [vmem:[#allocation2 + $0x3cf] sm:$0xff]
  %v4663 = vld [vmem:[#allocation2 + $0x3e7] sm:$0xff]
  %v4664 = vld [vmem:[#allocation2 + $0x3ef] sm:$0xff]
  %v4665 = vld [vmem:[#allocation2 + $0x407] sm:$0xff]
  %v4666 = vld [vmem:[#allocation2 + $0x40f] sm:$0xff]
  %v4667 = vld [vmem:[#allocation2 + $0x427] sm:$0xff]
  %v4668 = vld [vmem:[#allocation2 + $0x42f] sm:$0xff]
  %v4669 = vld [vmem:[#allocation2 + $0x8] sm:$0xff]
  %v4670 = vld [vmem:[#allocation2 + $0x10] sm:$0xff]
  %v4671 = vld [vmem:[#allocation2 + $0x28] sm:$0xff]
  %v4672 = vld [vmem:[#allocation2 + $0x30] sm:$0xff]
  %v4673 = vld [vmem:[#allocation2 + $0x48] sm:$0xff]
  %v4674 = vld [vmem:[#allocation2 + $0x50] sm:$0xff]
  %v4675 = vld [vmem:[#allocation2 + $0x68] sm:$0xff]
  %v4676 = vld [vmem:[#allocation2 + $0x70] sm:$0xff]
  %v4677 = vld [vmem:[#allocation2 + $0x88] sm:$0xff]
  %v4678 = vld [vmem:[#allocation2 + $0x90] sm:$0xff]
  %v4679 = vld [vmem:[#allocation2 + $0xa8] sm:$0xff]
  %v4680 = vld [vmem:[#allocation2 + $0xb0] sm:$0xff]
  %v4681 = vld [vmem:[#allocation2 + $0xc8] sm:$0xff]
  %v4682 = vld [vmem:[#allocation2 + $0xd0] sm:$0xff]
  %v4683 = vld [vmem:[#allocation2 + $0xe8] sm:$0xff]
  %v4684 = vld [vmem:[#allocation2 + $0xf0] sm:$0xff]
  %v4685 = vld [vmem:[#allocation2 + $0x108] sm:$0xff]
  %v4686 = vld [vmem:[#allocation2 + $0x110] sm:$0xff]
  %v4687 = vld [vmem:[#allocation2 + $0x128] sm:$0xff]
  %v4688 = vld [vmem:[#allocation2 + $0x130] sm:$0xff]
  %v4689 = vld [vmem:[#allocation2 + $0x148] sm:$0xff]
  %v4690 = vld [vmem:[#allocation2 + $0x150] sm:$0xff]
  %v4691 = vld [vmem:[#allocation2 + $0x168] sm:$0xff]
  %v4692 = vld [vmem:[#allocation2 + $0x170] sm:$0xff]
  %v4693 = vld [vmem:[#allocation2 + $0x188] sm:$0xff]
  %v4694 = vld [vmem:[#allocation2 + $0x190] sm:$0xff]
  %v4695 = vld [vmem:[#allocation2 + $0x1a8] sm:$0xff]
  %v4696 = vld [vmem:[#allocation2 + $0x1b0] sm:$0xff]
  %v4697 = vld [vmem:[#allocation2 + $0x1c8] sm:$0xff]
  %v4698 = vld [vmem:[#allocation2 + $0x1d0] sm:$0xff]
  %v4699 = vld [vmem:[#allocation2 + $0x1e8] sm:$0xff]
  %v4700 = vld [vmem:[#allocation2 + $0x1f0] sm:$0xff]
  %v4701 = vld [vmem:[#allocation2 + $0x248] sm:$0xff]
  %v4702 = vld [vmem:[#allocation2 + $0x250] sm:$0xff]
  %v4703 = vld [vmem:[#allocation2 + $0x268] sm:$0xff]
  %v4704 = vld [vmem:[#allocation2 + $0x270] sm:$0xff]
  %v4705 = vld [vmem:[#allocation2 + $0x288] sm:$0xff]
  %v4706 = vld [vmem:[#allocation2 + $0x290] sm:$0xff]
  %v4707 = vld [vmem:[#allocation2 + $0x2a8] sm:$0xff]
  %v4708 = vld [vmem:[#allocation2 + $0x2b0] sm:$0xff]
  %v4709 = vld [vmem:[#allocation2 + $0x2c8] sm:$0xff]
  %v4710 = vld [vmem:[#allocation2 + $0x2d0] sm:$0xff]
  %v4711 = vld [vmem:[#allocation2 + $0x2e8] sm:$0xff]
  %v4712 = vld [vmem:[#allocation2 + $0x2f0] sm:$0xff]
  %v4713 = vld [vmem:[#allocation2 + $0x308] sm:$0xff]
  %v4714 = vld [vmem:[#allocation2 + $0x310] sm:$0xff]
  %v4715 = vld [vmem:[#allocation2 + $0x328] sm:$0xff]
  %v4716 = vld [vmem:[#allocation2 + $0x330] sm:$0xff]
  %v4717 = vld [vmem:[#allocation2 + $0x348] sm:$0xff]
  %v4718 = vld [vmem:[#allocation2 + $0x350] sm:$0xff]
  %v4719 = vld [vmem:[#allocation2 + $0x368] sm:$0xff]
  %v4720 = vld [vmem:[#allocation2 + $0x370] sm:$0xff]
  %v4721 = vld [vmem:[#allocation2 + $0x388] sm:$0xff]
  %v4722 = vld [vmem:[#allocation2 + $0x390] sm:$0xff]
  %v4723 = vld [vmem:[#allocation2 + $0x3a8] sm:$0xff]
  %v4724 = vld [vmem:[#allocation2 + $0x3b0] sm:$0xff]
  %v4725 = vld [vmem:[#allocation2 + $0x3c8] sm:$0xff]
  %v4726 = vld [vmem:[#allocation2 + $0x3d0] sm:$0xff]
  %v4727 = vld [vmem:[#allocation2 + $0x3e8] sm:$0xff]
  %v4728 = vld [vmem:[#allocation2 + $0x3f0] sm:$0xff]
  %v4729 = vld [vmem:[#allocation2 + $0x408] sm:$0xff]
  %v4730 = vld [vmem:[#allocation2 + $0x410] sm:$0xff]
  %v4731 = vld [vmem:[#allocation2 + $0x428] sm:$0xff]
  %v4732 = vld [vmem:[#allocation2 + $0x430] sm:$0xff]
  %v4733 = vld [vmem:[#allocation2 + $0x9] sm:$0xff]
  %v4734 = vld [vmem:[#allocation2 + $0x11] sm:$0xff]
  %v4735 = vld [vmem:[#allocation2 + $0x29] sm:$0xff]
  %v4736 = vld [vmem:[#allocation2 + $0x31] sm:$0xff]
  %v4737 = vld [vmem:[#allocation2 + $0x49] sm:$0xff]
  %v4738 = vld [vmem:[#allocation2 + $0x51] sm:$0xff]
  %v4739 = vld [vmem:[#allocation2 + $0x69] sm:$0xff]
  %v4740 = vld [vmem:[#allocation2 + $0x71] sm:$0xff]
  %v4741 = vld [vmem:[#allocation2 + $0x89] sm:$0xff]
  %v4742 = vld [vmem:[#allocation2 + $0x91] sm:$0xff]
  %v4743 = vld [vmem:[#allocation2 + $0xa9] sm:$0xff]
  %v4744 = vld [vmem:[#allocation2 + $0xb1] sm:$0xff]
  %v4745 = vld [vmem:[#allocation2 + $0xc9] sm:$0xff]
  %v4746 = vld [vmem:[#allocation2 + $0xd1] sm:$0xff]
  %v4747 = vld [vmem:[#allocation2 + $0xe9] sm:$0xff]
  %v4748 = vld [vmem:[#allocation2 + $0xf1] sm:$0xff]
  %v4749 = vld [vmem:[#allocation2 + $0x109] sm:$0xff]
  %v4750 = vld [vmem:[#allocation2 + $0x111] sm:$0xff]
  %v4751 = vld [vmem:[#allocation2 + $0x129] sm:$0xff]
  %v4752 = vld [vmem:[#allocation2 + $0x131] sm:$0xff]
  %v4753 = vld [vmem:[#allocation2 + $0x149] sm:$0xff]
  %v4754 = vld [vmem:[#allocation2 + $0x151] sm:$0xff]
  %v4755 = vld [vmem:[#allocation2 + $0x169] sm:$0xff]
  %v4756 = vld [vmem:[#allocation2 + $0x171] sm:$0xff]
  %v4757 = vld [vmem:[#allocation2 + $0x189] sm:$0xff]
  %v4758 = vld [vmem:[#allocation2 + $0x191] sm:$0xff]
  %v4759 = vld [vmem:[#allocation2 + $0x1a9] sm:$0xff]
  %v4760 = vld [vmem:[#allocation2 + $0x1b1] sm:$0xff]
  %v4761 = vld [vmem:[#allocation2 + $0x1c9] sm:$0xff]
  %v4762 = vld [vmem:[#allocation2 + $0x1d1] sm:$0xff]
  %v4763 = vld [vmem:[#allocation2 + $0x1e9] sm:$0xff]
  %v4764 = vld [vmem:[#allocation2 + $0x1f1] sm:$0xff]
  %v4765 = vld [vmem:[#allocation2 + $0x249] sm:$0xff]
  %v4766 = vld [vmem:[#allocation2 + $0x251] sm:$0xff]
  %v4767 = vld [vmem:[#allocation2 + $0x269] sm:$0xff]
  %v4768 = vld [vmem:[#allocation2 + $0x271] sm:$0xff]
  %v4769 = vld [vmem:[#allocation2 + $0x289] sm:$0xff]
  %v4770 = vld [vmem:[#allocation2 + $0x291] sm:$0xff]
  %v4771 = vld [vmem:[#allocation2 + $0x2a9] sm:$0xff]
  %v4772 = vld [vmem:[#allocation2 + $0x2b1] sm:$0xff]
  %v4773 = vld [vmem:[#allocation2 + $0x2c9] sm:$0xff]
  %v4774 = vld [vmem:[#allocation2 + $0x2d1] sm:$0xff]
  %v4775 = vld [vmem:[#allocation2 + $0x2e9] sm:$0xff]
  %v4776 = vld [vmem:[#allocation2 + $0x2f1] sm:$0xff]
  %v4777 = vld [vmem:[#allocation2 + $0x309] sm:$0xff]
  %v4778 = vld [vmem:[#allocation2 + $0x311] sm:$0xff]
  %v4779 = vld [vmem:[#allocation2 + $0x329] sm:$0xff]
  %v4780 = vld [vmem:[#allocation2 + $0x331] sm:$0xff]
  %v4781 = vld [vmem:[#allocation2 + $0x349] sm:$0xff]
  %v4782 = vld [vmem:[#allocation2 + $0x351] sm:$0xff]
  %v4783 = vld [vmem:[#allocation2 + $0x369] sm:$0xff]
  %v4784 = vld [vmem:[#allocation2 + $0x371] sm:$0xff]
  %v4785 = vld [vmem:[#allocation2 + $0x389] sm:$0xff]
  %v4786 = vld [vmem:[#allocation2 + $0x391] sm:$0xff]
  %v4787 = vld [vmem:[#allocation2 + $0x3a9] sm:$0xff]
  %v4788 = vld [vmem:[#allocation2 + $0x3b1] sm:$0xff]
  %v4789 = vld [vmem:[#allocation2 + $0x3c9] sm:$0xff]
  %v4790 = vld [vmem:[#allocation2 + $0x3d1] sm:$0xff]
  %v4791 = vld [vmem:[#allocation2 + $0x3e9] sm:$0xff]
  %v4792 = vld [vmem:[#allocation2 + $0x3f1] sm:$0xff]
  %v4793 = vld [vmem:[#allocation2 + $0x409] sm:$0xff]
  %v4794 = vld [vmem:[#allocation2 + $0x411] sm:$0xff]
  %v4795 = vld [vmem:[#allocation2 + $0x429] sm:$0xff]
  %v4796 = vld [vmem:[#allocation2 + $0x431] sm:$0xff]
  %v4797 = vld [vmem:[%s242 + $0x7] sm:$0xff]
  %v4798 = vld [vmem:[%s242 + $0xf] sm:$0xff]
  %v4799 = vld [vmem:[%s242 + $0x27] sm:$0xff]
  %v4800 = vld [vmem:[%s242 + $0x2f] sm:$0xff]
  %v4801 = vld [vmem:[%s242 + $0x47] sm:$0xff]
  %v4802 = vld [vmem:[%s242 + $0x4f] sm:$0xff]
  %v4803 = vld [vmem:[%s242 + $0x67] sm:$0xff]
  %v4804 = vld [vmem:[%s242 + $0x6f] sm:$0xff]
  %v4805 = vld [vmem:[%s242 + $0x87] sm:$0xff]
  %v4806 = vld [vmem:[%s242 + $0x8f] sm:$0xff]
  %v4807 = vld [vmem:[%s242 + $0xa7] sm:$0xff]
  %v4808 = vld [vmem:[%s242 + $0xaf] sm:$0xff]
  %v4809 = vld [vmem:[%s242 + $0xc7] sm:$0xff]
  %v4810 = vld [vmem:[%s242 + $0xcf] sm:$0xff]
  %v4811 = vld [vmem:[%s242 + $0xe7] sm:$0xff]
  %v4812 = vld [vmem:[%s242 + $0xef] sm:$0xff]
  %v4813 = vld [vmem:[%s242 + $0x107] sm:$0xff]
  %v4814 = vld [vmem:[%s242 + $0x10f] sm:$0xff]
  %v4815 = vld [vmem:[%s242 + $0x127] sm:$0xff]
  %v4816 = vld [vmem:[%s242 + $0x12f] sm:$0xff]
  %v4817 = vld [vmem:[%s242 + $0x147] sm:$0xff]
  %v4818 = vld [vmem:[%s242 + $0x14f] sm:$0xff]
  %v4819 = vld [vmem:[%s242 + $0x167] sm:$0xff]
  %v4820 = vld [vmem:[%s242 + $0x16f] sm:$0xff]
  %v4821 = vld [vmem:[%s242 + $0x187] sm:$0xff]
  %v4822 = vld [vmem:[%s242 + $0x18f] sm:$0xff]
  %v4823 = vld [vmem:[%s242 + $0x1a7] sm:$0xff]
  %v4824 = vld [vmem:[%s242 + $0x1af] sm:$0xff]
  %v4825 = vld [vmem:[%s242 + $0x1c7] sm:$0xff]
  %v4826 = vld [vmem:[%s242 + $0x1cf] sm:$0xff]
  %v4827 = vld [vmem:[%s242 + $0x1e7] sm:$0xff]
  %v4828 = vld [vmem:[%s242 + $0x1ef] sm:$0xff]
  %v4829 = vld [vmem:[%s242 + $0x247] sm:$0xff]
  %v4830 = vld [vmem:[%s242 + $0x24f] sm:$0xff]
  %v4831 = vld [vmem:[%s242 + $0x267] sm:$0xff]
  %v4832 = vld [vmem:[%s242 + $0x26f] sm:$0xff]
  %v4833 = vld [vmem:[%s242 + $0x287] sm:$0xff]
  %v4834 = vld [vmem:[%s242 + $0x28f] sm:$0xff]
  %v4835 = vld [vmem:[%s242 + $0x2a7] sm:$0xff]
  %v4836 = vld [vmem:[%s242 + $0x2af] sm:$0xff]
  %v4837 = vld [vmem:[%s242 + $0x2c7] sm:$0xff]
  %v4838 = vld [vmem:[%s242 + $0x2cf] sm:$0xff]
  %v4839 = vld [vmem:[%s242 + $0x2e7] sm:$0xff]
  %v4840 = vld [vmem:[%s242 + $0x2ef] sm:$0xff]
  %v4841 = vld [vmem:[%s242 + $0x307] sm:$0xff]
  %v4842 = vld [vmem:[%s242 + $0x30f] sm:$0xff]
  %v4843 = vld [vmem:[%s242 + $0x327] sm:$0xff]
  %v4844 = vld [vmem:[%s242 + $0x32f] sm:$0xff]
  %v4845 = vld [vmem:[%s242 + $0x347] sm:$0xff]
  %v4846 = vld [vmem:[%s242 + $0x34f] sm:$0xff]
  %v4847 = vld [vmem:[%s242 + $0x367] sm:$0xff]
  %v4848 = vld [vmem:[%s242 + $0x36f] sm:$0xff]
  %v4849 = vld [vmem:[%s242 + $0x387] sm:$0xff]
  %v4850 = vld [vmem:[%s242 + $0x38f] sm:$0xff]
  %v4851 = vld [vmem:[%s242 + $0x3a7] sm:$0xff]
  %v4852 = vld [vmem:[%s242 + $0x3af] sm:$0xff]
  %v4853 = vld [vmem:[%s242 + $0x3c7] sm:$0xff]
  %v4854 = vld [vmem:[%s242 + $0x3cf] sm:$0xff]
  %v4855 = vld [vmem:[%s242 + $0x3e7] sm:$0xff]
  %v4856 = vld [vmem:[%s242 + $0x3ef] sm:$0xff]
  %v4857 = vld [vmem:[%s242 + $0x407] sm:$0xff]
  %v4858 = vld [vmem:[%s242 + $0x40f] sm:$0xff]
  %v4859 = vld [vmem:[%s242 + $0x427] sm:$0xff]
  %v4860 = vld [vmem:[%s242 + $0x42f] sm:$0xff]
  %v4861 = vld [vmem:[%s242 + $0x8] sm:$0xff]
  %v4862 = vld [vmem:[%s242 + $0x10] sm:$0xff]
  %v4863 = vld [vmem:[%s242 + $0x28] sm:$0xff]
  %v4864 = vld [vmem:[%s242 + $0x30] sm:$0xff]
  %v4865 = vld [vmem:[%s242 + $0x48] sm:$0xff]
  %v4866 = vld [vmem:[%s242 + $0x50] sm:$0xff]
  %v4867 = vld [vmem:[%s242 + $0x68] sm:$0xff]
  %v4868 = vld [vmem:[%s242 + $0x70] sm:$0xff]
  %v4869 = vld [vmem:[%s242 + $0x88] sm:$0xff]
  %v4870 = vld [vmem:[%s242 + $0x90] sm:$0xff]
  %v4871 = vld [vmem:[%s242 + $0xa8] sm:$0xff]
  %v4872 = vld [vmem:[%s242 + $0xb0] sm:$0xff]
  %v4873 = vld [vmem:[%s242 + $0xc8] sm:$0xff]
  %v4874 = vld [vmem:[%s242 + $0xd0] sm:$0xff]
  %v4875 = vld [vmem:[%s242 + $0xe8] sm:$0xff]
  %v4876 = vld [vmem:[%s242 + $0xf0] sm:$0xff]
  %v4877 = vld [vmem:[%s242 + $0x108] sm:$0xff]
  %v4878 = vld [vmem:[%s242 + $0x110] sm:$0xff]
  %v4879 = vld [vmem:[%s242 + $0x128] sm:$0xff]
  %v4880 = vld [vmem:[%s242 + $0x130] sm:$0xff]
  %v4881 = vld [vmem:[%s242 + $0x148] sm:$0xff]
  %v4882 = vld [vmem:[%s242 + $0x150] sm:$0xff]
  %v4883 = vld [vmem:[%s242 + $0x168] sm:$0xff]
  %v4884 = vld [vmem:[%s242 + $0x170] sm:$0xff]
  %v4885 = vld [vmem:[%s242 + $0x188] sm:$0xff]
  %v4886 = vld [vmem:[%s242 + $0x190] sm:$0xff]
  %v4887 = vld [vmem:[%s242 + $0x1a8] sm:$0xff]
  %v4888 = vld [vmem:[%s242 + $0x1b0] sm:$0xff]
  %v4889 = vld [vmem:[%s242 + $0x1c8] sm:$0xff]
  %v4890 = vld [vmem:[%s242 + $0x1d0] sm:$0xff]
  %v4891 = vld [vmem:[%s242 + $0x1e8] sm:$0xff]
  %v4892 = vld [vmem:[%s242 + $0x1f0] sm:$0xff]
  %v4893 = vld [vmem:[%s242 + $0x248] sm:$0xff]
  %v4894 = vld [vmem:[%s242 + $0x250] sm:$0xff]
  %v4895 = vld [vmem:[%s242 + $0x268] sm:$0xff]
  %v4896 = vld [vmem:[%s242 + $0x270] sm:$0xff]
  %v4897 = vld [vmem:[%s242 + $0x288] sm:$0xff]
  %v4898 = vld [vmem:[%s242 + $0x290] sm:$0xff]
  %v4899 = vld [vmem:[%s242 + $0x2a8] sm:$0xff]
  %v4900 = vld [vmem:[%s242 + $0x2b0] sm:$0xff]
  %v4901 = vld [vmem:[%s242 + $0x2c8] sm:$0xff]
  %v4902 = vld [vmem:[%s242 + $0x2d0] sm:$0xff]
  %v4903 = vld [vmem:[%s242 + $0x2e8] sm:$0xff]
  %v4904 = vld [vmem:[%s242 + $0x2f0] sm:$0xff]
  %v4905 = vld [vmem:[%s242 + $0x308] sm:$0xff]
  %v4906 = vld [vmem:[%s242 + $0x310] sm:$0xff]
  %v4907 = vld [vmem:[%s242 + $0x328] sm:$0xff]
  %v4908 = vld [vmem:[%s242 + $0x330] sm:$0xff]
  %v4909 = vld [vmem:[%s242 + $0x348] sm:$0xff]
  %v4910 = vld [vmem:[%s242 + $0x350] sm:$0xff]
  %v4911 = vld [vmem:[%s242 + $0x368] sm:$0xff]
  %v4912 = vld [vmem:[%s242 + $0x370] sm:$0xff]
  %v4913 = vld [vmem:[%s242 + $0x388] sm:$0xff]
  %v4914 = vld [vmem:[%s242 + $0x390] sm:$0xff]
  %v4915 = vld [vmem:[%s242 + $0x3a8] sm:$0xff]
  %v4916 = vld [vmem:[%s242 + $0x3b0] sm:$0xff]
  %v4917 = vld [vmem:[%s242 + $0x3c8] sm:$0xff]
  %v4918 = vld [vmem:[%s242 + $0x3d0] sm:$0xff]
  %v4919 = vld [vmem:[%s242 + $0x3e8] sm:$0xff]
  %v4920 = vld [vmem:[%s242 + $0x3f0] sm:$0xff]
  %v4921 = vld [vmem:[%s242 + $0x408] sm:$0xff]
  %v4922 = vld [vmem:[%s242 + $0x410] sm:$0xff]
  %v4923 = vld [vmem:[%s242 + $0x428] sm:$0xff]
  %v4924 = vld [vmem:[%s242 + $0x430] sm:$0xff]
  %v4925 = vld [vmem:[%s242 + $0x9] sm:$0xff]
  %v4926 = vld [vmem:[%s242 + $0x11] sm:$0xff]
  %v4927 = vld [vmem:[%s242 + $0x29] sm:$0xff]
  %v4928 = vld [vmem:[%s242 + $0x31] sm:$0xff]
  %v4929 = vld [vmem:[%s242 + $0x49] sm:$0xff]
  %v4930 = vld [vmem:[%s242 + $0x51] sm:$0xff]
  %v4931 = vld [vmem:[%s242 + $0x69] sm:$0xff]
  %v4932 = vld [vmem:[%s242 + $0x71] sm:$0xff]
  %v4933 = vld [vmem:[%s242 + $0x89] sm:$0xff]
  %v4934 = vld [vmem:[%s242 + $0x91] sm:$0xff]
  %v4935 = vld [vmem:[%s242 + $0xa9] sm:$0xff]
  %v4936 = vld [vmem:[%s242 + $0xb1] sm:$0xff]
  %v4937 = vld [vmem:[%s242 + $0xc9] sm:$0xff]
  %v4938 = vld [vmem:[%s242 + $0xd1] sm:$0xff]
  %v4939 = vld [vmem:[%s242 + $0xe9] sm:$0xff]
  %v4940 = vld [vmem:[%s242 + $0xf1] sm:$0xff]
  %v4941 = vld [vmem:[%s242 + $0x109] sm:$0xff]
  %v4942 = vld [vmem:[%s242 + $0x111] sm:$0xff]
  %v4943 = vld [vmem:[%s242 + $0x129] sm:$0xff]
  %v4944 = vld [vmem:[%s242 + $0x131] sm:$0xff]
  %v4945 = vld [vmem:[%s242 + $0x149] sm:$0xff]
  %v4946 = vld [vmem:[%s242 + $0x151] sm:$0xff]
  %v4947 = vld [vmem:[%s242 + $0x169] sm:$0xff]
  %v4948 = vld [vmem:[%s242 + $0x171] sm:$0xff]
  %v4949 = vld [vmem:[%s242 + $0x189] sm:$0xff]
  %v4950 = vld [vmem:[%s242 + $0x191] sm:$0xff]
  %v4951 = vld [vmem:[%s242 + $0x1a9] sm:$0xff]
  %v4952 = vld [vmem:[%s242 + $0x1b1] sm:$0xff]
  %v4953 = vld [vmem:[%s242 + $0x1c9] sm:$0xff]
  %v4954 = vld [vmem:[%s242 + $0x1d1] sm:$0xff]
  %v4955 = vld [vmem:[%s242 + $0x1e9] sm:$0xff]
  %v4956 = vld [vmem:[%s242 + $0x1f1] sm:$0xff]
  %v4957 = vld [vmem:[%s242 + $0x249] sm:$0xff]
  %v4958 = vld [vmem:[%s242 + $0x251] sm:$0xff]
  %v4959 = vld [vmem:[%s242 + $0x269] sm:$0xff]
  %v4960 = vld [vmem:[%s242 + $0x271] sm:$0xff]
  %v4961 = vld [vmem:[%s242 + $0x289] sm:$0xff]
  %v4962 = vld [vmem:[%s242 + $0x291] sm:$0xff]
  %v4963 = vld [vmem:[%s242 + $0x2a9] sm:$0xff]
  %v4964 = vld [vmem:[%s242 + $0x2b1] sm:$0xff]
  %v4965 = vld [vmem:[%s242 + $0x2c9] sm:$0xff]
  %v4966 = vld [vmem:[%s242 + $0x2d1] sm:$0xff]
  %v4967 = vld [vmem:[%s242 + $0x2e9] sm:$0xff]
  %v4968 = vld [vmem:[%s242 + $0x2f1] sm:$0xff]
  %v4969 = vld [vmem:[%s242 + $0x309] sm:$0xff]
  %v4970 = vld [vmem:[%s242 + $0x311] sm:$0xff]
  %v4971 = vld [vmem:[%s242 + $0x329] sm:$0xff]
  %v4972 = vld [vmem:[%s242 + $0x331] sm:$0xff]
  %v4973 = vld [vmem:[%s242 + $0x349] sm:$0xff]
  %v4974 = vld [vmem:[%s242 + $0x351] sm:$0xff]
  %v4975 = vld [vmem:[%s242 + $0x369] sm:$0xff]
  %v4976 = vld [vmem:[%s242 + $0x371] sm:$0xff]
  %v4977 = vld [vmem:[%s242 + $0x389] sm:$0xff]
  %v4978 = vld [vmem:[%s242 + $0x391] sm:$0xff]
  %v4979 = vld [vmem:[%s242 + $0x3a9] sm:$0xff]
  %v4980 = vld [vmem:[%s242 + $0x3b1] sm:$0xff]
  %v4981 = vld [vmem:[%s242 + $0x3c9] sm:$0xff]
  %v4982 = vld [vmem:[%s242 + $0x3d1] sm:$0xff]
  %v4983 = vld [vmem:[%s242 + $0x3e9] sm:$0xff]
  %v4984 = vld [vmem:[%s242 + $0x3f1] sm:$0xff]
  %v4985 = vld [vmem:[%s242 + $0x409] sm:$0xff]
  %v4986 = vld [vmem:[%s242 + $0x411] sm:$0xff]
  %v4987 = vld [vmem:[%s242 + $0x429] sm:$0xff]
  %v4988 = vld [vmem:[%s242 + $0x431] sm:$0xff]
  %v4989 = vld [vmem:[%s692 + $0x7] sm:$0xff]
  %v4990 = vld [vmem:[%s692 + $0xf] sm:$0xff]
  %v4991 = vld [vmem:[%s692 + $0x27] sm:$0xff]
  %v4992 = vld [vmem:[%s692 + $0x2f] sm:$0xff]
  %v4993 = vld [vmem:[%s692 + $0x47] sm:$0xff]
  %v4994 = vld [vmem:[%s692 + $0x4f] sm:$0xff]
  %v4995 = vld [vmem:[%s692 + $0x67] sm:$0xff]
  %v4996 = vld [vmem:[%s692 + $0x6f] sm:$0xff]
  %v4997 = vld [vmem:[%s692 + $0x87] sm:$0xff]
  %v4998 = vld [vmem:[%s692 + $0x8f] sm:$0xff]
  %v4999 = vld [vmem:[%s692 + $0xa7] sm:$0xff]
  %v5000 = vld [vmem:[%s692 + $0xaf] sm:$0xff]
  %v5001 = vld [vmem:[%s692 + $0xc7] sm:$0xff]
  %v5002 = vld [vmem:[%s692 + $0xcf] sm:$0xff]
  %v5003 = vld [vmem:[%s692 + $0xe7] sm:$0xff]
  %v5004 = vld [vmem:[%s692 + $0xef] sm:$0xff]
  %v5005 = vld [vmem:[%s692 + $0x107] sm:$0xff]
  %v5006 = vld [vmem:[%s692 + $0x10f] sm:$0xff]
  %v5007 = vld [vmem:[%s692 + $0x127] sm:$0xff]
  %v5008 = vld [vmem:[%s692 + $0x12f] sm:$0xff]
  %v5009 = vld [vmem:[%s692 + $0x147] sm:$0xff]
  %v5010 = vld [vmem:[%s692 + $0x14f] sm:$0xff]
  %v5011 = vld [vmem:[%s692 + $0x167] sm:$0xff]
  %v5012 = vld [vmem:[%s692 + $0x16f] sm:$0xff]
  %v5013 = vld [vmem:[%s692 + $0x187] sm:$0xff]
  %v5014 = vld [vmem:[%s692 + $0x18f] sm:$0xff]
  %v5015 = vld [vmem:[%s692 + $0x1a7] sm:$0xff]
  %v5016 = vld [vmem:[%s692 + $0x1af] sm:$0xff]
  %v5017 = vld [vmem:[%s692 + $0x1c7] sm:$0xff]
  %v5018 = vld [vmem:[%s692 + $0x1cf] sm:$0xff]
  %v5019 = vld [vmem:[%s692 + $0x1e7] sm:$0xff]
  %v5020 = vld [vmem:[%s692 + $0x1ef] sm:$0xff]
  %v5021 = vld [vmem:[%s692 + $0x247] sm:$0xff]
  %v5022 = vld [vmem:[%s692 + $0x24f] sm:$0xff]
  %v5023 = vld [vmem:[%s692 + $0x267] sm:$0xff]
  %v5024 = vld [vmem:[%s692 + $0x26f] sm:$0xff]
  %v5025 = vld [vmem:[%s692 + $0x287] sm:$0xff]
  %v5026 = vld [vmem:[%s692 + $0x28f] sm:$0xff]
  %v5027 = vld [vmem:[%s692 + $0x2a7] sm:$0xff]
  %v5028 = vld [vmem:[%s692 + $0x2af] sm:$0xff]
  %v5029 = vld [vmem:[%s692 + $0x2c7] sm:$0xff]
  %v5030 = vld [vmem:[%s692 + $0x2cf] sm:$0xff]
  %v5031 = vld [vmem:[%s692 + $0x2e7] sm:$0xff]
  %v5032 = vld [vmem:[%s692 + $0x2ef] sm:$0xff]
  %v5033 = vld [vmem:[%s692 + $0x307] sm:$0xff]
  %v5034 = vld [vmem:[%s692 + $0x30f] sm:$0xff]
  %v5035 = vld [vmem:[%s692 + $0x327] sm:$0xff]
  %v5036 = vld [vmem:[%s692 + $0x32f] sm:$0xff]
  %v5037 = vld [vmem:[%s692 + $0x347] sm:$0xff]
  %v5038 = vld [vmem:[%s692 + $0x34f] sm:$0xff]
  %v5039 = vld [vmem:[%s692 + $0x367] sm:$0xff]
  %v5040 = vld [vmem:[%s692 + $0x36f] sm:$0xff]
  %v5041 = vld [vmem:[%s692 + $0x387] sm:$0xff]
  %v5042 = vld [vmem:[%s692 + $0x38f] sm:$0xff]
  %v5043 = vld [vmem:[%s692 + $0x3a7] sm:$0xff]
  %v5044 = vld [vmem:[%s692 + $0x3af] sm:$0xff]
  %v5045 = vld [vmem:[%s692 + $0x3c7] sm:$0xff]
  %v5046 = vld [vmem:[%s692 + $0x3cf] sm:$0xff]
  %v5047 = vld [vmem:[%s692 + $0x3e7] sm:$0xff]
  %v5048 = vld [vmem:[%s692 + $0x3ef] sm:$0xff]
  %v5049 = vld [vmem:[%s692 + $0x407] sm:$0xff]
  %v5050 = vld [vmem:[%s692 + $0x40f] sm:$0xff]
  %v5051 = vld [vmem:[%s692 + $0x427] sm:$0xff]
  %v5052 = vld [vmem:[%s692 + $0x42f] sm:$0xff]
  %v5053 = vld [vmem:[%s692 + $0x8] sm:$0xff]
  %v5054 = vld [vmem:[%s692 + $0x10] sm:$0xff]
  %v5055 = vld [vmem:[%s692 + $0x28] sm:$0xff]
  %v5056 = vld [vmem:[%s692 + $0x30] sm:$0xff]
  %v5057 = vld [vmem:[%s692 + $0x48] sm:$0xff]
  %v5058 = vld [vmem:[%s692 + $0x50] sm:$0xff]
  %v5059 = vld [vmem:[%s692 + $0x68] sm:$0xff]
  %v5060 = vld [vmem:[%s692 + $0x70] sm:$0xff]
  %v5061 = vld [vmem:[%s692 + $0x88] sm:$0xff]
  %v5062 = vld [vmem:[%s692 + $0x90] sm:$0xff]
  %v5063 = vld [vmem:[%s692 + $0xa8] sm:$0xff]
  %v5064 = vld [vmem:[%s692 + $0xb0] sm:$0xff]
  %v5065 = vld [vmem:[%s692 + $0xc8] sm:$0xff]
  %v5066 = vld [vmem:[%s692 + $0xd0] sm:$0xff]
  %v5067 = vld [vmem:[%s692 + $0xe8] sm:$0xff]
  %v5068 = vld [vmem:[%s692 + $0xf0] sm:$0xff]
  %v5069 = vld [vmem:[%s692 + $0x108] sm:$0xff]
  %v5070 = vld [vmem:[%s692 + $0x110] sm:$0xff]
  %v5071 = vld [vmem:[%s692 + $0x128] sm:$0xff]
  %v5072 = vld [vmem:[%s692 + $0x130] sm:$0xff]
  %v5073 = vld [vmem:[%s692 + $0x148] sm:$0xff]
  %v5074 = vld [vmem:[%s692 + $0x150] sm:$0xff]
  %v5075 = vld [vmem:[%s692 + $0x168] sm:$0xff]
  %v5076 = vld [vmem:[%s692 + $0x170] sm:$0xff]
  %v5077 = vld [vmem:[%s692 + $0x188] sm:$0xff]
  %v5078 = vld [vmem:[%s692 + $0x190] sm:$0xff]
  %v5079 = vld [vmem:[%s692 + $0x1a8] sm:$0xff]
  %v5080 = vld [vmem:[%s692 + $0x1b0] sm:$0xff]
  %v5081 = vld [vmem:[%s692 + $0x1c8] sm:$0xff]
  %v5082 = vld [vmem:[%s692 + $0x1d0] sm:$0xff]
  %v5083 = vld [vmem:[%s692 + $0x1e8] sm:$0xff]
  %v5084 = vld [vmem:[%s692 + $0x1f0] sm:$0xff]
  %v5085 = vld [vmem:[%s692 + $0x248] sm:$0xff]
  %v5086 = vld [vmem:[%s692 + $0x250] sm:$0xff]
  %v5087 = vld [vmem:[%s692 + $0x268] sm:$0xff]
  %v5088 = vld [vmem:[%s692 + $0x270] sm:$0xff]
  %v5089 = vld [vmem:[%s692 + $0x288] sm:$0xff]
  %v5090 = vld [vmem:[%s692 + $0x290] sm:$0xff]
  %v5091 = vld [vmem:[%s692 + $0x2a8] sm:$0xff]
  %v5092 = vld [vmem:[%s692 + $0x2b0] sm:$0xff]
  %v5093 = vld [vmem:[%s692 + $0x2c8] sm:$0xff]
  %v5094 = vld [vmem:[%s692 + $0x2d0] sm:$0xff]
  %v5095 = vld [vmem:[%s692 + $0x2e8] sm:$0xff]
  %v5096 = vld [vmem:[%s692 + $0x2f0] sm:$0xff]
  %v5097 = vld [vmem:[%s692 + $0x308] sm:$0xff]
  %v5098 = vld [vmem:[%s692 + $0x310] sm:$0xff]
  %v5099 = vld [vmem:[%s692 + $0x328] sm:$0xff]
  %v5100 = vld [vmem:[%s692 + $0x330] sm:$0xff]
  %v5101 = vld [vmem:[%s692 + $0x348] sm:$0xff]
  %v5102 = vld [vmem:[%s692 + $0x350] sm:$0xff]
  %v5103 = vld [vmem:[%s692 + $0x368] sm:$0xff]
  %v5104 = vld [vmem:[%s692 + $0x370] sm:$0xff]
  %v5105 = vld [vmem:[%s692 + $0x388] sm:$0xff]
  %v5106 = vld [vmem:[%s692 + $0x390] sm:$0xff]
  %v5107 = vld [vmem:[%s692 + $0x3a8] sm:$0xff]
  %v5108 = vld [vmem:[%s692 + $0x3b0] sm:$0xff]
  %v5109 = vld [vmem:[%s692 + $0x3c8] sm:$0xff]
  %v5110 = vld [vmem:[%s692 + $0x3d0] sm:$0xff]
  %v5111 = vld [vmem:[%s692 + $0x3e8] sm:$0xff]
  %v5112 = vld [vmem:[%s692 + $0x3f0] sm:$0xff]
  %v5113 = vld [vmem:[%s692 + $0x408] sm:$0xff]
  %v5114 = vld [vmem:[%s692 + $0x410] sm:$0xff]
  %v5115 = vld [vmem:[%s692 + $0x428] sm:$0xff]
  %v5116 = vld [vmem:[%s692 + $0x430] sm:$0xff]
  %v5117 = vld [vmem:[%s692 + $0x9] sm:$0xff]
  %v5118 = vld [vmem:[%s692 + $0x11] sm:$0xff]
  %v5119 = vld [vmem:[%s692 + $0x29] sm:$0xff]
  %v5120 = vld [vmem:[%s692 + $0x31] sm:$0xff]
  %v5121 = vld [vmem:[%s692 + $0x49] sm:$0xff]
  %v5122 = vld [vmem:[%s692 + $0x51] sm:$0xff]
  %v5123 = vld [vmem:[%s692 + $0x69] sm:$0xff]
  %v5124 = vld [vmem:[%s692 + $0x71] sm:$0xff]
  %v5125 = vld [vmem:[%s692 + $0x89] sm:$0xff]
  %v5126 = vld [vmem:[%s692 + $0x91] sm:$0xff]
  %v5127 = vld [vmem:[%s692 + $0xa9] sm:$0xff]
  %v5128 = vld [vmem:[%s692 + $0xb1] sm:$0xff]
  %v5129 = vld [vmem:[%s692 + $0xc9] sm:$0xff]
  %v5130 = vld [vmem:[%s692 + $0xd1] sm:$0xff]
  %v5131 = vld [vmem:[%s692 + $0xe9] sm:$0xff]
  %v5132 = vld [vmem:[%s692 + $0xf1] sm:$0xff]
  %v5133 = vld [vmem:[%s692 + $0x109] sm:$0xff]
  %v5134 = vld [vmem:[%s692 + $0x111] sm:$0xff]
  %v5135 = vld [vmem:[%s692 + $0x129] sm:$0xff]
  %v5136 = vld [vmem:[%s692 + $0x131] sm:$0xff]
  %v5137 = vld [vmem:[%s692 + $0x149] sm:$0xff]
  %v5138 = vld [vmem:[%s692 + $0x151] sm:$0xff]
  %v5139 = vld [vmem:[%s692 + $0x169] sm:$0xff]
  %v5140 = vld [vmem:[%s692 + $0x171] sm:$0xff]
  %v5141 = vld [vmem:[%s692 + $0x189] sm:$0xff]
  %v5142 = vld [vmem:[%s692 + $0x191] sm:$0xff]
  %v5143 = vld [vmem:[%s692 + $0x1a9] sm:$0xff]
  %v5144 = vld [vmem:[%s692 + $0x1b1] sm:$0xff]
  %v5145 = vld [vmem:[%s692 + $0x1c9] sm:$0xff]
  %v5146 = vld [vmem:[%s692 + $0x1d1] sm:$0xff]
  %v5147 = vld [vmem:[%s692 + $0x1e9] sm:$0xff]
  %v5148 = vld [vmem:[%s692 + $0x1f1] sm:$0xff]
  %v5149 = vld [vmem:[%s692 + $0x249] sm:$0xff]
  %v5150 = vld [vmem:[%s692 + $0x251] sm:$0xff]
  %v5151 = vld [vmem:[%s692 + $0x269] sm:$0xff]
  %v5152 = vld [vmem:[%s692 + $0x271] sm:$0xff]
  %v5153 = vld [vmem:[%s692 + $0x289] sm:$0xff]
  %v5154 = vld [vmem:[%s692 + $0x291] sm:$0xff]
  %v5155 = vld [vmem:[%s692 + $0x2a9] sm:$0xff]
  %v5156 = vld [vmem:[%s692 + $0x2b1] sm:$0xff]
  %v5157 = vld [vmem:[%s692 + $0x2c9] sm:$0xff]
  %v5158 = vld [vmem:[%s692 + $0x2d1] sm:$0xff]
  %v5159 = vld [vmem:[%s692 + $0x2e9] sm:$0xff]
  %v5160 = vld [vmem:[%s692 + $0x2f1] sm:$0xff]
  %v5161 = vld [vmem:[%s692 + $0x309] sm:$0xff]
  %v5162 = vld [vmem:[%s692 + $0x311] sm:$0xff]
  %v5163 = vld [vmem:[%s692 + $0x329] sm:$0xff]
  %v5164 = vld [vmem:[%s692 + $0x331] sm:$0xff]
  %v5165 = vld [vmem:[%s692 + $0x349] sm:$0xff]
  %v5166 = vld [vmem:[%s692 + $0x351] sm:$0xff]
  %v5167 = vld [vmem:[%s692 + $0x369] sm:$0xff]
  %v5168 = vld [vmem:[%s692 + $0x371] sm:$0xff]
  %v5169 = vld [vmem:[%s692 + $0x389] sm:$0xff]
  %v5170 = vld [vmem:[%s692 + $0x391] sm:$0xff]
  %v5171 = vld [vmem:[%s692 + $0x3a9] sm:$0xff]
  %v5172 = vld [vmem:[%s692 + $0x3b1] sm:$0xff]
  %v5173 = vld [vmem:[%s692 + $0x3c9] sm:$0xff]
  %v5174 = vld [vmem:[%s692 + $0x3d1] sm:$0xff]
  %v5175 = vld [vmem:[%s692 + $0x3e9] sm:$0xff]
  %v5176 = vld [vmem:[%s692 + $0x3f1] sm:$0xff]
  %v5177 = vld [vmem:[%s692 + $0x409] sm:$0xff]
  %v5178 = vld [vmem:[%s692 + $0x411] sm:$0xff]
  %v5179 = vld [vmem:[%s692 + $0x429] sm:$0xff]
  %v5180 = vld [vmem:[%s692 + $0x431] sm:$0xff]
  %5245 = vrot.lane.b32.xlu0 %v4669, 8
  %v5246 = vpop.permute.xlu0 %5245
  %5247 = vrot.lane.b32.xlu0 %v4670, 8
  %v5248 = vpop.permute.xlu0 %5247
  %5249 = vrot.lane.b32.xlu0 %v4671, 8
  %v5250 = vpop.permute.xlu0 %5249
  %5251 = vrot.lane.b32.xlu0 %v4672, 8
  %v5252 = vpop.permute.xlu0 %5251
  %5253 = vrot.lane.b32.xlu0 %v4673, 8
  %v5254 = vpop.permute.xlu0 %5253
  %5255 = vrot.lane.b32.xlu0 %v4674, 8
  %v5256 = vpop.permute.xlu0 %5255
  %5257 = vrot.lane.b32.xlu0 %v4675, 8
  %v5258 = vpop.permute.xlu0 %5257
  %5259 = vrot.lane.b32.xlu0 %v4676, 8
  %v5260 = vpop.permute.xlu0 %5259
  %5261 = vrot.lane.b32.xlu0 %v4677, 8
  %v5262 = vpop.permute.xlu0 %5261
  %5263 = vrot.lane.b32.xlu0 %v4678, 8
  %v5264 = vpop.permute.xlu0 %5263
  %5265 = vrot.lane.b32.xlu0 %v4679, 8
  %v5266 = vpop.permute.xlu0 %5265
  %5267 = vrot.lane.b32.xlu0 %v4680, 8
  %v5268 = vpop.permute.xlu0 %5267
  %5269 = vrot.lane.b32.xlu0 %v4681, 8
  %v5270 = vpop.permute.xlu0 %5269
  %5271 = vrot.lane.b32.xlu0 %v4682, 8
  %v5272 = vpop.permute.xlu0 %5271
  %5273 = vrot.lane.b32.xlu0 %v4683, 8
  %v5274 = vpop.permute.xlu0 %5273
  %5275 = vrot.lane.b32.xlu0 %v4684, 8
  %v5276 = vpop.permute.xlu0 %5275
  %5277 = vrot.lane.b32.xlu0 %v4685, 8
  %v5278 = vpop.permute.xlu0 %5277
  %5279 = vrot.lane.b32.xlu0 %v4686, 8
  %v5280 = vpop.permute.xlu0 %5279
  %5281 = vrot.lane.b32.xlu0 %v4687, 8
  %v5282 = vpop.permute.xlu0 %5281
  %5283 = vrot.lane.b32.xlu0 %v4688, 8
  %v5284 = vpop.permute.xlu0 %5283
  %5285 = vrot.lane.b32.xlu0 %v4689, 8
  %v5286 = vpop.permute.xlu0 %5285
  %5287 = vrot.lane.b32.xlu0 %v4690, 8
  %v5288 = vpop.permute.xlu0 %5287
  %5289 = vrot.lane.b32.xlu0 %v4691, 8
  %v5290 = vpop.permute.xlu0 %5289
  %5291 = vrot.lane.b32.xlu0 %v4692, 8
  %v5292 = vpop.permute.xlu0 %5291
  %5293 = vrot.lane.b32.xlu0 %v4693, 8
  %v5294 = vpop.permute.xlu0 %5293
  %5295 = vrot.lane.b32.xlu0 %v4694, 8
  %v5296 = vpop.permute.xlu0 %5295
  %5297 = vrot.lane.b32.xlu0 %v4695, 8
  %v5298 = vpop.permute.xlu0 %5297
  %5299 = vrot.lane.b32.xlu0 %v4696, 8
  %v5300 = vpop.permute.xlu0 %5299
  %5301 = vrot.lane.b32.xlu0 %v4697, 8
  %v5302 = vpop.permute.xlu0 %5301
  %5303 = vrot.lane.b32.xlu0 %v4698, 8
  %v5304 = vpop.permute.xlu0 %5303
  %5305 = vrot.lane.b32.xlu0 %v4699, 8
  %v5306 = vpop.permute.xlu0 %5305
  %5307 = vrot.lane.b32.xlu0 %v4700, 8
  %v5308 = vpop.permute.xlu0 %5307
  %5309 = vrot.lane.b32.xlu0 %v4701, 8
  %v5310 = vpop.permute.xlu0 %5309
  %5311 = vrot.lane.b32.xlu0 %v4702, 8
  %v5312 = vpop.permute.xlu0 %5311
  %5313 = vrot.lane.b32.xlu0 %v4703, 8
  %v5314 = vpop.permute.xlu0 %5313
  %5315 = vrot.lane.b32.xlu0 %v4704, 8
  %v5316 = vpop.permute.xlu0 %5315
  %5317 = vrot.lane.b32.xlu0 %v4705, 8
  %v5318 = vpop.permute.xlu0 %5317
  %5319 = vrot.lane.b32.xlu0 %v4706, 8
  %v5320 = vpop.permute.xlu0 %5319
  %5321 = vrot.lane.b32.xlu0 %v4707, 8
  %v5322 = vpop.permute.xlu0 %5321
  %5323 = vrot.lane.b32.xlu0 %v4708, 8
  %v5324 = vpop.permute.xlu0 %5323
  %5325 = vrot.lane.b32.xlu0 %v4709, 8
  %v5326 = vpop.permute.xlu0 %5325
  %5327 = vrot.lane.b32.xlu0 %v4710, 8
  %v5328 = vpop.permute.xlu0 %5327
  %5329 = vrot.lane.b32.xlu0 %v4711, 8
  %v5330 = vpop.permute.xlu0 %5329
  %5331 = vrot.lane.b32.xlu0 %v4712, 8
  %v5332 = vpop.permute.xlu0 %5331
  %5333 = vrot.lane.b32.xlu0 %v4713, 8
  %v5334 = vpop.permute.xlu0 %5333
  %5335 = vrot.lane.b32.xlu0 %v4714, 8
  %v5336 = vpop.permute.xlu0 %5335
  %5337 = vrot.lane.b32.xlu0 %v4715, 8
  %v5338 = vpop.permute.xlu0 %5337
  %5339 = vrot.lane.b32.xlu0 %v4716, 8
  %v5340 = vpop.permute.xlu0 %5339
  %5341 = vrot.lane.b32.xlu0 %v4717, 8
  %v5342 = vpop.permute.xlu0 %5341
  %5343 = vrot.lane.b32.xlu0 %v4718, 8
  %v5344 = vpop.permute.xlu0 %5343
  %5345 = vrot.lane.b32.xlu0 %v4719, 8
  %v5346 = vpop.permute.xlu0 %5345
  %5347 = vrot.lane.b32.xlu0 %v4720, 8
  %v5348 = vpop.permute.xlu0 %5347
  %5349 = vrot.lane.b32.xlu0 %v4721, 8
  %v5350 = vpop.permute.xlu0 %5349
  %5351 = vrot.lane.b32.xlu0 %v4722, 8
  %v5352 = vpop.permute.xlu0 %5351
  %5353 = vrot.lane.b32.xlu0 %v4723, 8
  %v5354 = vpop.permute.xlu0 %5353
  %5355 = vrot.lane.b32.xlu0 %v4724, 8
  %v5356 = vpop.permute.xlu0 %5355
  %5357 = vrot.lane.b32.xlu0 %v4725, 8
  %v5358 = vpop.permute.xlu0 %5357
  %5359 = vrot.lane.b32.xlu0 %v4726, 8
  %v5360 = vpop.permute.xlu0 %5359
  %5361 = vrot.lane.b32.xlu0 %v4727, 8
  %v5362 = vpop.permute.xlu0 %5361
  %5363 = vrot.lane.b32.xlu0 %v4728, 8
  %v5364 = vpop.permute.xlu0 %5363
  %5365 = vrot.lane.b32.xlu0 %v4729, 8
  %v5366 = vpop.permute.xlu0 %5365
  %5367 = vrot.lane.b32.xlu0 %v4730, 8
  %v5368 = vpop.permute.xlu0 %5367
  %5369 = vrot.lane.b32.xlu0 %v4731, 8
  %v5370 = vpop.permute.xlu0 %5369
  %5371 = vrot.lane.b32.xlu0 %v4732, 8
  %v5372 = vpop.permute.xlu0 %5371
  %5501 = vrot.lane.b32.xlu0 %v4733, 16
  %v5502 = vpop.permute.xlu0 %5501
  %5503 = vrot.lane.b32.xlu0 %v4734, 16
  %v5504 = vpop.permute.xlu0 %5503
  %5505 = vrot.lane.b32.xlu0 %v4735, 16
  %v5506 = vpop.permute.xlu0 %5505
  %5507 = vrot.lane.b32.xlu0 %v4736, 16
  %v5508 = vpop.permute.xlu0 %5507
  %5509 = vrot.lane.b32.xlu0 %v4737, 16
  %v5510 = vpop.permute.xlu0 %5509
  %5511 = vrot.lane.b32.xlu0 %v4738, 16
  %v5512 = vpop.permute.xlu0 %5511
  %5513 = vrot.lane.b32.xlu0 %v4739, 16
  %v5514 = vpop.permute.xlu0 %5513
  %5515 = vrot.lane.b32.xlu0 %v4740, 16
  %v5516 = vpop.permute.xlu0 %5515
  %5517 = vrot.lane.b32.xlu0 %v4741, 16
  %v5518 = vpop.permute.xlu0 %5517
  %5519 = vrot.lane.b32.xlu0 %v4742, 16
  %v5520 = vpop.permute.xlu0 %5519
  %5521 = vrot.lane.b32.xlu0 %v4743, 16
  %v5522 = vpop.permute.xlu0 %5521
  %5523 = vrot.lane.b32.xlu0 %v4744, 16
  %v5524 = vpop.permute.xlu0 %5523
  %5525 = vrot.lane.b32.xlu0 %v4745, 16
  %v5526 = vpop.permute.xlu0 %5525
  %5527 = vrot.lane.b32.xlu0 %v4746, 16
  %v5528 = vpop.permute.xlu0 %5527
  %5529 = vrot.lane.b32.xlu0 %v4747, 16
  %v5530 = vpop.permute.xlu0 %5529
  %5531 = vrot.lane.b32.xlu0 %v4748, 16
  %v5532 = vpop.permute.xlu0 %5531
  %5533 = vrot.lane.b32.xlu0 %v4749, 16
  %v5534 = vpop.permute.xlu0 %5533
  %5535 = vrot.lane.b32.xlu0 %v4750, 16
  %v5536 = vpop.permute.xlu0 %5535
  %5537 = vrot.lane.b32.xlu0 %v4751, 16
  %v5538 = vpop.permute.xlu0 %5537
  %5539 = vrot.lane.b32.xlu0 %v4752, 16
  %v5540 = vpop.permute.xlu0 %5539
  %5541 = vrot.lane.b32.xlu0 %v4753, 16
  %v5542 = vpop.permute.xlu0 %5541
  %5543 = vrot.lane.b32.xlu0 %v4754, 16
  %v5544 = vpop.permute.xlu0 %5543
  %5545 = vrot.lane.b32.xlu0 %v4755, 16
  %v5546 = vpop.permute.xlu0 %5545
  %5547 = vrot.lane.b32.xlu0 %v4756, 16
  %v5548 = vpop.permute.xlu0 %5547
  %5549 = vrot.lane.b32.xlu0 %v4757, 16
  %v5550 = vpop.permute.xlu0 %5549
  %5551 = vrot.lane.b32.xlu0 %v4758, 16
  %v5552 = vpop.permute.xlu0 %5551
  %5553 = vrot.lane.b32.xlu0 %v4759, 16
  %v5554 = vpop.permute.xlu0 %5553
  %5555 = vrot.lane.b32.xlu0 %v4760, 16
  %v5556 = vpop.permute.xlu0 %5555
  %5557 = vrot.lane.b32.xlu0 %v4761, 16
  %v5558 = vpop.permute.xlu0 %5557
  %5559 = vrot.lane.b32.xlu0 %v4762, 16
  %v5560 = vpop.permute.xlu0 %5559
  %5561 = vrot.lane.b32.xlu0 %v4763, 16
  %v5562 = vpop.permute.xlu0 %5561
  %5563 = vrot.lane.b32.xlu0 %v4764, 16
  %v5564 = vpop.permute.xlu0 %5563
  %5565 = vrot.lane.b32.xlu0 %v4765, 16
  %v5566 = vpop.permute.xlu0 %5565
  %5567 = vrot.lane.b32.xlu0 %v4766, 16
  %v5568 = vpop.permute.xlu0 %5567
  %5569 = vrot.lane.b32.xlu0 %v4767, 16
  %v5570 = vpop.permute.xlu0 %5569
  %5571 = vrot.lane.b32.xlu0 %v4768, 16
  %v5572 = vpop.permute.xlu0 %5571
  %5573 = vrot.lane.b32.xlu0 %v4769, 16
  %v5574 = vpop.permute.xlu0 %5573
  %5575 = vrot.lane.b32.xlu0 %v4770, 16
  %v5576 = vpop.permute.xlu0 %5575
  %5577 = vrot.lane.b32.xlu0 %v4771, 16
  %v5578 = vpop.permute.xlu0 %5577
  %5579 = vrot.lane.b32.xlu0 %v4772, 16
  %v5580 = vpop.permute.xlu0 %5579
  %5581 = vrot.lane.b32.xlu0 %v4773, 16
  %v5582 = vpop.permute.xlu0 %5581
  %5583 = vrot.lane.b32.xlu0 %v4774, 16
  %v5584 = vpop.permute.xlu0 %5583
  %5585 = vrot.lane.b32.xlu0 %v4775, 16
  %v5586 = vpop.permute.xlu0 %5585
  %5587 = vrot.lane.b32.xlu0 %v4776, 16
  %v5588 = vpop.permute.xlu0 %5587
  %5589 = vrot.lane.b32.xlu0 %v4777, 16
  %v5590 = vpop.permute.xlu0 %5589
  %5591 = vrot.lane.b32.xlu0 %v4778, 16
  %v5592 = vpop.permute.xlu0 %5591
  %5593 = vrot.lane.b32.xlu0 %v4779, 16
  %v5594 = vpop.permute.xlu0 %5593
  %5595 = vrot.lane.b32.xlu0 %v4780, 16
  %v5596 = vpop.permute.xlu0 %5595
  %5597 = vrot.lane.b32.xlu0 %v4781, 16
  %v5598 = vpop.permute.xlu0 %5597
  %5599 = vrot.lane.b32.xlu0 %v4782, 16
  %v5600 = vpop.permute.xlu0 %5599
  %5601 = vrot.lane.b32.xlu0 %v4783, 16
  %v5602 = vpop.permute.xlu0 %5601
  %5603 = vrot.lane.b32.xlu0 %v4784, 16
  %v5604 = vpop.permute.xlu0 %5603
  %5605 = vrot.lane.b32.xlu0 %v4785, 16
  %v5606 = vpop.permute.xlu0 %5605
  %5607 = vrot.lane.b32.xlu0 %v4786, 16
  %v5608 = vpop.permute.xlu0 %5607
  %5609 = vrot.lane.b32.xlu0 %v4787, 16
  %v5610 = vpop.permute.xlu0 %5609
  %5611 = vrot.lane.b32.xlu0 %v4788, 16
  %v5612 = vpop.permute.xlu0 %5611
  %5613 = vrot.lane.b32.xlu0 %v4789, 16
  %v5614 = vpop.permute.xlu0 %5613
  %5615 = vrot.lane.b32.xlu0 %v4790, 16
  %v5616 = vpop.permute.xlu0 %5615
  %5617 = vrot.lane.b32.xlu0 %v4791, 16
  %v5618 = vpop.permute.xlu0 %5617
  %5619 = vrot.lane.b32.xlu0 %v4792, 16
  %v5620 = vpop.permute.xlu0 %5619
  %5621 = vrot.lane.b32.xlu0 %v4793, 16
  %v5622 = vpop.permute.xlu0 %5621
  %5623 = vrot.lane.b32.xlu0 %v4794, 16
  %v5624 = vpop.permute.xlu0 %5623
  %5625 = vrot.lane.b32.xlu0 %v4795, 16
  %v5626 = vpop.permute.xlu0 %5625
  %5627 = vrot.lane.b32.xlu0 %v4796, 16
  %v5628 = vpop.permute.xlu0 %5627
  %5757 = vrot.lane.b32.xlu0 %v4797, 24
  %v5758 = vpop.permute.xlu0 %5757
  %5759 = vrot.lane.b32.xlu0 %v4798, 24
  %v5760 = vpop.permute.xlu0 %5759
  %5761 = vrot.lane.b32.xlu0 %v4799, 24
  %v5762 = vpop.permute.xlu0 %5761
  %5763 = vrot.lane.b32.xlu0 %v4800, 24
  %v5764 = vpop.permute.xlu0 %5763
  %5765 = vrot.lane.b32.xlu0 %v4801, 24
  %v5766 = vpop.permute.xlu0 %5765
  %5767 = vrot.lane.b32.xlu0 %v4802, 24
  %v5768 = vpop.permute.xlu0 %5767
  %5769 = vrot.lane.b32.xlu0 %v4803, 24
  %v5770 = vpop.permute.xlu0 %5769
  %5771 = vrot.lane.b32.xlu0 %v4804, 24
  %v5772 = vpop.permute.xlu0 %5771
  %5773 = vrot.lane.b32.xlu0 %v4805, 24
  %v5774 = vpop.permute.xlu0 %5773
  %5775 = vrot.lane.b32.xlu0 %v4806, 24
  %v5776 = vpop.permute.xlu0 %5775
  %5777 = vrot.lane.b32.xlu0 %v4807, 24
  %v5778 = vpop.permute.xlu0 %5777
  %5779 = vrot.lane.b32.xlu0 %v4808, 24
  %v5780 = vpop.permute.xlu0 %5779
  %5781 = vrot.lane.b32.xlu0 %v4809, 24
  %v5782 = vpop.permute.xlu0 %5781
  %5783 = vrot.lane.b32.xlu0 %v4810, 24
  %v5784 = vpop.permute.xlu0 %5783
  %5785 = vrot.lane.b32.xlu0 %v4811, 24
  %v5786 = vpop.permute.xlu0 %5785
  %5787 = vrot.lane.b32.xlu0 %v4812, 24
  %v5788 = vpop.permute.xlu0 %5787
  %5789 = vrot.lane.b32.xlu0 %v4813, 24
  %v5790 = vpop.permute.xlu0 %5789
  %5791 = vrot.lane.b32.xlu0 %v4814, 24
  %v5792 = vpop.permute.xlu0 %5791
  %5793 = vrot.lane.b32.xlu0 %v4815, 24
  %v5794 = vpop.permute.xlu0 %5793
  %5795 = vrot.lane.b32.xlu0 %v4816, 24
  %v5796 = vpop.permute.xlu0 %5795
  %5797 = vrot.lane.b32.xlu0 %v4817, 24
  %v5798 = vpop.permute.xlu0 %5797
  %5799 = vrot.lane.b32.xlu0 %v4818, 24
  %v5800 = vpop.permute.xlu0 %5799
  %5801 = vrot.lane.b32.xlu0 %v4819, 24
  %v5802 = vpop.permute.xlu0 %5801
  %5803 = vrot.lane.b32.xlu0 %v4820, 24
  %v5804 = vpop.permute.xlu0 %5803
  %5805 = vrot.lane.b32.xlu0 %v4821, 24
  %v5806 = vpop.permute.xlu0 %5805
  %5807 = vrot.lane.b32.xlu0 %v4822, 24
  %v5808 = vpop.permute.xlu0 %5807
  %5809 = vrot.lane.b32.xlu0 %v4823, 24
  %v5810 = vpop.permute.xlu0 %5809
  %5811 = vrot.lane.b32.xlu0 %v4824, 24
  %v5812 = vpop.permute.xlu0 %5811
  %5813 = vrot.lane.b32.xlu0 %v4825, 24
  %v5814 = vpop.permute.xlu0 %5813
  %5815 = vrot.lane.b32.xlu0 %v4826, 24
  %v5816 = vpop.permute.xlu0 %5815
  %5817 = vrot.lane.b32.xlu0 %v4827, 24
  %v5818 = vpop.permute.xlu0 %5817
  %5819 = vrot.lane.b32.xlu0 %v4828, 24
  %v5820 = vpop.permute.xlu0 %5819
  %5821 = vrot.lane.b32.xlu0 %v4829, 24
  %v5822 = vpop.permute.xlu0 %5821
  %5823 = vrot.lane.b32.xlu0 %v4830, 24
  %v5824 = vpop.permute.xlu0 %5823
  %5825 = vrot.lane.b32.xlu0 %v4831, 24
  %v5826 = vpop.permute.xlu0 %5825
  %5827 = vrot.lane.b32.xlu0 %v4832, 24
  %v5828 = vpop.permute.xlu0 %5827
  %5829 = vrot.lane.b32.xlu0 %v4833, 24
  %v5830 = vpop.permute.xlu0 %5829
  %5831 = vrot.lane.b32.xlu0 %v4834, 24
  %v5832 = vpop.permute.xlu0 %5831
  %5833 = vrot.lane.b32.xlu0 %v4835, 24
  %v5834 = vpop.permute.xlu0 %5833
  %5835 = vrot.lane.b32.xlu0 %v4836, 24
  %v5836 = vpop.permute.xlu0 %5835
  %5837 = vrot.lane.b32.xlu0 %v4837, 24
  %v5838 = vpop.permute.xlu0 %5837
  %5839 = vrot.lane.b32.xlu0 %v4838, 24
  %v5840 = vpop.permute.xlu0 %5839
  %5841 = vrot.lane.b32.xlu0 %v4839, 24
  %v5842 = vpop.permute.xlu0 %5841
  %5843 = vrot.lane.b32.xlu0 %v4840, 24
  %v5844 = vpop.permute.xlu0 %5843
  %5845 = vrot.lane.b32.xlu0 %v4841, 24
  %v5846 = vpop.permute.xlu0 %5845
  %5847 = vrot.lane.b32.xlu0 %v4842, 24
  %v5848 = vpop.permute.xlu0 %5847
  %5849 = vrot.lane.b32.xlu0 %v4843, 24
  %v5850 = vpop.permute.xlu0 %5849
  %5851 = vrot.lane.b32.xlu0 %v4844, 24
  %v5852 = vpop.permute.xlu0 %5851
  %5853 = vrot.lane.b32.xlu0 %v4845, 24
  %v5854 = vpop.permute.xlu0 %5853
  %5855 = vrot.lane.b32.xlu0 %v4846, 24
  %v5856 = vpop.permute.xlu0 %5855
  %5857 = vrot.lane.b32.xlu0 %v4847, 24
  %v5858 = vpop.permute.xlu0 %5857
  %5859 = vrot.lane.b32.xlu0 %v4848, 24
  %v5860 = vpop.permute.xlu0 %5859
  %5861 = vrot.lane.b32.xlu0 %v4849, 24
  %v5862 = vpop.permute.xlu0 %5861
  %5863 = vrot.lane.b32.xlu0 %v4850, 24
  %v5864 = vpop.permute.xlu0 %5863
  %5865 = vrot.lane.b32.xlu0 %v4851, 24
  %v5866 = vpop.permute.xlu0 %5865
  %5867 = vrot.lane.b32.xlu0 %v4852, 24
  %v5868 = vpop.permute.xlu0 %5867
  %5869 = vrot.lane.b32.xlu0 %v4853, 24
  %v5870 = vpop.permute.xlu0 %5869
  %5871 = vrot.lane.b32.xlu0 %v4854, 24
  %v5872 = vpop.permute.xlu0 %5871
  %5873 = vrot.lane.b32.xlu0 %v4855, 24
  %v5874 = vpop.permute.xlu0 %5873
  %5875 = vrot.lane.b32.xlu0 %v4856, 24
  %v5876 = vpop.permute.xlu0 %5875
  %5877 = vrot.lane.b32.xlu0 %v4857, 24
  %v5878 = vpop.permute.xlu0 %5877
  %5879 = vrot.lane.b32.xlu0 %v4858, 24
  %v5880 = vpop.permute.xlu0 %5879
  %5881 = vrot.lane.b32.xlu0 %v4859, 24
  %v5882 = vpop.permute.xlu0 %5881
  %5883 = vrot.lane.b32.xlu0 %v4860, 24
  %v5884 = vpop.permute.xlu0 %5883
  %6013 = vrot.lane.b32.xlu0 %v4861, 32
  %v6014 = vpop.permute.xlu0 %6013
  %6015 = vrot.lane.b32.xlu0 %v4862, 32
  %v6016 = vpop.permute.xlu0 %6015
  %6017 = vrot.lane.b32.xlu0 %v4863, 32
  %v6018 = vpop.permute.xlu0 %6017
  %6019 = vrot.lane.b32.xlu0 %v4864, 32
  %v6020 = vpop.permute.xlu0 %6019
  %6021 = vrot.lane.b32.xlu0 %v4865, 32
  %v6022 = vpop.permute.xlu0 %6021
  %6023 = vrot.lane.b32.xlu0 %v4866, 32
  %v6024 = vpop.permute.xlu0 %6023
  %6025 = vrot.lane.b32.xlu0 %v4867, 32
  %v6026 = vpop.permute.xlu0 %6025
  %6027 = vrot.lane.b32.xlu0 %v4868, 32
  %v6028 = vpop.permute.xlu0 %6027
  %6029 = vrot.lane.b32.xlu0 %v4869, 32
  %v6030 = vpop.permute.xlu0 %6029
  %6031 = vrot.lane.b32.xlu0 %v4870, 32
  %v6032 = vpop.permute.xlu0 %6031
  %6033 = vrot.lane.b32.xlu0 %v4871, 32
  %v6034 = vpop.permute.xlu0 %6033
  %6035 = vrot.lane.b32.xlu0 %v4872, 32
  %v6036 = vpop.permute.xlu0 %6035
  %6037 = vrot.lane.b32.xlu0 %v4873, 32
  %v6038 = vpop.permute.xlu0 %6037
  %6039 = vrot.lane.b32.xlu0 %v4874, 32
  %v6040 = vpop.permute.xlu0 %6039
  %6041 = vrot.lane.b32.xlu0 %v4875, 32
  %v6042 = vpop.permute.xlu0 %6041
  %6043 = vrot.lane.b32.xlu0 %v4876, 32
  %v6044 = vpop.permute.xlu0 %6043
  %6045 = vrot.lane.b32.xlu0 %v4877, 32
  %v6046 = vpop.permute.xlu0 %6045
  %6047 = vrot.lane.b32.xlu0 %v4878, 32
  %v6048 = vpop.permute.xlu0 %6047
  %6049 = vrot.lane.b32.xlu0 %v4879, 32
  %v6050 = vpop.permute.xlu0 %6049
  %6051 = vrot.lane.b32.xlu0 %v4880, 32
  %v6052 = vpop.permute.xlu0 %6051
  %6053 = vrot.lane.b32.xlu0 %v4881, 32
  %v6054 = vpop.permute.xlu0 %6053
  %6055 = vrot.lane.b32.xlu0 %v4882, 32
  %v6056 = vpop.permute.xlu0 %6055
  %6057 = vrot.lane.b32.xlu0 %v4883, 32
  %v6058 = vpop.permute.xlu0 %6057
  %6059 = vrot.lane.b32.xlu0 %v4884, 32
  %v6060 = vpop.permute.xlu0 %6059
  %6061 = vrot.lane.b32.xlu0 %v4885, 32
  %v6062 = vpop.permute.xlu0 %6061
  %6063 = vrot.lane.b32.xlu0 %v4886, 32
  %v6064 = vpop.permute.xlu0 %6063
  %6065 = vrot.lane.b32.xlu0 %v4887, 32
  %v6066 = vpop.permute.xlu0 %6065
  %6067 = vrot.lane.b32.xlu0 %v4888, 32
  %v6068 = vpop.permute.xlu0 %6067
  %6069 = vrot.lane.b32.xlu0 %v4889, 32
  %v6070 = vpop.permute.xlu0 %6069
  %6071 = vrot.lane.b32.xlu0 %v4890, 32
  %v6072 = vpop.permute.xlu0 %6071
  %6073 = vrot.lane.b32.xlu0 %v4891, 32
  %v6074 = vpop.permute.xlu0 %6073
  %6075 = vrot.lane.b32.xlu0 %v4892, 32
  %v6076 = vpop.permute.xlu0 %6075
  %6077 = vrot.lane.b32.xlu0 %v4893, 32
  %v6078 = vpop.permute.xlu0 %6077
  %6079 = vrot.lane.b32.xlu0 %v4894, 32
  %v6080 = vpop.permute.xlu0 %6079
  %6081 = vrot.lane.b32.xlu0 %v4895, 32
  %v6082 = vpop.permute.xlu0 %6081
  %6083 = vrot.lane.b32.xlu0 %v4896, 32
  %v6084 = vpop.permute.xlu0 %6083
  %6085 = vrot.lane.b32.xlu0 %v4897, 32
  %v6086 = vpop.permute.xlu0 %6085
  %6087 = vrot.lane.b32.xlu0 %v4898, 32
  %v6088 = vpop.permute.xlu0 %6087
  %6089 = vrot.lane.b32.xlu0 %v4899, 32
  %v6090 = vpop.permute.xlu0 %6089
  %6091 = vrot.lane.b32.xlu0 %v4900, 32
  %v6092 = vpop.permute.xlu0 %6091
  %6093 = vrot.lane.b32.xlu0 %v4901, 32
  %v6094 = vpop.permute.xlu0 %6093
  %6095 = vrot.lane.b32.xlu0 %v4902, 32
  %v6096 = vpop.permute.xlu0 %6095
  %6097 = vrot.lane.b32.xlu0 %v4903, 32
  %v6098 = vpop.permute.xlu0 %6097
  %6099 = vrot.lane.b32.xlu0 %v4904, 32
  %v6100 = vpop.permute.xlu0 %6099
  %6101 = vrot.lane.b32.xlu0 %v4905, 32
  %v6102 = vpop.permute.xlu0 %6101
  %6103 = vrot.lane.b32.xlu0 %v4906, 32
  %v6104 = vpop.permute.xlu0 %6103
  %6105 = vrot.lane.b32.xlu0 %v4907, 32
  %v6106 = vpop.permute.xlu0 %6105
  %6107 = vrot.lane.b32.xlu0 %v4908, 32
  %v6108 = vpop.permute.xlu0 %6107
  %6109 = vrot.lane.b32.xlu0 %v4909, 32
  %v6110 = vpop.permute.xlu0 %6109
  %6111 = vrot.lane.b32.xlu0 %v4910, 32
  %v6112 = vpop.permute.xlu0 %6111
  %6113 = vrot.lane.b32.xlu0 %v4911, 32
  %v6114 = vpop.permute.xlu0 %6113
  %6115 = vrot.lane.b32.xlu0 %v4912, 32
  %v6116 = vpop.permute.xlu0 %6115
  %6117 = vrot.lane.b32.xlu0 %v4913, 32
  %v6118 = vpop.permute.xlu0 %6117
  %6119 = vrot.lane.b32.xlu0 %v4914, 32
  %v6120 = vpop.permute.xlu0 %6119
  %6121 = vrot.lane.b32.xlu0 %v4915, 32
  %v6122 = vpop.permute.xlu0 %6121
  %6123 = vrot.lane.b32.xlu0 %v4916, 32
  %v6124 = vpop.permute.xlu0 %6123
  %6125 = vrot.lane.b32.xlu0 %v4917, 32
  %v6126 = vpop.permute.xlu0 %6125
  %6127 = vrot.lane.b32.xlu0 %v4918, 32
  %v6128 = vpop.permute.xlu0 %6127
  %6129 = vrot.lane.b32.xlu0 %v4919, 32
  %v6130 = vpop.permute.xlu0 %6129
  %6131 = vrot.lane.b32.xlu0 %v4920, 32
  %v6132 = vpop.permute.xlu0 %6131
  %6133 = vrot.lane.b32.xlu0 %v4921, 32
  %v6134 = vpop.permute.xlu0 %6133
  %6135 = vrot.lane.b32.xlu0 %v4922, 32
  %v6136 = vpop.permute.xlu0 %6135
  %6137 = vrot.lane.b32.xlu0 %v4923, 32
  %v6138 = vpop.permute.xlu0 %6137
  %6139 = vrot.lane.b32.xlu0 %v4924, 32
  %v6140 = vpop.permute.xlu0 %6139
  %6269 = vrot.lane.b32.xlu0 %v4925, 40
  %v6270 = vpop.permute.xlu0 %6269
  %6271 = vrot.lane.b32.xlu0 %v4926, 40
  %v6272 = vpop.permute.xlu0 %6271
  %6273 = vrot.lane.b32.xlu0 %v4927, 40
  %v6274 = vpop.permute.xlu0 %6273
  %6275 = vrot.lane.b32.xlu0 %v4928, 40
  %v6276 = vpop.permute.xlu0 %6275
  %6277 = vrot.lane.b32.xlu0 %v4929, 40
  %v6278 = vpop.permute.xlu0 %6277
  %6279 = vrot.lane.b32.xlu0 %v4930, 40
  %v6280 = vpop.permute.xlu0 %6279
  %6281 = vrot.lane.b32.xlu0 %v4931, 40
  %v6282 = vpop.permute.xlu0 %6281
  %6283 = vrot.lane.b32.xlu0 %v4932, 40
  %v6284 = vpop.permute.xlu0 %6283
  %6285 = vrot.lane.b32.xlu0 %v4933, 40
  %v6286 = vpop.permute.xlu0 %6285
  %6287 = vrot.lane.b32.xlu0 %v4934, 40
  %v6288 = vpop.permute.xlu0 %6287
  %6289 = vrot.lane.b32.xlu0 %v4935, 40
  %v6290 = vpop.permute.xlu0 %6289
  %6291 = vrot.lane.b32.xlu0 %v4936, 40
  %v6292 = vpop.permute.xlu0 %6291
  %6293 = vrot.lane.b32.xlu0 %v4937, 40
  %v6294 = vpop.permute.xlu0 %6293
  %6295 = vrot.lane.b32.xlu0 %v4938, 40
  %v6296 = vpop.permute.xlu0 %6295
  %6297 = vrot.lane.b32.xlu0 %v4939, 40
  %v6298 = vpop.permute.xlu0 %6297
  %6299 = vrot.lane.b32.xlu0 %v4940, 40
  %v6300 = vpop.permute.xlu0 %6299
  %6301 = vrot.lane.b32.xlu0 %v4941, 40
  %v6302 = vpop.permute.xlu0 %6301
  %6303 = vrot.lane.b32.xlu0 %v4942, 40
  %v6304 = vpop.permute.xlu0 %6303
  %6305 = vrot.lane.b32.xlu0 %v4943, 40
  %v6306 = vpop.permute.xlu0 %6305
  %6307 = vrot.lane.b32.xlu0 %v4944, 40
  %v6308 = vpop.permute.xlu0 %6307
  %6309 = vrot.lane.b32.xlu0 %v4945, 40
  %v6310 = vpop.permute.xlu0 %6309
  %6311 = vrot.lane.b32.xlu0 %v4946, 40
  %v6312 = vpop.permute.xlu0 %6311
  %6313 = vrot.lane.b32.xlu0 %v4947, 40
  %v6314 = vpop.permute.xlu0 %6313
  %6315 = vrot.lane.b32.xlu0 %v4948, 40
  %v6316 = vpop.permute.xlu0 %6315
  %6317 = vrot.lane.b32.xlu0 %v4949, 40
  %v6318 = vpop.permute.xlu0 %6317
  %6319 = vrot.lane.b32.xlu0 %v4950, 40
  %v6320 = vpop.permute.xlu0 %6319
  %6321 = vrot.lane.b32.xlu0 %v4951, 40
  %v6322 = vpop.permute.xlu0 %6321
  %6323 = vrot.lane.b32.xlu0 %v4952, 40
  %v6324 = vpop.permute.xlu0 %6323
  %6325 = vrot.lane.b32.xlu0 %v4953, 40
  %v6326 = vpop.permute.xlu0 %6325
  %6327 = vrot.lane.b32.xlu0 %v4954, 40
  %v6328 = vpop.permute.xlu0 %6327
  %6329 = vrot.lane.b32.xlu0 %v4955, 40
  %v6330 = vpop.permute.xlu0 %6329
  %6331 = vrot.lane.b32.xlu0 %v4956, 40
  %v6332 = vpop.permute.xlu0 %6331
  %6333 = vrot.lane.b32.xlu0 %v4957, 40
  %v6334 = vpop.permute.xlu0 %6333
  %6335 = vrot.lane.b32.xlu0 %v4958, 40
  %v6336 = vpop.permute.xlu0 %6335
  %6337 = vrot.lane.b32.xlu0 %v4959, 40
  %v6338 = vpop.permute.xlu0 %6337
  %6339 = vrot.lane.b32.xlu0 %v4960, 40
  %v6340 = vpop.permute.xlu0 %6339
  %6341 = vrot.lane.b32.xlu0 %v4961, 40
  %v6342 = vpop.permute.xlu0 %6341
  %6343 = vrot.lane.b32.xlu0 %v4962, 40
  %v6344 = vpop.permute.xlu0 %6343
  %6345 = vrot.lane.b32.xlu0 %v4963, 40
  %v6346 = vpop.permute.xlu0 %6345
  %6347 = vrot.lane.b32.xlu0 %v4964, 40
  %v6348 = vpop.permute.xlu0 %6347
  %6349 = vrot.lane.b32.xlu0 %v4965, 40
  %v6350 = vpop.permute.xlu0 %6349
  %6351 = vrot.lane.b32.xlu0 %v4966, 40
  %v6352 = vpop.permute.xlu0 %6351
  %6353 = vrot.lane.b32.xlu0 %v4967, 40
  %v6354 = vpop.permute.xlu0 %6353
  %6355 = vrot.lane.b32.xlu0 %v4968, 40
  %v6356 = vpop.permute.xlu0 %6355
  %6357 = vrot.lane.b32.xlu0 %v4969, 40
  %v6358 = vpop.permute.xlu0 %6357
  %6359 = vrot.lane.b32.xlu0 %v4970, 40
  %v6360 = vpop.permute.xlu0 %6359
  %6361 = vrot.lane.b32.xlu0 %v4971, 40
  %v6362 = vpop.permute.xlu0 %6361
  %6363 = vrot.lane.b32.xlu0 %v4972, 40
  %v6364 = vpop.permute.xlu0 %6363
  %6365 = vrot.lane.b32.xlu0 %v4973, 40
  %v6366 = vpop.permute.xlu0 %6365
  %6367 = vrot.lane.b32.xlu0 %v4974, 40
  %v6368 = vpop.permute.xlu0 %6367
  %6369 = vrot.lane.b32.xlu0 %v4975, 40
  %v6370 = vpop.permute.xlu0 %6369
  %6371 = vrot.lane.b32.xlu0 %v4976, 40
  %v6372 = vpop.permute.xlu0 %6371
  %6373 = vrot.lane.b32.xlu0 %v4977, 40
  %v6374 = vpop.permute.xlu0 %6373
  %6375 = vrot.lane.b32.xlu0 %v4978, 40
  %v6376 = vpop.permute.xlu0 %6375
  %6377 = vrot.lane.b32.xlu0 %v4979, 40
  %v6378 = vpop.permute.xlu0 %6377
  %6379 = vrot.lane.b32.xlu0 %v4980, 40
  %v6380 = vpop.permute.xlu0 %6379
  %6381 = vrot.lane.b32.xlu0 %v4981, 40
  %v6382 = vpop.permute.xlu0 %6381
  %6383 = vrot.lane.b32.xlu0 %v4982, 40
  %v6384 = vpop.permute.xlu0 %6383
  %6385 = vrot.lane.b32.xlu0 %v4983, 40
  %v6386 = vpop.permute.xlu0 %6385
  %6387 = vrot.lane.b32.xlu0 %v4984, 40
  %v6388 = vpop.permute.xlu0 %6387
  %6389 = vrot.lane.b32.xlu0 %v4985, 40
  %v6390 = vpop.permute.xlu0 %6389
  %6391 = vrot.lane.b32.xlu0 %v4986, 40
  %v6392 = vpop.permute.xlu0 %6391
  %6393 = vrot.lane.b32.xlu0 %v4987, 40
  %v6394 = vpop.permute.xlu0 %6393
  %6395 = vrot.lane.b32.xlu0 %v4988, 40
  %v6396 = vpop.permute.xlu0 %6395
  %6525 = vrot.lane.b32.xlu0 %v4989, 48
  %v6526 = vpop.permute.xlu0 %6525
  %6527 = vrot.lane.b32.xlu0 %v4990, 48
  %v6528 = vpop.permute.xlu0 %6527
  %6529 = vrot.lane.b32.xlu0 %v4991, 48
  %v6530 = vpop.permute.xlu0 %6529
  %6531 = vrot.lane.b32.xlu0 %v4992, 48
  %v6532 = vpop.permute.xlu0 %6531
  %6533 = vrot.lane.b32.xlu0 %v4993, 48
  %v6534 = vpop.permute.xlu0 %6533
  %6535 = vrot.lane.b32.xlu0 %v4994, 48
  %v6536 = vpop.permute.xlu0 %6535
  %6537 = vrot.lane.b32.xlu0 %v4995, 48
  %v6538 = vpop.permute.xlu0 %6537
  %6539 = vrot.lane.b32.xlu0 %v4996, 48
  %v6540 = vpop.permute.xlu0 %6539
  %6541 = vrot.lane.b32.xlu0 %v4997, 48
  %v6542 = vpop.permute.xlu0 %6541
  %6543 = vrot.lane.b32.xlu0 %v4998, 48
  %v6544 = vpop.permute.xlu0 %6543
  %6545 = vrot.lane.b32.xlu0 %v4999, 48
  %v6546 = vpop.permute.xlu0 %6545
  %6547 = vrot.lane.b32.xlu0 %v5000, 48
  %v6548 = vpop.permute.xlu0 %6547
  %6549 = vrot.lane.b32.xlu0 %v5001, 48
  %v6550 = vpop.permute.xlu0 %6549
  %6551 = vrot.lane.b32.xlu0 %v5002, 48
  %v6552 = vpop.permute.xlu0 %6551
  %6553 = vrot.lane.b32.xlu0 %v5003, 48
  %v6554 = vpop.permute.xlu0 %6553
  %6555 = vrot.lane.b32.xlu0 %v5004, 48
  %v6556 = vpop.permute.xlu0 %6555
  %6557 = vrot.lane.b32.xlu0 %v5005, 48
  %v6558 = vpop.permute.xlu0 %6557
  %6559 = vrot.lane.b32.xlu0 %v5006, 48
  %v6560 = vpop.permute.xlu0 %6559
  %6561 = vrot.lane.b32.xlu0 %v5007, 48
  %v6562 = vpop.permute.xlu0 %6561
  %6563 = vrot.lane.b32.xlu0 %v5008, 48
  %v6564 = vpop.permute.xlu0 %6563
  %6565 = vrot.lane.b32.xlu0 %v5009, 48
  %v6566 = vpop.permute.xlu0 %6565
  %6567 = vrot.lane.b32.xlu0 %v5010, 48
  %v6568 = vpop.permute.xlu0 %6567
  %6569 = vrot.lane.b32.xlu0 %v5011, 48
  %v6570 = vpop.permute.xlu0 %6569
  %6571 = vrot.lane.b32.xlu0 %v5012, 48
  %v6572 = vpop.permute.xlu0 %6571
  %6573 = vrot.lane.b32.xlu0 %v5013, 48
  %v6574 = vpop.permute.xlu0 %6573
  %6575 = vrot.lane.b32.xlu0 %v5014, 48
  %v6576 = vpop.permute.xlu0 %6575
  %6577 = vrot.lane.b32.xlu0 %v5015, 48
  %v6578 = vpop.permute.xlu0 %6577
  %6579 = vrot.lane.b32.xlu0 %v5016, 48
  %v6580 = vpop.permute.xlu0 %6579
  %6581 = vrot.lane.b32.xlu0 %v5017, 48
  %v6582 = vpop.permute.xlu0 %6581
  %6583 = vrot.lane.b32.xlu0 %v5018, 48
  %v6584 = vpop.permute.xlu0 %6583
  %6585 = vrot.lane.b32.xlu0 %v5019, 48
  %v6586 = vpop.permute.xlu0 %6585
  %6587 = vrot.lane.b32.xlu0 %v5020, 48
  %v6588 = vpop.permute.xlu0 %6587
  %6589 = vrot.lane.b32.xlu0 %v5021, 48
  %v6590 = vpop.permute.xlu0 %6589
  %6591 = vrot.lane.b32.xlu0 %v5022, 48
  %v6592 = vpop.permute.xlu0 %6591
  %6593 = vrot.lane.b32.xlu0 %v5023, 48
  %v6594 = vpop.permute.xlu0 %6593
  %6595 = vrot.lane.b32.xlu0 %v5024, 48
  %v6596 = vpop.permute.xlu0 %6595
  %6597 = vrot.lane.b32.xlu0 %v5025, 48
  %v6598 = vpop.permute.xlu0 %6597
  %6599 = vrot.lane.b32.xlu0 %v5026, 48
  %v6600 = vpop.permute.xlu0 %6599
  %6601 = vrot.lane.b32.xlu0 %v5027, 48
  %v6602 = vpop.permute.xlu0 %6601
  %6603 = vrot.lane.b32.xlu0 %v5028, 48
  %v6604 = vpop.permute.xlu0 %6603
  %6605 = vrot.lane.b32.xlu0 %v5029, 48
  %v6606 = vpop.permute.xlu0 %6605
  %6607 = vrot.lane.b32.xlu0 %v5030, 48
  %v6608 = vpop.permute.xlu0 %6607
  %6609 = vrot.lane.b32.xlu0 %v5031, 48
  %v6610 = vpop.permute.xlu0 %6609
  %6611 = vrot.lane.b32.xlu0 %v5032, 48
  %v6612 = vpop.permute.xlu0 %6611
  %6613 = vrot.lane.b32.xlu0 %v5033, 48
  %v6614 = vpop.permute.xlu0 %6613
  %6615 = vrot.lane.b32.xlu0 %v5034, 48
  %v6616 = vpop.permute.xlu0 %6615
  %6617 = vrot.lane.b32.xlu0 %v5035, 48
  %v6618 = vpop.permute.xlu0 %6617
  %6619 = vrot.lane.b32.xlu0 %v5036, 48
  %v6620 = vpop.permute.xlu0 %6619
  %6621 = vrot.lane.b32.xlu0 %v5037, 48
  %v6622 = vpop.permute.xlu0 %6621
  %6623 = vrot.lane.b32.xlu0 %v5038, 48
  %v6624 = vpop.permute.xlu0 %6623
  %6625 = vrot.lane.b32.xlu0 %v5039, 48
  %v6626 = vpop.permute.xlu0 %6625
  %6627 = vrot.lane.b32.xlu0 %v5040, 48
  %v6628 = vpop.permute.xlu0 %6627
  %6629 = vrot.lane.b32.xlu0 %v5041, 48
  %v6630 = vpop.permute.xlu0 %6629
  %6631 = vrot.lane.b32.xlu0 %v5042, 48
  %v6632 = vpop.permute.xlu0 %6631
  %6633 = vrot.lane.b32.xlu0 %v5043, 48
  %v6634 = vpop.permute.xlu0 %6633
  %6635 = vrot.lane.b32.xlu0 %v5044, 48
  %v6636 = vpop.permute.xlu0 %6635
  %6637 = vrot.lane.b32.xlu0 %v5045, 48
  %v6638 = vpop.permute.xlu0 %6637
  %6639 = vrot.lane.b32.xlu0 %v5046, 48
  %v6640 = vpop.permute.xlu0 %6639
  %6641 = vrot.lane.b32.xlu0 %v5047, 48
  %v6642 = vpop.permute.xlu0 %6641
  %6643 = vrot.lane.b32.xlu0 %v5048, 48
  %v6644 = vpop.permute.xlu0 %6643
  %6645 = vrot.lane.b32.xlu0 %v5049, 48
  %v6646 = vpop.permute.xlu0 %6645
  %6647 = vrot.lane.b32.xlu0 %v5050, 48
  %v6648 = vpop.permute.xlu0 %6647
  %6649 = vrot.lane.b32.xlu0 %v5051, 48
  %v6650 = vpop.permute.xlu0 %6649
  %6651 = vrot.lane.b32.xlu0 %v5052, 48
  %v6652 = vpop.permute.xlu0 %6651
  %6781 = vrot.lane.b32.xlu0 %v5053, 56
  %v6782 = vpop.permute.xlu0 %6781
  %6783 = vrot.lane.b32.xlu0 %v5054, 56
  %v6784 = vpop.permute.xlu0 %6783
  %6785 = vrot.lane.b32.xlu0 %v5055, 56
  %v6786 = vpop.permute.xlu0 %6785
  %6787 = vrot.lane.b32.xlu0 %v5056, 56
  %v6788 = vpop.permute.xlu0 %6787
  %6789 = vrot.lane.b32.xlu0 %v5057, 56
  %v6790 = vpop.permute.xlu0 %6789
  %6791 = vrot.lane.b32.xlu0 %v5058, 56
  %v6792 = vpop.permute.xlu0 %6791
  %6793 = vrot.lane.b32.xlu0 %v5059, 56
  %v6794 = vpop.permute.xlu0 %6793
  %6795 = vrot.lane.b32.xlu0 %v5060, 56
  %v6796 = vpop.permute.xlu0 %6795
  %6797 = vrot.lane.b32.xlu0 %v5061, 56
  %v6798 = vpop.permute.xlu0 %6797
  %6799 = vrot.lane.b32.xlu0 %v5062, 56
  %v6800 = vpop.permute.xlu0 %6799
  %6801 = vrot.lane.b32.xlu0 %v5063, 56
  %v6802 = vpop.permute.xlu0 %6801
  %6803 = vrot.lane.b32.xlu0 %v5064, 56
  %v6804 = vpop.permute.xlu0 %6803
  %6805 = vrot.lane.b32.xlu0 %v5065, 56
  %v6806 = vpop.permute.xlu0 %6805
  %6807 = vrot.lane.b32.xlu0 %v5066, 56
  %v6808 = vpop.permute.xlu0 %6807
  %6809 = vrot.lane.b32.xlu0 %v5067, 56
  %v6810 = vpop.permute.xlu0 %6809
  %6811 = vrot.lane.b32.xlu0 %v5068, 56
  %v6812 = vpop.permute.xlu0 %6811
  %6813 = vrot.lane.b32.xlu0 %v5069, 56
  %v6814 = vpop.permute.xlu0 %6813
  %6815 = vrot.lane.b32.xlu0 %v5070, 56
  %v6816 = vpop.permute.xlu0 %6815
  %6817 = vrot.lane.b32.xlu0 %v5071, 56
  %v6818 = vpop.permute.xlu0 %6817
  %6819 = vrot.lane.b32.xlu0 %v5072, 56
  %v6820 = vpop.permute.xlu0 %6819
  %6821 = vrot.lane.b32.xlu0 %v5073, 56
  %v6822 = vpop.permute.xlu0 %6821
  %6823 = vrot.lane.b32.xlu0 %v5074, 56
  %v6824 = vpop.permute.xlu0 %6823
  %6825 = vrot.lane.b32.xlu0 %v5075, 56
  %v6826 = vpop.permute.xlu0 %6825
  %6827 = vrot.lane.b32.xlu0 %v5076, 56
  %v6828 = vpop.permute.xlu0 %6827
  %6829 = vrot.lane.b32.xlu0 %v5077, 56
  %v6830 = vpop.permute.xlu0 %6829
  %6831 = vrot.lane.b32.xlu0 %v5078, 56
  %v6832 = vpop.permute.xlu0 %6831
  %6833 = vrot.lane.b32.xlu0 %v5079, 56
  %v6834 = vpop.permute.xlu0 %6833
  %6835 = vrot.lane.b32.xlu0 %v5080, 56
  %v6836 = vpop.permute.xlu0 %6835
  %6837 = vrot.lane.b32.xlu0 %v5081, 56
  %v6838 = vpop.permute.xlu0 %6837
  %6839 = vrot.lane.b32.xlu0 %v5082, 56
  %v6840 = vpop.permute.xlu0 %6839
  %6841 = vrot.lane.b32.xlu0 %v5083, 56
  %v6842 = vpop.permute.xlu0 %6841
  %6843 = vrot.lane.b32.xlu0 %v5084, 56
  %v6844 = vpop.permute.xlu0 %6843
  %6845 = vrot.lane.b32.xlu0 %v5085, 56
  %v6846 = vpop.permute.xlu0 %6845
  %6847 = vrot.lane.b32.xlu0 %v5086, 56
  %v6848 = vpop.permute.xlu0 %6847
  %6849 = vrot.lane.b32.xlu0 %v5087, 56
  %v6850 = vpop.permute.xlu0 %6849
  %6851 = vrot.lane.b32.xlu0 %v5088, 56
  %v6852 = vpop.permute.xlu0 %6851
  %6853 = vrot.lane.b32.xlu0 %v5089, 56
  %v6854 = vpop.permute.xlu0 %6853
  %6855 = vrot.lane.b32.xlu0 %v5090, 56
  %v6856 = vpop.permute.xlu0 %6855
  %6857 = vrot.lane.b32.xlu0 %v5091, 56
  %v6858 = vpop.permute.xlu0 %6857
  %6859 = vrot.lane.b32.xlu0 %v5092, 56
  %v6860 = vpop.permute.xlu0 %6859
  %6861 = vrot.lane.b32.xlu0 %v5093, 56
  %v6862 = vpop.permute.xlu0 %6861
  %6863 = vrot.lane.b32.xlu0 %v5094, 56
  %v6864 = vpop.permute.xlu0 %6863
  %6865 = vrot.lane.b32.xlu0 %v5095, 56
  %v6866 = vpop.permute.xlu0 %6865
  %6867 = vrot.lane.b32.xlu0 %v5096, 56
  %v6868 = vpop.permute.xlu0 %6867
  %6869 = vrot.lane.b32.xlu0 %v5097, 56
  %v6870 = vpop.permute.xlu0 %6869
  %6871 = vrot.lane.b32.xlu0 %v5098, 56
  %v6872 = vpop.permute.xlu0 %6871
  %6873 = vrot.lane.b32.xlu0 %v5099, 56
  %v6874 = vpop.permute.xlu0 %6873
  %6875 = vrot.lane.b32.xlu0 %v5100, 56
  %v6876 = vpop.permute.xlu0 %6875
  %6877 = vrot.lane.b32.xlu0 %v5101, 56
  %v6878 = vpop.permute.xlu0 %6877
  %6879 = vrot.lane.b32.xlu0 %v5102, 56
  %v6880 = vpop.permute.xlu0 %6879
  %6881 = vrot.lane.b32.xlu0 %v5103, 56
  %v6882 = vpop.permute.xlu0 %6881
  %6883 = vrot.lane.b32.xlu0 %v5104, 56
  %v6884 = vpop.permute.xlu0 %6883
  %6885 = vrot.lane.b32.xlu0 %v5105, 56
  %v6886 = vpop.permute.xlu0 %6885
  %6887 = vrot.lane.b32.xlu0 %v5106, 56
  %v6888 = vpop.permute.xlu0 %6887
  %6889 = vrot.lane.b32.xlu0 %v5107, 56
  %v6890 = vpop.permute.xlu0 %6889
  %6891 = vrot.lane.b32.xlu0 %v5108, 56
  %v6892 = vpop.permute.xlu0 %6891
  %6893 = vrot.lane.b32.xlu0 %v5109, 56
  %v6894 = vpop.permute.xlu0 %6893
  %6895 = vrot.lane.b32.xlu0 %v5110, 56
  %v6896 = vpop.permute.xlu0 %6895
  %6897 = vrot.lane.b32.xlu0 %v5111, 56
  %v6898 = vpop.permute.xlu0 %6897
  %6899 = vrot.lane.b32.xlu0 %v5112, 56
  %v6900 = vpop.permute.xlu0 %6899
  %6901 = vrot.lane.b32.xlu0 %v5113, 56
  %v6902 = vpop.permute.xlu0 %6901
  %6903 = vrot.lane.b32.xlu0 %v5114, 56
  %v6904 = vpop.permute.xlu0 %6903
  %6905 = vrot.lane.b32.xlu0 %v5115, 56
  %v6906 = vpop.permute.xlu0 %6905
  %6907 = vrot.lane.b32.xlu0 %v5116, 56
  %v6908 = vpop.permute.xlu0 %6907
  %7037 = vrot.lane.b32.xlu0 %v5117, 64
  %v7038 = vpop.permute.xlu0 %7037
  %7039 = vrot.lane.b32.xlu0 %v5118, 64
  %v7040 = vpop.permute.xlu0 %7039
  %7041 = vrot.lane.b32.xlu0 %v5119, 64
  %v7042 = vpop.permute.xlu0 %7041
  %7043 = vrot.lane.b32.xlu0 %v5120, 64
  %v7044 = vpop.permute.xlu0 %7043
  %7045 = vrot.lane.b32.xlu0 %v5121, 64
  %v7046 = vpop.permute.xlu0 %7045
  %7047 = vrot.lane.b32.xlu0 %v5122, 64
  %v7048 = vpop.permute.xlu0 %7047
  %7049 = vrot.lane.b32.xlu0 %v5123, 64
  %v7050 = vpop.permute.xlu0 %7049
  %7051 = vrot.lane.b32.xlu0 %v5124, 64
  %v7052 = vpop.permute.xlu0 %7051
  %7053 = vrot.lane.b32.xlu0 %v5125, 64
  %v7054 = vpop.permute.xlu0 %7053
  %7055 = vrot.lane.b32.xlu0 %v5126, 64
  %v7056 = vpop.permute.xlu0 %7055
  %7057 = vrot.lane.b32.xlu0 %v5127, 64
  %v7058 = vpop.permute.xlu0 %7057
  %7059 = vrot.lane.b32.xlu0 %v5128, 64
  %v7060 = vpop.permute.xlu0 %7059
  %7061 = vrot.lane.b32.xlu0 %v5129, 64
  %v7062 = vpop.permute.xlu0 %7061
  %7063 = vrot.lane.b32.xlu0 %v5130, 64
  %v7064 = vpop.permute.xlu0 %7063
  %7065 = vrot.lane.b32.xlu0 %v5131, 64
  %v7066 = vpop.permute.xlu0 %7065
  %7067 = vrot.lane.b32.xlu0 %v5132, 64
  %v7068 = vpop.permute.xlu0 %7067
  %7069 = vrot.lane.b32.xlu0 %v5133, 64
  %v7070 = vpop.permute.xlu0 %7069
  %7071 = vrot.lane.b32.xlu0 %v5134, 64
  %v7072 = vpop.permute.xlu0 %7071
  %7073 = vrot.lane.b32.xlu0 %v5135, 64
  %v7074 = vpop.permute.xlu0 %7073
  %7075 = vrot.lane.b32.xlu0 %v5136, 64
  %v7076 = vpop.permute.xlu0 %7075
  %7077 = vrot.lane.b32.xlu0 %v5137, 64
  %v7078 = vpop.permute.xlu0 %7077
  %7079 = vrot.lane.b32.xlu0 %v5138, 64
  %v7080 = vpop.permute.xlu0 %7079
  %7081 = vrot.lane.b32.xlu0 %v5139, 64
  %v7082 = vpop.permute.xlu0 %7081
  %7083 = vrot.lane.b32.xlu0 %v5140, 64
  %v7084 = vpop.permute.xlu0 %7083
  %7085 = vrot.lane.b32.xlu0 %v5141, 64
  %v7086 = vpop.permute.xlu0 %7085
  %7087 = vrot.lane.b32.xlu0 %v5142, 64
  %v7088 = vpop.permute.xlu0 %7087
  %7089 = vrot.lane.b32.xlu0 %v5143, 64
  %v7090 = vpop.permute.xlu0 %7089
  %7091 = vrot.lane.b32.xlu0 %v5144, 64
  %v7092 = vpop.permute.xlu0 %7091
  %7093 = vrot.lane.b32.xlu0 %v5145, 64
  %v7094 = vpop.permute.xlu0 %7093
  %7095 = vrot.lane.b32.xlu0 %v5146, 64
  %v7096 = vpop.permute.xlu0 %7095
  %7097 = vrot.lane.b32.xlu0 %v5147, 64
  %v7098 = vpop.permute.xlu0 %7097
  %7099 = vrot.lane.b32.xlu0 %v5148, 64
  %v7100 = vpop.permute.xlu0 %7099
  %7101 = vrot.lane.b32.xlu0 %v5149, 64
  %v7102 = vpop.permute.xlu0 %7101
  %7103 = vrot.lane.b32.xlu0 %v5150, 64
  %v7104 = vpop.permute.xlu0 %7103
  %7105 = vrot.lane.b32.xlu0 %v5151, 64
  %v7106 = vpop.permute.xlu0 %7105
  %7107 = vrot.lane.b32.xlu0 %v5152, 64
  %v7108 = vpop.permute.xlu0 %7107
  %7109 = vrot.lane.b32.xlu0 %v5153, 64
  %v7110 = vpop.permute.xlu0 %7109
  %7111 = vrot.lane.b32.xlu0 %v5154, 64
  %v7112 = vpop.permute.xlu0 %7111
  %7113 = vrot.lane.b32.xlu0 %v5155, 64
  %v7114 = vpop.permute.xlu0 %7113
  %7115 = vrot.lane.b32.xlu0 %v5156, 64
  %v7116 = vpop.permute.xlu0 %7115
  %7117 = vrot.lane.b32.xlu0 %v5157, 64
  %v7118 = vpop.permute.xlu0 %7117
  %7119 = vrot.lane.b32.xlu0 %v5158, 64
  %v7120 = vpop.permute.xlu0 %7119
  %7121 = vrot.lane.b32.xlu0 %v5159, 64
  %v7122 = vpop.permute.xlu0 %7121
  %7123 = vrot.lane.b32.xlu0 %v5160, 64
  %v7124 = vpop.permute.xlu0 %7123
  %7125 = vrot.lane.b32.xlu0 %v5161, 64
  %v7126 = vpop.permute.xlu0 %7125
  %7127 = vrot.lane.b32.xlu0 %v5162, 64
  %v7128 = vpop.permute.xlu0 %7127
  %7129 = vrot.lane.b32.xlu0 %v5163, 64
  %v7130 = vpop.permute.xlu0 %7129
  %7131 = vrot.lane.b32.xlu0 %v5164, 64
  %v7132 = vpop.permute.xlu0 %7131
  %7133 = vrot.lane.b32.xlu0 %v5165, 64
  %v7134 = vpop.permute.xlu0 %7133
  %7135 = vrot.lane.b32.xlu0 %v5166, 64
  %v7136 = vpop.permute.xlu0 %7135
  %7137 = vrot.lane.b32.xlu0 %v5167, 64
  %v7138 = vpop.permute.xlu0 %7137
  %7139 = vrot.lane.b32.xlu0 %v5168, 64
  %v7140 = vpop.permute.xlu0 %7139
  %7141 = vrot.lane.b32.xlu0 %v5169, 64
  %v7142 = vpop.permute.xlu0 %7141
  %7143 = vrot.lane.b32.xlu0 %v5170, 64
  %v7144 = vpop.permute.xlu0 %7143
  %7145 = vrot.lane.b32.xlu0 %v5171, 64
  %v7146 = vpop.permute.xlu0 %7145
  %7147 = vrot.lane.b32.xlu0 %v5172, 64
  %v7148 = vpop.permute.xlu0 %7147
  %7149 = vrot.lane.b32.xlu0 %v5173, 64
  %v7150 = vpop.permute.xlu0 %7149
  %7151 = vrot.lane.b32.xlu0 %v5174, 64
  %v7152 = vpop.permute.xlu0 %7151
  %7153 = vrot.lane.b32.xlu0 %v5175, 64
  %v7154 = vpop.permute.xlu0 %7153
  %7155 = vrot.lane.b32.xlu0 %v5176, 64
  %v7156 = vpop.permute.xlu0 %7155
  %7157 = vrot.lane.b32.xlu0 %v5177, 64
  %v7158 = vpop.permute.xlu0 %7157
  %7159 = vrot.lane.b32.xlu0 %v5178, 64
  %v7160 = vpop.permute.xlu0 %7159
  %7161 = vrot.lane.b32.xlu0 %v5179, 64
  %v7162 = vpop.permute.xlu0 %7161
  %7163 = vrot.lane.b32.xlu0 %v5180, 64
  %v7164 = vpop.permute.xlu0 %7163
  %v7229 = vsel %vm32, %v4605, %v5246
  %v7230 = vsel %vm32, %v4606, %v5248
  %v7231 = vsel %vm32, %v4607, %v5250
  %v7232 = vsel %vm32, %v4608, %v5252
  %v7233 = vsel %vm32, %v4609, %v5254
  %v7234 = vsel %vm32, %v4610, %v5256
  %v7235 = vsel %vm32, %v4611, %v5258
  %v7236 = vsel %vm32, %v4612, %v5260
  %v7237 = vsel %vm32, %v4613, %v5262
  %v7238 = vsel %vm32, %v4614, %v5264
  %v7239 = vsel %vm32, %v4615, %v5266
  %v7240 = vsel %vm32, %v4616, %v5268
  %v7241 = vsel %vm32, %v4617, %v5270
  %v7242 = vsel %vm32, %v4618, %v5272
  %v7243 = vsel %vm32, %v4619, %v5274
  %v7244 = vsel %vm32, %v4620, %v5276
  %v7245 = vsel %vm32, %v4621, %v5278
  %v7246 = vsel %vm32, %v4622, %v5280
  %v7247 = vsel %vm32, %v4623, %v5282
  %v7248 = vsel %vm32, %v4624, %v5284
  %v7249 = vsel %vm32, %v4625, %v5286
  %v7250 = vsel %vm32, %v4626, %v5288
  %v7251 = vsel %vm32, %v4627, %v5290
  %v7252 = vsel %vm32, %v4628, %v5292
  %v7253 = vsel %vm32, %v4629, %v5294
  %v7254 = vsel %vm32, %v4630, %v5296
  %v7255 = vsel %vm32, %v4631, %v5298
  %v7256 = vsel %vm32, %v4632, %v5300
  %v7257 = vsel %vm32, %v4633, %v5302
  %v7258 = vsel %vm32, %v4634, %v5304
  %v7259 = vsel %vm32, %v4635, %v5306
  %v7260 = vsel %vm32, %v4636, %v5308
  %v7261 = vsel %vm32, %v4637, %v5310
  %v7262 = vsel %vm32, %v4638, %v5312
  %v7263 = vsel %vm32, %v4639, %v5314
  %v7264 = vsel %vm32, %v4640, %v5316
  %v7265 = vsel %vm32, %v4641, %v5318
  %v7266 = vsel %vm32, %v4642, %v5320
  %v7267 = vsel %vm32, %v4643, %v5322
  %v7268 = vsel %vm32, %v4644, %v5324
  %v7269 = vsel %vm32, %v4645, %v5326
  %v7270 = vsel %vm32, %v4646, %v5328
  %v7271 = vsel %vm32, %v4647, %v5330
  %v7272 = vsel %vm32, %v4648, %v5332
  %v7273 = vsel %vm32, %v4649, %v5334
  %v7274 = vsel %vm32, %v4650, %v5336
  %v7275 = vsel %vm32, %v4651, %v5338
  %v7276 = vsel %vm32, %v4652, %v5340
  %v7277 = vsel %vm32, %v4653, %v5342
  %v7278 = vsel %vm32, %v4654, %v5344
  %v7279 = vsel %vm32, %v4655, %v5346
  %v7280 = vsel %vm32, %v4656, %v5348
  %v7281 = vsel %vm32, %v4657, %v5350
  %v7282 = vsel %vm32, %v4658, %v5352
  %v7283 = vsel %vm32, %v4659, %v5354
  %v7284 = vsel %vm32, %v4660, %v5356
  %v7285 = vsel %vm32, %v4661, %v5358
  %v7286 = vsel %vm32, %v4662, %v5360
  %v7287 = vsel %vm32, %v4663, %v5362
  %v7288 = vsel %vm32, %v4664, %v5364
  %v7289 = vsel %vm32, %v4665, %v5366
  %v7290 = vsel %vm32, %v4666, %v5368
  %v7291 = vsel %vm32, %v4667, %v5370
  %v7292 = vsel %vm32, %v4668, %v5372
  %v7293 = vsel %vm2997, %v7229, %v5502
  %v7294 = vsel %vm2997, %v7230, %v5504
  %v7295 = vsel %vm2997, %v7231, %v5506
  %v7296 = vsel %vm2997, %v7232, %v5508
  %v7297 = vsel %vm2997, %v7233, %v5510
  %v7298 = vsel %vm2997, %v7234, %v5512
  %v7299 = vsel %vm2997, %v7235, %v5514
  %v7300 = vsel %vm2997, %v7236, %v5516
  %v7301 = vsel %vm2997, %v7237, %v5518
  %v7302 = vsel %vm2997, %v7238, %v5520
  %v7303 = vsel %vm2997, %v7239, %v5522
  %v7304 = vsel %vm2997, %v7240, %v5524
  %v7305 = vsel %vm2997, %v7241, %v5526
  %v7306 = vsel %vm2997, %v7242, %v5528
  %v7307 = vsel %vm2997, %v7243, %v5530
  %v7308 = vsel %vm2997, %v7244, %v5532
  %v7309 = vsel %vm2997, %v7245, %v5534
  %v7310 = vsel %vm2997, %v7246, %v5536
  %v7311 = vsel %vm2997, %v7247, %v5538
  %v7312 = vsel %vm2997, %v7248, %v5540
  %v7313 = vsel %vm2997, %v7249, %v5542
  %v7314 = vsel %vm2997, %v7250, %v5544
  %v7315 = vsel %vm2997, %v7251, %v5546
  %v7316 = vsel %vm2997, %v7252, %v5548
  %v7317 = vsel %vm2997, %v7253, %v5550
  %v7318 = vsel %vm2997, %v7254, %v5552
  %v7319 = vsel %vm2997, %v7255, %v5554
  %v7320 = vsel %vm2997, %v7256, %v5556
  %v7321 = vsel %vm2997, %v7257, %v5558
  %v7322 = vsel %vm2997, %v7258, %v5560
  %v7323 = vsel %vm2997, %v7259, %v5562
  %v7324 = vsel %vm2997, %v7260, %v5564
  %v7325 = vsel %vm2997, %v7261, %v5566
  %v7326 = vsel %vm2997, %v7262, %v5568
  %v7327 = vsel %vm2997, %v7263, %v5570
  %v7328 = vsel %vm2997, %v7264, %v5572
  %v7329 = vsel %vm2997, %v7265, %v5574
  %v7330 = vsel %vm2997, %v7266, %v5576
  %v7331 = vsel %vm2997, %v7267, %v5578
  %v7332 = vsel %vm2997, %v7268, %v5580
  %v7333 = vsel %vm2997, %v7269, %v5582
  %v7334 = vsel %vm2997, %v7270, %v5584
  %v7335 = vsel %vm2997, %v7271, %v5586
  %v7336 = vsel %vm2997, %v7272, %v5588
  %v7337 = vsel %vm2997, %v7273, %v5590
  %v7338 = vsel %vm2997, %v7274, %v5592
  %v7339 = vsel %vm2997, %v7275, %v5594
  %v7340 = vsel %vm2997, %v7276, %v5596
  %v7341 = vsel %vm2997, %v7277, %v5598
  %v7342 = vsel %vm2997, %v7278, %v5600
  %v7343 = vsel %vm2997, %v7279, %v5602
  %v7344 = vsel %vm2997, %v7280, %v5604
  %v7345 = vsel %vm2997, %v7281, %v5606
  %v7346 = vsel %vm2997, %v7282, %v5608
  %v7347 = vsel %vm2997, %v7283, %v5610
  %v7348 = vsel %vm2997, %v7284, %v5612
  %v7349 = vsel %vm2997, %v7285, %v5614
  %v7350 = vsel %vm2997, %v7286, %v5616
  %v7351 = vsel %vm2997, %v7287, %v5618
  %v7352 = vsel %vm2997, %v7288, %v5620
  %v7353 = vsel %vm2997, %v7289, %v5622
  %v7354 = vsel %vm2997, %v7290, %v5624
  %v7355 = vsel %vm2997, %v7291, %v5626
  %v7356 = vsel %vm2997, %v7292, %v5628
  %v7357 = vsel %vm3062, %v7293, %v5758
  %v7358 = vsel %vm3062, %v7294, %v5760
  %v7359 = vsel %vm3062, %v7295, %v5762
  %v7360 = vsel %vm3062, %v7296, %v5764
  %v7361 = vsel %vm3062, %v7297, %v5766
  %v7362 = vsel %vm3062, %v7298, %v5768
  %v7363 = vsel %vm3062, %v7299, %v5770
  %v7364 = vsel %vm3062, %v7300, %v5772
  %v7365 = vsel %vm3062, %v7301, %v5774
  %v7366 = vsel %vm3062, %v7302, %v5776
  %v7367 = vsel %vm3062, %v7303, %v5778
  %v7368 = vsel %vm3062, %v7304, %v5780
  %v7369 = vsel %vm3062, %v7305, %v5782
  %v7370 = vsel %vm3062, %v7306, %v5784
  %v7371 = vsel %vm3062, %v7307, %v5786
  %v7372 = vsel %vm3062, %v7308, %v5788
  %v7373 = vsel %vm3062, %v7309, %v5790
  %v7374 = vsel %vm3062, %v7310, %v5792
  %v7375 = vsel %vm3062, %v7311, %v5794
  %v7376 = vsel %vm3062, %v7312, %v5796
  %v7377 = vsel %vm3062, %v7313, %v5798
  %v7378 = vsel %vm3062, %v7314, %v5800
  %v7379 = vsel %vm3062, %v7315, %v5802
  %v7380 = vsel %vm3062, %v7316, %v5804
  %v7381 = vsel %vm3062, %v7317, %v5806
  %v7382 = vsel %vm3062, %v7318, %v5808
  %v7383 = vsel %vm3062, %v7319, %v5810
  %v7384 = vsel %vm3062, %v7320, %v5812
  %v7385 = vsel %vm3062, %v7321, %v5814
  %v7386 = vsel %vm3062, %v7322, %v5816
  %v7387 = vsel %vm3062, %v7323, %v5818
  %v7388 = vsel %vm3062, %v7324, %v5820
  %v7389 = vsel %vm3062, %v7325, %v5822
  %v7390 = vsel %vm3062, %v7326, %v5824
  %v7391 = vsel %vm3062, %v7327, %v5826
  %v7392 = vsel %vm3062, %v7328, %v5828
  %v7393 = vsel %vm3062, %v7329, %v5830
  %v7394 = vsel %vm3062, %v7330, %v5832
  %v7395 = vsel %vm3062, %v7331, %v5834
  %v7396 = vsel %vm3062, %v7332, %v5836
  %v7397 = vsel %vm3062, %v7333, %v5838
  %v7398 = vsel %vm3062, %v7334, %v5840
  %v7399 = vsel %vm3062, %v7335, %v5842
  %v7400 = vsel %vm3062, %v7336, %v5844
  %v7401 = vsel %vm3062, %v7337, %v5846
  %v7402 = vsel %vm3062, %v7338, %v5848
  %v7403 = vsel %vm3062, %v7339, %v5850
  %v7404 = vsel %vm3062, %v7340, %v5852
  %v7405 = vsel %vm3062, %v7341, %v5854
  %v7406 = vsel %vm3062, %v7342, %v5856
  %v7407 = vsel %vm3062, %v7343, %v5858
  %v7408 = vsel %vm3062, %v7344, %v5860
  %v7409 = vsel %vm3062, %v7345, %v5862
  %v7410 = vsel %vm3062, %v7346, %v5864
  %v7411 = vsel %vm3062, %v7347, %v5866
  %v7412 = vsel %vm3062, %v7348, %v5868
  %v7413 = vsel %vm3062, %v7349, %v5870
  %v7414 = vsel %vm3062, %v7350, %v5872
  %v7415 = vsel %vm3062, %v7351, %v5874
  %v7416 = vsel %vm3062, %v7352, %v5876
  %v7417 = vsel %vm3062, %v7353, %v5878
  %v7418 = vsel %vm3062, %v7354, %v5880
  %v7419 = vsel %vm3062, %v7355, %v5882
  %v7420 = vsel %vm3062, %v7356, %v5884
  %v7421 = vsel %vm3127, %v7357, %v6014
  %v7422 = vsel %vm3127, %v7358, %v6016
  %v7423 = vsel %vm3127, %v7359, %v6018
  %v7424 = vsel %vm3127, %v7360, %v6020
  %v7425 = vsel %vm3127, %v7361, %v6022
  %v7426 = vsel %vm3127, %v7362, %v6024
  %v7427 = vsel %vm3127, %v7363, %v6026
  %v7428 = vsel %vm3127, %v7364, %v6028
  %v7429 = vsel %vm3127, %v7365, %v6030
  %v7430 = vsel %vm3127, %v7366, %v6032
  %v7431 = vsel %vm3127, %v7367, %v6034
  %v7432 = vsel %vm3127, %v7368, %v6036
  %v7433 = vsel %vm3127, %v7369, %v6038
  %v7434 = vsel %vm3127, %v7370, %v6040
  %v7435 = vsel %vm3127, %v7371, %v6042
  %v7436 = vsel %vm3127, %v7372, %v6044
  %v7437 = vsel %vm3127, %v7373, %v6046
  %v7438 = vsel %vm3127, %v7374, %v6048
  %v7439 = vsel %vm3127, %v7375, %v6050
  %v7440 = vsel %vm3127, %v7376, %v6052
  %v7441 = vsel %vm3127, %v7377, %v6054
  %v7442 = vsel %vm3127, %v7378, %v6056
  %v7443 = vsel %vm3127, %v7379, %v6058
  %v7444 = vsel %vm3127, %v7380, %v6060
  %v7445 = vsel %vm3127, %v7381, %v6062
  %v7446 = vsel %vm3127, %v7382, %v6064
  %v7447 = vsel %vm3127, %v7383, %v6066
  %v7448 = vsel %vm3127, %v7384, %v6068
  %v7449 = vsel %vm3127, %v7385, %v6070
  %v7450 = vsel %vm3127, %v7386, %v6072
  %v7451 = vsel %vm3127, %v7387, %v6074
  %v7452 = vsel %vm3127, %v7388, %v6076
  %v7453 = vsel %vm3127, %v7389, %v6078
  %v7454 = vsel %vm3127, %v7390, %v6080
  %v7455 = vsel %vm3127, %v7391, %v6082
  %v7456 = vsel %vm3127, %v7392, %v6084
  %v7457 = vsel %vm3127, %v7393, %v6086
  %v7458 = vsel %vm3127, %v7394, %v6088
  %v7459 = vsel %vm3127, %v7395, %v6090
  %v7460 = vsel %vm3127, %v7396, %v6092
  %v7461 = vsel %vm3127, %v7397, %v6094
  %v7462 = vsel %vm3127, %v7398, %v6096
  %v7463 = vsel %vm3127, %v7399, %v6098
  %v7464 = vsel %vm3127, %v7400, %v6100
  %v7465 = vsel %vm3127, %v7401, %v6102
  %v7466 = vsel %vm3127, %v7402, %v6104
  %v7467 = vsel %vm3127, %v7403, %v6106
  %v7468 = vsel %vm3127, %v7404, %v6108
  %v7469 = vsel %vm3127, %v7405, %v6110
  %v7470 = vsel %vm3127, %v7406, %v6112
  %v7471 = vsel %vm3127, %v7407, %v6114
  %v7472 = vsel %vm3127, %v7408, %v6116
  %v7473 = vsel %vm3127, %v7409, %v6118
  %v7474 = vsel %vm3127, %v7410, %v6120
  %v7475 = vsel %vm3127, %v7411, %v6122
  %v7476 = vsel %vm3127, %v7412, %v6124
  %v7477 = vsel %vm3127, %v7413, %v6126
  %v7478 = vsel %vm3127, %v7414, %v6128
  %v7479 = vsel %vm3127, %v7415, %v6130
  %v7480 = vsel %vm3127, %v7416, %v6132
  %v7481 = vsel %vm3127, %v7417, %v6134
  %v7482 = vsel %vm3127, %v7418, %v6136
  %v7483 = vsel %vm3127, %v7419, %v6138
  %v7484 = vsel %vm3127, %v7420, %v6140
  %v7485 = vsel %vm3192, %v7421, %v6270
  %v7486 = vsel %vm3192, %v7422, %v6272
  %v7487 = vsel %vm3192, %v7423, %v6274
  %v7488 = vsel %vm3192, %v7424, %v6276
  %v7489 = vsel %vm3192, %v7425, %v6278
  %v7490 = vsel %vm3192, %v7426, %v6280
  %v7491 = vsel %vm3192, %v7427, %v6282
  %v7492 = vsel %vm3192, %v7428, %v6284
  %v7493 = vsel %vm3192, %v7429, %v6286
  %v7494 = vsel %vm3192, %v7430, %v6288
  %v7495 = vsel %vm3192, %v7431, %v6290
  %v7496 = vsel %vm3192, %v7432, %v6292
  %v7497 = vsel %vm3192, %v7433, %v6294
  %v7498 = vsel %vm3192, %v7434, %v6296
  %v7499 = vsel %vm3192, %v7435, %v6298
  %v7500 = vsel %vm3192, %v7436, %v6300
  %v7501 = vsel %vm3192, %v7437, %v6302
  %v7502 = vsel %vm3192, %v7438, %v6304
  %v7503 = vsel %vm3192, %v7439, %v6306
  %v7504 = vsel %vm3192, %v7440, %v6308
  %v7505 = vsel %vm3192, %v7441, %v6310
  %v7506 = vsel %vm3192, %v7442, %v6312
  %v7507 = vsel %vm3192, %v7443, %v6314
  %v7508 = vsel %vm3192, %v7444, %v6316
  %v7509 = vsel %vm3192, %v7445, %v6318
  %v7510 = vsel %vm3192, %v7446, %v6320
  %v7511 = vsel %vm3192, %v7447, %v6322
  %v7512 = vsel %vm3192, %v7448, %v6324
  %v7513 = vsel %vm3192, %v7449, %v6326
  %v7514 = vsel %vm3192, %v7450, %v6328
  %v7515 = vsel %vm3192, %v7451, %v6330
  %v7516 = vsel %vm3192, %v7452, %v6332
  %v7517 = vsel %vm3192, %v7453, %v6334
  %v7518 = vsel %vm3192, %v7454, %v6336
  %v7519 = vsel %vm3192, %v7455, %v6338
  %v7520 = vsel %vm3192, %v7456, %v6340
  %v7521 = vsel %vm3192, %v7457, %v6342
  %v7522 = vsel %vm3192, %v7458, %v6344
  %v7523 = vsel %vm3192, %v7459, %v6346
  %v7524 = vsel %vm3192, %v7460, %v6348
  %v7525 = vsel %vm3192, %v7461, %v6350
  %v7526 = vsel %vm3192, %v7462, %v6352
  %v7527 = vsel %vm3192, %v7463, %v6354
  %v7528 = vsel %vm3192, %v7464, %v6356
  %v7529 = vsel %vm3192, %v7465, %v6358
  %v7530 = vsel %vm3192, %v7466, %v6360
  %v7531 = vsel %vm3192, %v7467, %v6362
  %v7532 = vsel %vm3192, %v7468, %v6364
  %v7533 = vsel %vm3192, %v7469, %v6366
  %v7534 = vsel %vm3192, %v7470, %v6368
  %v7535 = vsel %vm3192, %v7471, %v6370
  %v7536 = vsel %vm3192, %v7472, %v6372
  %v7537 = vsel %vm3192, %v7473, %v6374
  %v7538 = vsel %vm3192, %v7474, %v6376
  %v7539 = vsel %vm3192, %v7475, %v6378
  %v7540 = vsel %vm3192, %v7476, %v6380
  %v7541 = vsel %vm3192, %v7477, %v6382
  %v7542 = vsel %vm3192, %v7478, %v6384
  %v7543 = vsel %vm3192, %v7479, %v6386
  %v7544 = vsel %vm3192, %v7480, %v6388
  %v7545 = vsel %vm3192, %v7481, %v6390
  %v7546 = vsel %vm3192, %v7482, %v6392
  %v7547 = vsel %vm3192, %v7483, %v6394
  %v7548 = vsel %vm3192, %v7484, %v6396
  %v7549 = vsel %vm3257, %v7485, %v6526
  %v7550 = vsel %vm3257, %v7486, %v6528
  %v7551 = vsel %vm3257, %v7487, %v6530
  %v7552 = vsel %vm3257, %v7488, %v6532
  %v7553 = vsel %vm3257, %v7489, %v6534
  %v7554 = vsel %vm3257, %v7490, %v6536
  %v7555 = vsel %vm3257, %v7491, %v6538
  %v7556 = vsel %vm3257, %v7492, %v6540
  %v7557 = vsel %vm3257, %v7493, %v6542
  %v7558 = vsel %vm3257, %v7494, %v6544
  %v7559 = vsel %vm3257, %v7495, %v6546
  %v7560 = vsel %vm3257, %v7496, %v6548
  %v7561 = vsel %vm3257, %v7497, %v6550
  %v7562 = vsel %vm3257, %v7498, %v6552
  %v7563 = vsel %vm3257, %v7499, %v6554
  %v7564 = vsel %vm3257, %v7500, %v6556
  %v7565 = vsel %vm3257, %v7501, %v6558
  %v7566 = vsel %vm3257, %v7502, %v6560
  %v7567 = vsel %vm3257, %v7503, %v6562
  %v7568 = vsel %vm3257, %v7504, %v6564
  %v7569 = vsel %vm3257, %v7505, %v6566
  %v7570 = vsel %vm3257, %v7506, %v6568
  %v7571 = vsel %vm3257, %v7507, %v6570
  %v7572 = vsel %vm3257, %v7508, %v6572
  %v7573 = vsel %vm3257, %v7509, %v6574
  %v7574 = vsel %vm3257, %v7510, %v6576
  %v7575 = vsel %vm3257, %v7511, %v6578
  %v7576 = vsel %vm3257, %v7512, %v6580
  %v7577 = vsel %vm3257, %v7513, %v6582
  %v7578 = vsel %vm3257, %v7514, %v6584
  %v7579 = vsel %vm3257, %v7515, %v6586
  %v7580 = vsel %vm3257, %v7516, %v6588
  %v7581 = vsel %vm3257, %v7517, %v6590
  %v7582 = vsel %vm3257, %v7518, %v6592
  %v7583 = vsel %vm3257, %v7519, %v6594
  %v7584 = vsel %vm3257, %v7520, %v6596
  %v7585 = vsel %vm3257, %v7521, %v6598
  %v7586 = vsel %vm3257, %v7522, %v6600
  %v7587 = vsel %vm3257, %v7523, %v6602
  %v7588 = vsel %vm3257, %v7524, %v6604
  %v7589 = vsel %vm3257, %v7525, %v6606
  %v7590 = vsel %vm3257, %v7526, %v6608
  %v7591 = vsel %vm3257, %v7527, %v6610
  %v7592 = vsel %vm3257, %v7528, %v6612
  %v7593 = vsel %vm3257, %v7529, %v6614
  %v7594 = vsel %vm3257, %v7530, %v6616
  %v7595 = vsel %vm3257, %v7531, %v6618
  %v7596 = vsel %vm3257, %v7532, %v6620
  %v7597 = vsel %vm3257, %v7533, %v6622
  %v7598 = vsel %vm3257, %v7534, %v6624
  %v7599 = vsel %vm3257, %v7535, %v6626
  %v7600 = vsel %vm3257, %v7536, %v6628
  %v7601 = vsel %vm3257, %v7537, %v6630
  %v7602 = vsel %vm3257, %v7538, %v6632
  %v7603 = vsel %vm3257, %v7539, %v6634
  %v7604 = vsel %vm3257, %v7540, %v6636
  %v7605 = vsel %vm3257, %v7541, %v6638
  %v7606 = vsel %vm3257, %v7542, %v6640
  %v7607 = vsel %vm3257, %v7543, %v6642
  %v7608 = vsel %vm3257, %v7544, %v6644
  %v7609 = vsel %vm3257, %v7545, %v6646
  %v7610 = vsel %vm3257, %v7546, %v6648
  %v7611 = vsel %vm3257, %v7547, %v6650
  %v7612 = vsel %vm3257, %v7548, %v6652
  %v7613 = vsel %vm3322, %v7549, %v6782
  %v7614 = vsel %vm3322, %v7550, %v6784
  %v7615 = vsel %vm3322, %v7551, %v6786
  %v7616 = vsel %vm3322, %v7552, %v6788
  %v7617 = vsel %vm3322, %v7553, %v6790
  %v7618 = vsel %vm3322, %v7554, %v6792
  %v7619 = vsel %vm3322, %v7555, %v6794
  %v7620 = vsel %vm3322, %v7556, %v6796
  %v7621 = vsel %vm3322, %v7557, %v6798
  %v7622 = vsel %vm3322, %v7558, %v6800
  %v7623 = vsel %vm3322, %v7559, %v6802
  %v7624 = vsel %vm3322, %v7560, %v6804
  %v7625 = vsel %vm3322, %v7561, %v6806
  %v7626 = vsel %vm3322, %v7562, %v6808
  %v7627 = vsel %vm3322, %v7563, %v6810
  %v7628 = vsel %vm3322, %v7564, %v6812
  %v7629 = vsel %vm3322, %v7565, %v6814
  %v7630 = vsel %vm3322, %v7566, %v6816
  %v7631 = vsel %vm3322, %v7567, %v6818
  %v7632 = vsel %vm3322, %v7568, %v6820
  %v7633 = vsel %vm3322, %v7569, %v6822
  %v7634 = vsel %vm3322, %v7570, %v6824
  %v7635 = vsel %vm3322, %v7571, %v6826
  %v7636 = vsel %vm3322, %v7572, %v6828
  %v7637 = vsel %vm3322, %v7573, %v6830
  %v7638 = vsel %vm3322, %v7574, %v6832
  %v7639 = vsel %vm3322, %v7575, %v6834
  %v7640 = vsel %vm3322, %v7576, %v6836
  %v7641 = vsel %vm3322, %v7577, %v6838
  %v7642 = vsel %vm3322, %v7578, %v6840
  %v7643 = vsel %vm3322, %v7579, %v6842
  %v7644 = vsel %vm3322, %v7580, %v6844
  %v7645 = vsel %vm3322, %v7581, %v6846
  %v7646 = vsel %vm3322, %v7582, %v6848
  %v7647 = vsel %vm3322, %v7583, %v6850
  %v7648 = vsel %vm3322, %v7584, %v6852
  %v7649 = vsel %vm3322, %v7585, %v6854
  %v7650 = vsel %vm3322, %v7586, %v6856
  %v7651 = vsel %vm3322, %v7587, %v6858
  %v7652 = vsel %vm3322, %v7588, %v6860
  %v7653 = vsel %vm3322, %v7589, %v6862
  %v7654 = vsel %vm3322, %v7590, %v6864
  %v7655 = vsel %vm3322, %v7591, %v6866
  %v7656 = vsel %vm3322, %v7592, %v6868
  %v7657 = vsel %vm3322, %v7593, %v6870
  %v7658 = vsel %vm3322, %v7594, %v6872
  %v7659 = vsel %vm3322, %v7595, %v6874
  %v7660 = vsel %vm3322, %v7596, %v6876
  %v7661 = vsel %vm3322, %v7597, %v6878
  %v7662 = vsel %vm3322, %v7598, %v6880
  %v7663 = vsel %vm3322, %v7599, %v6882
  %v7664 = vsel %vm3322, %v7600, %v6884
  %v7665 = vsel %vm3322, %v7601, %v6886
  %v7666 = vsel %vm3322, %v7602, %v6888
  %v7667 = vsel %vm3322, %v7603, %v6890
  %v7668 = vsel %vm3322, %v7604, %v6892
  %v7669 = vsel %vm3322, %v7605, %v6894
  %v7670 = vsel %vm3322, %v7606, %v6896
  %v7671 = vsel %vm3322, %v7607, %v6898
  %v7672 = vsel %vm3322, %v7608, %v6900
  %v7673 = vsel %vm3322, %v7609, %v6902
  %v7674 = vsel %vm3322, %v7610, %v6904
  %v7675 = vsel %vm3322, %v7611, %v6906
  %v7676 = vsel %vm3322, %v7612, %v6908
  %v7677 = vsel %vm3387, %v7613, %v7038
  %v7678 = vsel %vm3387, %v7614, %v7040
  %v7679 = vsel %vm3387, %v7615, %v7042
  %v7680 = vsel %vm3387, %v7616, %v7044
  %v7681 = vsel %vm3387, %v7617, %v7046
  %v7682 = vsel %vm3387, %v7618, %v7048
  %v7683 = vsel %vm3387, %v7619, %v7050
  %v7684 = vsel %vm3387, %v7620, %v7052
  %v7685 = vsel %vm3387, %v7621, %v7054
  %v7686 = vsel %vm3387, %v7622, %v7056
  %v7687 = vsel %vm3387, %v7623, %v7058
  %v7688 = vsel %vm3387, %v7624, %v7060
  %v7689 = vsel %vm3387, %v7625, %v7062
  %v7690 = vsel %vm3387, %v7626, %v7064
  %v7691 = vsel %vm3387, %v7627, %v7066
  %v7692 = vsel %vm3387, %v7628, %v7068
  %v7693 = vsel %vm3387, %v7629, %v7070
  %v7694 = vsel %vm3387, %v7630, %v7072
  %v7695 = vsel %vm3387, %v7631, %v7074
  %v7696 = vsel %vm3387, %v7632, %v7076
  %v7697 = vsel %vm3387, %v7633, %v7078
  %v7698 = vsel %vm3387, %v7634, %v7080
  %v7699 = vsel %vm3387, %v7635, %v7082
  %v7700 = vsel %vm3387, %v7636, %v7084
  %v7701 = vsel %vm3387, %v7637, %v7086
  %v7702 = vsel %vm3387, %v7638, %v7088
  %v7703 = vsel %vm3387, %v7639, %v7090
  %v7704 = vsel %vm3387, %v7640, %v7092
  %v7705 = vsel %vm3387, %v7641, %v7094
  %v7706 = vsel %vm3387, %v7642, %v7096
  %v7707 = vsel %vm3387, %v7643, %v7098
  %v7708 = vsel %vm3387, %v7644, %v7100
  %v7709 = vsel %vm3387, %v7645, %v7102
  %v7710 = vsel %vm3387, %v7646, %v7104
  %v7711 = vsel %vm3387, %v7647, %v7106
  %v7712 = vsel %vm3387, %v7648, %v7108
  %v7713 = vsel %vm3387, %v7649, %v7110
  %v7714 = vsel %vm3387, %v7650, %v7112
  %v7715 = vsel %vm3387, %v7651, %v7114
  %v7716 = vsel %vm3387, %v7652, %v7116
  %v7717 = vsel %vm3387, %v7653, %v7118
  %v7718 = vsel %vm3387, %v7654, %v7120
  %v7719 = vsel %vm3387, %v7655, %v7122
  %v7720 = vsel %vm3387, %v7656, %v7124
  %v7721 = vsel %vm3387, %v7657, %v7126
  %v7722 = vsel %vm3387, %v7658, %v7128
  %v7723 = vsel %vm3387, %v7659, %v7130
  %v7724 = vsel %vm3387, %v7660, %v7132
  %v7725 = vsel %vm3387, %v7661, %v7134
  %v7726 = vsel %vm3387, %v7662, %v7136
  %v7727 = vsel %vm3387, %v7663, %v7138
  %v7728 = vsel %vm3387, %v7664, %v7140
  %v7729 = vsel %vm3387, %v7665, %v7142
  %v7730 = vsel %vm3387, %v7666, %v7144
  %v7731 = vsel %vm3387, %v7667, %v7146
  %v7732 = vsel %vm3387, %v7668, %v7148
  %v7733 = vsel %vm3387, %v7669, %v7150
  %v7734 = vsel %vm3387, %v7670, %v7152
  %v7735 = vsel %vm3387, %v7671, %v7154
  %v7736 = vsel %vm3387, %v7672, %v7156
  %v7737 = vsel %vm3387, %v7673, %v7158
  %v7738 = vsel %vm3387, %v7674, %v7160
  %v7739 = vsel %vm3387, %v7675, %v7162
  %v7740 = vsel %vm3387, %v7676, %v7164
  %v7741 = vld [vmem:[%s2] sm:$0xff]
  %v7742 = vld [vmem:[%s2 + $0x8] sm:$0xff]
  %v7743 = vld [vmem:[%s2 + $0x10] sm:$0xff]
  %v7744 = vld [vmem:[%s2 + $0x18] sm:$0xff]
  %v7745 = vld [vmem:[%s2 + $0x20] sm:$0xff]
  %v7746 = vld [vmem:[%s2 + $0x28] sm:$0xff]
  %v7747 = vld [vmem:[%s2 + $0x30] sm:$0xff]
  %v7748 = vld [vmem:[%s2 + $0x38] sm:$0xff]
  %v7749 = vld [vmem:[%s2 + $0x40] sm:$0xff]
  %v7751 = vsel %vm3461, %v7677, 0
  %v7754 = vsel %vm3461, %v7678, 0
  %v7757 = vsel %vm3461, %v7679, 0
  %v7760 = vsel %vm3461, %v7680, 0
  %v7763 = vsel %vm3461, %v7681, 0
  %v7766 = vsel %vm3461, %v7682, 0
  %v7769 = vsel %vm3461, %v7683, 0
  %v7772 = vsel %vm3461, %v7684, 0
  %v7775 = vsel %vm3461, %v7685, 0
  %v7778 = vsel %vm3461, %v7686, 0
  %v7781 = vsel %vm3461, %v7687, 0
  %v7784 = vsel %vm3461, %v7688, 0
  %v7787 = vsel %vm3461, %v7689, 0
  %v7790 = vsel %vm3461, %v7690, 0
  %v7793 = vsel %vm3461, %v7691, 0
  %v7796 = vsel %vm3461, %v7692, 0
  %v7799 = vsel %vm3461, %v7693, 0
  %v7802 = vsel %vm3461, %v7694, 0
  %v7805 = vsel %vm3461, %v7695, 0
  %v7808 = vsel %vm3461, %v7696, 0
  %v7811 = vsel %vm3461, %v7697, 0
  %v7814 = vsel %vm3461, %v7698, 0
  %v7817 = vsel %vm3461, %v7699, 0
  %v7820 = vsel %vm3461, %v7700, 0
  %v7823 = vsel %vm3461, %v7701, 0
  %v7826 = vsel %vm3461, %v7702, 0
  %v7829 = vsel %vm3461, %v7703, 0
  %v7832 = vsel %vm3461, %v7704, 0
  %v7835 = vsel %vm3461, %v7705, 0
  %v7838 = vsel %vm3461, %v7706, 0
  %v7841 = vsel %vm3461, %v7707, 0
  %v7844 = vsel %vm3461, %v7708, 0
  %v7847 = vsel %vm3461, %v7709, 0
  %v7850 = vsel %vm3461, %v7710, 0
  %v7853 = vsel %vm3461, %v7711, 0
  %v7856 = vsel %vm3461, %v7712, 0
  %v7859 = vsel %vm3461, %v7713, 0
  %v7862 = vsel %vm3461, %v7714, 0
  %v7865 = vsel %vm3461, %v7715, 0
  %v7868 = vsel %vm3461, %v7716, 0
  %v7871 = vsel %vm3461, %v7717, 0
  %v7874 = vsel %vm3461, %v7718, 0
  %v7877 = vsel %vm3461, %v7719, 0
  %v7880 = vsel %vm3461, %v7720, 0
  %v7883 = vsel %vm3461, %v7721, 0
  %v7886 = vsel %vm3461, %v7722, 0
  %v7889 = vsel %vm3461, %v7723, 0
  %v7892 = vsel %vm3461, %v7724, 0
  %v7895 = vsel %vm3461, %v7725, 0
  %v7898 = vsel %vm3461, %v7726, 0
  %v7901 = vsel %vm3461, %v7727, 0
  %v7904 = vsel %vm3461, %v7728, 0
  %v7907 = vsel %vm3461, %v7729, 0
  %v7910 = vsel %vm3461, %v7730, 0
  %v7913 = vsel %vm3461, %v7731, 0
  %v7916 = vsel %vm3461, %v7732, 0
  %v7919 = vsel %vm3461, %v7733, 0
  %v7922 = vsel %vm3461, %v7734, 0
  %v7925 = vsel %vm3461, %v7735, 0
  %v7928 = vsel %vm3461, %v7736, 0
  %v7931 = vsel %vm3461, %v7737, 0
  %v7934 = vsel %vm3461, %v7738, 0
  %v7937 = vsel %vm3461, %v7739, 0
  %v7940 = vsel %vm3461, %v7740, 0
  %7942 = vmatpush.msra.mxu0 0.0
  %7943 = vmatpush.msra.mxu0 0.0
  %7944 = vmatpush.msra.mxu0 0.0
  %7945 = vmatpush.msra.mxu0 0.0
  %7946 = vmatpush.msra.mxu0 0.0
  %7947 = vmatpush.msra.mxu0 0.0
  %7948 = vmatpush.msra.mxu0 0.0
  %7949 = vmatpush.msra.mxu0 %v7749
  %7950 = vmatpush.msra.mxu0 %v7748
  %7951 = vmatpush.msra.mxu0 %v7747
  %7952 = vmatpush.msra.mxu0 %v7746
  %7953 = vmatpush.msra.mxu0 %v7745
  %7954 = vmatpush.msra.mxu0 %v7744
  %7955 = vmatpush.msra.mxu0 %v7743
  %7956 = vmatpush.msra.mxu0 %v7742
  %7957 = vmatpush.msra.mxu0 %v7741
  %7958 = vmatmul.f32.gmra.mxu0 %v7751
  %v7959 = vpop.f32.mrf.mxu0
  %v7960 = vadd.f32 0.0, %v7959
  %7961 = vmatmul.f32.gmra.mxu0 %v7754
  %v7962 = vpop.f32.mrf.mxu0
  %v7963 = vadd.f32 0.0, %v7962
  %7964 = vmatmul.f32.gmra.mxu0 %v7757
  %v7965 = vpop.f32.mrf.mxu0
  %v7966 = vadd.f32 0.0, %v7965
  %7967 = vmatmul.f32.gmra.mxu0 %v7760
  %v7968 = vpop.f32.mrf.mxu0
  %v7969 = vadd.f32 0.0, %v7968
  %7970 = vmatmul.f32.gmra.mxu0 %v7763
  %v7971 = vpop.f32.mrf.mxu0
  %v7972 = vadd.f32 0.0, %v7971
  %7973 = vmatmul.f32.gmra.mxu0 %v7766
  %v7974 = vpop.f32.mrf.mxu0
  %v7975 = vadd.f32 0.0, %v7974
  %7976 = vmatmul.f32.gmra.mxu0 %v7769
  %v7977 = vpop.f32.mrf.mxu0
  %v7978 = vadd.f32 0.0, %v7977
  %7979 = vmatmul.f32.gmra.mxu0 %v7772
  %v7980 = vpop.f32.mrf.mxu0
  %v7981 = vadd.f32 0.0, %v7980
  %7982 = vmatmul.f32.gmra.mxu0 %v7775
  %v7983 = vpop.f32.mrf.mxu0
  %v7984 = vadd.f32 0.0, %v7983
  %7985 = vmatmul.f32.gmra.mxu0 %v7778
  %v7986 = vpop.f32.mrf.mxu0
  %v7987 = vadd.f32 0.0, %v7986
  %7988 = vmatmul.f32.gmra.mxu0 %v7781
  %v7989 = vpop.f32.mrf.mxu0
  %v7990 = vadd.f32 0.0, %v7989
  %7991 = vmatmul.f32.gmra.mxu0 %v7784
  %v7992 = vpop.f32.mrf.mxu0
  %v7993 = vadd.f32 0.0, %v7992
  %7994 = vmatmul.f32.gmra.mxu0 %v7787
  %v7995 = vpop.f32.mrf.mxu0
  %v7996 = vadd.f32 0.0, %v7995
  %7997 = vmatmul.f32.gmra.mxu0 %v7790
  %v7998 = vpop.f32.mrf.mxu0
  %v7999 = vadd.f32 0.0, %v7998
  %8000 = vmatmul.f32.gmra.mxu0 %v7793
  %v8001 = vpop.f32.mrf.mxu0
  %v8002 = vadd.f32 0.0, %v8001
  %8003 = vmatmul.f32.gmra.mxu0 %v7796
  %v8004 = vpop.f32.mrf.mxu0
  %v8005 = vadd.f32 0.0, %v8004
  %8006 = vmatmul.f32.gmra.mxu0 %v7799
  %v8007 = vpop.f32.mrf.mxu0
  %v8008 = vadd.f32 0.0, %v8007
  %8009 = vmatmul.f32.gmra.mxu0 %v7802
  %v8010 = vpop.f32.mrf.mxu0
  %v8011 = vadd.f32 0.0, %v8010
  %8012 = vmatmul.f32.gmra.mxu0 %v7805
  %v8013 = vpop.f32.mrf.mxu0
  %v8014 = vadd.f32 0.0, %v8013
  %8015 = vmatmul.f32.gmra.mxu0 %v7808
  %v8016 = vpop.f32.mrf.mxu0
  %v8017 = vadd.f32 0.0, %v8016
  %8018 = vmatmul.f32.gmra.mxu0 %v7811
  %v8019 = vpop.f32.mrf.mxu0
  %v8020 = vadd.f32 0.0, %v8019
  %8021 = vmatmul.f32.gmra.mxu0 %v7814
  %v8022 = vpop.f32.mrf.mxu0
  %v8023 = vadd.f32 0.0, %v8022
  %8024 = vmatmul.f32.gmra.mxu0 %v7817
  %v8025 = vpop.f32.mrf.mxu0
  %v8026 = vadd.f32 0.0, %v8025
  %8027 = vmatmul.f32.gmra.mxu0 %v7820
  %v8028 = vpop.f32.mrf.mxu0
  %v8029 = vadd.f32 0.0, %v8028
  %8030 = vmatmul.f32.gmra.mxu0 %v7823
  %v8031 = vpop.f32.mrf.mxu0
  %v8032 = vadd.f32 0.0, %v8031
  %8033 = vmatmul.f32.gmra.mxu0 %v7826
  %v8034 = vpop.f32.mrf.mxu0
  %v8035 = vadd.f32 0.0, %v8034
  %8036 = vmatmul.f32.gmra.mxu0 %v7829
  %v8037 = vpop.f32.mrf.mxu0
  %v8038 = vadd.f32 0.0, %v8037
  %8039 = vmatmul.f32.gmra.mxu0 %v7832
  %v8040 = vpop.f32.mrf.mxu0
  %v8041 = vadd.f32 0.0, %v8040
  %8042 = vmatmul.f32.gmra.mxu0 %v7835
  %v8043 = vpop.f32.mrf.mxu0
  %v8044 = vadd.f32 0.0, %v8043
  %8045 = vmatmul.f32.gmra.mxu0 %v7838
  %v8046 = vpop.f32.mrf.mxu0
  %v8047 = vadd.f32 0.0, %v8046
  %8048 = vmatmul.f32.gmra.mxu0 %v7841
  %v8049 = vpop.f32.mrf.mxu0
  %v8050 = vadd.f32 0.0, %v8049
  %8051 = vmatmul.f32.gmra.mxu0 %v7844
  %v8052 = vpop.f32.mrf.mxu0
  %v8053 = vadd.f32 0.0, %v8052
  %8054 = vmatmul.f32.gmra.mxu0 %v7847
  %v8055 = vpop.f32.mrf.mxu0
  %v8056 = vadd.f32 0.0, %v8055
  %8057 = vmatmul.f32.gmra.mxu0 %v7850
  %v8058 = vpop.f32.mrf.mxu0
  %v8059 = vadd.f32 0.0, %v8058
  %8060 = vmatmul.f32.gmra.mxu0 %v7853
  %v8061 = vpop.f32.mrf.mxu0
  %v8062 = vadd.f32 0.0, %v8061
  %8063 = vmatmul.f32.gmra.mxu0 %v7856
  %v8064 = vpop.f32.mrf.mxu0
  %v8065 = vadd.f32 0.0, %v8064
  %8066 = vmatmul.f32.gmra.mxu0 %v7859
  %v8067 = vpop.f32.mrf.mxu0
  %v8068 = vadd.f32 0.0, %v8067
  %8069 = vmatmul.f32.gmra.mxu0 %v7862
  %v8070 = vpop.f32.mrf.mxu0
  %v8071 = vadd.f32 0.0, %v8070
  %8072 = vmatmul.f32.gmra.mxu0 %v7865
  %v8073 = vpop.f32.mrf.mxu0
  %v8074 = vadd.f32 0.0, %v8073
  %8075 = vmatmul.f32.gmra.mxu0 %v7868
  %v8076 = vpop.f32.mrf.mxu0
  %v8077 = vadd.f32 0.0, %v8076
  %8078 = vmatmul.f32.gmra.mxu0 %v7871
  %v8079 = vpop.f32.mrf.mxu0
  %v8080 = vadd.f32 0.0, %v8079
  %8081 = vmatmul.f32.gmra.mxu0 %v7874
  %v8082 = vpop.f32.mrf.mxu0
  %v8083 = vadd.f32 0.0, %v8082
  %8084 = vmatmul.f32.gmra.mxu0 %v7877
  %v8085 = vpop.f32.mrf.mxu0
  %v8086 = vadd.f32 0.0, %v8085
  %8087 = vmatmul.f32.gmra.mxu0 %v7880
  %v8088 = vpop.f32.mrf.mxu0
  %v8089 = vadd.f32 0.0, %v8088
  %8090 = vmatmul.f32.gmra.mxu0 %v7883
  %v8091 = vpop.f32.mrf.mxu0
  %v8092 = vadd.f32 0.0, %v8091
  %8093 = vmatmul.f32.gmra.mxu0 %v7886
  %v8094 = vpop.f32.mrf.mxu0
  %v8095 = vadd.f32 0.0, %v8094
  %8096 = vmatmul.f32.gmra.mxu0 %v7889
  %v8097 = vpop.f32.mrf.mxu0
  %v8098 = vadd.f32 0.0, %v8097
  %8099 = vmatmul.f32.gmra.mxu0 %v7892
  %v8100 = vpop.f32.mrf.mxu0
  %v8101 = vadd.f32 0.0, %v8100
  %8102 = vmatmul.f32.gmra.mxu0 %v7895
  %v8103 = vpop.f32.mrf.mxu0
  %v8104 = vadd.f32 0.0, %v8103
  %8105 = vmatmul.f32.gmra.mxu0 %v7898
  %v8106 = vpop.f32.mrf.mxu0
  %v8107 = vadd.f32 0.0, %v8106
  %8108 = vmatmul.f32.gmra.mxu0 %v7901
  %v8109 = vpop.f32.mrf.mxu0
  %v8110 = vadd.f32 0.0, %v8109
  %8111 = vmatmul.f32.gmra.mxu0 %v7904
  %v8112 = vpop.f32.mrf.mxu0
  %v8113 = vadd.f32 0.0, %v8112
  %8114 = vmatmul.f32.gmra.mxu0 %v7907
  %v8115 = vpop.f32.mrf.mxu0
  %v8116 = vadd.f32 0.0, %v8115
  %8117 = vmatmul.f32.gmra.mxu0 %v7910
  %v8118 = vpop.f32.mrf.mxu0
  %v8119 = vadd.f32 0.0, %v8118
  %8120 = vmatmul.f32.gmra.mxu0 %v7913
  %v8121 = vpop.f32.mrf.mxu0
  %v8122 = vadd.f32 0.0, %v8121
  %8123 = vmatmul.f32.gmra.mxu0 %v7916
  %v8124 = vpop.f32.mrf.mxu0
  %v8125 = vadd.f32 0.0, %v8124
  %8126 = vmatmul.f32.gmra.mxu0 %v7919
  %v8127 = vpop.f32.mrf.mxu0
  %v8128 = vadd.f32 0.0, %v8127
  %8129 = vmatmul.f32.gmra.mxu0 %v7922
  %v8130 = vpop.f32.mrf.mxu0
  %v8131 = vadd.f32 0.0, %v8130
  %8132 = vmatmul.f32.gmra.mxu0 %v7925
  %v8133 = vpop.f32.mrf.mxu0
  %v8134 = vadd.f32 0.0, %v8133
  %8135 = vmatmul.f32.gmra.mxu0 %v7928
  %v8136 = vpop.f32.mrf.mxu0
  %v8137 = vadd.f32 0.0, %v8136
  %8138 = vmatmul.f32.gmra.mxu0 %v7931
  %v8139 = vpop.f32.mrf.mxu0
  %v8140 = vadd.f32 0.0, %v8139
  %8141 = vmatmul.f32.gmra.mxu0 %v7934
  %v8142 = vpop.f32.mrf.mxu0
  %v8143 = vadd.f32 0.0, %v8142
  %8144 = vmatmul.f32.gmra.mxu0 %v7937
  %v8145 = vpop.f32.mrf.mxu0
  %v8146 = vadd.f32 0.0, %v8145
  %8147 = vmatmul.f32.gmra.mxu0 %v7940
  %v8148 = vpop.f32.mrf.mxu0
  %v8149 = vadd.f32 0.0, %v8148
  %8150 = vdwg.mxu0
  %v8151 = vsel %vm32, %v7960, 0.0
  %v8152 = vsel %vm32, %v7963, 0.0
  %v8153 = vadd.f32 %v8151, %v8152
  %v8154 = vsel %vm32, %v7966, 0.0
  %v8155 = vadd.f32 %v8153, %v8154
  %v8156 = vsel %vm32, %v7969, 0.0
  %v8157 = vadd.f32 %v8155, %v8156
  %v8158 = vsel %vm32, %v7972, 0.0
  %v8159 = vadd.f32 %v8157, %v8158
  %v8160 = vsel %vm32, %v7975, 0.0
  %v8161 = vadd.f32 %v8159, %v8160
  %v8162 = vsel %vm32, %v7978, 0.0
  %v8163 = vadd.f32 %v8161, %v8162
  %v8164 = vsel %vm32, %v7981, 0.0
  %v8165 = vadd.f32 %v8163, %v8164
  %v8166 = vsel %vm32, %v7984, 0.0
  %v8167 = vadd.f32 %v8165, %v8166
  %v8168 = vsel %vm32, %v7987, 0.0
  %v8169 = vadd.f32 %v8167, %v8168
  %v8170 = vsel %vm32, %v7990, 0.0
  %v8171 = vadd.f32 %v8169, %v8170
  %v8172 = vsel %vm32, %v7993, 0.0
  %v8173 = vadd.f32 %v8171, %v8172
  %v8174 = vsel %vm32, %v7996, 0.0
  %v8175 = vadd.f32 %v8173, %v8174
  %v8176 = vsel %vm32, %v7999, 0.0
  %v8177 = vadd.f32 %v8175, %v8176
  %v8178 = vsel %vm32, %v8002, 0.0
  %v8179 = vadd.f32 %v8177, %v8178
  %v8180 = vsel %vm32, %v8005, 0.0
  %v8181 = vadd.f32 %v8179, %v8180
  %v8182 = vsel %vm32, %v8008, 0.0
  %v8183 = vadd.f32 %v8181, %v8182
  %v8184 = vsel %vm32, %v8011, 0.0
  %v8185 = vadd.f32 %v8183, %v8184
  %v8186 = vsel %vm32, %v8014, 0.0
  %v8187 = vadd.f32 %v8185, %v8186
  %v8188 = vsel %vm32, %v8017, 0.0
  %v8189 = vadd.f32 %v8187, %v8188
  %v8190 = vsel %vm32, %v8020, 0.0
  %v8191 = vadd.f32 %v8189, %v8190
  %v8192 = vsel %vm32, %v8023, 0.0
  %v8193 = vadd.f32 %v8191, %v8192
  %v8194 = vsel %vm32, %v8026, 0.0
  %v8195 = vadd.f32 %v8193, %v8194
  %v8196 = vsel %vm32, %v8029, 0.0
  %v8197 = vadd.f32 %v8195, %v8196
  %v8198 = vsel %vm32, %v8032, 0.0
  %v8199 = vadd.f32 %v8197, %v8198
  %v8200 = vsel %vm32, %v8035, 0.0
  %v8201 = vadd.f32 %v8199, %v8200
  %v8202 = vsel %vm32, %v8038, 0.0
  %v8203 = vadd.f32 %v8201, %v8202
  %v8204 = vsel %vm32, %v8041, 0.0
  %v8205 = vadd.f32 %v8203, %v8204
  %v8206 = vsel %vm32, %v8044, 0.0
  %v8207 = vadd.f32 %v8205, %v8206
  %v8208 = vsel %vm32, %v8047, 0.0
  %v8209 = vadd.f32 %v8207, %v8208
  %v8210 = vsel %vm32, %v8050, 0.0
  %v8211 = vadd.f32 %v8209, %v8210
  %v8212 = vsel %vm32, %v8053, 0.0
  %v8213 = vadd.f32 %v8211, %v8212
  %v8214 = vsel %vm32, %v8056, 0.0
  %v8215 = vadd.f32 %v8213, %v8214
  %v8216 = vsel %vm32, %v8059, 0.0
  %v8217 = vadd.f32 %v8215, %v8216
  %v8218 = vsel %vm32, %v8062, 0.0
  %v8219 = vadd.f32 %v8217, %v8218
  %v8220 = vsel %vm32, %v8065, 0.0
  %v8221 = vadd.f32 %v8219, %v8220
  %v8222 = vsel %vm32, %v8068, 0.0
  %v8223 = vadd.f32 %v8221, %v8222
  %v8224 = vsel %vm32, %v8071, 0.0
  %v8225 = vadd.f32 %v8223, %v8224
  %v8226 = vsel %vm32, %v8074, 0.0
  %v8227 = vadd.f32 %v8225, %v8226
  %v8228 = vsel %vm32, %v8077, 0.0
  %v8229 = vadd.f32 %v8227, %v8228
  %v8230 = vsel %vm32, %v8080, 0.0
  %v8231 = vadd.f32 %v8229, %v8230
  %v8232 = vsel %vm32, %v8083, 0.0
  %v8233 = vadd.f32 %v8231, %v8232
  %v8234 = vsel %vm32, %v8086, 0.0
  %v8235 = vadd.f32 %v8233, %v8234
  %v8236 = vsel %vm32, %v8089, 0.0
  %v8237 = vadd.f32 %v8235, %v8236
  %v8238 = vsel %vm32, %v8092, 0.0
  %v8239 = vadd.f32 %v8237, %v8238
  %v8240 = vsel %vm32, %v8095, 0.0
  %v8241 = vadd.f32 %v8239, %v8240
  %v8242 = vsel %vm32, %v8098, 0.0
  %v8243 = vadd.f32 %v8241, %v8242
  %v8244 = vsel %vm32, %v8101, 0.0
  %v8245 = vadd.f32 %v8243, %v8244
  %v8246 = vsel %vm32, %v8104, 0.0
  %v8247 = vadd.f32 %v8245, %v8246
  %v8248 = vsel %vm32, %v8107, 0.0
  %v8249 = vadd.f32 %v8247, %v8248
  %v8250 = vsel %vm32, %v8110, 0.0
  %v8251 = vadd.f32 %v8249, %v8250
  %v8252 = vsel %vm32, %v8113, 0.0
  %v8253 = vadd.f32 %v8251, %v8252
  %v8254 = vsel %vm32, %v8116, 0.0
  %v8255 = vadd.f32 %v8253, %v8254
  %v8256 = vsel %vm32, %v8119, 0.0
  %v8257 = vadd.f32 %v8255, %v8256
  %v8258 = vsel %vm32, %v8122, 0.0
  %v8259 = vadd.f32 %v8257, %v8258
  %v8260 = vsel %vm32, %v8125, 0.0
  %v8261 = vadd.f32 %v8259, %v8260
  %v8262 = vsel %vm32, %v8128, 0.0
  %v8263 = vadd.f32 %v8261, %v8262
  %v8264 = vsel %vm32, %v8131, 0.0
  %v8265 = vadd.f32 %v8263, %v8264
  %v8266 = vsel %vm32, %v8134, 0.0
  %v8267 = vadd.f32 %v8265, %v8266
  %v8268 = vsel %vm32, %v8137, 0.0
  %v8269 = vadd.f32 %v8267, %v8268
  %v8270 = vsel %vm32, %v8140, 0.0
  %v8271 = vadd.f32 %v8269, %v8270
  %v8272 = vsel %vm32, %v8143, 0.0
  %v8273 = vadd.f32 %v8271, %v8272
  %v8274 = vsel %vm32, %v8146, 0.0
  %v8275 = vadd.f32 %v8273, %v8274
  %v8276 = vsel %vm32, %v8149, 0.0
  %v8277 = vadd.f32 %v8275, %v8276
  %v8278 = vrot.slane %v8277, 4
  %v8279 = vadd.f32 %v8277, %v8278
  %v8280 = vrot.slane %v8279, 2
  %v8281 = vadd.f32 %v8279, %v8280
  %v8282 = vrot.slane %v8281, 1
  %v8283 = vadd.f32 %v8281, %v8282
  %v8284 = vmul.f32 %v8283, %v4002
  %v8285 = vsub.f32 %v7960, %v8284
  %v8286 = vsub.f32 %v7963, %v8284
  %v8287 = vsub.f32 %v7966, %v8284
  %v8288 = vsub.f32 %v7969, %v8284
  %v8289 = vsub.f32 %v7972, %v8284
  %v8290 = vsub.f32 %v7975, %v8284
  %v8291 = vsub.f32 %v7978, %v8284
  %v8292 = vsub.f32 %v7981, %v8284
  %v8293 = vsub.f32 %v7984, %v8284
  %v8294 = vsub.f32 %v7987, %v8284
  %v8295 = vsub.f32 %v7990, %v8284
  %v8296 = vsub.f32 %v7993, %v8284
  %v8297 = vsub.f32 %v7996, %v8284
  %v8298 = vsub.f32 %v7999, %v8284
  %v8299 = vsub.f32 %v8002, %v8284
  %v8300 = vsub.f32 %v8005, %v8284
  %v8301 = vsub.f32 %v8008, %v8284
  %v8302 = vsub.f32 %v8011, %v8284
  %v8303 = vsub.f32 %v8014, %v8284
  %v8304 = vsub.f32 %v8017, %v8284
  %v8305 = vsub.f32 %v8020, %v8284
  %v8306 = vsub.f32 %v8023, %v8284
  %v8307 = vsub.f32 %v8026, %v8284
  %v8308 = vsub.f32 %v8029, %v8284
  %v8309 = vsub.f32 %v8032, %v8284
  %v8310 = vsub.f32 %v8035, %v8284
  %v8311 = vsub.f32 %v8038, %v8284
  %v8312 = vsub.f32 %v8041, %v8284
  %v8313 = vsub.f32 %v8044, %v8284
  %v8314 = vsub.f32 %v8047, %v8284
  %v8315 = vsub.f32 %v8050, %v8284
  %v8316 = vsub.f32 %v8053, %v8284
  %v8317 = vsub.f32 %v8056, %v8284
  %v8318 = vsub.f32 %v8059, %v8284
  %v8319 = vsub.f32 %v8062, %v8284
  %v8320 = vsub.f32 %v8065, %v8284
  %v8321 = vsub.f32 %v8068, %v8284
  %v8322 = vsub.f32 %v8071, %v8284
  %v8323 = vsub.f32 %v8074, %v8284
  %v8324 = vsub.f32 %v8077, %v8284
  %v8325 = vsub.f32 %v8080, %v8284
  %v8326 = vsub.f32 %v8083, %v8284
  %v8327 = vsub.f32 %v8086, %v8284
  %v8328 = vsub.f32 %v8089, %v8284
  %v8329 = vsub.f32 %v8092, %v8284
  %v8330 = vsub.f32 %v8095, %v8284
  %v8331 = vsub.f32 %v8098, %v8284
  %v8332 = vsub.f32 %v8101, %v8284
  %v8333 = vsub.f32 %v8104, %v8284
  %v8334 = vsub.f32 %v8107, %v8284
  %v8335 = vsub.f32 %v8110, %v8284
  %v8336 = vsub.f32 %v8113, %v8284
  %v8337 = vsub.f32 %v8116, %v8284
  %v8338 = vsub.f32 %v8119, %v8284
  %v8339 = vsub.f32 %v8122, %v8284
  %v8340 = vsub.f32 %v8125, %v8284
  %v8341 = vsub.f32 %v8128, %v8284
  %v8342 = vsub.f32 %v8131, %v8284
  %v8343 = vsub.f32 %v8134, %v8284
  %v8344 = vsub.f32 %v8137, %v8284
  %v8345 = vsub.f32 %v8140, %v8284
  %v8346 = vsub.f32 %v8143, %v8284
  %v8347 = vsub.f32 %v8146, %v8284
  %v8348 = vsub.f32 %v8149, %v8284
  %v8349 = vmul.f32 %v8285, %v8285
  %v8350 = vmul.f32 %v8286, %v8286
  %v8351 = vmul.f32 %v8287, %v8287
  %v8352 = vmul.f32 %v8288, %v8288
  %v8353 = vmul.f32 %v8289, %v8289
  %v8354 = vmul.f32 %v8290, %v8290
  %v8355 = vmul.f32 %v8291, %v8291
  %v8356 = vmul.f32 %v8292, %v8292
  %v8357 = vmul.f32 %v8293, %v8293
  %v8358 = vmul.f32 %v8294, %v8294
  %v8359 = vmul.f32 %v8295, %v8295
  %v8360 = vmul.f32 %v8296, %v8296
  %v8361 = vmul.f32 %v8297, %v8297
  %v8362 = vmul.f32 %v8298, %v8298
  %v8363 = vmul.f32 %v8299, %v8299
  %v8364 = vmul.f32 %v8300, %v8300
  %v8365 = vmul.f32 %v8301, %v8301
  %v8366 = vmul.f32 %v8302, %v8302
  %v8367 = vmul.f32 %v8303, %v8303
  %v8368 = vmul.f32 %v8304, %v8304
  %v8369 = vmul.f32 %v8305, %v8305
  %v8370 = vmul.f32 %v8306, %v8306
  %v8371 = vmul.f32 %v8307, %v8307
  %v8372 = vmul.f32 %v8308, %v8308
  %v8373 = vmul.f32 %v8309, %v8309
  %v8374 = vmul.f32 %v8310, %v8310
  %v8375 = vmul.f32 %v8311, %v8311
  %v8376 = vmul.f32 %v8312, %v8312
  %v8377 = vmul.f32 %v8313, %v8313
  %v8378 = vmul.f32 %v8314, %v8314
  %v8379 = vmul.f32 %v8315, %v8315
  %v8380 = vmul.f32 %v8316, %v8316
  %v8381 = vmul.f32 %v8317, %v8317
  %v8382 = vmul.f32 %v8318, %v8318
  %v8383 = vmul.f32 %v8319, %v8319
  %v8384 = vmul.f32 %v8320, %v8320
  %v8385 = vmul.f32 %v8321, %v8321
  %v8386 = vmul.f32 %v8322, %v8322
  %v8387 = vmul.f32 %v8323, %v8323
  %v8388 = vmul.f32 %v8324, %v8324
  %v8389 = vmul.f32 %v8325, %v8325
  %v8390 = vmul.f32 %v8326, %v8326
  %v8391 = vmul.f32 %v8327, %v8327
  %v8392 = vmul.f32 %v8328, %v8328
  %v8393 = vmul.f32 %v8329, %v8329
  %v8394 = vmul.f32 %v8330, %v8330
  %v8395 = vmul.f32 %v8331, %v8331
  %v8396 = vmul.f32 %v8332, %v8332
  %v8397 = vmul.f32 %v8333, %v8333
  %v8398 = vmul.f32 %v8334, %v8334
  %v8399 = vmul.f32 %v8335, %v8335
  %v8400 = vmul.f32 %v8336, %v8336
  %v8401 = vmul.f32 %v8337, %v8337
  %v8402 = vmul.f32 %v8338, %v8338
  %v8403 = vmul.f32 %v8339, %v8339
  %v8404 = vmul.f32 %v8340, %v8340
  %v8405 = vmul.f32 %v8341, %v8341
  %v8406 = vmul.f32 %v8342, %v8342
  %v8407 = vmul.f32 %v8343, %v8343
  %v8408 = vmul.f32 %v8344, %v8344
  %v8409 = vmul.f32 %v8345, %v8345
  %v8410 = vmul.f32 %v8346, %v8346
  %v8411 = vmul.f32 %v8347, %v8347
  %v8412 = vmul.f32 %v8348, %v8348
  %v8413 = vsel %vm32, %v8349, 0.0
  %v8414 = vsel %vm32, %v8350, 0.0
  %v8415 = vadd.f32 %v8413, %v8414
  %v8416 = vsel %vm32, %v8351, 0.0
  %v8417 = vadd.f32 %v8415, %v8416
  %v8418 = vsel %vm32, %v8352, 0.0
  %v8419 = vadd.f32 %v8417, %v8418
  %v8420 = vsel %vm32, %v8353, 0.0
  %v8421 = vadd.f32 %v8419, %v8420
  %v8422 = vsel %vm32, %v8354, 0.0
  %v8423 = vadd.f32 %v8421, %v8422
  %v8424 = vsel %vm32, %v8355, 0.0
  %v8425 = vadd.f32 %v8423, %v8424
  %v8426 = vsel %vm32, %v8356, 0.0
  %v8427 = vadd.f32 %v8425, %v8426
  %v8428 = vsel %vm32, %v8357, 0.0
  %v8429 = vadd.f32 %v8427, %v8428
  %v8430 = vsel %vm32, %v8358, 0.0
  %v8431 = vadd.f32 %v8429, %v8430
  %v8432 = vsel %vm32, %v8359, 0.0
  %v8433 = vadd.f32 %v8431, %v8432
  %v8434 = vsel %vm32, %v8360, 0.0
  %v8435 = vadd.f32 %v8433, %v8434
  %v8436 = vsel %vm32, %v8361, 0.0
  %v8437 = vadd.f32 %v8435, %v8436
  %v8438 = vsel %vm32, %v8362, 0.0
  %v8439 = vadd.f32 %v8437, %v8438
  %v8440 = vsel %vm32, %v8363, 0.0
  %v8441 = vadd.f32 %v8439, %v8440
  %v8442 = vsel %vm32, %v8364, 0.0
  %v8443 = vadd.f32 %v8441, %v8442
  %v8444 = vsel %vm32, %v8365, 0.0
  %v8445 = vadd.f32 %v8443, %v8444
  %v8446 = vsel %vm32, %v8366, 0.0
  %v8447 = vadd.f32 %v8445, %v8446
  %v8448 = vsel %vm32, %v8367, 0.0
  %v8449 = vadd.f32 %v8447, %v8448
  %v8450 = vsel %vm32, %v8368, 0.0
  %v8451 = vadd.f32 %v8449, %v8450
  %v8452 = vsel %vm32, %v8369, 0.0
  %v8453 = vadd.f32 %v8451, %v8452
  %v8454 = vsel %vm32, %v8370, 0.0
  %v8455 = vadd.f32 %v8453, %v8454
  %v8456 = vsel %vm32, %v8371, 0.0
  %v8457 = vadd.f32 %v8455, %v8456
  %v8458 = vsel %vm32, %v8372, 0.0
  %v8459 = vadd.f32 %v8457, %v8458
  %v8460 = vsel %vm32, %v8373, 0.0
  %v8461 = vadd.f32 %v8459, %v8460
  %v8462 = vsel %vm32, %v8374, 0.0
  %v8463 = vadd.f32 %v8461, %v8462
  %v8464 = vsel %vm32, %v8375, 0.0
  %v8465 = vadd.f32 %v8463, %v8464
  %v8466 = vsel %vm32, %v8376, 0.0
  %v8467 = vadd.f32 %v8465, %v8466
  %v8468 = vsel %vm32, %v8377, 0.0
  %v8469 = vadd.f32 %v8467, %v8468
  %v8470 = vsel %vm32, %v8378, 0.0
  %v8471 = vadd.f32 %v8469, %v8470
  %v8472 = vsel %vm32, %v8379, 0.0
  %v8473 = vadd.f32 %v8471, %v8472
  %v8474 = vsel %vm32, %v8380, 0.0
  %v8475 = vadd.f32 %v8473, %v8474
  %v8476 = vsel %vm32, %v8381, 0.0
  %v8477 = vadd.f32 %v8475, %v8476
  %v8478 = vsel %vm32, %v8382, 0.0
  %v8479 = vadd.f32 %v8477, %v8478
  %v8480 = vsel %vm32, %v8383, 0.0
  %v8481 = vadd.f32 %v8479, %v8480
  %v8482 = vsel %vm32, %v8384, 0.0
  %v8483 = vadd.f32 %v8481, %v8482
  %v8484 = vsel %vm32, %v8385, 0.0
  %v8485 = vadd.f32 %v8483, %v8484
  %v8486 = vsel %vm32, %v8386, 0.0
  %v8487 = vadd.f32 %v8485, %v8486
  %v8488 = vsel %vm32, %v8387, 0.0
  %v8489 = vadd.f32 %v8487, %v8488
  %v8490 = vsel %vm32, %v8388, 0.0
  %v8491 = vadd.f32 %v8489, %v8490
  %v8492 = vsel %vm32, %v8389, 0.0
  %v8493 = vadd.f32 %v8491, %v8492
  %v8494 = vsel %vm32, %v8390, 0.0
  %v8495 = vadd.f32 %v8493, %v8494
  %v8496 = vsel %vm32, %v8391, 0.0
  %v8497 = vadd.f32 %v8495, %v8496
  %v8498 = vsel %vm32, %v8392, 0.0
  %v8499 = vadd.f32 %v8497, %v8498
  %v8500 = vsel %vm32, %v8393, 0.0
  %v8501 = vadd.f32 %v8499, %v8500
  %v8502 = vsel %vm32, %v8394, 0.0
  %v8503 = vadd.f32 %v8501, %v8502
  %v8504 = vsel %vm32, %v8395, 0.0
  %v8505 = vadd.f32 %v8503, %v8504
  %v8506 = vsel %vm32, %v8396, 0.0
  %v8507 = vadd.f32 %v8505, %v8506
  %v8508 = vsel %vm32, %v8397, 0.0
  %v8509 = vadd.f32 %v8507, %v8508
  %v8510 = vsel %vm32, %v8398, 0.0
  %v8511 = vadd.f32 %v8509, %v8510
  %v8512 = vsel %vm32, %v8399, 0.0
  %v8513 = vadd.f32 %v8511, %v8512
  %v8514 = vsel %vm32, %v8400, 0.0
  %v8515 = vadd.f32 %v8513, %v8514
  %v8516 = vsel %vm32, %v8401, 0.0
  %v8517 = vadd.f32 %v8515, %v8516
  %v8518 = vsel %vm32, %v8402, 0.0
  %v8519 = vadd.f32 %v8517, %v8518
  %v8520 = vsel %vm32, %v8403, 0.0
  %v8521 = vadd.f32 %v8519, %v8520
  %v8522 = vsel %vm32, %v8404, 0.0
  %v8523 = vadd.f32 %v8521, %v8522
  %v8524 = vsel %vm32, %v8405, 0.0
  %v8525 = vadd.f32 %v8523, %v8524
  %v8526 = vsel %vm32, %v8406, 0.0
  %v8527 = vadd.f32 %v8525, %v8526
  %v8528 = vsel %vm32, %v8407, 0.0
  %v8529 = vadd.f32 %v8527, %v8528
  %v8530 = vsel %vm32, %v8408, 0.0
  %v8531 = vadd.f32 %v8529, %v8530
  %v8532 = vsel %vm32, %v8409, 0.0
  %v8533 = vadd.f32 %v8531, %v8532
  %v8534 = vsel %vm32, %v8410, 0.0
  %v8535 = vadd.f32 %v8533, %v8534
  %v8536 = vsel %vm32, %v8411, 0.0
  %v8537 = vadd.f32 %v8535, %v8536
  %v8538 = vsel %vm32, %v8412, 0.0
  %v8539 = vadd.f32 %v8537, %v8538
  %v8540 = vrot.slane %v8539, 4
  %v8541 = vadd.f32 %v8539, %v8540
  %v8542 = vrot.slane %v8541, 2
  %v8543 = vadd.f32 %v8541, %v8542
  %v8544 = vrot.slane %v8543, 1
  %v8545 = vadd.f32 %v8543, %v8544
  %v8546 = vmul.f32 %v8545, %v4002
  %v8547 = vadd.f32 %v8546, 1e-05
  %v8548 = vrsqrt.pop %v8547
  %v8549 = vmul.f32 %v8548, %v8547
  %v8550 = vmul.f32 %v8549, %v8548
  %v8551 = vmul.f32 0.5, %v8550
  %v8552 = vsub.f32 1.5, %v8551
  %v8553 = vmul.f32 %v8548, %v8552
  %vm8554 = vweird.f32 %v8547
  %vm8555 = vweird.f32 %v8548
  %vm8556 = vmor %vm8554, %vm8555
  %v8557 = vsel %vm8556, %v8548, %v8553
  %v8558 = vmul.f32 %v8285, %v8557
  %v8559 = vmul.f32 %v8286, %v8557
  %v8560 = vmul.f32 %v8287, %v8557
  %v8561 = vmul.f32 %v8288, %v8557
  %v8562 = vmul.f32 %v8289, %v8557
  %v8563 = vmul.f32 %v8290, %v8557
  %v8564 = vmul.f32 %v8291, %v8557
  %v8565 = vmul.f32 %v8292, %v8557
  %v8566 = vmul.f32 %v8293, %v8557
  %v8567 = vmul.f32 %v8294, %v8557
  %v8568 = vmul.f32 %v8295, %v8557
  %v8569 = vmul.f32 %v8296, %v8557
  %v8570 = vmul.f32 %v8297, %v8557
  %v8571 = vmul.f32 %v8298, %v8557
  %v8572 = vmul.f32 %v8299, %v8557
  %v8573 = vmul.f32 %v8300, %v8557
  %v8574 = vmul.f32 %v8301, %v8557
  %v8575 = vmul.f32 %v8302, %v8557
  %v8576 = vmul.f32 %v8303, %v8557
  %v8577 = vmul.f32 %v8304, %v8557
  %v8578 = vmul.f32 %v8305, %v8557
  %v8579 = vmul.f32 %v8306, %v8557
  %v8580 = vmul.f32 %v8307, %v8557
  %v8581 = vmul.f32 %v8308, %v8557
  %v8582 = vmul.f32 %v8309, %v8557
  %v8583 = vmul.f32 %v8310, %v8557
  %v8584 = vmul.f32 %v8311, %v8557
  %v8585 = vmul.f32 %v8312, %v8557
  %v8586 = vmul.f32 %v8313, %v8557
  %v8587 = vmul.f32 %v8314, %v8557
  %v8588 = vmul.f32 %v8315, %v8557
  %v8589 = vmul.f32 %v8316, %v8557
  %v8590 = vmul.f32 %v8317, %v8557
  %v8591 = vmul.f32 %v8318, %v8557
  %v8592 = vmul.f32 %v8319, %v8557
  %v8593 = vmul.f32 %v8320, %v8557
  %v8594 = vmul.f32 %v8321, %v8557
  %v8595 = vmul.f32 %v8322, %v8557
  %v8596 = vmul.f32 %v8323, %v8557
  %v8597 = vmul.f32 %v8324, %v8557
  %v8598 = vmul.f32 %v8325, %v8557
  %v8599 = vmul.f32 %v8326, %v8557
  %v8600 = vmul.f32 %v8327, %v8557
  %v8601 = vmul.f32 %v8328, %v8557
  %v8602 = vmul.f32 %v8329, %v8557
  %v8603 = vmul.f32 %v8330, %v8557
  %v8604 = vmul.f32 %v8331, %v8557
  %v8605 = vmul.f32 %v8332, %v8557
  %v8606 = vmul.f32 %v8333, %v8557
  %v8607 = vmul.f32 %v8334, %v8557
  %v8608 = vmul.f32 %v8335, %v8557
  %v8609 = vmul.f32 %v8336, %v8557
  %v8610 = vmul.f32 %v8337, %v8557
  %v8611 = vmul.f32 %v8338, %v8557
  %v8612 = vmul.f32 %v8339, %v8557
  %v8613 = vmul.f32 %v8340, %v8557
  %v8614 = vmul.f32 %v8341, %v8557
  %v8615 = vmul.f32 %v8342, %v8557
  %v8616 = vmul.f32 %v8343, %v8557
  %v8617 = vmul.f32 %v8344, %v8557
  %v8618 = vmul.f32 %v8345, %v8557
  %v8619 = vmul.f32 %v8346, %v8557
  %v8620 = vmul.f32 %v8347, %v8557
  %v8621 = vmul.f32 %v8348, %v8557
  %v8622 = vld [vmem:[%s7] sm:$0x1]
  %v8624 = vperm.slane %v8622, 0
  %v8626 = vmul.f32 %v8558, %v8624
  %v8627 = vmul.f32 %v8559, %v8624
  %v8628 = vmul.f32 %v8560, %v8624
  %v8629 = vmul.f32 %v8561, %v8624
  %v8630 = vmul.f32 %v8562, %v8624
  %v8631 = vmul.f32 %v8563, %v8624
  %v8632 = vmul.f32 %v8564, %v8624
  %v8633 = vmul.f32 %v8565, %v8624
  %v8634 = vmul.f32 %v8566, %v8624
  %v8635 = vmul.f32 %v8567, %v8624
  %v8636 = vmul.f32 %v8568, %v8624
  %v8637 = vmul.f32 %v8569, %v8624
  %v8638 = vmul.f32 %v8570, %v8624
  %v8639 = vmul.f32 %v8571, %v8624
  %v8640 = vmul.f32 %v8572, %v8624
  %v8641 = vmul.f32 %v8573, %v8624
  %v8642 = vmul.f32 %v8574, %v8624
  %v8643 = vmul.f32 %v8575, %v8624
  %v8644 = vmul.f32 %v8576, %v8624
  %v8645 = vmul.f32 %v8577, %v8624
  %v8646 = vmul.f32 %v8578, %v8624
  %v8647 = vmul.f32 %v8579, %v8624
  %v8648 = vmul.f32 %v8580, %v8624
  %v8649 = vmul.f32 %v8581, %v8624
  %v8650 = vmul.f32 %v8582, %v8624
  %v8651 = vmul.f32 %v8583, %v8624
  %v8652 = vmul.f32 %v8584, %v8624
  %v8653 = vmul.f32 %v8585, %v8624
  %v8654 = vmul.f32 %v8586, %v8624
  %v8655 = vmul.f32 %v8587, %v8624
  %v8656 = vmul.f32 %v8588, %v8624
  %v8657 = vmul.f32 %v8589, %v8624
  %v8658 = vmul.f32 %v8590, %v8624
  %v8659 = vmul.f32 %v8591, %v8624
  %v8660 = vmul.f32 %v8592, %v8624
  %v8661 = vmul.f32 %v8593, %v8624
  %v8662 = vmul.f32 %v8594, %v8624
  %v8663 = vmul.f32 %v8595, %v8624
  %v8664 = vmul.f32 %v8596, %v8624
  %v8665 = vmul.f32 %v8597, %v8624
  %v8666 = vmul.f32 %v8598, %v8624
  %v8667 = vmul.f32 %v8599, %v8624
  %v8668 = vmul.f32 %v8600, %v8624
  %v8669 = vmul.f32 %v8601, %v8624
  %v8670 = vmul.f32 %v8602, %v8624
  %v8671 = vmul.f32 %v8603, %v8624
  %v8672 = vmul.f32 %v8604, %v8624
  %v8673 = vmul.f32 %v8605, %v8624
  %v8674 = vmul.f32 %v8606, %v8624
  %v8675 = vmul.f32 %v8607, %v8624
  %v8676 = vmul.f32 %v8608, %v8624
  %v8677 = vmul.f32 %v8609, %v8624
  %v8678 = vmul.f32 %v8610, %v8624
  %v8679 = vmul.f32 %v8611, %v8624
  %v8680 = vmul.f32 %v8612, %v8624
  %v8681 = vmul.f32 %v8613, %v8624
  %v8682 = vmul.f32 %v8614, %v8624
  %v8683 = vmul.f32 %v8615, %v8624
  %v8684 = vmul.f32 %v8616, %v8624
  %v8685 = vmul.f32 %v8617, %v8624
  %v8686 = vmul.f32 %v8618, %v8624
  %v8687 = vmul.f32 %v8619, %v8624
  %v8688 = vmul.f32 %v8620, %v8624
  %v8689 = vmul.f32 %v8621, %v8624
  %v8690 = vld [vmem:[%s8] sm:$0x1]
  %v8692 = vperm.slane %v8690, 0
  %v8694 = vadd.f32 %v8626, %v8692
  %v8695 = vadd.f32 %v8627, %v8692
  %v8696 = vadd.f32 %v8628, %v8692
  %v8697 = vadd.f32 %v8629, %v8692
  %v8698 = vadd.f32 %v8630, %v8692
  %v8699 = vadd.f32 %v8631, %v8692
  %v8700 = vadd.f32 %v8632, %v8692
  %v8701 = vadd.f32 %v8633, %v8692
  %v8702 = vadd.f32 %v8634, %v8692
  %v8703 = vadd.f32 %v8635, %v8692
  %v8704 = vadd.f32 %v8636, %v8692
  %v8705 = vadd.f32 %v8637, %v8692
  %v8706 = vadd.f32 %v8638, %v8692
  %v8707 = vadd.f32 %v8639, %v8692
  %v8708 = vadd.f32 %v8640, %v8692
  %v8709 = vadd.f32 %v8641, %v8692
  %v8710 = vadd.f32 %v8642, %v8692
  %v8711 = vadd.f32 %v8643, %v8692
  %v8712 = vadd.f32 %v8644, %v8692
  %v8713 = vadd.f32 %v8645, %v8692
  %v8714 = vadd.f32 %v8646, %v8692
  %v8715 = vadd.f32 %v8647, %v8692
  %v8716 = vadd.f32 %v8648, %v8692
  %v8717 = vadd.f32 %v8649, %v8692
  %v8718 = vadd.f32 %v8650, %v8692
  %v8719 = vadd.f32 %v8651, %v8692
  %v8720 = vadd.f32 %v8652, %v8692
  %v8721 = vadd.f32 %v8653, %v8692
  %v8722 = vadd.f32 %v8654, %v8692
  %v8723 = vadd.f32 %v8655, %v8692
  %v8724 = vadd.f32 %v8656, %v8692
  %v8725 = vadd.f32 %v8657, %v8692
  %v8726 = vadd.f32 %v8658, %v8692
  %v8727 = vadd.f32 %v8659, %v8692
  %v8728 = vadd.f32 %v8660, %v8692
  %v8729 = vadd.f32 %v8661, %v8692
  %v8730 = vadd.f32 %v8662, %v8692
  %v8731 = vadd.f32 %v8663, %v8692
  %v8732 = vadd.f32 %v8664, %v8692
  %v8733 = vadd.f32 %v8665, %v8692
  %v8734 = vadd.f32 %v8666, %v8692
  %v8735 = vadd.f32 %v8667, %v8692
  %v8736 = vadd.f32 %v8668, %v8692
  %v8737 = vadd.f32 %v8669, %v8692
  %v8738 = vadd.f32 %v8670, %v8692
  %v8739 = vadd.f32 %v8671, %v8692
  %v8740 = vadd.f32 %v8672, %v8692
  %v8741 = vadd.f32 %v8673, %v8692
  %v8742 = vadd.f32 %v8674, %v8692
  %v8743 = vadd.f32 %v8675, %v8692
  %v8744 = vadd.f32 %v8676, %v8692
  %v8745 = vadd.f32 %v8677, %v8692
  %v8746 = vadd.f32 %v8678, %v8692
  %v8747 = vadd.f32 %v8679, %v8692
  %v8748 = vadd.f32 %v8680, %v8692
  %v8749 = vadd.f32 %v8681, %v8692
  %v8750 = vadd.f32 %v8682, %v8692
  %v8751 = vadd.f32 %v8683, %v8692
  %v8752 = vadd.f32 %v8684, %v8692
  %v8753 = vadd.f32 %v8685, %v8692
  %v8754 = vadd.f32 %v8686, %v8692
  %v8755 = vadd.f32 %v8687, %v8692
  %v8756 = vadd.f32 %v8688, %v8692
  %v8757 = vadd.f32 %v8689, %v8692
  %8758 = vst.msk [vmem:[%s242 + $0x8] sm:$0xff] %vm32, %v8694
  %8759 = vst.msk [vmem:[%s242 + $0x10] sm:$0xff] %vm32, %v8695
  %8760 = vst.msk [vmem:[%s242 + $0x28] sm:$0xff] %vm32, %v8696
  %8761 = vst.msk [vmem:[%s242 + $0x30] sm:$0xff] %vm32, %v8697
  %8762 = vst.msk [vmem:[%s242 + $0x48] sm:$0xff] %vm32, %v8698
  %8763 = vst.msk [vmem:[%s242 + $0x50] sm:$0xff] %vm32, %v8699
  %8764 = vst.msk [vmem:[%s242 + $0x68] sm:$0xff] %vm32, %v8700
  %8765 = vst.msk [vmem:[%s242 + $0x70] sm:$0xff] %vm32, %v8701
  %8766 = vst.msk [vmem:[%s242 + $0x88] sm:$0xff] %vm32, %v8702
  %8767 = vst.msk [vmem:[%s242 + $0x90] sm:$0xff] %vm32, %v8703
  %8768 = vst.msk [vmem:[%s242 + $0xa8] sm:$0xff] %vm32, %v8704
  %8769 = vst.msk [vmem:[%s242 + $0xb0] sm:$0xff] %vm32, %v8705
  %8770 = vst.msk [vmem:[%s242 + $0xc8] sm:$0xff] %vm32, %v8706
  %8771 = vst.msk [vmem:[%s242 + $0xd0] sm:$0xff] %vm32, %v8707
  %8772 = vst.msk [vmem:[%s242 + $0xe8] sm:$0xff] %vm32, %v8708
  %8773 = vst.msk [vmem:[%s242 + $0xf0] sm:$0xff] %vm32, %v8709
  %8774 = vst.msk [vmem:[%s242 + $0x108] sm:$0xff] %vm32, %v8710
  %8775 = vst.msk [vmem:[%s242 + $0x110] sm:$0xff] %vm32, %v8711
  %8776 = vst.msk [vmem:[%s242 + $0x128] sm:$0xff] %vm32, %v8712
  %8777 = vst.msk [vmem:[%s242 + $0x130] sm:$0xff] %vm32, %v8713
  %8778 = vst.msk [vmem:[%s242 + $0x148] sm:$0xff] %vm32, %v8714
  %8779 = vst.msk [vmem:[%s242 + $0x150] sm:$0xff] %vm32, %v8715
  %8780 = vst.msk [vmem:[%s242 + $0x168] sm:$0xff] %vm32, %v8716
  %8781 = vst.msk [vmem:[%s242 + $0x170] sm:$0xff] %vm32, %v8717
  %8782 = vst.msk [vmem:[%s242 + $0x188] sm:$0xff] %vm32, %v8718
  %8783 = vst.msk [vmem:[%s242 + $0x190] sm:$0xff] %vm32, %v8719
  %8784 = vst.msk [vmem:[%s242 + $0x1a8] sm:$0xff] %vm32, %v8720
  %8785 = vst.msk [vmem:[%s242 + $0x1b0] sm:$0xff] %vm32, %v8721
  %8786 = vst.msk [vmem:[%s242 + $0x1c8] sm:$0xff] %vm32, %v8722
  %8787 = vst.msk [vmem:[%s242 + $0x1d0] sm:$0xff] %vm32, %v8723
  %8788 = vst.msk [vmem:[%s242 + $0x1e8] sm:$0xff] %vm32, %v8724
  %8789 = vst.msk [vmem:[%s242 + $0x1f0] sm:$0xff] %vm32, %v8725
  %8790 = vst.msk [vmem:[%s242 + $0x248] sm:$0xff] %vm32, %v8726
  %8791 = vst.msk [vmem:[%s242 + $0x250] sm:$0xff] %vm32, %v8727
  %8792 = vst.msk [vmem:[%s242 + $0x268] sm:$0xff] %vm32, %v8728
  %8793 = vst.msk [vmem:[%s242 + $0x270] sm:$0xff] %vm32, %v8729
  %8794 = vst.msk [vmem:[%s242 + $0x288] sm:$0xff] %vm32, %v8730
  %8795 = vst.msk [vmem:[%s242 + $0x290] sm:$0xff] %vm32, %v8731
  %8796 = vst.msk [vmem:[%s242 + $0x2a8] sm:$0xff] %vm32, %v8732
  %8797 = vst.msk [vmem:[%s242 + $0x2b0] sm:$0xff] %vm32, %v8733
  %8798 = vst.msk [vmem:[%s242 + $0x2c8] sm:$0xff] %vm32, %v8734
  %8799 = vst.msk [vmem:[%s242 + $0x2d0] sm:$0xff] %vm32, %v8735
  %8800 = vst.msk [vmem:[%s242 + $0x2e8] sm:$0xff] %vm32, %v8736
  %8801 = vst.msk [vmem:[%s242 + $0x2f0] sm:$0xff] %vm32, %v8737
  %8802 = vst.msk [vmem:[%s242 + $0x308] sm:$0xff] %vm32, %v8738
  %8803 = vst.msk [vmem:[%s242 + $0x310] sm:$0xff] %vm32, %v8739
  %8804 = vst.msk [vmem:[%s242 + $0x328] sm:$0xff] %vm32, %v8740
  %8805 = vst.msk [vmem:[%s242 + $0x330] sm:$0xff] %vm32, %v8741
  %8806 = vst.msk [vmem:[%s242 + $0x348] sm:$0xff] %vm32, %v8742
  %8807 = vst.msk [vmem:[%s242 + $0x350] sm:$0xff] %vm32, %v8743
  %8808 = vst.msk [vmem:[%s242 + $0x368] sm:$0xff] %vm32, %v8744
  %8809 = vst.msk [vmem:[%s242 + $0x370] sm:$0xff] %vm32, %v8745
  %8810 = vst.msk [vmem:[%s242 + $0x388] sm:$0xff] %vm32, %v8746
  %8811 = vst.msk [vmem:[%s242 + $0x390] sm:$0xff] %vm32, %v8747
  %8812 = vst.msk [vmem:[%s242 + $0x3a8] sm:$0xff] %vm32, %v8748
  %8813 = vst.msk [vmem:[%s242 + $0x3b0] sm:$0xff] %vm32, %v8749
  %8814 = vst.msk [vmem:[%s242 + $0x3c8] sm:$0xff] %vm32, %v8750
  %8815 = vst.msk [vmem:[%s242 + $0x3d0] sm:$0xff] %vm32, %v8751
  %8816 = vst.msk [vmem:[%s242 + $0x3e8] sm:$0xff] %vm32, %v8752
  %8817 = vst.msk [vmem:[%s242 + $0x3f0] sm:$0xff] %vm32, %v8753
  %8818 = vst.msk [vmem:[%s242 + $0x408] sm:$0xff] %vm32, %v8754
  %8819 = vst.msk [vmem:[%s242 + $0x410] sm:$0xff] %vm32, %v8755
  %8820 = vst.msk [vmem:[%s242 + $0x428] sm:$0xff] %vm32, %v8756
  %8821 = vst.msk [vmem:[%s242 + $0x430] sm:$0xff] %vm32, %v8757
  %v8822 = vld [vmem:[#allocation2 + $0x7] sm:$0xff]
  %v8823 = vld [vmem:[#allocation2 + $0xf] sm:$0xff]
  %v8824 = vld [vmem:[#allocation2 + $0x27] sm:$0xff]
  %v8825 = vld [vmem:[#allocation2 + $0x2f] sm:$0xff]
  %v8826 = vld [vmem:[#allocation2 + $0x47] sm:$0xff]
  %v8827 = vld [vmem:[#allocation2 + $0x4f] sm:$0xff]
  %v8828 = vld [vmem:[#allocation2 + $0x67] sm:$0xff]
  %v8829 = vld [vmem:[#allocation2 + $0x6f] sm:$0xff]
  %v8830 = vld [vmem:[#allocation2 + $0x87] sm:$0xff]
  %v8831 = vld [vmem:[#allocation2 + $0x8f] sm:$0xff]
  %v8832 = vld [vmem:[#allocation2 + $0xa7] sm:$0xff]
  %v8833 = vld [vmem:[#allocation2 + $0xaf] sm:$0xff]
  %v8834 = vld [vmem:[#allocation2 + $0xc7] sm:$0xff]
  %v8835 = vld [vmem:[#allocation2 + $0xcf] sm:$0xff]
  %v8836 = vld [vmem:[#allocation2 + $0xe7] sm:$0xff]
  %v8837 = vld [vmem:[#allocation2 + $0xef] sm:$0xff]
  %v8838 = vld [vmem:[#allocation2 + $0x107] sm:$0xff]
  %v8839 = vld [vmem:[#allocation2 + $0x10f] sm:$0xff]
  %v8840 = vld [vmem:[#allocation2 + $0x127] sm:$0xff]
  %v8841 = vld [vmem:[#allocation2 + $0x12f] sm:$0xff]
  %v8842 = vld [vmem:[#allocation2 + $0x147] sm:$0xff]
  %v8843 = vld [vmem:[#allocation2 + $0x14f] sm:$0xff]
  %v8844 = vld [vmem:[#allocation2 + $0x167] sm:$0xff]
  %v8845 = vld [vmem:[#allocation2 + $0x16f] sm:$0xff]
  %v8846 = vld [vmem:[#allocation2 + $0x187] sm:$0xff]
  %v8847 = vld [vmem:[#allocation2 + $0x18f] sm:$0xff]
  %v8848 = vld [vmem:[#allocation2 + $0x1a7] sm:$0xff]
  %v8849 = vld [vmem:[#allocation2 + $0x1af] sm:$0xff]
  %v8850 = vld [vmem:[#allocation2 + $0x1c7] sm:$0xff]
  %v8851 = vld [vmem:[#allocation2 + $0x1cf] sm:$0xff]
  %v8852 = vld [vmem:[#allocation2 + $0x1e7] sm:$0xff]
  %v8853 = vld [vmem:[#allocation2 + $0x1ef] sm:$0xff]
  %v8854 = vld [vmem:[#allocation2 + $0x247] sm:$0xff]
  %v8855 = vld [vmem:[#allocation2 + $0x24f] sm:$0xff]
  %v8856 = vld [vmem:[#allocation2 + $0x267] sm:$0xff]
  %v8857 = vld [vmem:[#allocation2 + $0x26f] sm:$0xff]
  %v8858 = vld [vmem:[#allocation2 + $0x287] sm:$0xff]
  %v8859 = vld [vmem:[#allocation2 + $0x28f] sm:$0xff]
  %v8860 = vld [vmem:[#allocation2 + $0x2a7] sm:$0xff]
  %v8861 = vld [vmem:[#allocation2 + $0x2af] sm:$0xff]
  %v8862 = vld [vmem:[#allocation2 + $0x2c7] sm:$0xff]
  %v8863 = vld [vmem:[#allocation2 + $0x2cf] sm:$0xff]
  %v8864 = vld [vmem:[#allocation2 + $0x2e7] sm:$0xff]
  %v8865 = vld [vmem:[#allocation2 + $0x2ef] sm:$0xff]
  %v8866 = vld [vmem:[#allocation2 + $0x307] sm:$0xff]
  %v8867 = vld [vmem:[#allocation2 + $0x30f] sm:$0xff]
  %v8868 = vld [vmem:[#allocation2 + $0x327] sm:$0xff]
  %v8869 = vld [vmem:[#allocation2 + $0x32f] sm:$0xff]
  %v8870 = vld [vmem:[#allocation2 + $0x347] sm:$0xff]
  %v8871 = vld [vmem:[#allocation2 + $0x34f] sm:$0xff]
  %v8872 = vld [vmem:[#allocation2 + $0x367] sm:$0xff]
  %v8873 = vld [vmem:[#allocation2 + $0x36f] sm:$0xff]
  %v8874 = vld [vmem:[#allocation2 + $0x387] sm:$0xff]
  %v8875 = vld [vmem:[#allocation2 + $0x38f] sm:$0xff]
  %v8876 = vld [vmem:[#allocation2 + $0x3a7] sm:$0xff]
  %v8877 = vld [vmem:[#allocation2 + $0x3af] sm:$0xff]
  %v8878 = vld [vmem:[#allocation2 + $0x3c7] sm:$0xff]
  %v8879 = vld [vmem:[#allocation2 + $0x3cf] sm:$0xff]
  %v8880 = vld [vmem:[#allocation2 + $0x3e7] sm:$0xff]
  %v8881 = vld [vmem:[#allocation2 + $0x3ef] sm:$0xff]
  %v8882 = vld [vmem:[#allocation2 + $0x407] sm:$0xff]
  %v8883 = vld [vmem:[#allocation2 + $0x40f] sm:$0xff]
  %v8884 = vld [vmem:[#allocation2 + $0x427] sm:$0xff]
  %v8885 = vld [vmem:[#allocation2 + $0x42f] sm:$0xff]
  %v8886 = vld [vmem:[#allocation2 + $0x8] sm:$0xff]
  %v8887 = vld [vmem:[#allocation2 + $0x10] sm:$0xff]
  %v8888 = vld [vmem:[#allocation2 + $0x28] sm:$0xff]
  %v8889 = vld [vmem:[#allocation2 + $0x30] sm:$0xff]
  %v8890 = vld [vmem:[#allocation2 + $0x48] sm:$0xff]
  %v8891 = vld [vmem:[#allocation2 + $0x50] sm:$0xff]
  %v8892 = vld [vmem:[#allocation2 + $0x68] sm:$0xff]
  %v8893 = vld [vmem:[#allocation2 + $0x70] sm:$0xff]
  %v8894 = vld [vmem:[#allocation2 + $0x88] sm:$0xff]
  %v8895 = vld [vmem:[#allocation2 + $0x90] sm:$0xff]
  %v8896 = vld [vmem:[#allocation2 + $0xa8] sm:$0xff]
  %v8897 = vld [vmem:[#allocation2 + $0xb0] sm:$0xff]
  %v8898 = vld [vmem:[#allocation2 + $0xc8] sm:$0xff]
  %v8899 = vld [vmem:[#allocation2 + $0xd0] sm:$0xff]
  %v8900 = vld [vmem:[#allocation2 + $0xe8] sm:$0xff]
  %v8901 = vld [vmem:[#allocation2 + $0xf0] sm:$0xff]
  %v8902 = vld [vmem:[#allocation2 + $0x108] sm:$0xff]
  %v8903 = vld [vmem:[#allocation2 + $0x110] sm:$0xff]
  %v8904 = vld [vmem:[#allocation2 + $0x128] sm:$0xff]
  %v8905 = vld [vmem:[#allocation2 + $0x130] sm:$0xff]
  %v8906 = vld [vmem:[#allocation2 + $0x148] sm:$0xff]
  %v8907 = vld [vmem:[#allocation2 + $0x150] sm:$0xff]
  %v8908 = vld [vmem:[#allocation2 + $0x168] sm:$0xff]
  %v8909 = vld [vmem:[#allocation2 + $0x170] sm:$0xff]
  %v8910 = vld [vmem:[#allocation2 + $0x188] sm:$0xff]
  %v8911 = vld [vmem:[#allocation2 + $0x190] sm:$0xff]
  %v8912 = vld [vmem:[#allocation2 + $0x1a8] sm:$0xff]
  %v8913 = vld [vmem:[#allocation2 + $0x1b0] sm:$0xff]
  %v8914 = vld [vmem:[#allocation2 + $0x1c8] sm:$0xff]
  %v8915 = vld [vmem:[#allocation2 + $0x1d0] sm:$0xff]
  %v8916 = vld [vmem:[#allocation2 + $0x1e8] sm:$0xff]
  %v8917 = vld [vmem:[#allocation2 + $0x1f0] sm:$0xff]
  %v8918 = vld [vmem:[#allocation2 + $0x248] sm:$0xff]
  %v8919 = vld [vmem:[#allocation2 + $0x250] sm:$0xff]
  %v8920 = vld [vmem:[#allocation2 + $0x268] sm:$0xff]
  %v8921 = vld [vmem:[#allocation2 + $0x270] sm:$0xff]
  %v8922 = vld [vmem:[#allocation2 + $0x288] sm:$0xff]
  %v8923 = vld [vmem:[#allocation2 + $0x290] sm:$0xff]
  %v8924 = vld [vmem:[#allocation2 + $0x2a8] sm:$0xff]
  %v8925 = vld [vmem:[#allocation2 + $0x2b0] sm:$0xff]
  %v8926 = vld [vmem:[#allocation2 + $0x2c8] sm:$0xff]
  %v8927 = vld [vmem:[#allocation2 + $0x2d0] sm:$0xff]
  %v8928 = vld [vmem:[#allocation2 + $0x2e8] sm:$0xff]
  %v8929 = vld [vmem:[#allocation2 + $0x2f0] sm:$0xff]
  %v8930 = vld [vmem:[#allocation2 + $0x308] sm:$0xff]
  %v8931 = vld [vmem:[#allocation2 + $0x310] sm:$0xff]
  %v8932 = vld [vmem:[#allocation2 + $0x328] sm:$0xff]
  %v8933 = vld [vmem:[#allocation2 + $0x330] sm:$0xff]
  %v8934 = vld [vmem:[#allocation2 + $0x348] sm:$0xff]
  %v8935 = vld [vmem:[#allocation2 + $0x350] sm:$0xff]
  %v8936 = vld [vmem:[#allocation2 + $0x368] sm:$0xff]
  %v8937 = vld [vmem:[#allocation2 + $0x370] sm:$0xff]
  %v8938 = vld [vmem:[#allocation2 + $0x388] sm:$0xff]
  %v8939 = vld [vmem:[#allocation2 + $0x390] sm:$0xff]
  %v8940 = vld [vmem:[#allocation2 + $0x3a8] sm:$0xff]
  %v8941 = vld [vmem:[#allocation2 + $0x3b0] sm:$0xff]
  %v8942 = vld [vmem:[#allocation2 + $0x3c8] sm:$0xff]
  %v8943 = vld [vmem:[#allocation2 + $0x3d0] sm:$0xff]
  %v8944 = vld [vmem:[#allocation2 + $0x3e8] sm:$0xff]
  %v8945 = vld [vmem:[#allocation2 + $0x3f0] sm:$0xff]
  %v8946 = vld [vmem:[#allocation2 + $0x408] sm:$0xff]
  %v8947 = vld [vmem:[#allocation2 + $0x410] sm:$0xff]
  %v8948 = vld [vmem:[#allocation2 + $0x428] sm:$0xff]
  %v8949 = vld [vmem:[#allocation2 + $0x430] sm:$0xff]
  %v8950 = vld [vmem:[#allocation2 + $0x9] sm:$0xff]
  %v8951 = vld [vmem:[#allocation2 + $0x11] sm:$0xff]
  %v8952 = vld [vmem:[#allocation2 + $0x29] sm:$0xff]
  %v8953 = vld [vmem:[#allocation2 + $0x31] sm:$0xff]
  %v8954 = vld [vmem:[#allocation2 + $0x49] sm:$0xff]
  %v8955 = vld [vmem:[#allocation2 + $0x51] sm:$0xff]
  %v8956 = vld [vmem:[#allocation2 + $0x69] sm:$0xff]
  %v8957 = vld [vmem:[#allocation2 + $0x71] sm:$0xff]
  %v8958 = vld [vmem:[#allocation2 + $0x89] sm:$0xff]
  %v8959 = vld [vmem:[#allocation2 + $0x91] sm:$0xff]
  %v8960 = vld [vmem:[#allocation2 + $0xa9] sm:$0xff]
  %v8961 = vld [vmem:[#allocation2 + $0xb1] sm:$0xff]
  %v8962 = vld [vmem:[#allocation2 + $0xc9] sm:$0xff]
  %v8963 = vld [vmem:[#allocation2 + $0xd1] sm:$0xff]
  %v8964 = vld [vmem:[#allocation2 + $0xe9] sm:$0xff]
  %v8965 = vld [vmem:[#allocation2 + $0xf1] sm:$0xff]
  %v8966 = vld [vmem:[#allocation2 + $0x109] sm:$0xff]
  %v8967 = vld [vmem:[#allocation2 + $0x111] sm:$0xff]
  %v8968 = vld [vmem:[#allocation2 + $0x129] sm:$0xff]
  %v8969 = vld [vmem:[#allocation2 + $0x131] sm:$0xff]
  %v8970 = vld [vmem:[#allocation2 + $0x149] sm:$0xff]
  %v8971 = vld [vmem:[#allocation2 + $0x151] sm:$0xff]
  %v8972 = vld [vmem:[#allocation2 + $0x169] sm:$0xff]
  %v8973 = vld [vmem:[#allocation2 + $0x171] sm:$0xff]
  %v8974 = vld [vmem:[#allocation2 + $0x189] sm:$0xff]
  %v8975 = vld [vmem:[#allocation2 + $0x191] sm:$0xff]
  %v8976 = vld [vmem:[#allocation2 + $0x1a9] sm:$0xff]
  %v8977 = vld [vmem:[#allocation2 + $0x1b1] sm:$0xff]
  %v8978 = vld [vmem:[#allocation2 + $0x1c9] sm:$0xff]
  %v8979 = vld [vmem:[#allocation2 + $0x1d1] sm:$0xff]
  %v8980 = vld [vmem:[#allocation2 + $0x1e9] sm:$0xff]
  %v8981 = vld [vmem:[#allocation2 + $0x1f1] sm:$0xff]
  %v8982 = vld [vmem:[#allocation2 + $0x249] sm:$0xff]
  %v8983 = vld [vmem:[#allocation2 + $0x251] sm:$0xff]
  %v8984 = vld [vmem:[#allocation2 + $0x269] sm:$0xff]
  %v8985 = vld [vmem:[#allocation2 + $0x271] sm:$0xff]
  %v8986 = vld [vmem:[#allocation2 + $0x289] sm:$0xff]
  %v8987 = vld [vmem:[#allocation2 + $0x291] sm:$0xff]
  %v8988 = vld [vmem:[#allocation2 + $0x2a9] sm:$0xff]
  %v8989 = vld [vmem:[#allocation2 + $0x2b1] sm:$0xff]
  %v8990 = vld [vmem:[#allocation2 + $0x2c9] sm:$0xff]
  %v8991 = vld [vmem:[#allocation2 + $0x2d1] sm:$0xff]
  %v8992 = vld [vmem:[#allocation2 + $0x2e9] sm:$0xff]
  %v8993 = vld [vmem:[#allocation2 + $0x2f1] sm:$0xff]
  %v8994 = vld [vmem:[#allocation2 + $0x309] sm:$0xff]
  %v8995 = vld [vmem:[#allocation2 + $0x311] sm:$0xff]
  %v8996 = vld [vmem:[#allocation2 + $0x329] sm:$0xff]
  %v8997 = vld [vmem:[#allocation2 + $0x331] sm:$0xff]
  %v8998 = vld [vmem:[#allocation2 + $0x349] sm:$0xff]
  %v8999 = vld [vmem:[#allocation2 + $0x351] sm:$0xff]
  %v9000 = vld [vmem:[#allocation2 + $0x369] sm:$0xff]
  %v9001 = vld [vmem:[#allocation2 + $0x371] sm:$0xff]
  %v9002 = vld [vmem:[#allocation2 + $0x389] sm:$0xff]
  %v9003 = vld [vmem:[#allocation2 + $0x391] sm:$0xff]
  %v9004 = vld [vmem:[#allocation2 + $0x3a9] sm:$0xff]
  %v9005 = vld [vmem:[#allocation2 + $0x3b1] sm:$0xff]
  %v9006 = vld [vmem:[#allocation2 + $0x3c9] sm:$0xff]
  %v9007 = vld [vmem:[#allocation2 + $0x3d1] sm:$0xff]
  %v9008 = vld [vmem:[#allocation2 + $0x3e9] sm:$0xff]
  %v9009 = vld [vmem:[#allocation2 + $0x3f1] sm:$0xff]
  %v9010 = vld [vmem:[#allocation2 + $0x409] sm:$0xff]
  %v9011 = vld [vmem:[#allocation2 + $0x411] sm:$0xff]
  %v9012 = vld [vmem:[#allocation2 + $0x429] sm:$0xff]
  %v9013 = vld [vmem:[#allocation2 + $0x431] sm:$0xff]
  %v9014 = vld [vmem:[%s242 + $0x7] sm:$0xff]
  %v9015 = vld [vmem:[%s242 + $0xf] sm:$0xff]
  %v9016 = vld [vmem:[%s242 + $0x27] sm:$0xff]
  %v9017 = vld [vmem:[%s242 + $0x2f] sm:$0xff]
  %v9018 = vld [vmem:[%s242 + $0x47] sm:$0xff]
  %v9019 = vld [vmem:[%s242 + $0x4f] sm:$0xff]
  %v9020 = vld [vmem:[%s242 + $0x67] sm:$0xff]
  %v9021 = vld [vmem:[%s242 + $0x6f] sm:$0xff]
  %v9022 = vld [vmem:[%s242 + $0x87] sm:$0xff]
  %v9023 = vld [vmem:[%s242 + $0x8f] sm:$0xff]
  %v9024 = vld [vmem:[%s242 + $0xa7] sm:$0xff]
  %v9025 = vld [vmem:[%s242 + $0xaf] sm:$0xff]
  %v9026 = vld [vmem:[%s242 + $0xc7] sm:$0xff]
  %v9027 = vld [vmem:[%s242 + $0xcf] sm:$0xff]
  %v9028 = vld [vmem:[%s242 + $0xe7] sm:$0xff]
  %v9029 = vld [vmem:[%s242 + $0xef] sm:$0xff]
  %v9030 = vld [vmem:[%s242 + $0x107] sm:$0xff]
  %v9031 = vld [vmem:[%s242 + $0x10f] sm:$0xff]
  %v9032 = vld [vmem:[%s242 + $0x127] sm:$0xff]
  %v9033 = vld [vmem:[%s242 + $0x12f] sm:$0xff]
  %v9034 = vld [vmem:[%s242 + $0x147] sm:$0xff]
  %v9035 = vld [vmem:[%s242 + $0x14f] sm:$0xff]
  %v9036 = vld [vmem:[%s242 + $0x167] sm:$0xff]
  %v9037 = vld [vmem:[%s242 + $0x16f] sm:$0xff]
  %v9038 = vld [vmem:[%s242 + $0x187] sm:$0xff]
  %v9039 = vld [vmem:[%s242 + $0x18f] sm:$0xff]
  %v9040 = vld [vmem:[%s242 + $0x1a7] sm:$0xff]
  %v9041 = vld [vmem:[%s242 + $0x1af] sm:$0xff]
  %v9042 = vld [vmem:[%s242 + $0x1c7] sm:$0xff]
  %v9043 = vld [vmem:[%s242 + $0x1cf] sm:$0xff]
  %v9044 = vld [vmem:[%s242 + $0x1e7] sm:$0xff]
  %v9045 = vld [vmem:[%s242 + $0x1ef] sm:$0xff]
  %v9046 = vld [vmem:[%s242 + $0x247] sm:$0xff]
  %v9047 = vld [vmem:[%s242 + $0x24f] sm:$0xff]
  %v9048 = vld [vmem:[%s242 + $0x267] sm:$0xff]
  %v9049 = vld [vmem:[%s242 + $0x26f] sm:$0xff]
  %v9050 = vld [vmem:[%s242 + $0x287] sm:$0xff]
  %v9051 = vld [vmem:[%s242 + $0x28f] sm:$0xff]
  %v9052 = vld [vmem:[%s242 + $0x2a7] sm:$0xff]
  %v9053 = vld [vmem:[%s242 + $0x2af] sm:$0xff]
  %v9054 = vld [vmem:[%s242 + $0x2c7] sm:$0xff]
  %v9055 = vld [vmem:[%s242 + $0x2cf] sm:$0xff]
  %v9056 = vld [vmem:[%s242 + $0x2e7] sm:$0xff]
  %v9057 = vld [vmem:[%s242 + $0x2ef] sm:$0xff]
  %v9058 = vld [vmem:[%s242 + $0x307] sm:$0xff]
  %v9059 = vld [vmem:[%s242 + $0x30f] sm:$0xff]
  %v9060 = vld [vmem:[%s242 + $0x327] sm:$0xff]
  %v9061 = vld [vmem:[%s242 + $0x32f] sm:$0xff]
  %v9062 = vld [vmem:[%s242 + $0x347] sm:$0xff]
  %v9063 = vld [vmem:[%s242 + $0x34f] sm:$0xff]
  %v9064 = vld [vmem:[%s242 + $0x367] sm:$0xff]
  %v9065 = vld [vmem:[%s242 + $0x36f] sm:$0xff]
  %v9066 = vld [vmem:[%s242 + $0x387] sm:$0xff]
  %v9067 = vld [vmem:[%s242 + $0x38f] sm:$0xff]
  %v9068 = vld [vmem:[%s242 + $0x3a7] sm:$0xff]
  %v9069 = vld [vmem:[%s242 + $0x3af] sm:$0xff]
  %v9070 = vld [vmem:[%s242 + $0x3c7] sm:$0xff]
  %v9071 = vld [vmem:[%s242 + $0x3cf] sm:$0xff]
  %v9072 = vld [vmem:[%s242 + $0x3e7] sm:$0xff]
  %v9073 = vld [vmem:[%s242 + $0x3ef] sm:$0xff]
  %v9074 = vld [vmem:[%s242 + $0x407] sm:$0xff]
  %v9075 = vld [vmem:[%s242 + $0x40f] sm:$0xff]
  %v9076 = vld [vmem:[%s242 + $0x427] sm:$0xff]
  %v9077 = vld [vmem:[%s242 + $0x42f] sm:$0xff]
  %v9078 = vld [vmem:[%s242 + $0x8] sm:$0xff]
  %v9079 = vld [vmem:[%s242 + $0x10] sm:$0xff]
  %v9080 = vld [vmem:[%s242 + $0x28] sm:$0xff]
  %v9081 = vld [vmem:[%s242 + $0x30] sm:$0xff]
  %v9082 = vld [vmem:[%s242 + $0x48] sm:$0xff]
  %v9083 = vld [vmem:[%s242 + $0x50] sm:$0xff]
  %v9084 = vld [vmem:[%s242 + $0x68] sm:$0xff]
  %v9085 = vld [vmem:[%s242 + $0x70] sm:$0xff]
  %v9086 = vld [vmem:[%s242 + $0x88] sm:$0xff]
  %v9087 = vld [vmem:[%s242 + $0x90] sm:$0xff]
  %v9088 = vld [vmem:[%s242 + $0xa8] sm:$0xff]
  %v9089 = vld [vmem:[%s242 + $0xb0] sm:$0xff]
  %v9090 = vld [vmem:[%s242 + $0xc8] sm:$0xff]
  %v9091 = vld [vmem:[%s242 + $0xd0] sm:$0xff]
  %v9092 = vld [vmem:[%s242 + $0xe8] sm:$0xff]
  %v9093 = vld [vmem:[%s242 + $0xf0] sm:$0xff]
  %v9094 = vld [vmem:[%s242 + $0x108] sm:$0xff]
  %v9095 = vld [vmem:[%s242 + $0x110] sm:$0xff]
  %v9096 = vld [vmem:[%s242 + $0x128] sm:$0xff]
  %v9097 = vld [vmem:[%s242 + $0x130] sm:$0xff]
  %v9098 = vld [vmem:[%s242 + $0x148] sm:$0xff]
  %v9099 = vld [vmem:[%s242 + $0x150] sm:$0xff]
  %v9100 = vld [vmem:[%s242 + $0x168] sm:$0xff]
  %v9101 = vld [vmem:[%s242 + $0x170] sm:$0xff]
  %v9102 = vld [vmem:[%s242 + $0x188] sm:$0xff]
  %v9103 = vld [vmem:[%s242 + $0x190] sm:$0xff]
  %v9104 = vld [vmem:[%s242 + $0x1a8] sm:$0xff]
  %v9105 = vld [vmem:[%s242 + $0x1b0] sm:$0xff]
  %v9106 = vld [vmem:[%s242 + $0x1c8] sm:$0xff]
  %v9107 = vld [vmem:[%s242 + $0x1d0] sm:$0xff]
  %v9108 = vld [vmem:[%s242 + $0x1e8] sm:$0xff]
  %v9109 = vld [vmem:[%s242 + $0x1f0] sm:$0xff]
  %v9110 = vld [vmem:[%s242 + $0x248] sm:$0xff]
  %v9111 = vld [vmem:[%s242 + $0x250] sm:$0xff]
  %v9112 = vld [vmem:[%s242 + $0x268] sm:$0xff]
  %v9113 = vld [vmem:[%s242 + $0x270] sm:$0xff]
  %v9114 = vld [vmem:[%s242 + $0x288] sm:$0xff]
  %v9115 = vld [vmem:[%s242 + $0x290] sm:$0xff]
  %v9116 = vld [vmem:[%s242 + $0x2a8] sm:$0xff]
  %v9117 = vld [vmem:[%s242 + $0x2b0] sm:$0xff]
  %v9118 = vld [vmem:[%s242 + $0x2c8] sm:$0xff]
  %v9119 = vld [vmem:[%s242 + $0x2d0] sm:$0xff]
  %v9120 = vld [vmem:[%s242 + $0x2e8] sm:$0xff]
  %v9121 = vld [vmem:[%s242 + $0x2f0] sm:$0xff]
  %v9122 = vld [vmem:[%s242 + $0x308] sm:$0xff]
  %v9123 = vld [vmem:[%s242 + $0x310] sm:$0xff]
  %v9124 = vld [vmem:[%s242 + $0x328] sm:$0xff]
  %v9125 = vld [vmem:[%s242 + $0x330] sm:$0xff]
  %v9126 = vld [vmem:[%s242 + $0x348] sm:$0xff]
  %v9127 = vld [vmem:[%s242 + $0x350] sm:$0xff]
  %v9128 = vld [vmem:[%s242 + $0x368] sm:$0xff]
  %v9129 = vld [vmem:[%s242 + $0x370] sm:$0xff]
  %v9130 = vld [vmem:[%s242 + $0x388] sm:$0xff]
  %v9131 = vld [vmem:[%s242 + $0x390] sm:$0xff]
  %v9132 = vld [vmem:[%s242 + $0x3a8] sm:$0xff]
  %v9133 = vld [vmem:[%s242 + $0x3b0] sm:$0xff]
  %v9134 = vld [vmem:[%s242 + $0x3c8] sm:$0xff]
  %v9135 = vld [vmem:[%s242 + $0x3d0] sm:$0xff]
  %v9136 = vld [vmem:[%s242 + $0x3e8] sm:$0xff]
  %v9137 = vld [vmem:[%s242 + $0x3f0] sm:$0xff]
  %v9138 = vld [vmem:[%s242 + $0x408] sm:$0xff]
  %v9139 = vld [vmem:[%s242 + $0x410] sm:$0xff]
  %v9140 = vld [vmem:[%s242 + $0x428] sm:$0xff]
  %v9141 = vld [vmem:[%s242 + $0x430] sm:$0xff]
  %v9142 = vld [vmem:[%s242 + $0x9] sm:$0xff]
  %v9143 = vld [vmem:[%s242 + $0x11] sm:$0xff]
  %v9144 = vld [vmem:[%s242 + $0x29] sm:$0xff]
  %v9145 = vld [vmem:[%s242 + $0x31] sm:$0xff]
  %v9146 = vld [vmem:[%s242 + $0x49] sm:$0xff]
  %v9147 = vld [vmem:[%s242 + $0x51] sm:$0xff]
  %v9148 = vld [vmem:[%s242 + $0x69] sm:$0xff]
  %v9149 = vld [vmem:[%s242 + $0x71] sm:$0xff]
  %v9150 = vld [vmem:[%s242 + $0x89] sm:$0xff]
  %v9151 = vld [vmem:[%s242 + $0x91] sm:$0xff]
  %v9152 = vld [vmem:[%s242 + $0xa9] sm:$0xff]
  %v9153 = vld [vmem:[%s242 + $0xb1] sm:$0xff]
  %v9154 = vld [vmem:[%s242 + $0xc9] sm:$0xff]
  %v9155 = vld [vmem:[%s242 + $0xd1] sm:$0xff]
  %v9156 = vld [vmem:[%s242 + $0xe9] sm:$0xff]
  %v9157 = vld [vmem:[%s242 + $0xf1] sm:$0xff]
  %v9158 = vld [vmem:[%s242 + $0x109] sm:$0xff]
  %v9159 = vld [vmem:[%s242 + $0x111] sm:$0xff]
  %v9160 = vld [vmem:[%s242 + $0x129] sm:$0xff]
  %v9161 = vld [vmem:[%s242 + $0x131] sm:$0xff]
  %v9162 = vld [vmem:[%s242 + $0x149] sm:$0xff]
  %v9163 = vld [vmem:[%s242 + $0x151] sm:$0xff]
  %v9164 = vld [vmem:[%s242 + $0x169] sm:$0xff]
  %v9165 = vld [vmem:[%s242 + $0x171] sm:$0xff]
  %v9166 = vld [vmem:[%s242 + $0x189] sm:$0xff]
  %v9167 = vld [vmem:[%s242 + $0x191] sm:$0xff]
  %v9168 = vld [vmem:[%s242 + $0x1a9] sm:$0xff]
  %v9169 = vld [vmem:[%s242 + $0x1b1] sm:$0xff]
  %v9170 = vld [vmem:[%s242 + $0x1c9] sm:$0xff]
  %v9171 = vld [vmem:[%s242 + $0x1d1] sm:$0xff]
  %v9172 = vld [vmem:[%s242 + $0x1e9] sm:$0xff]
  %v9173 = vld [vmem:[%s242 + $0x1f1] sm:$0xff]
  %v9174 = vld [vmem:[%s242 + $0x249] sm:$0xff]
  %v9175 = vld [vmem:[%s242 + $0x251] sm:$0xff]
  %v9176 = vld [vmem:[%s242 + $0x269] sm:$0xff]
  %v9177 = vld [vmem:[%s242 + $0x271] sm:$0xff]
  %v9178 = vld [vmem:[%s242 + $0x289] sm:$0xff]
  %v9179 = vld [vmem:[%s242 + $0x291] sm:$0xff]
  %v9180 = vld [vmem:[%s242 + $0x2a9] sm:$0xff]
  %v9181 = vld [vmem:[%s242 + $0x2b1] sm:$0xff]
  %v9182 = vld [vmem:[%s242 + $0x2c9] sm:$0xff]
  %v9183 = vld [vmem:[%s242 + $0x2d1] sm:$0xff]
  %v9184 = vld [vmem:[%s242 + $0x2e9] sm:$0xff]
  %v9185 = vld [vmem:[%s242 + $0x2f1] sm:$0xff]
  %v9186 = vld [vmem:[%s242 + $0x309] sm:$0xff]
  %v9187 = vld [vmem:[%s242 + $0x311] sm:$0xff]
  %v9188 = vld [vmem:[%s242 + $0x329] sm:$0xff]
  %v9189 = vld [vmem:[%s242 + $0x331] sm:$0xff]
  %v9190 = vld [vmem:[%s242 + $0x349] sm:$0xff]
  %v9191 = vld [vmem:[%s242 + $0x351] sm:$0xff]
  %v9192 = vld [vmem:[%s242 + $0x369] sm:$0xff]
  %v9193 = vld [vmem:[%s242 + $0x371] sm:$0xff]
  %v9194 = vld [vmem:[%s242 + $0x389] sm:$0xff]
  %v9195 = vld [vmem:[%s242 + $0x391] sm:$0xff]
  %v9196 = vld [vmem:[%s242 + $0x3a9] sm:$0xff]
  %v9197 = vld [vmem:[%s242 + $0x3b1] sm:$0xff]
  %v9198 = vld [vmem:[%s242 + $0x3c9] sm:$0xff]
  %v9199 = vld [vmem:[%s242 + $0x3d1] sm:$0xff]
  %v9200 = vld [vmem:[%s242 + $0x3e9] sm:$0xff]
  %v9201 = vld [vmem:[%s242 + $0x3f1] sm:$0xff]
  %v9202 = vld [vmem:[%s242 + $0x409] sm:$0xff]
  %v9203 = vld [vmem:[%s242 + $0x411] sm:$0xff]
  %v9204 = vld [vmem:[%s242 + $0x429] sm:$0xff]
  %v9205 = vld [vmem:[%s242 + $0x431] sm:$0xff]
  %v9206 = vld [vmem:[%s692 + $0x7] sm:$0xff]
  %v9207 = vld [vmem:[%s692 + $0xf] sm:$0xff]
  %v9208 = vld [vmem:[%s692 + $0x27] sm:$0xff]
  %v9209 = vld [vmem:[%s692 + $0x2f] sm:$0xff]
  %v9210 = vld [vmem:[%s692 + $0x47] sm:$0xff]
  %v9211 = vld [vmem:[%s692 + $0x4f] sm:$0xff]
  %v9212 = vld [vmem:[%s692 + $0x67] sm:$0xff]
  %v9213 = vld [vmem:[%s692 + $0x6f] sm:$0xff]
  %v9214 = vld [vmem:[%s692 + $0x87] sm:$0xff]
  %v9215 = vld [vmem:[%s692 + $0x8f] sm:$0xff]
  %v9216 = vld [vmem:[%s692 + $0xa7] sm:$0xff]
  %v9217 = vld [vmem:[%s692 + $0xaf] sm:$0xff]
  %v9218 = vld [vmem:[%s692 + $0xc7] sm:$0xff]
  %v9219 = vld [vmem:[%s692 + $0xcf] sm:$0xff]
  %v9220 = vld [vmem:[%s692 + $0xe7] sm:$0xff]
  %v9221 = vld [vmem:[%s692 + $0xef] sm:$0xff]
  %v9222 = vld [vmem:[%s692 + $0x107] sm:$0xff]
  %v9223 = vld [vmem:[%s692 + $0x10f] sm:$0xff]
  %v9224 = vld [vmem:[%s692 + $0x127] sm:$0xff]
  %v9225 = vld [vmem:[%s692 + $0x12f] sm:$0xff]
  %v9226 = vld [vmem:[%s692 + $0x147] sm:$0xff]
  %v9227 = vld [vmem:[%s692 + $0x14f] sm:$0xff]
  %v9228 = vld [vmem:[%s692 + $0x167] sm:$0xff]
  %v9229 = vld [vmem:[%s692 + $0x16f] sm:$0xff]
  %v9230 = vld [vmem:[%s692 + $0x187] sm:$0xff]
  %v9231 = vld [vmem:[%s692 + $0x18f] sm:$0xff]
  %v9232 = vld [vmem:[%s692 + $0x1a7] sm:$0xff]
  %v9233 = vld [vmem:[%s692 + $0x1af] sm:$0xff]
  %v9234 = vld [vmem:[%s692 + $0x1c7] sm:$0xff]
  %v9235 = vld [vmem:[%s692 + $0x1cf] sm:$0xff]
  %v9236 = vld [vmem:[%s692 + $0x1e7] sm:$0xff]
  %v9237 = vld [vmem:[%s692 + $0x1ef] sm:$0xff]
  %v9238 = vld [vmem:[%s692 + $0x247] sm:$0xff]
  %v9239 = vld [vmem:[%s692 + $0x24f] sm:$0xff]
  %v9240 = vld [vmem:[%s692 + $0x267] sm:$0xff]
  %v9241 = vld [vmem:[%s692 + $0x26f] sm:$0xff]
  %v9242 = vld [vmem:[%s692 + $0x287] sm:$0xff]
  %v9243 = vld [vmem:[%s692 + $0x28f] sm:$0xff]
  %v9244 = vld [vmem:[%s692 + $0x2a7] sm:$0xff]
  %v9245 = vld [vmem:[%s692 + $0x2af] sm:$0xff]
  %v9246 = vld [vmem:[%s692 + $0x2c7] sm:$0xff]
  %v9247 = vld [vmem:[%s692 + $0x2cf] sm:$0xff]
  %v9248 = vld [vmem:[%s692 + $0x2e7] sm:$0xff]
  %v9249 = vld [vmem:[%s692 + $0x2ef] sm:$0xff]
  %v9250 = vld [vmem:[%s692 + $0x307] sm:$0xff]
  %v9251 = vld [vmem:[%s692 + $0x30f] sm:$0xff]
  %v9252 = vld [vmem:[%s692 + $0x327] sm:$0xff]
  %v9253 = vld [vmem:[%s692 + $0x32f] sm:$0xff]
  %v9254 = vld [vmem:[%s692 + $0x347] sm:$0xff]
  %v9255 = vld [vmem:[%s692 + $0x34f] sm:$0xff]
  %v9256 = vld [vmem:[%s692 + $0x367] sm:$0xff]
  %v9257 = vld [vmem:[%s692 + $0x36f] sm:$0xff]
  %v9258 = vld [vmem:[%s692 + $0x387] sm:$0xff]
  %v9259 = vld [vmem:[%s692 + $0x38f] sm:$0xff]
  %v9260 = vld [vmem:[%s692 + $0x3a7] sm:$0xff]
  %v9261 = vld [vmem:[%s692 + $0x3af] sm:$0xff]
  %v9262 = vld [vmem:[%s692 + $0x3c7] sm:$0xff]
  %v9263 = vld [vmem:[%s692 + $0x3cf] sm:$0xff]
  %v9264 = vld [vmem:[%s692 + $0x3e7] sm:$0xff]
  %v9265 = vld [vmem:[%s692 + $0x3ef] sm:$0xff]
  %v9266 = vld [vmem:[%s692 + $0x407] sm:$0xff]
  %v9267 = vld [vmem:[%s692 + $0x40f] sm:$0xff]
  %v9268 = vld [vmem:[%s692 + $0x427] sm:$0xff]
  %v9269 = vld [vmem:[%s692 + $0x42f] sm:$0xff]
  %v9270 = vld [vmem:[%s692 + $0x8] sm:$0xff]
  %v9271 = vld [vmem:[%s692 + $0x10] sm:$0xff]
  %v9272 = vld [vmem:[%s692 + $0x28] sm:$0xff]
  %v9273 = vld [vmem:[%s692 + $0x30] sm:$0xff]
  %v9274 = vld [vmem:[%s692 + $0x48] sm:$0xff]
  %v9275 = vld [vmem:[%s692 + $0x50] sm:$0xff]
  %v9276 = vld [vmem:[%s692 + $0x68] sm:$0xff]
  %v9277 = vld [vmem:[%s692 + $0x70] sm:$0xff]
  %v9278 = vld [vmem:[%s692 + $0x88] sm:$0xff]
  %v9279 = vld [vmem:[%s692 + $0x90] sm:$0xff]
  %v9280 = vld [vmem:[%s692 + $0xa8] sm:$0xff]
  %v9281 = vld [vmem:[%s692 + $0xb0] sm:$0xff]
  %v9282 = vld [vmem:[%s692 + $0xc8] sm:$0xff]
  %v9283 = vld [vmem:[%s692 + $0xd0] sm:$0xff]
  %v9284 = vld [vmem:[%s692 + $0xe8] sm:$0xff]
  %v9285 = vld [vmem:[%s692 + $0xf0] sm:$0xff]
  %v9286 = vld [vmem:[%s692 + $0x108] sm:$0xff]
  %v9287 = vld [vmem:[%s692 + $0x110] sm:$0xff]
  %v9288 = vld [vmem:[%s692 + $0x128] sm:$0xff]
  %v9289 = vld [vmem:[%s692 + $0x130] sm:$0xff]
  %v9290 = vld [vmem:[%s692 + $0x148] sm:$0xff]
  %v9291 = vld [vmem:[%s692 + $0x150] sm:$0xff]
  %v9292 = vld [vmem:[%s692 + $0x168] sm:$0xff]
  %v9293 = vld [vmem:[%s692 + $0x170] sm:$0xff]
  %v9294 = vld [vmem:[%s692 + $0x188] sm:$0xff]
  %v9295 = vld [vmem:[%s692 + $0x190] sm:$0xff]
  %v9296 = vld [vmem:[%s692 + $0x1a8] sm:$0xff]
  %v9297 = vld [vmem:[%s692 + $0x1b0] sm:$0xff]
  %v9298 = vld [vmem:[%s692 + $0x1c8] sm:$0xff]
  %v9299 = vld [vmem:[%s692 + $0x1d0] sm:$0xff]
  %v9300 = vld [vmem:[%s692 + $0x1e8] sm:$0xff]
  %v9301 = vld [vmem:[%s692 + $0x1f0] sm:$0xff]
  %v9302 = vld [vmem:[%s692 + $0x248] sm:$0xff]
  %v9303 = vld [vmem:[%s692 + $0x250] sm:$0xff]
  %v9304 = vld [vmem:[%s692 + $0x268] sm:$0xff]
  %v9305 = vld [vmem:[%s692 + $0x270] sm:$0xff]
  %v9306 = vld [vmem:[%s692 + $0x288] sm:$0xff]
  %v9307 = vld [vmem:[%s692 + $0x290] sm:$0xff]
  %v9308 = vld [vmem:[%s692 + $0x2a8] sm:$0xff]
  %v9309 = vld [vmem:[%s692 + $0x2b0] sm:$0xff]
  %v9310 = vld [vmem:[%s692 + $0x2c8] sm:$0xff]
  %v9311 = vld [vmem:[%s692 + $0x2d0] sm:$0xff]
  %v9312 = vld [vmem:[%s692 + $0x2e8] sm:$0xff]
  %v9313 = vld [vmem:[%s692 + $0x2f0] sm:$0xff]
  %v9314 = vld [vmem:[%s692 + $0x308] sm:$0xff]
  %v9315 = vld [vmem:[%s692 + $0x310] sm:$0xff]
  %v9316 = vld [vmem:[%s692 + $0x328] sm:$0xff]
  %v9317 = vld [vmem:[%s692 + $0x330] sm:$0xff]
  %v9318 = vld [vmem:[%s692 + $0x348] sm:$0xff]
  %v9319 = vld [vmem:[%s692 + $0x350] sm:$0xff]
  %v9320 = vld [vmem:[%s692 + $0x368] sm:$0xff]
  %v9321 = vld [vmem:[%s692 + $0x370] sm:$0xff]
  %v9322 = vld [vmem:[%s692 + $0x388] sm:$0xff]
  %v9323 = vld [vmem:[%s692 + $0x390] sm:$0xff]
  %v9324 = vld [vmem:[%s692 + $0x3a8] sm:$0xff]
  %v9325 = vld [vmem:[%s692 + $0x3b0] sm:$0xff]
  %v9326 = vld [vmem:[%s692 + $0x3c8] sm:$0xff]
  %v9327 = vld [vmem:[%s692 + $0x3d0] sm:$0xff]
  %v9328 = vld [vmem:[%s692 + $0x3e8] sm:$0xff]
  %v9329 = vld [vmem:[%s692 + $0x3f0] sm:$0xff]
  %v9330 = vld [vmem:[%s692 + $0x408] sm:$0xff]
  %v9331 = vld [vmem:[%s692 + $0x410] sm:$0xff]
  %v9332 = vld [vmem:[%s692 + $0x428] sm:$0xff]
  %v9333 = vld [vmem:[%s692 + $0x430] sm:$0xff]
  %v9334 = vld [vmem:[%s692 + $0x9] sm:$0xff]
  %v9335 = vld [vmem:[%s692 + $0x11] sm:$0xff]
  %v9336 = vld [vmem:[%s692 + $0x29] sm:$0xff]
  %v9337 = vld [vmem:[%s692 + $0x31] sm:$0xff]
  %v9338 = vld [vmem:[%s692 + $0x49] sm:$0xff]
  %v9339 = vld [vmem:[%s692 + $0x51] sm:$0xff]
  %v9340 = vld [vmem:[%s692 + $0x69] sm:$0xff]
  %v9341 = vld [vmem:[%s692 + $0x71] sm:$0xff]
  %v9342 = vld [vmem:[%s692 + $0x89] sm:$0xff]
  %v9343 = vld [vmem:[%s692 + $0x91] sm:$0xff]
  %v9344 = vld [vmem:[%s692 + $0xa9] sm:$0xff]
  %v9345 = vld [vmem:[%s692 + $0xb1] sm:$0xff]
  %v9346 = vld [vmem:[%s692 + $0xc9] sm:$0xff]
  %v9347 = vld [vmem:[%s692 + $0xd1] sm:$0xff]
  %v9348 = vld [vmem:[%s692 + $0xe9] sm:$0xff]
  %v9349 = vld [vmem:[%s692 + $0xf1] sm:$0xff]
  %v9350 = vld [vmem:[%s692 + $0x109] sm:$0xff]
  %v9351 = vld [vmem:[%s692 + $0x111] sm:$0xff]
  %v9352 = vld [vmem:[%s692 + $0x129] sm:$0xff]
  %v9353 = vld [vmem:[%s692 + $0x131] sm:$0xff]
  %v9354 = vld [vmem:[%s692 + $0x149] sm:$0xff]
  %v9355 = vld [vmem:[%s692 + $0x151] sm:$0xff]
  %v9356 = vld [vmem:[%s692 + $0x169] sm:$0xff]
  %v9357 = vld [vmem:[%s692 + $0x171] sm:$0xff]
  %v9358 = vld [vmem:[%s692 + $0x189] sm:$0xff]
  %v9359 = vld [vmem:[%s692 + $0x191] sm:$0xff]
  %v9360 = vld [vmem:[%s692 + $0x1a9] sm:$0xff]
  %v9361 = vld [vmem:[%s692 + $0x1b1] sm:$0xff]
  %v9362 = vld [vmem:[%s692 + $0x1c9] sm:$0xff]
  %v9363 = vld [vmem:[%s692 + $0x1d1] sm:$0xff]
  %v9364 = vld [vmem:[%s692 + $0x1e9] sm:$0xff]
  %v9365 = vld [vmem:[%s692 + $0x1f1] sm:$0xff]
  %v9366 = vld [vmem:[%s692 + $0x249] sm:$0xff]
  %v9367 = vld [vmem:[%s692 + $0x251] sm:$0xff]
  %v9368 = vld [vmem:[%s692 + $0x269] sm:$0xff]
  %v9369 = vld [vmem:[%s692 + $0x271] sm:$0xff]
  %v9370 = vld [vmem:[%s692 + $0x289] sm:$0xff]
  %v9371 = vld [vmem:[%s692 + $0x291] sm:$0xff]
  %v9372 = vld [vmem:[%s692 + $0x2a9] sm:$0xff]
  %v9373 = vld [vmem:[%s692 + $0x2b1] sm:$0xff]
  %v9374 = vld [vmem:[%s692 + $0x2c9] sm:$0xff]
  %v9375 = vld [vmem:[%s692 + $0x2d1] sm:$0xff]
  %v9376 = vld [vmem:[%s692 + $0x2e9] sm:$0xff]
  %v9377 = vld [vmem:[%s692 + $0x2f1] sm:$0xff]
  %v9378 = vld [vmem:[%s692 + $0x309] sm:$0xff]
  %v9379 = vld [vmem:[%s692 + $0x311] sm:$0xff]
  %v9380 = vld [vmem:[%s692 + $0x329] sm:$0xff]
  %v9381 = vld [vmem:[%s692 + $0x331] sm:$0xff]
  %v9382 = vld [vmem:[%s692 + $0x349] sm:$0xff]
  %v9383 = vld [vmem:[%s692 + $0x351] sm:$0xff]
  %v9384 = vld [vmem:[%s692 + $0x369] sm:$0xff]
  %v9385 = vld [vmem:[%s692 + $0x371] sm:$0xff]
  %v9386 = vld [vmem:[%s692 + $0x389] sm:$0xff]
  %v9387 = vld [vmem:[%s692 + $0x391] sm:$0xff]
  %v9388 = vld [vmem:[%s692 + $0x3a9] sm:$0xff]
  %v9389 = vld [vmem:[%s692 + $0x3b1] sm:$0xff]
  %v9390 = vld [vmem:[%s692 + $0x3c9] sm:$0xff]
  %v9391 = vld [vmem:[%s692 + $0x3d1] sm:$0xff]
  %v9392 = vld [vmem:[%s692 + $0x3e9] sm:$0xff]
  %v9393 = vld [vmem:[%s692 + $0x3f1] sm:$0xff]
  %v9394 = vld [vmem:[%s692 + $0x409] sm:$0xff]
  %v9395 = vld [vmem:[%s692 + $0x411] sm:$0xff]
  %v9396 = vld [vmem:[%s692 + $0x429] sm:$0xff]
  %v9397 = vld [vmem:[%s692 + $0x431] sm:$0xff]
  %9462 = vrot.lane.b32.xlu0 %v8886, 8
  %v9463 = vpop.permute.xlu0 %9462
  %9464 = vrot.lane.b32.xlu0 %v8887, 8
  %v9465 = vpop.permute.xlu0 %9464
  %9466 = vrot.lane.b32.xlu0 %v8888, 8
  %v9467 = vpop.permute.xlu0 %9466
  %9468 = vrot.lane.b32.xlu0 %v8889, 8
  %v9469 = vpop.permute.xlu0 %9468
  %9470 = vrot.lane.b32.xlu0 %v8890, 8
  %v9471 = vpop.permute.xlu0 %9470
  %9472 = vrot.lane.b32.xlu0 %v8891, 8
  %v9473 = vpop.permute.xlu0 %9472
  %9474 = vrot.lane.b32.xlu0 %v8892, 8
  %v9475 = vpop.permute.xlu0 %9474
  %9476 = vrot.lane.b32.xlu0 %v8893, 8
  %v9477 = vpop.permute.xlu0 %9476
  %9478 = vrot.lane.b32.xlu0 %v8894, 8
  %v9479 = vpop.permute.xlu0 %9478
  %9480 = vrot.lane.b32.xlu0 %v8895, 8
  %v9481 = vpop.permute.xlu0 %9480
  %9482 = vrot.lane.b32.xlu0 %v8896, 8
  %v9483 = vpop.permute.xlu0 %9482
  %9484 = vrot.lane.b32.xlu0 %v8897, 8
  %v9485 = vpop.permute.xlu0 %9484
  %9486 = vrot.lane.b32.xlu0 %v8898, 8
  %v9487 = vpop.permute.xlu0 %9486
  %9488 = vrot.lane.b32.xlu0 %v8899, 8
  %v9489 = vpop.permute.xlu0 %9488
  %9490 = vrot.lane.b32.xlu0 %v8900, 8
  %v9491 = vpop.permute.xlu0 %9490
  %9492 = vrot.lane.b32.xlu0 %v8901, 8
  %v9493 = vpop.permute.xlu0 %9492
  %9494 = vrot.lane.b32.xlu0 %v8902, 8
  %v9495 = vpop.permute.xlu0 %9494
  %9496 = vrot.lane.b32.xlu0 %v8903, 8
  %v9497 = vpop.permute.xlu0 %9496
  %9498 = vrot.lane.b32.xlu0 %v8904, 8
  %v9499 = vpop.permute.xlu0 %9498
  %9500 = vrot.lane.b32.xlu0 %v8905, 8
  %v9501 = vpop.permute.xlu0 %9500
  %9502 = vrot.lane.b32.xlu0 %v8906, 8
  %v9503 = vpop.permute.xlu0 %9502
  %9504 = vrot.lane.b32.xlu0 %v8907, 8
  %v9505 = vpop.permute.xlu0 %9504
  %9506 = vrot.lane.b32.xlu0 %v8908, 8
  %v9507 = vpop.permute.xlu0 %9506
  %9508 = vrot.lane.b32.xlu0 %v8909, 8
  %v9509 = vpop.permute.xlu0 %9508
  %9510 = vrot.lane.b32.xlu0 %v8910, 8
  %v9511 = vpop.permute.xlu0 %9510
  %9512 = vrot.lane.b32.xlu0 %v8911, 8
  %v9513 = vpop.permute.xlu0 %9512
  %9514 = vrot.lane.b32.xlu0 %v8912, 8
  %v9515 = vpop.permute.xlu0 %9514
  %9516 = vrot.lane.b32.xlu0 %v8913, 8
  %v9517 = vpop.permute.xlu0 %9516
  %9518 = vrot.lane.b32.xlu0 %v8914, 8
  %v9519 = vpop.permute.xlu0 %9518
  %9520 = vrot.lane.b32.xlu0 %v8915, 8
  %v9521 = vpop.permute.xlu0 %9520
  %9522 = vrot.lane.b32.xlu0 %v8916, 8
  %v9523 = vpop.permute.xlu0 %9522
  %9524 = vrot.lane.b32.xlu0 %v8917, 8
  %v9525 = vpop.permute.xlu0 %9524
  %9526 = vrot.lane.b32.xlu0 %v8918, 8
  %v9527 = vpop.permute.xlu0 %9526
  %9528 = vrot.lane.b32.xlu0 %v8919, 8
  %v9529 = vpop.permute.xlu0 %9528
  %9530 = vrot.lane.b32.xlu0 %v8920, 8
  %v9531 = vpop.permute.xlu0 %9530
  %9532 = vrot.lane.b32.xlu0 %v8921, 8
  %v9533 = vpop.permute.xlu0 %9532
  %9534 = vrot.lane.b32.xlu0 %v8922, 8
  %v9535 = vpop.permute.xlu0 %9534
  %9536 = vrot.lane.b32.xlu0 %v8923, 8
  %v9537 = vpop.permute.xlu0 %9536
  %9538 = vrot.lane.b32.xlu0 %v8924, 8
  %v9539 = vpop.permute.xlu0 %9538
  %9540 = vrot.lane.b32.xlu0 %v8925, 8
  %v9541 = vpop.permute.xlu0 %9540
  %9542 = vrot.lane.b32.xlu0 %v8926, 8
  %v9543 = vpop.permute.xlu0 %9542
  %9544 = vrot.lane.b32.xlu0 %v8927, 8
  %v9545 = vpop.permute.xlu0 %9544
  %9546 = vrot.lane.b32.xlu0 %v8928, 8
  %v9547 = vpop.permute.xlu0 %9546
  %9548 = vrot.lane.b32.xlu0 %v8929, 8
  %v9549 = vpop.permute.xlu0 %9548
  %9550 = vrot.lane.b32.xlu0 %v8930, 8
  %v9551 = vpop.permute.xlu0 %9550
  %9552 = vrot.lane.b32.xlu0 %v8931, 8
  %v9553 = vpop.permute.xlu0 %9552
  %9554 = vrot.lane.b32.xlu0 %v8932, 8
  %v9555 = vpop.permute.xlu0 %9554
  %9556 = vrot.lane.b32.xlu0 %v8933, 8
  %v9557 = vpop.permute.xlu0 %9556
  %9558 = vrot.lane.b32.xlu0 %v8934, 8
  %v9559 = vpop.permute.xlu0 %9558
  %9560 = vrot.lane.b32.xlu0 %v8935, 8
  %v9561 = vpop.permute.xlu0 %9560
  %9562 = vrot.lane.b32.xlu0 %v8936, 8
  %v9563 = vpop.permute.xlu0 %9562
  %9564 = vrot.lane.b32.xlu0 %v8937, 8
  %v9565 = vpop.permute.xlu0 %9564
  %9566 = vrot.lane.b32.xlu0 %v8938, 8
  %v9567 = vpop.permute.xlu0 %9566
  %9568 = vrot.lane.b32.xlu0 %v8939, 8
  %v9569 = vpop.permute.xlu0 %9568
  %9570 = vrot.lane.b32.xlu0 %v8940, 8
  %v9571 = vpop.permute.xlu0 %9570
  %9572 = vrot.lane.b32.xlu0 %v8941, 8
  %v9573 = vpop.permute.xlu0 %9572
  %9574 = vrot.lane.b32.xlu0 %v8942, 8
  %v9575 = vpop.permute.xlu0 %9574
  %9576 = vrot.lane.b32.xlu0 %v8943, 8
  %v9577 = vpop.permute.xlu0 %9576
  %9578 = vrot.lane.b32.xlu0 %v8944, 8
  %v9579 = vpop.permute.xlu0 %9578
  %9580 = vrot.lane.b32.xlu0 %v8945, 8
  %v9581 = vpop.permute.xlu0 %9580
  %9582 = vrot.lane.b32.xlu0 %v8946, 8
  %v9583 = vpop.permute.xlu0 %9582
  %9584 = vrot.lane.b32.xlu0 %v8947, 8
  %v9585 = vpop.permute.xlu0 %9584
  %9586 = vrot.lane.b32.xlu0 %v8948, 8
  %v9587 = vpop.permute.xlu0 %9586
  %9588 = vrot.lane.b32.xlu0 %v8949, 8
  %v9589 = vpop.permute.xlu0 %9588
  %9718 = vrot.lane.b32.xlu0 %v8950, 16
  %v9719 = vpop.permute.xlu0 %9718
  %9720 = vrot.lane.b32.xlu0 %v8951, 16
  %v9721 = vpop.permute.xlu0 %9720
  %9722 = vrot.lane.b32.xlu0 %v8952, 16
  %v9723 = vpop.permute.xlu0 %9722
  %9724 = vrot.lane.b32.xlu0 %v8953, 16
  %v9725 = vpop.permute.xlu0 %9724
  %9726 = vrot.lane.b32.xlu0 %v8954, 16
  %v9727 = vpop.permute.xlu0 %9726
  %9728 = vrot.lane.b32.xlu0 %v8955, 16
  %v9729 = vpop.permute.xlu0 %9728
  %9730 = vrot.lane.b32.xlu0 %v8956, 16
  %v9731 = vpop.permute.xlu0 %9730
  %9732 = vrot.lane.b32.xlu0 %v8957, 16
  %v9733 = vpop.permute.xlu0 %9732
  %9734 = vrot.lane.b32.xlu0 %v8958, 16
  %v9735 = vpop.permute.xlu0 %9734
  %9736 = vrot.lane.b32.xlu0 %v8959, 16
  %v9737 = vpop.permute.xlu0 %9736
  %9738 = vrot.lane.b32.xlu0 %v8960, 16
  %v9739 = vpop.permute.xlu0 %9738
  %9740 = vrot.lane.b32.xlu0 %v8961, 16
  %v9741 = vpop.permute.xlu0 %9740
  %9742 = vrot.lane.b32.xlu0 %v8962, 16
  %v9743 = vpop.permute.xlu0 %9742
  %9744 = vrot.lane.b32.xlu0 %v8963, 16
  %v9745 = vpop.permute.xlu0 %9744
  %9746 = vrot.lane.b32.xlu0 %v8964, 16
  %v9747 = vpop.permute.xlu0 %9746
  %9748 = vrot.lane.b32.xlu0 %v8965, 16
  %v9749 = vpop.permute.xlu0 %9748
  %9750 = vrot.lane.b32.xlu0 %v8966, 16
  %v9751 = vpop.permute.xlu0 %9750
  %9752 = vrot.lane.b32.xlu0 %v8967, 16
  %v9753 = vpop.permute.xlu0 %9752
  %9754 = vrot.lane.b32.xlu0 %v8968, 16
  %v9755 = vpop.permute.xlu0 %9754
  %9756 = vrot.lane.b32.xlu0 %v8969, 16
  %v9757 = vpop.permute.xlu0 %9756
  %9758 = vrot.lane.b32.xlu0 %v8970, 16
  %v9759 = vpop.permute.xlu0 %9758
  %9760 = vrot.lane.b32.xlu0 %v8971, 16
  %v9761 = vpop.permute.xlu0 %9760
  %9762 = vrot.lane.b32.xlu0 %v8972, 16
  %v9763 = vpop.permute.xlu0 %9762
  %9764 = vrot.lane.b32.xlu0 %v8973, 16
  %v9765 = vpop.permute.xlu0 %9764
  %9766 = vrot.lane.b32.xlu0 %v8974, 16
  %v9767 = vpop.permute.xlu0 %9766
  %9768 = vrot.lane.b32.xlu0 %v8975, 16
  %v9769 = vpop.permute.xlu0 %9768
  %9770 = vrot.lane.b32.xlu0 %v8976, 16
  %v9771 = vpop.permute.xlu0 %9770
  %9772 = vrot.lane.b32.xlu0 %v8977, 16
  %v9773 = vpop.permute.xlu0 %9772
  %9774 = vrot.lane.b32.xlu0 %v8978, 16
  %v9775 = vpop.permute.xlu0 %9774
  %9776 = vrot.lane.b32.xlu0 %v8979, 16
  %v9777 = vpop.permute.xlu0 %9776
  %9778 = vrot.lane.b32.xlu0 %v8980, 16
  %v9779 = vpop.permute.xlu0 %9778
  %9780 = vrot.lane.b32.xlu0 %v8981, 16
  %v9781 = vpop.permute.xlu0 %9780
  %9782 = vrot.lane.b32.xlu0 %v8982, 16
  %v9783 = vpop.permute.xlu0 %9782
  %9784 = vrot.lane.b32.xlu0 %v8983, 16
  %v9785 = vpop.permute.xlu0 %9784
  %9786 = vrot.lane.b32.xlu0 %v8984, 16
  %v9787 = vpop.permute.xlu0 %9786
  %9788 = vrot.lane.b32.xlu0 %v8985, 16
  %v9789 = vpop.permute.xlu0 %9788
  %9790 = vrot.lane.b32.xlu0 %v8986, 16
  %v9791 = vpop.permute.xlu0 %9790
  %9792 = vrot.lane.b32.xlu0 %v8987, 16
  %v9793 = vpop.permute.xlu0 %9792
  %9794 = vrot.lane.b32.xlu0 %v8988, 16
  %v9795 = vpop.permute.xlu0 %9794
  %9796 = vrot.lane.b32.xlu0 %v8989, 16
  %v9797 = vpop.permute.xlu0 %9796
  %9798 = vrot.lane.b32.xlu0 %v8990, 16
  %v9799 = vpop.permute.xlu0 %9798
  %9800 = vrot.lane.b32.xlu0 %v8991, 16
  %v9801 = vpop.permute.xlu0 %9800
  %9802 = vrot.lane.b32.xlu0 %v8992, 16
  %v9803 = vpop.permute.xlu0 %9802
  %9804 = vrot.lane.b32.xlu0 %v8993, 16
  %v9805 = vpop.permute.xlu0 %9804
  %9806 = vrot.lane.b32.xlu0 %v8994, 16
  %v9807 = vpop.permute.xlu0 %9806
  %9808 = vrot.lane.b32.xlu0 %v8995, 16
  %v9809 = vpop.permute.xlu0 %9808
  %9810 = vrot.lane.b32.xlu0 %v8996, 16
  %v9811 = vpop.permute.xlu0 %9810
  %9812 = vrot.lane.b32.xlu0 %v8997, 16
  %v9813 = vpop.permute.xlu0 %9812
  %9814 = vrot.lane.b32.xlu0 %v8998, 16
  %v9815 = vpop.permute.xlu0 %9814
  %9816 = vrot.lane.b32.xlu0 %v8999, 16
  %v9817 = vpop.permute.xlu0 %9816
  %9818 = vrot.lane.b32.xlu0 %v9000, 16
  %v9819 = vpop.permute.xlu0 %9818
  %9820 = vrot.lane.b32.xlu0 %v9001, 16
  %v9821 = vpop.permute.xlu0 %9820
  %9822 = vrot.lane.b32.xlu0 %v9002, 16
  %v9823 = vpop.permute.xlu0 %9822
  %9824 = vrot.lane.b32.xlu0 %v9003, 16
  %v9825 = vpop.permute.xlu0 %9824
  %9826 = vrot.lane.b32.xlu0 %v9004, 16
  %v9827 = vpop.permute.xlu0 %9826
  %9828 = vrot.lane.b32.xlu0 %v9005, 16
  %v9829 = vpop.permute.xlu0 %9828
  %9830 = vrot.lane.b32.xlu0 %v9006, 16
  %v9831 = vpop.permute.xlu0 %9830
  %9832 = vrot.lane.b32.xlu0 %v9007, 16
  %v9833 = vpop.permute.xlu0 %9832
  %9834 = vrot.lane.b32.xlu0 %v9008, 16
  %v9835 = vpop.permute.xlu0 %9834
  %9836 = vrot.lane.b32.xlu0 %v9009, 16
  %v9837 = vpop.permute.xlu0 %9836
  %9838 = vrot.lane.b32.xlu0 %v9010, 16
  %v9839 = vpop.permute.xlu0 %9838
  %9840 = vrot.lane.b32.xlu0 %v9011, 16
  %v9841 = vpop.permute.xlu0 %9840
  %9842 = vrot.lane.b32.xlu0 %v9012, 16
  %v9843 = vpop.permute.xlu0 %9842
  %9844 = vrot.lane.b32.xlu0 %v9013, 16
  %v9845 = vpop.permute.xlu0 %9844
  %9974 = vrot.lane.b32.xlu0 %v9014, 24
  %v9975 = vpop.permute.xlu0 %9974
  %9976 = vrot.lane.b32.xlu0 %v9015, 24
  %v9977 = vpop.permute.xlu0 %9976
  %9978 = vrot.lane.b32.xlu0 %v9016, 24
  %v9979 = vpop.permute.xlu0 %9978
  %9980 = vrot.lane.b32.xlu0 %v9017, 24
  %v9981 = vpop.permute.xlu0 %9980
  %9982 = vrot.lane.b32.xlu0 %v9018, 24
  %v9983 = vpop.permute.xlu0 %9982
  %9984 = vrot.lane.b32.xlu0 %v9019, 24
  %v9985 = vpop.permute.xlu0 %9984
  %9986 = vrot.lane.b32.xlu0 %v9020, 24
  %v9987 = vpop.permute.xlu0 %9986
  %9988 = vrot.lane.b32.xlu0 %v9021, 24
  %v9989 = vpop.permute.xlu0 %9988
  %9990 = vrot.lane.b32.xlu0 %v9022, 24
  %v9991 = vpop.permute.xlu0 %9990
  %9992 = vrot.lane.b32.xlu0 %v9023, 24
  %v9993 = vpop.permute.xlu0 %9992
  %9994 = vrot.lane.b32.xlu0 %v9024, 24
  %v9995 = vpop.permute.xlu0 %9994
  %9996 = vrot.lane.b32.xlu0 %v9025, 24
  %v9997 = vpop.permute.xlu0 %9996
  %9998 = vrot.lane.b32.xlu0 %v9026, 24
  %v9999 = vpop.permute.xlu0 %9998
  %10000 = vrot.lane.b32.xlu0 %v9027, 24
  %v10001 = vpop.permute.xlu0 %10000
  %10002 = vrot.lane.b32.xlu0 %v9028, 24
  %v10003 = vpop.permute.xlu0 %10002
  %10004 = vrot.lane.b32.xlu0 %v9029, 24
  %v10005 = vpop.permute.xlu0 %10004
  %10006 = vrot.lane.b32.xlu0 %v9030, 24
  %v10007 = vpop.permute.xlu0 %10006
  %10008 = vrot.lane.b32.xlu0 %v9031, 24
  %v10009 = vpop.permute.xlu0 %10008
  %10010 = vrot.lane.b32.xlu0 %v9032, 24
  %v10011 = vpop.permute.xlu0 %10010
  %10012 = vrot.lane.b32.xlu0 %v9033, 24
  %v10013 = vpop.permute.xlu0 %10012
  %10014 = vrot.lane.b32.xlu0 %v9034, 24
  %v10015 = vpop.permute.xlu0 %10014
  %10016 = vrot.lane.b32.xlu0 %v9035, 24
  %v10017 = vpop.permute.xlu0 %10016
  %10018 = vrot.lane.b32.xlu0 %v9036, 24
  %v10019 = vpop.permute.xlu0 %10018
  %10020 = vrot.lane.b32.xlu0 %v9037, 24
  %v10021 = vpop.permute.xlu0 %10020
  %10022 = vrot.lane.b32.xlu0 %v9038, 24
  %v10023 = vpop.permute.xlu0 %10022
  %10024 = vrot.lane.b32.xlu0 %v9039, 24
  %v10025 = vpop.permute.xlu0 %10024
  %10026 = vrot.lane.b32.xlu0 %v9040, 24
  %v10027 = vpop.permute.xlu0 %10026
  %10028 = vrot.lane.b32.xlu0 %v9041, 24
  %v10029 = vpop.permute.xlu0 %10028
  %10030 = vrot.lane.b32.xlu0 %v9042, 24
  %v10031 = vpop.permute.xlu0 %10030
  %10032 = vrot.lane.b32.xlu0 %v9043, 24
  %v10033 = vpop.permute.xlu0 %10032
  %10034 = vrot.lane.b32.xlu0 %v9044, 24
  %v10035 = vpop.permute.xlu0 %10034
  %10036 = vrot.lane.b32.xlu0 %v9045, 24
  %v10037 = vpop.permute.xlu0 %10036
  %10038 = vrot.lane.b32.xlu0 %v9046, 24
  %v10039 = vpop.permute.xlu0 %10038
  %10040 = vrot.lane.b32.xlu0 %v9047, 24
  %v10041 = vpop.permute.xlu0 %10040
  %10042 = vrot.lane.b32.xlu0 %v9048, 24
  %v10043 = vpop.permute.xlu0 %10042
  %10044 = vrot.lane.b32.xlu0 %v9049, 24
  %v10045 = vpop.permute.xlu0 %10044
  %10046 = vrot.lane.b32.xlu0 %v9050, 24
  %v10047 = vpop.permute.xlu0 %10046
  %10048 = vrot.lane.b32.xlu0 %v9051, 24
  %v10049 = vpop.permute.xlu0 %10048
  %10050 = vrot.lane.b32.xlu0 %v9052, 24
  %v10051 = vpop.permute.xlu0 %10050
  %10052 = vrot.lane.b32.xlu0 %v9053, 24
  %v10053 = vpop.permute.xlu0 %10052
  %10054 = vrot.lane.b32.xlu0 %v9054, 24
  %v10055 = vpop.permute.xlu0 %10054
  %10056 = vrot.lane.b32.xlu0 %v9055, 24
  %v10057 = vpop.permute.xlu0 %10056
  %10058 = vrot.lane.b32.xlu0 %v9056, 24
  %v10059 = vpop.permute.xlu0 %10058
  %10060 = vrot.lane.b32.xlu0 %v9057, 24
  %v10061 = vpop.permute.xlu0 %10060
  %10062 = vrot.lane.b32.xlu0 %v9058, 24
  %v10063 = vpop.permute.xlu0 %10062
  %10064 = vrot.lane.b32.xlu0 %v9059, 24
  %v10065 = vpop.permute.xlu0 %10064
  %10066 = vrot.lane.b32.xlu0 %v9060, 24
  %v10067 = vpop.permute.xlu0 %10066
  %10068 = vrot.lane.b32.xlu0 %v9061, 24
  %v10069 = vpop.permute.xlu0 %10068
  %10070 = vrot.lane.b32.xlu0 %v9062, 24
  %v10071 = vpop.permute.xlu0 %10070
  %10072 = vrot.lane.b32.xlu0 %v9063, 24
  %v10073 = vpop.permute.xlu0 %10072
  %10074 = vrot.lane.b32.xlu0 %v9064, 24
  %v10075 = vpop.permute.xlu0 %10074
  %10076 = vrot.lane.b32.xlu0 %v9065, 24
  %v10077 = vpop.permute.xlu0 %10076
  %10078 = vrot.lane.b32.xlu0 %v9066, 24
  %v10079 = vpop.permute.xlu0 %10078
  %10080 = vrot.lane.b32.xlu0 %v9067, 24
  %v10081 = vpop.permute.xlu0 %10080
  %10082 = vrot.lane.b32.xlu0 %v9068, 24
  %v10083 = vpop.permute.xlu0 %10082
  %10084 = vrot.lane.b32.xlu0 %v9069, 24
  %v10085 = vpop.permute.xlu0 %10084
  %10086 = vrot.lane.b32.xlu0 %v9070, 24
  %v10087 = vpop.permute.xlu0 %10086
  %10088 = vrot.lane.b32.xlu0 %v9071, 24
  %v10089 = vpop.permute.xlu0 %10088
  %10090 = vrot.lane.b32.xlu0 %v9072, 24
  %v10091 = vpop.permute.xlu0 %10090
  %10092 = vrot.lane.b32.xlu0 %v9073, 24
  %v10093 = vpop.permute.xlu0 %10092
  %10094 = vrot.lane.b32.xlu0 %v9074, 24
  %v10095 = vpop.permute.xlu0 %10094
  %10096 = vrot.lane.b32.xlu0 %v9075, 24
  %v10097 = vpop.permute.xlu0 %10096
  %10098 = vrot.lane.b32.xlu0 %v9076, 24
  %v10099 = vpop.permute.xlu0 %10098
  %10100 = vrot.lane.b32.xlu0 %v9077, 24
  %v10101 = vpop.permute.xlu0 %10100
  %10230 = vrot.lane.b32.xlu0 %v9078, 32
  %v10231 = vpop.permute.xlu0 %10230
  %10232 = vrot.lane.b32.xlu0 %v9079, 32
  %v10233 = vpop.permute.xlu0 %10232
  %10234 = vrot.lane.b32.xlu0 %v9080, 32
  %v10235 = vpop.permute.xlu0 %10234
  %10236 = vrot.lane.b32.xlu0 %v9081, 32
  %v10237 = vpop.permute.xlu0 %10236
  %10238 = vrot.lane.b32.xlu0 %v9082, 32
  %v10239 = vpop.permute.xlu0 %10238
  %10240 = vrot.lane.b32.xlu0 %v9083, 32
  %v10241 = vpop.permute.xlu0 %10240
  %10242 = vrot.lane.b32.xlu0 %v9084, 32
  %v10243 = vpop.permute.xlu0 %10242
  %10244 = vrot.lane.b32.xlu0 %v9085, 32
  %v10245 = vpop.permute.xlu0 %10244
  %10246 = vrot.lane.b32.xlu0 %v9086, 32
  %v10247 = vpop.permute.xlu0 %10246
  %10248 = vrot.lane.b32.xlu0 %v9087, 32
  %v10249 = vpop.permute.xlu0 %10248
  %10250 = vrot.lane.b32.xlu0 %v9088, 32
  %v10251 = vpop.permute.xlu0 %10250
  %10252 = vrot.lane.b32.xlu0 %v9089, 32
  %v10253 = vpop.permute.xlu0 %10252
  %10254 = vrot.lane.b32.xlu0 %v9090, 32
  %v10255 = vpop.permute.xlu0 %10254
  %10256 = vrot.lane.b32.xlu0 %v9091, 32
  %v10257 = vpop.permute.xlu0 %10256
  %10258 = vrot.lane.b32.xlu0 %v9092, 32
  %v10259 = vpop.permute.xlu0 %10258
  %10260 = vrot.lane.b32.xlu0 %v9093, 32
  %v10261 = vpop.permute.xlu0 %10260
  %10262 = vrot.lane.b32.xlu0 %v9094, 32
  %v10263 = vpop.permute.xlu0 %10262
  %10264 = vrot.lane.b32.xlu0 %v9095, 32
  %v10265 = vpop.permute.xlu0 %10264
  %10266 = vrot.lane.b32.xlu0 %v9096, 32
  %v10267 = vpop.permute.xlu0 %10266
  %10268 = vrot.lane.b32.xlu0 %v9097, 32
  %v10269 = vpop.permute.xlu0 %10268
  %10270 = vrot.lane.b32.xlu0 %v9098, 32
  %v10271 = vpop.permute.xlu0 %10270
  %10272 = vrot.lane.b32.xlu0 %v9099, 32
  %v10273 = vpop.permute.xlu0 %10272
  %10274 = vrot.lane.b32.xlu0 %v9100, 32
  %v10275 = vpop.permute.xlu0 %10274
  %10276 = vrot.lane.b32.xlu0 %v9101, 32
  %v10277 = vpop.permute.xlu0 %10276
  %10278 = vrot.lane.b32.xlu0 %v9102, 32
  %v10279 = vpop.permute.xlu0 %10278
  %10280 = vrot.lane.b32.xlu0 %v9103, 32
  %v10281 = vpop.permute.xlu0 %10280
  %10282 = vrot.lane.b32.xlu0 %v9104, 32
  %v10283 = vpop.permute.xlu0 %10282
  %10284 = vrot.lane.b32.xlu0 %v9105, 32
  %v10285 = vpop.permute.xlu0 %10284
  %10286 = vrot.lane.b32.xlu0 %v9106, 32
  %v10287 = vpop.permute.xlu0 %10286
  %10288 = vrot.lane.b32.xlu0 %v9107, 32
  %v10289 = vpop.permute.xlu0 %10288
  %10290 = vrot.lane.b32.xlu0 %v9108, 32
  %v10291 = vpop.permute.xlu0 %10290
  %10292 = vrot.lane.b32.xlu0 %v9109, 32
  %v10293 = vpop.permute.xlu0 %10292
  %10294 = vrot.lane.b32.xlu0 %v9110, 32
  %v10295 = vpop.permute.xlu0 %10294
  %10296 = vrot.lane.b32.xlu0 %v9111, 32
  %v10297 = vpop.permute.xlu0 %10296
  %10298 = vrot.lane.b32.xlu0 %v9112, 32
  %v10299 = vpop.permute.xlu0 %10298
  %10300 = vrot.lane.b32.xlu0 %v9113, 32
  %v10301 = vpop.permute.xlu0 %10300
  %10302 = vrot.lane.b32.xlu0 %v9114, 32
  %v10303 = vpop.permute.xlu0 %10302
  %10304 = vrot.lane.b32.xlu0 %v9115, 32
  %v10305 = vpop.permute.xlu0 %10304
  %10306 = vrot.lane.b32.xlu0 %v9116, 32
  %v10307 = vpop.permute.xlu0 %10306
  %10308 = vrot.lane.b32.xlu0 %v9117, 32
  %v10309 = vpop.permute.xlu0 %10308
  %10310 = vrot.lane.b32.xlu0 %v9118, 32
  %v10311 = vpop.permute.xlu0 %10310
  %10312 = vrot.lane.b32.xlu0 %v9119, 32
  %v10313 = vpop.permute.xlu0 %10312
  %10314 = vrot.lane.b32.xlu0 %v9120, 32
  %v10315 = vpop.permute.xlu0 %10314
  %10316 = vrot.lane.b32.xlu0 %v9121, 32
  %v10317 = vpop.permute.xlu0 %10316
  %10318 = vrot.lane.b32.xlu0 %v9122, 32
  %v10319 = vpop.permute.xlu0 %10318
  %10320 = vrot.lane.b32.xlu0 %v9123, 32
  %v10321 = vpop.permute.xlu0 %10320
  %10322 = vrot.lane.b32.xlu0 %v9124, 32
  %v10323 = vpop.permute.xlu0 %10322
  %10324 = vrot.lane.b32.xlu0 %v9125, 32
  %v10325 = vpop.permute.xlu0 %10324
  %10326 = vrot.lane.b32.xlu0 %v9126, 32
  %v10327 = vpop.permute.xlu0 %10326
  %10328 = vrot.lane.b32.xlu0 %v9127, 32
  %v10329 = vpop.permute.xlu0 %10328
  %10330 = vrot.lane.b32.xlu0 %v9128, 32
  %v10331 = vpop.permute.xlu0 %10330
  %10332 = vrot.lane.b32.xlu0 %v9129, 32
  %v10333 = vpop.permute.xlu0 %10332
  %10334 = vrot.lane.b32.xlu0 %v9130, 32
  %v10335 = vpop.permute.xlu0 %10334
  %10336 = vrot.lane.b32.xlu0 %v9131, 32
  %v10337 = vpop.permute.xlu0 %10336
  %10338 = vrot.lane.b32.xlu0 %v9132, 32
  %v10339 = vpop.permute.xlu0 %10338
  %10340 = vrot.lane.b32.xlu0 %v9133, 32
  %v10341 = vpop.permute.xlu0 %10340
  %10342 = vrot.lane.b32.xlu0 %v9134, 32
  %v10343 = vpop.permute.xlu0 %10342
  %10344 = vrot.lane.b32.xlu0 %v9135, 32
  %v10345 = vpop.permute.xlu0 %10344
  %10346 = vrot.lane.b32.xlu0 %v9136, 32
  %v10347 = vpop.permute.xlu0 %10346
  %10348 = vrot.lane.b32.xlu0 %v9137, 32
  %v10349 = vpop.permute.xlu0 %10348
  %10350 = vrot.lane.b32.xlu0 %v9138, 32
  %v10351 = vpop.permute.xlu0 %10350
  %10352 = vrot.lane.b32.xlu0 %v9139, 32
  %v10353 = vpop.permute.xlu0 %10352
  %10354 = vrot.lane.b32.xlu0 %v9140, 32
  %v10355 = vpop.permute.xlu0 %10354
  %10356 = vrot.lane.b32.xlu0 %v9141, 32
  %v10357 = vpop.permute.xlu0 %10356
  %10486 = vrot.lane.b32.xlu0 %v9142, 40
  %v10487 = vpop.permute.xlu0 %10486
  %10488 = vrot.lane.b32.xlu0 %v9143, 40
  %v10489 = vpop.permute.xlu0 %10488
  %10490 = vrot.lane.b32.xlu0 %v9144, 40
  %v10491 = vpop.permute.xlu0 %10490
  %10492 = vrot.lane.b32.xlu0 %v9145, 40
  %v10493 = vpop.permute.xlu0 %10492
  %10494 = vrot.lane.b32.xlu0 %v9146, 40
  %v10495 = vpop.permute.xlu0 %10494
  %10496 = vrot.lane.b32.xlu0 %v9147, 40
  %v10497 = vpop.permute.xlu0 %10496
  %10498 = vrot.lane.b32.xlu0 %v9148, 40
  %v10499 = vpop.permute.xlu0 %10498
  %10500 = vrot.lane.b32.xlu0 %v9149, 40
  %v10501 = vpop.permute.xlu0 %10500
  %10502 = vrot.lane.b32.xlu0 %v9150, 40
  %v10503 = vpop.permute.xlu0 %10502
  %10504 = vrot.lane.b32.xlu0 %v9151, 40
  %v10505 = vpop.permute.xlu0 %10504
  %10506 = vrot.lane.b32.xlu0 %v9152, 40
  %v10507 = vpop.permute.xlu0 %10506
  %10508 = vrot.lane.b32.xlu0 %v9153, 40
  %v10509 = vpop.permute.xlu0 %10508
  %10510 = vrot.lane.b32.xlu0 %v9154, 40
  %v10511 = vpop.permute.xlu0 %10510
  %10512 = vrot.lane.b32.xlu0 %v9155, 40
  %v10513 = vpop.permute.xlu0 %10512
  %10514 = vrot.lane.b32.xlu0 %v9156, 40
  %v10515 = vpop.permute.xlu0 %10514
  %10516 = vrot.lane.b32.xlu0 %v9157, 40
  %v10517 = vpop.permute.xlu0 %10516
  %10518 = vrot.lane.b32.xlu0 %v9158, 40
  %v10519 = vpop.permute.xlu0 %10518
  %10520 = vrot.lane.b32.xlu0 %v9159, 40
  %v10521 = vpop.permute.xlu0 %10520
  %10522 = vrot.lane.b32.xlu0 %v9160, 40
  %v10523 = vpop.permute.xlu0 %10522
  %10524 = vrot.lane.b32.xlu0 %v9161, 40
  %v10525 = vpop.permute.xlu0 %10524
  %10526 = vrot.lane.b32.xlu0 %v9162, 40
  %v10527 = vpop.permute.xlu0 %10526
  %10528 = vrot.lane.b32.xlu0 %v9163, 40
  %v10529 = vpop.permute.xlu0 %10528
  %10530 = vrot.lane.b32.xlu0 %v9164, 40
  %v10531 = vpop.permute.xlu0 %10530
  %10532 = vrot.lane.b32.xlu0 %v9165, 40
  %v10533 = vpop.permute.xlu0 %10532
  %10534 = vrot.lane.b32.xlu0 %v9166, 40
  %v10535 = vpop.permute.xlu0 %10534
  %10536 = vrot.lane.b32.xlu0 %v9167, 40
  %v10537 = vpop.permute.xlu0 %10536
  %10538 = vrot.lane.b32.xlu0 %v9168, 40
  %v10539 = vpop.permute.xlu0 %10538
  %10540 = vrot.lane.b32.xlu0 %v9169, 40
  %v10541 = vpop.permute.xlu0 %10540
  %10542 = vrot.lane.b32.xlu0 %v9170, 40
  %v10543 = vpop.permute.xlu0 %10542
  %10544 = vrot.lane.b32.xlu0 %v9171, 40
  %v10545 = vpop.permute.xlu0 %10544
  %10546 = vrot.lane.b32.xlu0 %v9172, 40
  %v10547 = vpop.permute.xlu0 %10546
  %10548 = vrot.lane.b32.xlu0 %v9173, 40
  %v10549 = vpop.permute.xlu0 %10548
  %10550 = vrot.lane.b32.xlu0 %v9174, 40
  %v10551 = vpop.permute.xlu0 %10550
  %10552 = vrot.lane.b32.xlu0 %v9175, 40
  %v10553 = vpop.permute.xlu0 %10552
  %10554 = vrot.lane.b32.xlu0 %v9176, 40
  %v10555 = vpop.permute.xlu0 %10554
  %10556 = vrot.lane.b32.xlu0 %v9177, 40
  %v10557 = vpop.permute.xlu0 %10556
  %10558 = vrot.lane.b32.xlu0 %v9178, 40
  %v10559 = vpop.permute.xlu0 %10558
  %10560 = vrot.lane.b32.xlu0 %v9179, 40
  %v10561 = vpop.permute.xlu0 %10560
  %10562 = vrot.lane.b32.xlu0 %v9180, 40
  %v10563 = vpop.permute.xlu0 %10562
  %10564 = vrot.lane.b32.xlu0 %v9181, 40
  %v10565 = vpop.permute.xlu0 %10564
  %10566 = vrot.lane.b32.xlu0 %v9182, 40
  %v10567 = vpop.permute.xlu0 %10566
  %10568 = vrot.lane.b32.xlu0 %v9183, 40
  %v10569 = vpop.permute.xlu0 %10568
  %10570 = vrot.lane.b32.xlu0 %v9184, 40
  %v10571 = vpop.permute.xlu0 %10570
  %10572 = vrot.lane.b32.xlu0 %v9185, 40
  %v10573 = vpop.permute.xlu0 %10572
  %10574 = vrot.lane.b32.xlu0 %v9186, 40
  %v10575 = vpop.permute.xlu0 %10574
  %10576 = vrot.lane.b32.xlu0 %v9187, 40
  %v10577 = vpop.permute.xlu0 %10576
  %10578 = vrot.lane.b32.xlu0 %v9188, 40
  %v10579 = vpop.permute.xlu0 %10578
  %10580 = vrot.lane.b32.xlu0 %v9189, 40
  %v10581 = vpop.permute.xlu0 %10580
  %10582 = vrot.lane.b32.xlu0 %v9190, 40
  %v10583 = vpop.permute.xlu0 %10582
  %10584 = vrot.lane.b32.xlu0 %v9191, 40
  %v10585 = vpop.permute.xlu0 %10584
  %10586 = vrot.lane.b32.xlu0 %v9192, 40
  %v10587 = vpop.permute.xlu0 %10586
  %10588 = vrot.lane.b32.xlu0 %v9193, 40
  %v10589 = vpop.permute.xlu0 %10588
  %10590 = vrot.lane.b32.xlu0 %v9194, 40
  %v10591 = vpop.permute.xlu0 %10590
  %10592 = vrot.lane.b32.xlu0 %v9195, 40
  %v10593 = vpop.permute.xlu0 %10592
  %10594 = vrot.lane.b32.xlu0 %v9196, 40
  %v10595 = vpop.permute.xlu0 %10594
  %10596 = vrot.lane.b32.xlu0 %v9197, 40
  %v10597 = vpop.permute.xlu0 %10596
  %10598 = vrot.lane.b32.xlu0 %v9198, 40
  %v10599 = vpop.permute.xlu0 %10598
  %10600 = vrot.lane.b32.xlu0 %v9199, 40
  %v10601 = vpop.permute.xlu0 %10600
  %10602 = vrot.lane.b32.xlu0 %v9200, 40
  %v10603 = vpop.permute.xlu0 %10602
  %10604 = vrot.lane.b32.xlu0 %v9201, 40
  %v10605 = vpop.permute.xlu0 %10604
  %10606 = vrot.lane.b32.xlu0 %v9202, 40
  %v10607 = vpop.permute.xlu0 %10606
  %10608 = vrot.lane.b32.xlu0 %v9203, 40
  %v10609 = vpop.permute.xlu0 %10608
  %10610 = vrot.lane.b32.xlu0 %v9204, 40
  %v10611 = vpop.permute.xlu0 %10610
  %10612 = vrot.lane.b32.xlu0 %v9205, 40
  %v10613 = vpop.permute.xlu0 %10612
  %10742 = vrot.lane.b32.xlu0 %v9206, 48
  %v10743 = vpop.permute.xlu0 %10742
  %10744 = vrot.lane.b32.xlu0 %v9207, 48
  %v10745 = vpop.permute.xlu0 %10744
  %10746 = vrot.lane.b32.xlu0 %v9208, 48
  %v10747 = vpop.permute.xlu0 %10746
  %10748 = vrot.lane.b32.xlu0 %v9209, 48
  %v10749 = vpop.permute.xlu0 %10748
  %10750 = vrot.lane.b32.xlu0 %v9210, 48
  %v10751 = vpop.permute.xlu0 %10750
  %10752 = vrot.lane.b32.xlu0 %v9211, 48
  %v10753 = vpop.permute.xlu0 %10752
  %10754 = vrot.lane.b32.xlu0 %v9212, 48
  %v10755 = vpop.permute.xlu0 %10754
  %10756 = vrot.lane.b32.xlu0 %v9213, 48
  %v10757 = vpop.permute.xlu0 %10756
  %10758 = vrot.lane.b32.xlu0 %v9214, 48
  %v10759 = vpop.permute.xlu0 %10758
  %10760 = vrot.lane.b32.xlu0 %v9215, 48
  %v10761 = vpop.permute.xlu0 %10760
  %10762 = vrot.lane.b32.xlu0 %v9216, 48
  %v10763 = vpop.permute.xlu0 %10762
  %10764 = vrot.lane.b32.xlu0 %v9217, 48
  %v10765 = vpop.permute.xlu0 %10764
  %10766 = vrot.lane.b32.xlu0 %v9218, 48
  %v10767 = vpop.permute.xlu0 %10766
  %10768 = vrot.lane.b32.xlu0 %v9219, 48
  %v10769 = vpop.permute.xlu0 %10768
  %10770 = vrot.lane.b32.xlu0 %v9220, 48
  %v10771 = vpop.permute.xlu0 %10770
  %10772 = vrot.lane.b32.xlu0 %v9221, 48
  %v10773 = vpop.permute.xlu0 %10772
  %10774 = vrot.lane.b32.xlu0 %v9222, 48
  %v10775 = vpop.permute.xlu0 %10774
  %10776 = vrot.lane.b32.xlu0 %v9223, 48
  %v10777 = vpop.permute.xlu0 %10776
  %10778 = vrot.lane.b32.xlu0 %v9224, 48
  %v10779 = vpop.permute.xlu0 %10778
  %10780 = vrot.lane.b32.xlu0 %v9225, 48
  %v10781 = vpop.permute.xlu0 %10780
  %10782 = vrot.lane.b32.xlu0 %v9226, 48
  %v10783 = vpop.permute.xlu0 %10782
  %10784 = vrot.lane.b32.xlu0 %v9227, 48
  %v10785 = vpop.permute.xlu0 %10784
  %10786 = vrot.lane.b32.xlu0 %v9228, 48
  %v10787 = vpop.permute.xlu0 %10786
  %10788 = vrot.lane.b32.xlu0 %v9229, 48
  %v10789 = vpop.permute.xlu0 %10788
  %10790 = vrot.lane.b32.xlu0 %v9230, 48
  %v10791 = vpop.permute.xlu0 %10790
  %10792 = vrot.lane.b32.xlu0 %v9231, 48
  %v10793 = vpop.permute.xlu0 %10792
  %10794 = vrot.lane.b32.xlu0 %v9232, 48
  %v10795 = vpop.permute.xlu0 %10794
  %10796 = vrot.lane.b32.xlu0 %v9233, 48
  %v10797 = vpop.permute.xlu0 %10796
  %10798 = vrot.lane.b32.xlu0 %v9234, 48
  %v10799 = vpop.permute.xlu0 %10798
  %10800 = vrot.lane.b32.xlu0 %v9235, 48
  %v10801 = vpop.permute.xlu0 %10800
  %10802 = vrot.lane.b32.xlu0 %v9236, 48
  %v10803 = vpop.permute.xlu0 %10802
  %10804 = vrot.lane.b32.xlu0 %v9237, 48
  %v10805 = vpop.permute.xlu0 %10804
  %10806 = vrot.lane.b32.xlu0 %v9238, 48
  %v10807 = vpop.permute.xlu0 %10806
  %10808 = vrot.lane.b32.xlu0 %v9239, 48
  %v10809 = vpop.permute.xlu0 %10808
  %10810 = vrot.lane.b32.xlu0 %v9240, 48
  %v10811 = vpop.permute.xlu0 %10810
  %10812 = vrot.lane.b32.xlu0 %v9241, 48
  %v10813 = vpop.permute.xlu0 %10812
  %10814 = vrot.lane.b32.xlu0 %v9242, 48
  %v10815 = vpop.permute.xlu0 %10814
  %10816 = vrot.lane.b32.xlu0 %v9243, 48
  %v10817 = vpop.permute.xlu0 %10816
  %10818 = vrot.lane.b32.xlu0 %v9244, 48
  %v10819 = vpop.permute.xlu0 %10818
  %10820 = vrot.lane.b32.xlu0 %v9245, 48
  %v10821 = vpop.permute.xlu0 %10820
  %10822 = vrot.lane.b32.xlu0 %v9246, 48
  %v10823 = vpop.permute.xlu0 %10822
  %10824 = vrot.lane.b32.xlu0 %v9247, 48
  %v10825 = vpop.permute.xlu0 %10824
  %10826 = vrot.lane.b32.xlu0 %v9248, 48
  %v10827 = vpop.permute.xlu0 %10826
  %10828 = vrot.lane.b32.xlu0 %v9249, 48
  %v10829 = vpop.permute.xlu0 %10828
  %10830 = vrot.lane.b32.xlu0 %v9250, 48
  %v10831 = vpop.permute.xlu0 %10830
  %10832 = vrot.lane.b32.xlu0 %v9251, 48
  %v10833 = vpop.permute.xlu0 %10832
  %10834 = vrot.lane.b32.xlu0 %v9252, 48
  %v10835 = vpop.permute.xlu0 %10834
  %10836 = vrot.lane.b32.xlu0 %v9253, 48
  %v10837 = vpop.permute.xlu0 %10836
  %10838 = vrot.lane.b32.xlu0 %v9254, 48
  %v10839 = vpop.permute.xlu0 %10838
  %10840 = vrot.lane.b32.xlu0 %v9255, 48
  %v10841 = vpop.permute.xlu0 %10840
  %10842 = vrot.lane.b32.xlu0 %v9256, 48
  %v10843 = vpop.permute.xlu0 %10842
  %10844 = vrot.lane.b32.xlu0 %v9257, 48
  %v10845 = vpop.permute.xlu0 %10844
  %10846 = vrot.lane.b32.xlu0 %v9258, 48
  %v10847 = vpop.permute.xlu0 %10846
  %10848 = vrot.lane.b32.xlu0 %v9259, 48
  %v10849 = vpop.permute.xlu0 %10848
  %10850 = vrot.lane.b32.xlu0 %v9260, 48
  %v10851 = vpop.permute.xlu0 %10850
  %10852 = vrot.lane.b32.xlu0 %v9261, 48
  %v10853 = vpop.permute.xlu0 %10852
  %10854 = vrot.lane.b32.xlu0 %v9262, 48
  %v10855 = vpop.permute.xlu0 %10854
  %10856 = vrot.lane.b32.xlu0 %v9263, 48
  %v10857 = vpop.permute.xlu0 %10856
  %10858 = vrot.lane.b32.xlu0 %v9264, 48
  %v10859 = vpop.permute.xlu0 %10858
  %10860 = vrot.lane.b32.xlu0 %v9265, 48
  %v10861 = vpop.permute.xlu0 %10860
  %10862 = vrot.lane.b32.xlu0 %v9266, 48
  %v10863 = vpop.permute.xlu0 %10862
  %10864 = vrot.lane.b32.xlu0 %v9267, 48
  %v10865 = vpop.permute.xlu0 %10864
  %10866 = vrot.lane.b32.xlu0 %v9268, 48
  %v10867 = vpop.permute.xlu0 %10866
  %10868 = vrot.lane.b32.xlu0 %v9269, 48
  %v10869 = vpop.permute.xlu0 %10868
  %10998 = vrot.lane.b32.xlu0 %v9270, 56
  %v10999 = vpop.permute.xlu0 %10998
  %11000 = vrot.lane.b32.xlu0 %v9271, 56
  %v11001 = vpop.permute.xlu0 %11000
  %11002 = vrot.lane.b32.xlu0 %v9272, 56
  %v11003 = vpop.permute.xlu0 %11002
  %11004 = vrot.lane.b32.xlu0 %v9273, 56
  %v11005 = vpop.permute.xlu0 %11004
  %11006 = vrot.lane.b32.xlu0 %v9274, 56
  %v11007 = vpop.permute.xlu0 %11006
  %11008 = vrot.lane.b32.xlu0 %v9275, 56
  %v11009 = vpop.permute.xlu0 %11008
  %11010 = vrot.lane.b32.xlu0 %v9276, 56
  %v11011 = vpop.permute.xlu0 %11010
  %11012 = vrot.lane.b32.xlu0 %v9277, 56
  %v11013 = vpop.permute.xlu0 %11012
  %11014 = vrot.lane.b32.xlu0 %v9278, 56
  %v11015 = vpop.permute.xlu0 %11014
  %11016 = vrot.lane.b32.xlu0 %v9279, 56
  %v11017 = vpop.permute.xlu0 %11016
  %11018 = vrot.lane.b32.xlu0 %v9280, 56
  %v11019 = vpop.permute.xlu0 %11018
  %11020 = vrot.lane.b32.xlu0 %v9281, 56
  %v11021 = vpop.permute.xlu0 %11020
  %11022 = vrot.lane.b32.xlu0 %v9282, 56
  %v11023 = vpop.permute.xlu0 %11022
  %11024 = vrot.lane.b32.xlu0 %v9283, 56
  %v11025 = vpop.permute.xlu0 %11024
  %11026 = vrot.lane.b32.xlu0 %v9284, 56
  %v11027 = vpop.permute.xlu0 %11026
  %11028 = vrot.lane.b32.xlu0 %v9285, 56
  %v11029 = vpop.permute.xlu0 %11028
  %11030 = vrot.lane.b32.xlu0 %v9286, 56
  %v11031 = vpop.permute.xlu0 %11030
  %11032 = vrot.lane.b32.xlu0 %v9287, 56
  %v11033 = vpop.permute.xlu0 %11032
  %11034 = vrot.lane.b32.xlu0 %v9288, 56
  %v11035 = vpop.permute.xlu0 %11034
  %11036 = vrot.lane.b32.xlu0 %v9289, 56
  %v11037 = vpop.permute.xlu0 %11036
  %11038 = vrot.lane.b32.xlu0 %v9290, 56
  %v11039 = vpop.permute.xlu0 %11038
  %11040 = vrot.lane.b32.xlu0 %v9291, 56
  %v11041 = vpop.permute.xlu0 %11040
  %11042 = vrot.lane.b32.xlu0 %v9292, 56
  %v11043 = vpop.permute.xlu0 %11042
  %11044 = vrot.lane.b32.xlu0 %v9293, 56
  %v11045 = vpop.permute.xlu0 %11044
  %11046 = vrot.lane.b32.xlu0 %v9294, 56
  %v11047 = vpop.permute.xlu0 %11046
  %11048 = vrot.lane.b32.xlu0 %v9295, 56
  %v11049 = vpop.permute.xlu0 %11048
  %11050 = vrot.lane.b32.xlu0 %v9296, 56
  %v11051 = vpop.permute.xlu0 %11050
  %11052 = vrot.lane.b32.xlu0 %v9297, 56
  %v11053 = vpop.permute.xlu0 %11052
  %11054 = vrot.lane.b32.xlu0 %v9298, 56
  %v11055 = vpop.permute.xlu0 %11054
  %11056 = vrot.lane.b32.xlu0 %v9299, 56
  %v11057 = vpop.permute.xlu0 %11056
  %11058 = vrot.lane.b32.xlu0 %v9300, 56
  %v11059 = vpop.permute.xlu0 %11058
  %11060 = vrot.lane.b32.xlu0 %v9301, 56
  %v11061 = vpop.permute.xlu0 %11060
  %11062 = vrot.lane.b32.xlu0 %v9302, 56
  %v11063 = vpop.permute.xlu0 %11062
  %11064 = vrot.lane.b32.xlu0 %v9303, 56
  %v11065 = vpop.permute.xlu0 %11064
  %11066 = vrot.lane.b32.xlu0 %v9304, 56
  %v11067 = vpop.permute.xlu0 %11066
  %11068 = vrot.lane.b32.xlu0 %v9305, 56
  %v11069 = vpop.permute.xlu0 %11068
  %11070 = vrot.lane.b32.xlu0 %v9306, 56
  %v11071 = vpop.permute.xlu0 %11070
  %11072 = vrot.lane.b32.xlu0 %v9307, 56
  %v11073 = vpop.permute.xlu0 %11072
  %11074 = vrot.lane.b32.xlu0 %v9308, 56
  %v11075 = vpop.permute.xlu0 %11074
  %11076 = vrot.lane.b32.xlu0 %v9309, 56
  %v11077 = vpop.permute.xlu0 %11076
  %11078 = vrot.lane.b32.xlu0 %v9310, 56
  %v11079 = vpop.permute.xlu0 %11078
  %11080 = vrot.lane.b32.xlu0 %v9311, 56
  %v11081 = vpop.permute.xlu0 %11080
  %11082 = vrot.lane.b32.xlu0 %v9312, 56
  %v11083 = vpop.permute.xlu0 %11082
  %11084 = vrot.lane.b32.xlu0 %v9313, 56
  %v11085 = vpop.permute.xlu0 %11084
  %11086 = vrot.lane.b32.xlu0 %v9314, 56
  %v11087 = vpop.permute.xlu0 %11086
  %11088 = vrot.lane.b32.xlu0 %v9315, 56
  %v11089 = vpop.permute.xlu0 %11088
  %11090 = vrot.lane.b32.xlu0 %v9316, 56
  %v11091 = vpop.permute.xlu0 %11090
  %11092 = vrot.lane.b32.xlu0 %v9317, 56
  %v11093 = vpop.permute.xlu0 %11092
  %11094 = vrot.lane.b32.xlu0 %v9318, 56
  %v11095 = vpop.permute.xlu0 %11094
  %11096 = vrot.lane.b32.xlu0 %v9319, 56
  %v11097 = vpop.permute.xlu0 %11096
  %11098 = vrot.lane.b32.xlu0 %v9320, 56
  %v11099 = vpop.permute.xlu0 %11098
  %11100 = vrot.lane.b32.xlu0 %v9321, 56
  %v11101 = vpop.permute.xlu0 %11100
  %11102 = vrot.lane.b32.xlu0 %v9322, 56
  %v11103 = vpop.permute.xlu0 %11102
  %11104 = vrot.lane.b32.xlu0 %v9323, 56
  %v11105 = vpop.permute.xlu0 %11104
  %11106 = vrot.lane.b32.xlu0 %v9324, 56
  %v11107 = vpop.permute.xlu0 %11106
  %11108 = vrot.lane.b32.xlu0 %v9325, 56
  %v11109 = vpop.permute.xlu0 %11108
  %11110 = vrot.lane.b32.xlu0 %v9326, 56
  %v11111 = vpop.permute.xlu0 %11110
  %11112 = vrot.lane.b32.xlu0 %v9327, 56
  %v11113 = vpop.permute.xlu0 %11112
  %11114 = vrot.lane.b32.xlu0 %v9328, 56
  %v11115 = vpop.permute.xlu0 %11114
  %11116 = vrot.lane.b32.xlu0 %v9329, 56
  %v11117 = vpop.permute.xlu0 %11116
  %11118 = vrot.lane.b32.xlu0 %v9330, 56
  %v11119 = vpop.permute.xlu0 %11118
  %11120 = vrot.lane.b32.xlu0 %v9331, 56
  %v11121 = vpop.permute.xlu0 %11120
  %11122 = vrot.lane.b32.xlu0 %v9332, 56
  %v11123 = vpop.permute.xlu0 %11122
  %11124 = vrot.lane.b32.xlu0 %v9333, 56
  %v11125 = vpop.permute.xlu0 %11124
  %11254 = vrot.lane.b32.xlu0 %v9334, 64
  %v11255 = vpop.permute.xlu0 %11254
  %11256 = vrot.lane.b32.xlu0 %v9335, 64
  %v11257 = vpop.permute.xlu0 %11256
  %11258 = vrot.lane.b32.xlu0 %v9336, 64
  %v11259 = vpop.permute.xlu0 %11258
  %11260 = vrot.lane.b32.xlu0 %v9337, 64
  %v11261 = vpop.permute.xlu0 %11260
  %11262 = vrot.lane.b32.xlu0 %v9338, 64
  %v11263 = vpop.permute.xlu0 %11262
  %11264 = vrot.lane.b32.xlu0 %v9339, 64
  %v11265 = vpop.permute.xlu0 %11264
  %11266 = vrot.lane.b32.xlu0 %v9340, 64
  %v11267 = vpop.permute.xlu0 %11266
  %11268 = vrot.lane.b32.xlu0 %v9341, 64
  %v11269 = vpop.permute.xlu0 %11268
  %11270 = vrot.lane.b32.xlu0 %v9342, 64
  %v11271 = vpop.permute.xlu0 %11270
  %11272 = vrot.lane.b32.xlu0 %v9343, 64
  %v11273 = vpop.permute.xlu0 %11272
  %11274 = vrot.lane.b32.xlu0 %v9344, 64
  %v11275 = vpop.permute.xlu0 %11274
  %11276 = vrot.lane.b32.xlu0 %v9345, 64
  %v11277 = vpop.permute.xlu0 %11276
  %11278 = vrot.lane.b32.xlu0 %v9346, 64
  %v11279 = vpop.permute.xlu0 %11278
  %11280 = vrot.lane.b32.xlu0 %v9347, 64
  %v11281 = vpop.permute.xlu0 %11280
  %11282 = vrot.lane.b32.xlu0 %v9348, 64
  %v11283 = vpop.permute.xlu0 %11282
  %11284 = vrot.lane.b32.xlu0 %v9349, 64
  %v11285 = vpop.permute.xlu0 %11284
  %11286 = vrot.lane.b32.xlu0 %v9350, 64
  %v11287 = vpop.permute.xlu0 %11286
  %11288 = vrot.lane.b32.xlu0 %v9351, 64
  %v11289 = vpop.permute.xlu0 %11288
  %11290 = vrot.lane.b32.xlu0 %v9352, 64
  %v11291 = vpop.permute.xlu0 %11290
  %11292 = vrot.lane.b32.xlu0 %v9353, 64
  %v11293 = vpop.permute.xlu0 %11292
  %11294 = vrot.lane.b32.xlu0 %v9354, 64
  %v11295 = vpop.permute.xlu0 %11294
  %11296 = vrot.lane.b32.xlu0 %v9355, 64
  %v11297 = vpop.permute.xlu0 %11296
  %11298 = vrot.lane.b32.xlu0 %v9356, 64
  %v11299 = vpop.permute.xlu0 %11298
  %11300 = vrot.lane.b32.xlu0 %v9357, 64
  %v11301 = vpop.permute.xlu0 %11300
  %11302 = vrot.lane.b32.xlu0 %v9358, 64
  %v11303 = vpop.permute.xlu0 %11302
  %11304 = vrot.lane.b32.xlu0 %v9359, 64
  %v11305 = vpop.permute.xlu0 %11304
  %11306 = vrot.lane.b32.xlu0 %v9360, 64
  %v11307 = vpop.permute.xlu0 %11306
  %11308 = vrot.lane.b32.xlu0 %v9361, 64
  %v11309 = vpop.permute.xlu0 %11308
  %11310 = vrot.lane.b32.xlu0 %v9362, 64
  %v11311 = vpop.permute.xlu0 %11310
  %11312 = vrot.lane.b32.xlu0 %v9363, 64
  %v11313 = vpop.permute.xlu0 %11312
  %11314 = vrot.lane.b32.xlu0 %v9364, 64
  %v11315 = vpop.permute.xlu0 %11314
  %11316 = vrot.lane.b32.xlu0 %v9365, 64
  %v11317 = vpop.permute.xlu0 %11316
  %11318 = vrot.lane.b32.xlu0 %v9366, 64
  %v11319 = vpop.permute.xlu0 %11318
  %11320 = vrot.lane.b32.xlu0 %v9367, 64
  %v11321 = vpop.permute.xlu0 %11320
  %11322 = vrot.lane.b32.xlu0 %v9368, 64
  %v11323 = vpop.permute.xlu0 %11322
  %11324 = vrot.lane.b32.xlu0 %v9369, 64
  %v11325 = vpop.permute.xlu0 %11324
  %11326 = vrot.lane.b32.xlu0 %v9370, 64
  %v11327 = vpop.permute.xlu0 %11326
  %11328 = vrot.lane.b32.xlu0 %v9371, 64
  %v11329 = vpop.permute.xlu0 %11328
  %11330 = vrot.lane.b32.xlu0 %v9372, 64
  %v11331 = vpop.permute.xlu0 %11330
  %11332 = vrot.lane.b32.xlu0 %v9373, 64
  %v11333 = vpop.permute.xlu0 %11332
  %11334 = vrot.lane.b32.xlu0 %v9374, 64
  %v11335 = vpop.permute.xlu0 %11334
  %11336 = vrot.lane.b32.xlu0 %v9375, 64
  %v11337 = vpop.permute.xlu0 %11336
  %11338 = vrot.lane.b32.xlu0 %v9376, 64
  %v11339 = vpop.permute.xlu0 %11338
  %11340 = vrot.lane.b32.xlu0 %v9377, 64
  %v11341 = vpop.permute.xlu0 %11340
  %11342 = vrot.lane.b32.xlu0 %v9378, 64
  %v11343 = vpop.permute.xlu0 %11342
  %11344 = vrot.lane.b32.xlu0 %v9379, 64
  %v11345 = vpop.permute.xlu0 %11344
  %11346 = vrot.lane.b32.xlu0 %v9380, 64
  %v11347 = vpop.permute.xlu0 %11346
  %11348 = vrot.lane.b32.xlu0 %v9381, 64
  %v11349 = vpop.permute.xlu0 %11348
  %11350 = vrot.lane.b32.xlu0 %v9382, 64
  %v11351 = vpop.permute.xlu0 %11350
  %11352 = vrot.lane.b32.xlu0 %v9383, 64
  %v11353 = vpop.permute.xlu0 %11352
  %11354 = vrot.lane.b32.xlu0 %v9384, 64
  %v11355 = vpop.permute.xlu0 %11354
  %11356 = vrot.lane.b32.xlu0 %v9385, 64
  %v11357 = vpop.permute.xlu0 %11356
  %11358 = vrot.lane.b32.xlu0 %v9386, 64
  %v11359 = vpop.permute.xlu0 %11358
  %11360 = vrot.lane.b32.xlu0 %v9387, 64
  %v11361 = vpop.permute.xlu0 %11360
  %11362 = vrot.lane.b32.xlu0 %v9388, 64
  %v11363 = vpop.permute.xlu0 %11362
  %11364 = vrot.lane.b32.xlu0 %v9389, 64
  %v11365 = vpop.permute.xlu0 %11364
  %11366 = vrot.lane.b32.xlu0 %v9390, 64
  %v11367 = vpop.permute.xlu0 %11366
  %11368 = vrot.lane.b32.xlu0 %v9391, 64
  %v11369 = vpop.permute.xlu0 %11368
  %11370 = vrot.lane.b32.xlu0 %v9392, 64
  %v11371 = vpop.permute.xlu0 %11370
  %11372 = vrot.lane.b32.xlu0 %v9393, 64
  %v11373 = vpop.permute.xlu0 %11372
  %11374 = vrot.lane.b32.xlu0 %v9394, 64
  %v11375 = vpop.permute.xlu0 %11374
  %11376 = vrot.lane.b32.xlu0 %v9395, 64
  %v11377 = vpop.permute.xlu0 %11376
  %11378 = vrot.lane.b32.xlu0 %v9396, 64
  %v11379 = vpop.permute.xlu0 %11378
  %11380 = vrot.lane.b32.xlu0 %v9397, 64
  %v11381 = vpop.permute.xlu0 %11380
  %v11446 = vsel %vm32, %v8822, %v9463
  %v11447 = vsel %vm32, %v8823, %v9465
  %v11448 = vsel %vm32, %v8824, %v9467
  %v11449 = vsel %vm32, %v8825, %v9469
  %v11450 = vsel %vm32, %v8826, %v9471
  %v11451 = vsel %vm32, %v8827, %v9473
  %v11452 = vsel %vm32, %v8828, %v9475
  %v11453 = vsel %vm32, %v8829, %v9477
  %v11454 = vsel %vm32, %v8830, %v9479
  %v11455 = vsel %vm32, %v8831, %v9481
  %v11456 = vsel %vm32, %v8832, %v9483
  %v11457 = vsel %vm32, %v8833, %v9485
  %v11458 = vsel %vm32, %v8834, %v9487
  %v11459 = vsel %vm32, %v8835, %v9489
  %v11460 = vsel %vm32, %v8836, %v9491
  %v11461 = vsel %vm32, %v8837, %v9493
  %v11462 = vsel %vm32, %v8838, %v9495
  %v11463 = vsel %vm32, %v8839, %v9497
  %v11464 = vsel %vm32, %v8840, %v9499
  %v11465 = vsel %vm32, %v8841, %v9501
  %v11466 = vsel %vm32, %v8842, %v9503
  %v11467 = vsel %vm32, %v8843, %v9505
  %v11468 = vsel %vm32, %v8844, %v9507
  %v11469 = vsel %vm32, %v8845, %v9509
  %v11470 = vsel %vm32, %v8846, %v9511
  %v11471 = vsel %vm32, %v8847, %v9513
  %v11472 = vsel %vm32, %v8848, %v9515
  %v11473 = vsel %vm32, %v8849, %v9517
  %v11474 = vsel %vm32, %v8850, %v9519
  %v11475 = vsel %vm32, %v8851, %v9521
  %v11476 = vsel %vm32, %v8852, %v9523
  %v11477 = vsel %vm32, %v8853, %v9525
  %v11478 = vsel %vm32, %v8854, %v9527
  %v11479 = vsel %vm32, %v8855, %v9529
  %v11480 = vsel %vm32, %v8856, %v9531
  %v11481 = vsel %vm32, %v8857, %v9533
  %v11482 = vsel %vm32, %v8858, %v9535
  %v11483 = vsel %vm32, %v8859, %v9537
  %v11484 = vsel %vm32, %v8860, %v9539
  %v11485 = vsel %vm32, %v8861, %v9541
  %v11486 = vsel %vm32, %v8862, %v9543
  %v11487 = vsel %vm32, %v8863, %v9545
  %v11488 = vsel %vm32, %v8864, %v9547
  %v11489 = vsel %vm32, %v8865, %v9549
  %v11490 = vsel %vm32, %v8866, %v9551
  %v11491 = vsel %vm32, %v8867, %v9553
  %v11492 = vsel %vm32, %v8868, %v9555
  %v11493 = vsel %vm32, %v8869, %v9557
  %v11494 = vsel %vm32, %v8870, %v9559
  %v11495 = vsel %vm32, %v8871, %v9561
  %v11496 = vsel %vm32, %v8872, %v9563
  %v11497 = vsel %vm32, %v8873, %v9565
  %v11498 = vsel %vm32, %v8874, %v9567
  %v11499 = vsel %vm32, %v8875, %v9569
  %v11500 = vsel %vm32, %v8876, %v9571
  %v11501 = vsel %vm32, %v8877, %v9573
  %v11502 = vsel %vm32, %v8878, %v9575
  %v11503 = vsel %vm32, %v8879, %v9577
  %v11504 = vsel %vm32, %v8880, %v9579
  %v11505 = vsel %vm32, %v8881, %v9581
  %v11506 = vsel %vm32, %v8882, %v9583
  %v11507 = vsel %vm32, %v8883, %v9585
  %v11508 = vsel %vm32, %v8884, %v9587
  %v11509 = vsel %vm32, %v8885, %v9589
  %v11510 = vsel %vm2997, %v11446, %v9719
  %v11511 = vsel %vm2997, %v11447, %v9721
  %v11512 = vsel %vm2997, %v11448, %v9723
  %v11513 = vsel %vm2997, %v11449, %v9725
  %v11514 = vsel %vm2997, %v11450, %v9727
  %v11515 = vsel %vm2997, %v11451, %v9729
  %v11516 = vsel %vm2997, %v11452, %v9731
  %v11517 = vsel %vm2997, %v11453, %v9733
  %v11518 = vsel %vm2997, %v11454, %v9735
  %v11519 = vsel %vm2997, %v11455, %v9737
  %v11520 = vsel %vm2997, %v11456, %v9739
  %v11521 = vsel %vm2997, %v11457, %v9741
  %v11522 = vsel %vm2997, %v11458, %v9743
  %v11523 = vsel %vm2997, %v11459, %v9745
  %v11524 = vsel %vm2997, %v11460, %v9747
  %v11525 = vsel %vm2997, %v11461, %v9749
  %v11526 = vsel %vm2997, %v11462, %v9751
  %v11527 = vsel %vm2997, %v11463, %v9753
  %v11528 = vsel %vm2997, %v11464, %v9755
  %v11529 = vsel %vm2997, %v11465, %v9757
  %v11530 = vsel %vm2997, %v11466, %v9759
  %v11531 = vsel %vm2997, %v11467, %v9761
  %v11532 = vsel %vm2997, %v11468, %v9763
  %v11533 = vsel %vm2997, %v11469, %v9765
  %v11534 = vsel %vm2997, %v11470, %v9767
  %v11535 = vsel %vm2997, %v11471, %v9769
  %v11536 = vsel %vm2997, %v11472, %v9771
  %v11537 = vsel %vm2997, %v11473, %v9773
  %v11538 = vsel %vm2997, %v11474, %v9775
  %v11539 = vsel %vm2997, %v11475, %v9777
  %v11540 = vsel %vm2997, %v11476, %v9779
  %v11541 = vsel %vm2997, %v11477, %v9781
  %v11542 = vsel %vm2997, %v11478, %v9783
  %v11543 = vsel %vm2997, %v11479, %v9785
  %v11544 = vsel %vm2997, %v11480, %v9787
  %v11545 = vsel %vm2997, %v11481, %v9789
  %v11546 = vsel %vm2997, %v11482, %v9791
  %v11547 = vsel %vm2997, %v11483, %v9793
  %v11548 = vsel %vm2997, %v11484, %v9795
  %v11549 = vsel %vm2997, %v11485, %v9797
  %v11550 = vsel %vm2997, %v11486, %v9799
  %v11551 = vsel %vm2997, %v11487, %v9801
  %v11552 = vsel %vm2997, %v11488, %v9803
  %v11553 = vsel %vm2997, %v11489, %v9805
  %v11554 = vsel %vm2997, %v11490, %v9807
  %v11555 = vsel %vm2997, %v11491, %v9809
  %v11556 = vsel %vm2997, %v11492, %v9811
  %v11557 = vsel %vm2997, %v11493, %v9813
  %v11558 = vsel %vm2997, %v11494, %v9815
  %v11559 = vsel %vm2997, %v11495, %v9817
  %v11560 = vsel %vm2997, %v11496, %v9819
  %v11561 = vsel %vm2997, %v11497, %v9821
  %v11562 = vsel %vm2997, %v11498, %v9823
  %v11563 = vsel %vm2997, %v11499, %v9825
  %v11564 = vsel %vm2997, %v11500, %v9827
  %v11565 = vsel %vm2997, %v11501, %v9829
  %v11566 = vsel %vm2997, %v11502, %v9831
  %v11567 = vsel %vm2997, %v11503, %v9833
  %v11568 = vsel %vm2997, %v11504, %v9835
  %v11569 = vsel %vm2997, %v11505, %v9837
  %v11570 = vsel %vm2997, %v11506, %v9839
  %v11571 = vsel %vm2997, %v11507, %v9841
  %v11572 = vsel %vm2997, %v11508, %v9843
  %v11573 = vsel %vm2997, %v11509, %v9845
  %v11574 = vsel %vm3062, %v11510, %v9975
  %v11575 = vsel %vm3062, %v11511, %v9977
  %v11576 = vsel %vm3062, %v11512, %v9979
  %v11577 = vsel %vm3062, %v11513, %v9981
  %v11578 = vsel %vm3062, %v11514, %v9983
  %v11579 = vsel %vm3062, %v11515, %v9985
  %v11580 = vsel %vm3062, %v11516, %v9987
  %v11581 = vsel %vm3062, %v11517, %v9989
  %v11582 = vsel %vm3062, %v11518, %v9991
  %v11583 = vsel %vm3062, %v11519, %v9993
  %v11584 = vsel %vm3062, %v11520, %v9995
  %v11585 = vsel %vm3062, %v11521, %v9997
  %v11586 = vsel %vm3062, %v11522, %v9999
  %v11587 = vsel %vm3062, %v11523, %v10001
  %v11588 = vsel %vm3062, %v11524, %v10003
  %v11589 = vsel %vm3062, %v11525, %v10005
  %v11590 = vsel %vm3062, %v11526, %v10007
  %v11591 = vsel %vm3062, %v11527, %v10009
  %v11592 = vsel %vm3062, %v11528, %v10011
  %v11593 = vsel %vm3062, %v11529, %v10013
  %v11594 = vsel %vm3062, %v11530, %v10015
  %v11595 = vsel %vm3062, %v11531, %v10017
  %v11596 = vsel %vm3062, %v11532, %v10019
  %v11597 = vsel %vm3062, %v11533, %v10021
  %v11598 = vsel %vm3062, %v11534, %v10023
  %v11599 = vsel %vm3062, %v11535, %v10025
  %v11600 = vsel %vm3062, %v11536, %v10027
  %v11601 = vsel %vm3062, %v11537, %v10029
  %v11602 = vsel %vm3062, %v11538, %v10031
  %v11603 = vsel %vm3062, %v11539, %v10033
  %v11604 = vsel %vm3062, %v11540, %v10035
  %v11605 = vsel %vm3062, %v11541, %v10037
  %v11606 = vsel %vm3062, %v11542, %v10039
  %v11607 = vsel %vm3062, %v11543, %v10041
  %v11608 = vsel %vm3062, %v11544, %v10043
  %v11609 = vsel %vm3062, %v11545, %v10045
  %v11610 = vsel %vm3062, %v11546, %v10047
  %v11611 = vsel %vm3062, %v11547, %v10049
  %v11612 = vsel %vm3062, %v11548, %v10051
  %v11613 = vsel %vm3062, %v11549, %v10053
  %v11614 = vsel %vm3062, %v11550, %v10055
  %v11615 = vsel %vm3062, %v11551, %v10057
  %v11616 = vsel %vm3062, %v11552, %v10059
  %v11617 = vsel %vm3062, %v11553, %v10061
  %v11618 = vsel %vm3062, %v11554, %v10063
  %v11619 = vsel %vm3062, %v11555, %v10065
  %v11620 = vsel %vm3062, %v11556, %v10067
  %v11621 = vsel %vm3062, %v11557, %v10069
  %v11622 = vsel %vm3062, %v11558, %v10071
  %v11623 = vsel %vm3062, %v11559, %v10073
  %v11624 = vsel %vm3062, %v11560, %v10075
  %v11625 = vsel %vm3062, %v11561, %v10077
  %v11626 = vsel %vm3062, %v11562, %v10079
  %v11627 = vsel %vm3062, %v11563, %v10081
  %v11628 = vsel %vm3062, %v11564, %v10083
  %v11629 = vsel %vm3062, %v11565, %v10085
  %v11630 = vsel %vm3062, %v11566, %v10087
  %v11631 = vsel %vm3062, %v11567, %v10089
  %v11632 = vsel %vm3062, %v11568, %v10091
  %v11633 = vsel %vm3062, %v11569, %v10093
  %v11634 = vsel %vm3062, %v11570, %v10095
  %v11635 = vsel %vm3062, %v11571, %v10097
  %v11636 = vsel %vm3062, %v11572, %v10099
  %v11637 = vsel %vm3062, %v11573, %v10101
  %v11638 = vsel %vm3127, %v11574, %v10231
  %v11639 = vsel %vm3127, %v11575, %v10233
  %v11640 = vsel %vm3127, %v11576, %v10235
  %v11641 = vsel %vm3127, %v11577, %v10237
  %v11642 = vsel %vm3127, %v11578, %v10239
  %v11643 = vsel %vm3127, %v11579, %v10241
  %v11644 = vsel %vm3127, %v11580, %v10243
  %v11645 = vsel %vm3127, %v11581, %v10245
  %v11646 = vsel %vm3127, %v11582, %v10247
  %v11647 = vsel %vm3127, %v11583, %v10249
  %v11648 = vsel %vm3127, %v11584, %v10251
  %v11649 = vsel %vm3127, %v11585, %v10253
  %v11650 = vsel %vm3127, %v11586, %v10255
  %v11651 = vsel %vm3127, %v11587, %v10257
  %v11652 = vsel %vm3127, %v11588, %v10259
  %v11653 = vsel %vm3127, %v11589, %v10261
  %v11654 = vsel %vm3127, %v11590, %v10263
  %v11655 = vsel %vm3127, %v11591, %v10265
  %v11656 = vsel %vm3127, %v11592, %v10267
  %v11657 = vsel %vm3127, %v11593, %v10269
  %v11658 = vsel %vm3127, %v11594, %v10271
  %v11659 = vsel %vm3127, %v11595, %v10273
  %v11660 = vsel %vm3127, %v11596, %v10275
  %v11661 = vsel %vm3127, %v11597, %v10277
  %v11662 = vsel %vm3127, %v11598, %v10279
  %v11663 = vsel %vm3127, %v11599, %v10281
  %v11664 = vsel %vm3127, %v11600, %v10283
  %v11665 = vsel %vm3127, %v11601, %v10285
  %v11666 = vsel %vm3127, %v11602, %v10287
  %v11667 = vsel %vm3127, %v11603, %v10289
  %v11668 = vsel %vm3127, %v11604, %v10291
  %v11669 = vsel %vm3127, %v11605, %v10293
  %v11670 = vsel %vm3127, %v11606, %v10295
  %v11671 = vsel %vm3127, %v11607, %v10297
  %v11672 = vsel %vm3127, %v11608, %v10299
  %v11673 = vsel %vm3127, %v11609, %v10301
  %v11674 = vsel %vm3127, %v11610, %v10303
  %v11675 = vsel %vm3127, %v11611, %v10305
  %v11676 = vsel %vm3127, %v11612, %v10307
  %v11677 = vsel %vm3127, %v11613, %v10309
  %v11678 = vsel %vm3127, %v11614, %v10311
  %v11679 = vsel %vm3127, %v11615, %v10313
  %v11680 = vsel %vm3127, %v11616, %v10315
  %v11681 = vsel %vm3127, %v11617, %v10317
  %v11682 = vsel %vm3127, %v11618, %v10319
  %v11683 = vsel %vm3127, %v11619, %v10321
  %v11684 = vsel %vm3127, %v11620, %v10323
  %v11685 = vsel %vm3127, %v11621, %v10325
  %v11686 = vsel %vm3127, %v11622, %v10327
  %v11687 = vsel %vm3127, %v11623, %v10329
  %v11688 = vsel %vm3127, %v11624, %v10331
  %v11689 = vsel %vm3127, %v11625, %v10333
  %v11690 = vsel %vm3127, %v11626, %v10335
  %v11691 = vsel %vm3127, %v11627, %v10337
  %v11692 = vsel %vm3127, %v11628, %v10339
  %v11693 = vsel %vm3127, %v11629, %v10341
  %v11694 = vsel %vm3127, %v11630, %v10343
  %v11695 = vsel %vm3127, %v11631, %v10345
  %v11696 = vsel %vm3127, %v11632, %v10347
  %v11697 = vsel %vm3127, %v11633, %v10349
  %v11698 = vsel %vm3127, %v11634, %v10351
  %v11699 = vsel %vm3127, %v11635, %v10353
  %v11700 = vsel %vm3127, %v11636, %v10355
  %v11701 = vsel %vm3127, %v11637, %v10357
  %v11702 = vsel %vm3192, %v11638, %v10487
  %v11703 = vsel %vm3192, %v11639, %v10489
  %v11704 = vsel %vm3192, %v11640, %v10491
  %v11705 = vsel %vm3192, %v11641, %v10493
  %v11706 = vsel %vm3192, %v11642, %v10495
  %v11707 = vsel %vm3192, %v11643, %v10497
  %v11708 = vsel %vm3192, %v11644, %v10499
  %v11709 = vsel %vm3192, %v11645, %v10501
  %v11710 = vsel %vm3192, %v11646, %v10503
  %v11711 = vsel %vm3192, %v11647, %v10505
  %v11712 = vsel %vm3192, %v11648, %v10507
  %v11713 = vsel %vm3192, %v11649, %v10509
  %v11714 = vsel %vm3192, %v11650, %v10511
  %v11715 = vsel %vm3192, %v11651, %v10513
  %v11716 = vsel %vm3192, %v11652, %v10515
  %v11717 = vsel %vm3192, %v11653, %v10517
  %v11718 = vsel %vm3192, %v11654, %v10519
  %v11719 = vsel %vm3192, %v11655, %v10521
  %v11720 = vsel %vm3192, %v11656, %v10523
  %v11721 = vsel %vm3192, %v11657, %v10525
  %v11722 = vsel %vm3192, %v11658, %v10527
  %v11723 = vsel %vm3192, %v11659, %v10529
  %v11724 = vsel %vm3192, %v11660, %v10531
  %v11725 = vsel %vm3192, %v11661, %v10533
  %v11726 = vsel %vm3192, %v11662, %v10535
  %v11727 = vsel %vm3192, %v11663, %v10537
  %v11728 = vsel %vm3192, %v11664, %v10539
  %v11729 = vsel %vm3192, %v11665, %v10541
  %v11730 = vsel %vm3192, %v11666, %v10543
  %v11731 = vsel %vm3192, %v11667, %v10545
  %v11732 = vsel %vm3192, %v11668, %v10547
  %v11733 = vsel %vm3192, %v11669, %v10549
  %v11734 = vsel %vm3192, %v11670, %v10551
  %v11735 = vsel %vm3192, %v11671, %v10553
  %v11736 = vsel %vm3192, %v11672, %v10555
  %v11737 = vsel %vm3192, %v11673, %v10557
  %v11738 = vsel %vm3192, %v11674, %v10559
  %v11739 = vsel %vm3192, %v11675, %v10561
  %v11740 = vsel %vm3192, %v11676, %v10563
  %v11741 = vsel %vm3192, %v11677, %v10565
  %v11742 = vsel %vm3192, %v11678, %v10567
  %v11743 = vsel %vm3192, %v11679, %v10569
  %v11744 = vsel %vm3192, %v11680, %v10571
  %v11745 = vsel %vm3192, %v11681, %v10573
  %v11746 = vsel %vm3192, %v11682, %v10575
  %v11747 = vsel %vm3192, %v11683, %v10577
  %v11748 = vsel %vm3192, %v11684, %v10579
  %v11749 = vsel %vm3192, %v11685, %v10581
  %v11750 = vsel %vm3192, %v11686, %v10583
  %v11751 = vsel %vm3192, %v11687, %v10585
  %v11752 = vsel %vm3192, %v11688, %v10587
  %v11753 = vsel %vm3192, %v11689, %v10589
  %v11754 = vsel %vm3192, %v11690, %v10591
  %v11755 = vsel %vm3192, %v11691, %v10593
  %v11756 = vsel %vm3192, %v11692, %v10595
  %v11757 = vsel %vm3192, %v11693, %v10597
  %v11758 = vsel %vm3192, %v11694, %v10599
  %v11759 = vsel %vm3192, %v11695, %v10601
  %v11760 = vsel %vm3192, %v11696, %v10603
  %v11761 = vsel %vm3192, %v11697, %v10605
  %v11762 = vsel %vm3192, %v11698, %v10607
  %v11763 = vsel %vm3192, %v11699, %v10609
  %v11764 = vsel %vm3192, %v11700, %v10611
  %v11765 = vsel %vm3192, %v11701, %v10613
  %v11766 = vsel %vm3257, %v11702, %v10743
  %v11767 = vsel %vm3257, %v11703, %v10745
  %v11768 = vsel %vm3257, %v11704, %v10747
  %v11769 = vsel %vm3257, %v11705, %v10749
  %v11770 = vsel %vm3257, %v11706, %v10751
  %v11771 = vsel %vm3257, %v11707, %v10753
  %v11772 = vsel %vm3257, %v11708, %v10755
  %v11773 = vsel %vm3257, %v11709, %v10757
  %v11774 = vsel %vm3257, %v11710, %v10759
  %v11775 = vsel %vm3257, %v11711, %v10761
  %v11776 = vsel %vm3257, %v11712, %v10763
  %v11777 = vsel %vm3257, %v11713, %v10765
  %v11778 = vsel %vm3257, %v11714, %v10767
  %v11779 = vsel %vm3257, %v11715, %v10769
  %v11780 = vsel %vm3257, %v11716, %v10771
  %v11781 = vsel %vm3257, %v11717, %v10773
  %v11782 = vsel %vm3257, %v11718, %v10775
  %v11783 = vsel %vm3257, %v11719, %v10777
  %v11784 = vsel %vm3257, %v11720, %v10779
  %v11785 = vsel %vm3257, %v11721, %v10781
  %v11786 = vsel %vm3257, %v11722, %v10783
  %v11787 = vsel %vm3257, %v11723, %v10785
  %v11788 = vsel %vm3257, %v11724, %v10787
  %v11789 = vsel %vm3257, %v11725, %v10789
  %v11790 = vsel %vm3257, %v11726, %v10791
  %v11791 = vsel %vm3257, %v11727, %v10793
  %v11792 = vsel %vm3257, %v11728, %v10795
  %v11793 = vsel %vm3257, %v11729, %v10797
  %v11794 = vsel %vm3257, %v11730, %v10799
  %v11795 = vsel %vm3257, %v11731, %v10801
  %v11796 = vsel %vm3257, %v11732, %v10803
  %v11797 = vsel %vm3257, %v11733, %v10805
  %v11798 = vsel %vm3257, %v11734, %v10807
  %v11799 = vsel %vm3257, %v11735, %v10809
  %v11800 = vsel %vm3257, %v11736, %v10811
  %v11801 = vsel %vm3257, %v11737, %v10813
  %v11802 = vsel %vm3257, %v11738, %v10815
  %v11803 = vsel %vm3257, %v11739, %v10817
  %v11804 = vsel %vm3257, %v11740, %v10819
  %v11805 = vsel %vm3257, %v11741, %v10821
  %v11806 = vsel %vm3257, %v11742, %v10823
  %v11807 = vsel %vm3257, %v11743, %v10825
  %v11808 = vsel %vm3257, %v11744, %v10827
  %v11809 = vsel %vm3257, %v11745, %v10829
  %v11810 = vsel %vm3257, %v11746, %v10831
  %v11811 = vsel %vm3257, %v11747, %v10833
  %v11812 = vsel %vm3257, %v11748, %v10835
  %v11813 = vsel %vm3257, %v11749, %v10837
  %v11814 = vsel %vm3257, %v11750, %v10839
  %v11815 = vsel %vm3257, %v11751, %v10841
  %v11816 = vsel %vm3257, %v11752, %v10843
  %v11817 = vsel %vm3257, %v11753, %v10845
  %v11818 = vsel %vm3257, %v11754, %v10847
  %v11819 = vsel %vm3257, %v11755, %v10849
  %v11820 = vsel %vm3257, %v11756, %v10851
  %v11821 = vsel %vm3257, %v11757, %v10853
  %v11822 = vsel %vm3257, %v11758, %v10855
  %v11823 = vsel %vm3257, %v11759, %v10857
  %v11824 = vsel %vm3257, %v11760, %v10859
  %v11825 = vsel %vm3257, %v11761, %v10861
  %v11826 = vsel %vm3257, %v11762, %v10863
  %v11827 = vsel %vm3257, %v11763, %v10865
  %v11828 = vsel %vm3257, %v11764, %v10867
  %v11829 = vsel %vm3257, %v11765, %v10869
  %v11830 = vsel %vm3322, %v11766, %v10999
  %v11831 = vsel %vm3322, %v11767, %v11001
  %v11832 = vsel %vm3322, %v11768, %v11003
  %v11833 = vsel %vm3322, %v11769, %v11005
  %v11834 = vsel %vm3322, %v11770, %v11007
  %v11835 = vsel %vm3322, %v11771, %v11009
  %v11836 = vsel %vm3322, %v11772, %v11011
  %v11837 = vsel %vm3322, %v11773, %v11013
  %v11838 = vsel %vm3322, %v11774, %v11015
  %v11839 = vsel %vm3322, %v11775, %v11017
  %v11840 = vsel %vm3322, %v11776, %v11019
  %v11841 = vsel %vm3322, %v11777, %v11021
  %v11842 = vsel %vm3322, %v11778, %v11023
  %v11843 = vsel %vm3322, %v11779, %v11025
  %v11844 = vsel %vm3322, %v11780, %v11027
  %v11845 = vsel %vm3322, %v11781, %v11029
  %v11846 = vsel %vm3322, %v11782, %v11031
  %v11847 = vsel %vm3322, %v11783, %v11033
  %v11848 = vsel %vm3322, %v11784, %v11035
  %v11849 = vsel %vm3322, %v11785, %v11037
  %v11850 = vsel %vm3322, %v11786, %v11039
  %v11851 = vsel %vm3322, %v11787, %v11041
  %v11852 = vsel %vm3322, %v11788, %v11043
  %v11853 = vsel %vm3322, %v11789, %v11045
  %v11854 = vsel %vm3322, %v11790, %v11047
  %v11855 = vsel %vm3322, %v11791, %v11049
  %v11856 = vsel %vm3322, %v11792, %v11051
  %v11857 = vsel %vm3322, %v11793, %v11053
  %v11858 = vsel %vm3322, %v11794, %v11055
  %v11859 = vsel %vm3322, %v11795, %v11057
  %v11860 = vsel %vm3322, %v11796, %v11059
  %v11861 = vsel %vm3322, %v11797, %v11061
  %v11862 = vsel %vm3322, %v11798, %v11063
  %v11863 = vsel %vm3322, %v11799, %v11065
  %v11864 = vsel %vm3322, %v11800, %v11067
  %v11865 = vsel %vm3322, %v11801, %v11069
  %v11866 = vsel %vm3322, %v11802, %v11071
  %v11867 = vsel %vm3322, %v11803, %v11073
  %v11868 = vsel %vm3322, %v11804, %v11075
  %v11869 = vsel %vm3322, %v11805, %v11077
  %v11870 = vsel %vm3322, %v11806, %v11079
  %v11871 = vsel %vm3322, %v11807, %v11081
  %v11872 = vsel %vm3322, %v11808, %v11083
  %v11873 = vsel %vm3322, %v11809, %v11085
  %v11874 = vsel %vm3322, %v11810, %v11087
  %v11875 = vsel %vm3322, %v11811, %v11089
  %v11876 = vsel %vm3322, %v11812, %v11091
  %v11877 = vsel %vm3322, %v11813, %v11093
  %v11878 = vsel %vm3322, %v11814, %v11095
  %v11879 = vsel %vm3322, %v11815, %v11097
  %v11880 = vsel %vm3322, %v11816, %v11099
  %v11881 = vsel %vm3322, %v11817, %v11101
  %v11882 = vsel %vm3322, %v11818, %v11103
  %v11883 = vsel %vm3322, %v11819, %v11105
  %v11884 = vsel %vm3322, %v11820, %v11107
  %v11885 = vsel %vm3322, %v11821, %v11109
  %v11886 = vsel %vm3322, %v11822, %v11111
  %v11887 = vsel %vm3322, %v11823, %v11113
  %v11888 = vsel %vm3322, %v11824, %v11115
  %v11889 = vsel %vm3322, %v11825, %v11117
  %v11890 = vsel %vm3322, %v11826, %v11119
  %v11891 = vsel %vm3322, %v11827, %v11121
  %v11892 = vsel %vm3322, %v11828, %v11123
  %v11893 = vsel %vm3322, %v11829, %v11125
  %v11894 = vsel %vm3387, %v11830, %v11255
  %v11895 = vsel %vm3387, %v11831, %v11257
  %v11896 = vsel %vm3387, %v11832, %v11259
  %v11897 = vsel %vm3387, %v11833, %v11261
  %v11898 = vsel %vm3387, %v11834, %v11263
  %v11899 = vsel %vm3387, %v11835, %v11265
  %v11900 = vsel %vm3387, %v11836, %v11267
  %v11901 = vsel %vm3387, %v11837, %v11269
  %v11902 = vsel %vm3387, %v11838, %v11271
  %v11903 = vsel %vm3387, %v11839, %v11273
  %v11904 = vsel %vm3387, %v11840, %v11275
  %v11905 = vsel %vm3387, %v11841, %v11277
  %v11906 = vsel %vm3387, %v11842, %v11279
  %v11907 = vsel %vm3387, %v11843, %v11281
  %v11908 = vsel %vm3387, %v11844, %v11283
  %v11909 = vsel %vm3387, %v11845, %v11285
  %v11910 = vsel %vm3387, %v11846, %v11287
  %v11911 = vsel %vm3387, %v11847, %v11289
  %v11912 = vsel %vm3387, %v11848, %v11291
  %v11913 = vsel %vm3387, %v11849, %v11293
  %v11914 = vsel %vm3387, %v11850, %v11295
  %v11915 = vsel %vm3387, %v11851, %v11297
  %v11916 = vsel %vm3387, %v11852, %v11299
  %v11917 = vsel %vm3387, %v11853, %v11301
  %v11918 = vsel %vm3387, %v11854, %v11303
  %v11919 = vsel %vm3387, %v11855, %v11305
  %v11920 = vsel %vm3387, %v11856, %v11307
  %v11921 = vsel %vm3387, %v11857, %v11309
  %v11922 = vsel %vm3387, %v11858, %v11311
  %v11923 = vsel %vm3387, %v11859, %v11313
  %v11924 = vsel %vm3387, %v11860, %v11315
  %v11925 = vsel %vm3387, %v11861, %v11317
  %v11926 = vsel %vm3387, %v11862, %v11319
  %v11927 = vsel %vm3387, %v11863, %v11321
  %v11928 = vsel %vm3387, %v11864, %v11323
  %v11929 = vsel %vm3387, %v11865, %v11325
  %v11930 = vsel %vm3387, %v11866, %v11327
  %v11931 = vsel %vm3387, %v11867, %v11329
  %v11932 = vsel %vm3387, %v11868, %v11331
  %v11933 = vsel %vm3387, %v11869, %v11333
  %v11934 = vsel %vm3387, %v11870, %v11335
  %v11935 = vsel %vm3387, %v11871, %v11337
  %v11936 = vsel %vm3387, %v11872, %v11339
  %v11937 = vsel %vm3387, %v11873, %v11341
  %v11938 = vsel %vm3387, %v11874, %v11343
  %v11939 = vsel %vm3387, %v11875, %v11345
  %v11940 = vsel %vm3387, %v11876, %v11347
  %v11941 = vsel %vm3387, %v11877, %v11349
  %v11942 = vsel %vm3387, %v11878, %v11351
  %v11943 = vsel %vm3387, %v11879, %v11353
  %v11944 = vsel %vm3387, %v11880, %v11355
  %v11945 = vsel %vm3387, %v11881, %v11357
  %v11946 = vsel %vm3387, %v11882, %v11359
  %v11947 = vsel %vm3387, %v11883, %v11361
  %v11948 = vsel %vm3387, %v11884, %v11363
  %v11949 = vsel %vm3387, %v11885, %v11365
  %v11950 = vsel %vm3387, %v11886, %v11367
  %v11951 = vsel %vm3387, %v11887, %v11369
  %v11952 = vsel %vm3387, %v11888, %v11371
  %v11953 = vsel %vm3387, %v11889, %v11373
  %v11954 = vsel %vm3387, %v11890, %v11375
  %v11955 = vsel %vm3387, %v11891, %v11377
  %v11956 = vsel %vm3387, %v11892, %v11379
  %v11957 = vsel %vm3387, %v11893, %v11381
  %v11958 = vld [vmem:[%s2] sm:$0xff]
  %v11959 = vld [vmem:[%s2 + $0x8] sm:$0xff]
  %v11960 = vld [vmem:[%s2 + $0x10] sm:$0xff]
  %v11961 = vld [vmem:[%s2 + $0x18] sm:$0xff]
  %v11962 = vld [vmem:[%s2 + $0x20] sm:$0xff]
  %v11963 = vld [vmem:[%s2 + $0x28] sm:$0xff]
  %v11964 = vld [vmem:[%s2 + $0x30] sm:$0xff]
  %v11965 = vld [vmem:[%s2 + $0x38] sm:$0xff]
  %v11966 = vld [vmem:[%s2 + $0x40] sm:$0xff]
  %v11968 = vsel %vm3461, %v11894, 0
  %v11971 = vsel %vm3461, %v11895, 0
  %v11974 = vsel %vm3461, %v11896, 0
  %v11977 = vsel %vm3461, %v11897, 0
  %v11980 = vsel %vm3461, %v11898, 0
  %v11983 = vsel %vm3461, %v11899, 0
  %v11986 = vsel %vm3461, %v11900, 0
  %v11989 = vsel %vm3461, %v11901, 0
  %v11992 = vsel %vm3461, %v11902, 0
  %v11995 = vsel %vm3461, %v11903, 0
  %v11998 = vsel %vm3461, %v11904, 0
  %v12001 = vsel %vm3461, %v11905, 0
  %v12004 = vsel %vm3461, %v11906, 0
  %v12007 = vsel %vm3461, %v11907, 0
  %v12010 = vsel %vm3461, %v11908, 0
  %v12013 = vsel %vm3461, %v11909, 0
  %v12016 = vsel %vm3461, %v11910, 0
  %v12019 = vsel %vm3461, %v11911, 0
  %v12022 = vsel %vm3461, %v11912, 0
  %v12025 = vsel %vm3461, %v11913, 0
  %v12028 = vsel %vm3461, %v11914, 0
  %v12031 = vsel %vm3461, %v11915, 0
  %v12034 = vsel %vm3461, %v11916, 0
  %v12037 = vsel %vm3461, %v11917, 0
  %v12040 = vsel %vm3461, %v11918, 0
  %v12043 = vsel %vm3461, %v11919, 0
  %v12046 = vsel %vm3461, %v11920, 0
  %v12049 = vsel %vm3461, %v11921, 0
  %v12052 = vsel %vm3461, %v11922, 0
  %v12055 = vsel %vm3461, %v11923, 0
  %v12058 = vsel %vm3461, %v11924, 0
  %v12061 = vsel %vm3461, %v11925, 0
  %v12064 = vsel %vm3461, %v11926, 0
  %v12067 = vsel %vm3461, %v11927, 0
  %v12070 = vsel %vm3461, %v11928, 0
  %v12073 = vsel %vm3461, %v11929, 0
  %v12076 = vsel %vm3461, %v11930, 0
  %v12079 = vsel %vm3461, %v11931, 0
  %v12082 = vsel %vm3461, %v11932, 0
  %v12085 = vsel %vm3461, %v11933, 0
  %v12088 = vsel %vm3461, %v11934, 0
  %v12091 = vsel %vm3461, %v11935, 0
  %v12094 = vsel %vm3461, %v11936, 0
  %v12097 = vsel %vm3461, %v11937, 0
  %v12100 = vsel %vm3461, %v11938, 0
  %v12103 = vsel %vm3461, %v11939, 0
  %v12106 = vsel %vm3461, %v11940, 0
  %v12109 = vsel %vm3461, %v11941, 0
  %v12112 = vsel %vm3461, %v11942, 0
  %v12115 = vsel %vm3461, %v11943, 0
  %v12118 = vsel %vm3461, %v11944, 0
  %v12121 = vsel %vm3461, %v11945, 0
  %v12124 = vsel %vm3461, %v11946, 0
  %v12127 = vsel %vm3461, %v11947, 0
  %v12130 = vsel %vm3461, %v11948, 0
  %v12133 = vsel %vm3461, %v11949, 0
  %v12136 = vsel %vm3461, %v11950, 0
  %v12139 = vsel %vm3461, %v11951, 0
  %v12142 = vsel %vm3461, %v11952, 0
  %v12145 = vsel %vm3461, %v11953, 0
  %v12148 = vsel %vm3461, %v11954, 0
  %v12151 = vsel %vm3461, %v11955, 0
  %v12154 = vsel %vm3461, %v11956, 0
  %v12157 = vsel %vm3461, %v11957, 0
  %12159 = vmatpush.msra.mxu0 0.0
  %12160 = vmatpush.msra.mxu0 0.0
  %12161 = vmatpush.msra.mxu0 0.0
  %12162 = vmatpush.msra.mxu0 0.0
  %12163 = vmatpush.msra.mxu0 0.0
  %12164 = vmatpush.msra.mxu0 0.0
  %12165 = vmatpush.msra.mxu0 0.0
  %12166 = vmatpush.msra.mxu0 %v11966
  %12167 = vmatpush.msra.mxu0 %v11965
  %12168 = vmatpush.msra.mxu0 %v11964
  %12169 = vmatpush.msra.mxu0 %v11963
  %12170 = vmatpush.msra.mxu0 %v11962
  %12171 = vmatpush.msra.mxu0 %v11961
  %12172 = vmatpush.msra.mxu0 %v11960
  %12173 = vmatpush.msra.mxu0 %v11959
  %12174 = vmatpush.msra.mxu0 %v11958
  %12175 = vmatmul.f32.gmra.mxu0 %v11968
  %v12176 = vpop.f32.mrf.mxu0
  %v12177 = vadd.f32 0.0, %v12176
  %12178 = vmatmul.f32.gmra.mxu0 %v11971
  %v12179 = vpop.f32.mrf.mxu0
  %v12180 = vadd.f32 0.0, %v12179
  %12181 = vmatmul.f32.gmra.mxu0 %v11974
  %v12182 = vpop.f32.mrf.mxu0
  %v12183 = vadd.f32 0.0, %v12182
  %12184 = vmatmul.f32.gmra.mxu0 %v11977
  %v12185 = vpop.f32.mrf.mxu0
  %v12186 = vadd.f32 0.0, %v12185
  %12187 = vmatmul.f32.gmra.mxu0 %v11980
  %v12188 = vpop.f32.mrf.mxu0
  %v12189 = vadd.f32 0.0, %v12188
  %12190 = vmatmul.f32.gmra.mxu0 %v11983
  %v12191 = vpop.f32.mrf.mxu0
  %v12192 = vadd.f32 0.0, %v12191
  %12193 = vmatmul.f32.gmra.mxu0 %v11986
  %v12194 = vpop.f32.mrf.mxu0
  %v12195 = vadd.f32 0.0, %v12194
  %12196 = vmatmul.f32.gmra.mxu0 %v11989
  %v12197 = vpop.f32.mrf.mxu0
  %v12198 = vadd.f32 0.0, %v12197
  %12199 = vmatmul.f32.gmra.mxu0 %v11992
  %v12200 = vpop.f32.mrf.mxu0
  %v12201 = vadd.f32 0.0, %v12200
  %12202 = vmatmul.f32.gmra.mxu0 %v11995
  %v12203 = vpop.f32.mrf.mxu0
  %v12204 = vadd.f32 0.0, %v12203
  %12205 = vmatmul.f32.gmra.mxu0 %v11998
  %v12206 = vpop.f32.mrf.mxu0
  %v12207 = vadd.f32 0.0, %v12206
  %12208 = vmatmul.f32.gmra.mxu0 %v12001
  %v12209 = vpop.f32.mrf.mxu0
  %v12210 = vadd.f32 0.0, %v12209
  %12211 = vmatmul.f32.gmra.mxu0 %v12004
  %v12212 = vpop.f32.mrf.mxu0
  %v12213 = vadd.f32 0.0, %v12212
  %12214 = vmatmul.f32.gmra.mxu0 %v12007
  %v12215 = vpop.f32.mrf.mxu0
  %v12216 = vadd.f32 0.0, %v12215
  %12217 = vmatmul.f32.gmra.mxu0 %v12010
  %v12218 = vpop.f32.mrf.mxu0
  %v12219 = vadd.f32 0.0, %v12218
  %12220 = vmatmul.f32.gmra.mxu0 %v12013
  %v12221 = vpop.f32.mrf.mxu0
  %v12222 = vadd.f32 0.0, %v12221
  %12223 = vmatmul.f32.gmra.mxu0 %v12016
  %v12224 = vpop.f32.mrf.mxu0
  %v12225 = vadd.f32 0.0, %v12224
  %12226 = vmatmul.f32.gmra.mxu0 %v12019
  %v12227 = vpop.f32.mrf.mxu0
  %v12228 = vadd.f32 0.0, %v12227
  %12229 = vmatmul.f32.gmra.mxu0 %v12022
  %v12230 = vpop.f32.mrf.mxu0
  %v12231 = vadd.f32 0.0, %v12230
  %12232 = vmatmul.f32.gmra.mxu0 %v12025
  %v12233 = vpop.f32.mrf.mxu0
  %v12234 = vadd.f32 0.0, %v12233
  %12235 = vmatmul.f32.gmra.mxu0 %v12028
  %v12236 = vpop.f32.mrf.mxu0
  %v12237 = vadd.f32 0.0, %v12236
  %12238 = vmatmul.f32.gmra.mxu0 %v12031
  %v12239 = vpop.f32.mrf.mxu0
  %v12240 = vadd.f32 0.0, %v12239
  %12241 = vmatmul.f32.gmra.mxu0 %v12034
  %v12242 = vpop.f32.mrf.mxu0
  %v12243 = vadd.f32 0.0, %v12242
  %12244 = vmatmul.f32.gmra.mxu0 %v12037
  %v12245 = vpop.f32.mrf.mxu0
  %v12246 = vadd.f32 0.0, %v12245
  %12247 = vmatmul.f32.gmra.mxu0 %v12040
  %v12248 = vpop.f32.mrf.mxu0
  %v12249 = vadd.f32 0.0, %v12248
  %12250 = vmatmul.f32.gmra.mxu0 %v12043
  %v12251 = vpop.f32.mrf.mxu0
  %v12252 = vadd.f32 0.0, %v12251
  %12253 = vmatmul.f32.gmra.mxu0 %v12046
  %v12254 = vpop.f32.mrf.mxu0
  %v12255 = vadd.f32 0.0, %v12254
  %12256 = vmatmul.f32.gmra.mxu0 %v12049
  %v12257 = vpop.f32.mrf.mxu0
  %v12258 = vadd.f32 0.0, %v12257
  %12259 = vmatmul.f32.gmra.mxu0 %v12052
  %v12260 = vpop.f32.mrf.mxu0
  %v12261 = vadd.f32 0.0, %v12260
  %12262 = vmatmul.f32.gmra.mxu0 %v12055
  %v12263 = vpop.f32.mrf.mxu0
  %v12264 = vadd.f32 0.0, %v12263
  %12265 = vmatmul.f32.gmra.mxu0 %v12058
  %v12266 = vpop.f32.mrf.mxu0
  %v12267 = vadd.f32 0.0, %v12266
  %12268 = vmatmul.f32.gmra.mxu0 %v12061
  %v12269 = vpop.f32.mrf.mxu0
  %v12270 = vadd.f32 0.0, %v12269
  %12271 = vmatmul.f32.gmra.mxu0 %v12064
  %v12272 = vpop.f32.mrf.mxu0
  %v12273 = vadd.f32 0.0, %v12272
  %12274 = vmatmul.f32.gmra.mxu0 %v12067
  %v12275 = vpop.f32.mrf.mxu0
  %v12276 = vadd.f32 0.0, %v12275
  %12277 = vmatmul.f32.gmra.mxu0 %v12070
  %v12278 = vpop.f32.mrf.mxu0
  %v12279 = vadd.f32 0.0, %v12278
  %12280 = vmatmul.f32.gmra.mxu0 %v12073
  %v12281 = vpop.f32.mrf.mxu0
  %v12282 = vadd.f32 0.0, %v12281
  %12283 = vmatmul.f32.gmra.mxu0 %v12076
  %v12284 = vpop.f32.mrf.mxu0
  %v12285 = vadd.f32 0.0, %v12284
  %12286 = vmatmul.f32.gmra.mxu0 %v12079
  %v12287 = vpop.f32.mrf.mxu0
  %v12288 = vadd.f32 0.0, %v12287
  %12289 = vmatmul.f32.gmra.mxu0 %v12082
  %v12290 = vpop.f32.mrf.mxu0
  %v12291 = vadd.f32 0.0, %v12290
  %12292 = vmatmul.f32.gmra.mxu0 %v12085
  %v12293 = vpop.f32.mrf.mxu0
  %v12294 = vadd.f32 0.0, %v12293
  %12295 = vmatmul.f32.gmra.mxu0 %v12088
  %v12296 = vpop.f32.mrf.mxu0
  %v12297 = vadd.f32 0.0, %v12296
  %12298 = vmatmul.f32.gmra.mxu0 %v12091
  %v12299 = vpop.f32.mrf.mxu0
  %v12300 = vadd.f32 0.0, %v12299
  %12301 = vmatmul.f32.gmra.mxu0 %v12094
  %v12302 = vpop.f32.mrf.mxu0
  %v12303 = vadd.f32 0.0, %v12302
  %12304 = vmatmul.f32.gmra.mxu0 %v12097
  %v12305 = vpop.f32.mrf.mxu0
  %v12306 = vadd.f32 0.0, %v12305
  %12307 = vmatmul.f32.gmra.mxu0 %v12100
  %v12308 = vpop.f32.mrf.mxu0
  %v12309 = vadd.f32 0.0, %v12308
  %12310 = vmatmul.f32.gmra.mxu0 %v12103
  %v12311 = vpop.f32.mrf.mxu0
  %v12312 = vadd.f32 0.0, %v12311
  %12313 = vmatmul.f32.gmra.mxu0 %v12106
  %v12314 = vpop.f32.mrf.mxu0
  %v12315 = vadd.f32 0.0, %v12314
  %12316 = vmatmul.f32.gmra.mxu0 %v12109
  %v12317 = vpop.f32.mrf.mxu0
  %v12318 = vadd.f32 0.0, %v12317
  %12319 = vmatmul.f32.gmra.mxu0 %v12112
  %v12320 = vpop.f32.mrf.mxu0
  %v12321 = vadd.f32 0.0, %v12320
  %12322 = vmatmul.f32.gmra.mxu0 %v12115
  %v12323 = vpop.f32.mrf.mxu0
  %v12324 = vadd.f32 0.0, %v12323
  %12325 = vmatmul.f32.gmra.mxu0 %v12118
  %v12326 = vpop.f32.mrf.mxu0
  %v12327 = vadd.f32 0.0, %v12326
  %12328 = vmatmul.f32.gmra.mxu0 %v12121
  %v12329 = vpop.f32.mrf.mxu0
  %v12330 = vadd.f32 0.0, %v12329
  %12331 = vmatmul.f32.gmra.mxu0 %v12124
  %v12332 = vpop.f32.mrf.mxu0
  %v12333 = vadd.f32 0.0, %v12332
  %12334 = vmatmul.f32.gmra.mxu0 %v12127
  %v12335 = vpop.f32.mrf.mxu0
  %v12336 = vadd.f32 0.0, %v12335
  %12337 = vmatmul.f32.gmra.mxu0 %v12130
  %v12338 = vpop.f32.mrf.mxu0
  %v12339 = vadd.f32 0.0, %v12338
  %12340 = vmatmul.f32.gmra.mxu0 %v12133
  %v12341 = vpop.f32.mrf.mxu0
  %v12342 = vadd.f32 0.0, %v12341
  %12343 = vmatmul.f32.gmra.mxu0 %v12136
  %v12344 = vpop.f32.mrf.mxu0
  %v12345 = vadd.f32 0.0, %v12344
  %12346 = vmatmul.f32.gmra.mxu0 %v12139
  %v12347 = vpop.f32.mrf.mxu0
  %v12348 = vadd.f32 0.0, %v12347
  %12349 = vmatmul.f32.gmra.mxu0 %v12142
  %v12350 = vpop.f32.mrf.mxu0
  %v12351 = vadd.f32 0.0, %v12350
  %12352 = vmatmul.f32.gmra.mxu0 %v12145
  %v12353 = vpop.f32.mrf.mxu0
  %v12354 = vadd.f32 0.0, %v12353
  %12355 = vmatmul.f32.gmra.mxu0 %v12148
  %v12356 = vpop.f32.mrf.mxu0
  %v12357 = vadd.f32 0.0, %v12356
  %12358 = vmatmul.f32.gmra.mxu0 %v12151
  %v12359 = vpop.f32.mrf.mxu0
  %v12360 = vadd.f32 0.0, %v12359
  %12361 = vmatmul.f32.gmra.mxu0 %v12154
  %v12362 = vpop.f32.mrf.mxu0
  %v12363 = vadd.f32 0.0, %v12362
  %12364 = vmatmul.f32.gmra.mxu0 %v12157
  %v12365 = vpop.f32.mrf.mxu0
  %v12366 = vadd.f32 0.0, %v12365
  %12367 = vdwg.mxu0
  %v12368 = vsel %vm32, %v12177, 0.0
  %v12369 = vsel %vm32, %v12180, 0.0
  %v12370 = vadd.f32 %v12368, %v12369
  %v12371 = vsel %vm32, %v12183, 0.0
  %v12372 = vadd.f32 %v12370, %v12371
  %v12373 = vsel %vm32, %v12186, 0.0
  %v12374 = vadd.f32 %v12372, %v12373
  %v12375 = vsel %vm32, %v12189, 0.0
  %v12376 = vadd.f32 %v12374, %v12375
  %v12377 = vsel %vm32, %v12192, 0.0
  %v12378 = vadd.f32 %v12376, %v12377
  %v12379 = vsel %vm32, %v12195, 0.0
  %v12380 = vadd.f32 %v12378, %v12379
  %v12381 = vsel %vm32, %v12198, 0.0
  %v12382 = vadd.f32 %v12380, %v12381
  %v12383 = vsel %vm32, %v12201, 0.0
  %v12384 = vadd.f32 %v12382, %v12383
  %v12385 = vsel %vm32, %v12204, 0.0
  %v12386 = vadd.f32 %v12384, %v12385
  %v12387 = vsel %vm32, %v12207, 0.0
  %v12388 = vadd.f32 %v12386, %v12387
  %v12389 = vsel %vm32, %v12210, 0.0
  %v12390 = vadd.f32 %v12388, %v12389
  %v12391 = vsel %vm32, %v12213, 0.0
  %v12392 = vadd.f32 %v12390, %v12391
  %v12393 = vsel %vm32, %v12216, 0.0
  %v12394 = vadd.f32 %v12392, %v12393
  %v12395 = vsel %vm32, %v12219, 0.0
  %v12396 = vadd.f32 %v12394, %v12395
  %v12397 = vsel %vm32, %v12222, 0.0
  %v12398 = vadd.f32 %v12396, %v12397
  %v12399 = vsel %vm32, %v12225, 0.0
  %v12400 = vadd.f32 %v12398, %v12399
  %v12401 = vsel %vm32, %v12228, 0.0
  %v12402 = vadd.f32 %v12400, %v12401
  %v12403 = vsel %vm32, %v12231, 0.0
  %v12404 = vadd.f32 %v12402, %v12403
  %v12405 = vsel %vm32, %v12234, 0.0
  %v12406 = vadd.f32 %v12404, %v12405
  %v12407 = vsel %vm32, %v12237, 0.0
  %v12408 = vadd.f32 %v12406, %v12407
  %v12409 = vsel %vm32, %v12240, 0.0
  %v12410 = vadd.f32 %v12408, %v12409
  %v12411 = vsel %vm32, %v12243, 0.0
  %v12412 = vadd.f32 %v12410, %v12411
  %v12413 = vsel %vm32, %v12246, 0.0
  %v12414 = vadd.f32 %v12412, %v12413
  %v12415 = vsel %vm32, %v12249, 0.0
  %v12416 = vadd.f32 %v12414, %v12415
  %v12417 = vsel %vm32, %v12252, 0.0
  %v12418 = vadd.f32 %v12416, %v12417
  %v12419 = vsel %vm32, %v12255, 0.0
  %v12420 = vadd.f32 %v12418, %v12419
  %v12421 = vsel %vm32, %v12258, 0.0
  %v12422 = vadd.f32 %v12420, %v12421
  %v12423 = vsel %vm32, %v12261, 0.0
  %v12424 = vadd.f32 %v12422, %v12423
  %v12425 = vsel %vm32, %v12264, 0.0
  %v12426 = vadd.f32 %v12424, %v12425
  %v12427 = vsel %vm32, %v12267, 0.0
  %v12428 = vadd.f32 %v12426, %v12427
  %v12429 = vsel %vm32, %v12270, 0.0
  %v12430 = vadd.f32 %v12428, %v12429
  %v12431 = vsel %vm32, %v12273, 0.0
  %v12432 = vadd.f32 %v12430, %v12431
  %v12433 = vsel %vm32, %v12276, 0.0
  %v12434 = vadd.f32 %v12432, %v12433
  %v12435 = vsel %vm32, %v12279, 0.0
  %v12436 = vadd.f32 %v12434, %v12435
  %v12437 = vsel %vm32, %v12282, 0.0
  %v12438 = vadd.f32 %v12436, %v12437
  %v12439 = vsel %vm32, %v12285, 0.0
  %v12440 = vadd.f32 %v12438, %v12439
  %v12441 = vsel %vm32, %v12288, 0.0
  %v12442 = vadd.f32 %v12440, %v12441
  %v12443 = vsel %vm32, %v12291, 0.0
  %v12444 = vadd.f32 %v12442, %v12443
  %v12445 = vsel %vm32, %v12294, 0.0
  %v12446 = vadd.f32 %v12444, %v12445
  %v12447 = vsel %vm32, %v12297, 0.0
  %v12448 = vadd.f32 %v12446, %v12447
  %v12449 = vsel %vm32, %v12300, 0.0
  %v12450 = vadd.f32 %v12448, %v12449
  %v12451 = vsel %vm32, %v12303, 0.0
  %v12452 = vadd.f32 %v12450, %v12451
  %v12453 = vsel %vm32, %v12306, 0.0
  %v12454 = vadd.f32 %v12452, %v12453
  %v12455 = vsel %vm32, %v12309, 0.0
  %v12456 = vadd.f32 %v12454, %v12455
  %v12457 = vsel %vm32, %v12312, 0.0
  %v12458 = vadd.f32 %v12456, %v12457
  %v12459 = vsel %vm32, %v12315, 0.0
  %v12460 = vadd.f32 %v12458, %v12459
  %v12461 = vsel %vm32, %v12318, 0.0
  %v12462 = vadd.f32 %v12460, %v12461
  %v12463 = vsel %vm32, %v12321, 0.0
  %v12464 = vadd.f32 %v12462, %v12463
  %v12465 = vsel %vm32, %v12324, 0.0
  %v12466 = vadd.f32 %v12464, %v12465
  %v12467 = vsel %vm32, %v12327, 0.0
  %v12468 = vadd.f32 %v12466, %v12467
  %v12469 = vsel %vm32, %v12330, 0.0
  %v12470 = vadd.f32 %v12468, %v12469
  %v12471 = vsel %vm32, %v12333, 0.0
  %v12472 = vadd.f32 %v12470, %v12471
  %v12473 = vsel %vm32, %v12336, 0.0
  %v12474 = vadd.f32 %v12472, %v12473
  %v12475 = vsel %vm32, %v12339, 0.0
  %v12476 = vadd.f32 %v12474, %v12475
  %v12477 = vsel %vm32, %v12342, 0.0
  %v12478 = vadd.f32 %v12476, %v12477
  %v12479 = vsel %vm32, %v12345, 0.0
  %v12480 = vadd.f32 %v12478, %v12479
  %v12481 = vsel %vm32, %v12348, 0.0
  %v12482 = vadd.f32 %v12480, %v12481
  %v12483 = vsel %vm32, %v12351, 0.0
  %v12484 = vadd.f32 %v12482, %v12483
  %v12485 = vsel %vm32, %v12354, 0.0
  %v12486 = vadd.f32 %v12484, %v12485
  %v12487 = vsel %vm32, %v12357, 0.0
  %v12488 = vadd.f32 %v12486, %v12487
  %v12489 = vsel %vm32, %v12360, 0.0
  %v12490 = vadd.f32 %v12488, %v12489
  %v12491 = vsel %vm32, %v12363, 0.0
  %v12492 = vadd.f32 %v12490, %v12491
  %v12493 = vsel %vm32, %v12366, 0.0
  %v12494 = vadd.f32 %v12492, %v12493
  %v12495 = vrot.slane %v12494, 4
  %v12496 = vadd.f32 %v12494, %v12495
  %v12497 = vrot.slane %v12496, 2
  %v12498 = vadd.f32 %v12496, %v12497
  %v12499 = vrot.slane %v12498, 1
  %v12500 = vadd.f32 %v12498, %v12499
  %v12501 = vmul.f32 %v12500, %v4002
  %v12502 = vsub.f32 %v12177, %v12501
  %v12503 = vsub.f32 %v12180, %v12501
  %v12504 = vsub.f32 %v12183, %v12501
  %v12505 = vsub.f32 %v12186, %v12501
  %v12506 = vsub.f32 %v12189, %v12501
  %v12507 = vsub.f32 %v12192, %v12501
  %v12508 = vsub.f32 %v12195, %v12501
  %v12509 = vsub.f32 %v12198, %v12501
  %v12510 = vsub.f32 %v12201, %v12501
  %v12511 = vsub.f32 %v12204, %v12501
  %v12512 = vsub.f32 %v12207, %v12501
  %v12513 = vsub.f32 %v12210, %v12501
  %v12514 = vsub.f32 %v12213, %v12501
  %v12515 = vsub.f32 %v12216, %v12501
  %v12516 = vsub.f32 %v12219, %v12501
  %v12517 = vsub.f32 %v12222, %v12501
  %v12518 = vsub.f32 %v12225, %v12501
  %v12519 = vsub.f32 %v12228, %v12501
  %v12520 = vsub.f32 %v12231, %v12501
  %v12521 = vsub.f32 %v12234, %v12501
  %v12522 = vsub.f32 %v12237, %v12501
  %v12523 = vsub.f32 %v12240, %v12501
  %v12524 = vsub.f32 %v12243, %v12501
  %v12525 = vsub.f32 %v12246, %v12501
  %v12526 = vsub.f32 %v12249, %v12501
  %v12527 = vsub.f32 %v12252, %v12501
  %v12528 = vsub.f32 %v12255, %v12501
  %v12529 = vsub.f32 %v12258, %v12501
  %v12530 = vsub.f32 %v12261, %v12501
  %v12531 = vsub.f32 %v12264, %v12501
  %v12532 = vsub.f32 %v12267, %v12501
  %v12533 = vsub.f32 %v12270, %v12501
  %v12534 = vsub.f32 %v12273, %v12501
  %v12535 = vsub.f32 %v12276, %v12501
  %v12536 = vsub.f32 %v12279, %v12501
  %v12537 = vsub.f32 %v12282, %v12501
  %v12538 = vsub.f32 %v12285, %v12501
  %v12539 = vsub.f32 %v12288, %v12501
  %v12540 = vsub.f32 %v12291, %v12501
  %v12541 = vsub.f32 %v12294, %v12501
  %v12542 = vsub.f32 %v12297, %v12501
  %v12543 = vsub.f32 %v12300, %v12501
  %v12544 = vsub.f32 %v12303, %v12501
  %v12545 = vsub.f32 %v12306, %v12501
  %v12546 = vsub.f32 %v12309, %v12501
  %v12547 = vsub.f32 %v12312, %v12501
  %v12548 = vsub.f32 %v12315, %v12501
  %v12549 = vsub.f32 %v12318, %v12501
  %v12550 = vsub.f32 %v12321, %v12501
  %v12551 = vsub.f32 %v12324, %v12501
  %v12552 = vsub.f32 %v12327, %v12501
  %v12553 = vsub.f32 %v12330, %v12501
  %v12554 = vsub.f32 %v12333, %v12501
  %v12555 = vsub.f32 %v12336, %v12501
  %v12556 = vsub.f32 %v12339, %v12501
  %v12557 = vsub.f32 %v12342, %v12501
  %v12558 = vsub.f32 %v12345, %v12501
  %v12559 = vsub.f32 %v12348, %v12501
  %v12560 = vsub.f32 %v12351, %v12501
  %v12561 = vsub.f32 %v12354, %v12501
  %v12562 = vsub.f32 %v12357, %v12501
  %v12563 = vsub.f32 %v12360, %v12501
  %v12564 = vsub.f32 %v12363, %v12501
  %v12565 = vsub.f32 %v12366, %v12501
  %v12566 = vmul.f32 %v12502, %v12502
  %v12567 = vmul.f32 %v12503, %v12503
  %v12568 = vmul.f32 %v12504, %v12504
  %v12569 = vmul.f32 %v12505, %v12505
  %v12570 = vmul.f32 %v12506, %v12506
  %v12571 = vmul.f32 %v12507, %v12507
  %v12572 = vmul.f32 %v12508, %v12508
  %v12573 = vmul.f32 %v12509, %v12509
  %v12574 = vmul.f32 %v12510, %v12510
  %v12575 = vmul.f32 %v12511, %v12511
  %v12576 = vmul.f32 %v12512, %v12512
  %v12577 = vmul.f32 %v12513, %v12513
  %v12578 = vmul.f32 %v12514, %v12514
  %v12579 = vmul.f32 %v12515, %v12515
  %v12580 = vmul.f32 %v12516, %v12516
  %v12581 = vmul.f32 %v12517, %v12517
  %v12582 = vmul.f32 %v12518, %v12518
  %v12583 = vmul.f32 %v12519, %v12519
  %v12584 = vmul.f32 %v12520, %v12520
  %v12585 = vmul.f32 %v12521, %v12521
  %v12586 = vmul.f32 %v12522, %v12522
  %v12587 = vmul.f32 %v12523, %v12523
  %v12588 = vmul.f32 %v12524, %v12524
  %v12589 = vmul.f32 %v12525, %v12525
  %v12590 = vmul.f32 %v12526, %v12526
  %v12591 = vmul.f32 %v12527, %v12527
  %v12592 = vmul.f32 %v12528, %v12528
  %v12593 = vmul.f32 %v12529, %v12529
  %v12594 = vmul.f32 %v12530, %v12530
  %v12595 = vmul.f32 %v12531, %v12531
  %v12596 = vmul.f32 %v12532, %v12532
  %v12597 = vmul.f32 %v12533, %v12533
  %v12598 = vmul.f32 %v12534, %v12534
  %v12599 = vmul.f32 %v12535, %v12535
  %v12600 = vmul.f32 %v12536, %v12536
  %v12601 = vmul.f32 %v12537, %v12537
  %v12602 = vmul.f32 %v12538, %v12538
  %v12603 = vmul.f32 %v12539, %v12539
  %v12604 = vmul.f32 %v12540, %v12540
  %v12605 = vmul.f32 %v12541, %v12541
  %v12606 = vmul.f32 %v12542, %v12542
  %v12607 = vmul.f32 %v12543, %v12543
  %v12608 = vmul.f32 %v12544, %v12544
  %v12609 = vmul.f32 %v12545, %v12545
  %v12610 = vmul.f32 %v12546, %v12546
  %v12611 = vmul.f32 %v12547, %v12547
  %v12612 = vmul.f32 %v12548, %v12548
  %v12613 = vmul.f32 %v12549, %v12549
  %v12614 = vmul.f32 %v12550, %v12550
  %v12615 = vmul.f32 %v12551, %v12551
  %v12616 = vmul.f32 %v12552, %v12552
  %v12617 = vmul.f32 %v12553, %v12553
  %v12618 = vmul.f32 %v12554, %v12554
  %v12619 = vmul.f32 %v12555, %v12555
  %v12620 = vmul.f32 %v12556, %v12556
  %v12621 = vmul.f32 %v12557, %v12557
  %v12622 = vmul.f32 %v12558, %v12558
  %v12623 = vmul.f32 %v12559, %v12559
  %v12624 = vmul.f32 %v12560, %v12560
  %v12625 = vmul.f32 %v12561, %v12561
  %v12626 = vmul.f32 %v12562, %v12562
  %v12627 = vmul.f32 %v12563, %v12563
  %v12628 = vmul.f32 %v12564, %v12564
  %v12629 = vmul.f32 %v12565, %v12565
  %v12630 = vsel %vm32, %v12566, 0.0
  %v12631 = vsel %vm32, %v12567, 0.0
  %v12632 = vadd.f32 %v12630, %v12631
  %v12633 = vsel %vm32, %v12568, 0.0
  %v12634 = vadd.f32 %v12632, %v12633
  %v12635 = vsel %vm32, %v12569, 0.0
  %v12636 = vadd.f32 %v12634, %v12635
  %v12637 = vsel %vm32, %v12570, 0.0
  %v12638 = vadd.f32 %v12636, %v12637
  %v12639 = vsel %vm32, %v12571, 0.0
  %v12640 = vadd.f32 %v12638, %v12639
  %v12641 = vsel %vm32, %v12572, 0.0
  %v12642 = vadd.f32 %v12640, %v12641
  %v12643 = vsel %vm32, %v12573, 0.0
  %v12644 = vadd.f32 %v12642, %v12643
  %v12645 = vsel %vm32, %v12574, 0.0
  %v12646 = vadd.f32 %v12644, %v12645
  %v12647 = vsel %vm32, %v12575, 0.0
  %v12648 = vadd.f32 %v12646, %v12647
  %v12649 = vsel %vm32, %v12576, 0.0
  %v12650 = vadd.f32 %v12648, %v12649
  %v12651 = vsel %vm32, %v12577, 0.0
  %v12652 = vadd.f32 %v12650, %v12651
  %v12653 = vsel %vm32, %v12578, 0.0
  %v12654 = vadd.f32 %v12652, %v12653
  %v12655 = vsel %vm32, %v12579, 0.0
  %v12656 = vadd.f32 %v12654, %v12655
  %v12657 = vsel %vm32, %v12580, 0.0
  %v12658 = vadd.f32 %v12656, %v12657
  %v12659 = vsel %vm32, %v12581, 0.0
  %v12660 = vadd.f32 %v12658, %v12659
  %v12661 = vsel %vm32, %v12582, 0.0
  %v12662 = vadd.f32 %v12660, %v12661
  %v12663 = vsel %vm32, %v12583, 0.0
  %v12664 = vadd.f32 %v12662, %v12663
  %v12665 = vsel %vm32, %v12584, 0.0
  %v12666 = vadd.f32 %v12664, %v12665
  %v12667 = vsel %vm32, %v12585, 0.0
  %v12668 = vadd.f32 %v12666, %v12667
  %v12669 = vsel %vm32, %v12586, 0.0
  %v12670 = vadd.f32 %v12668, %v12669
  %v12671 = vsel %vm32, %v12587, 0.0
  %v12672 = vadd.f32 %v12670, %v12671
  %v12673 = vsel %vm32, %v12588, 0.0
  %v12674 = vadd.f32 %v12672, %v12673
  %v12675 = vsel %vm32, %v12589, 0.0
  %v12676 = vadd.f32 %v12674, %v12675
  %v12677 = vsel %vm32, %v12590, 0.0
  %v12678 = vadd.f32 %v12676, %v12677
  %v12679 = vsel %vm32, %v12591, 0.0
  %v12680 = vadd.f32 %v12678, %v12679
  %v12681 = vsel %vm32, %v12592, 0.0
  %v12682 = vadd.f32 %v12680, %v12681
  %v12683 = vsel %vm32, %v12593, 0.0
  %v12684 = vadd.f32 %v12682, %v12683
  %v12685 = vsel %vm32, %v12594, 0.0
  %v12686 = vadd.f32 %v12684, %v12685
  %v12687 = vsel %vm32, %v12595, 0.0
  %v12688 = vadd.f32 %v12686, %v12687
  %v12689 = vsel %vm32, %v12596, 0.0
  %v12690 = vadd.f32 %v12688, %v12689
  %v12691 = vsel %vm32, %v12597, 0.0
  %v12692 = vadd.f32 %v12690, %v12691
  %v12693 = vsel %vm32, %v12598, 0.0
  %v12694 = vadd.f32 %v12692, %v12693
  %v12695 = vsel %vm32, %v12599, 0.0
  %v12696 = vadd.f32 %v12694, %v12695
  %v12697 = vsel %vm32, %v12600, 0.0
  %v12698 = vadd.f32 %v12696, %v12697
  %v12699 = vsel %vm32, %v12601, 0.0
  %v12700 = vadd.f32 %v12698, %v12699
  %v12701 = vsel %vm32, %v12602, 0.0
  %v12702 = vadd.f32 %v12700, %v12701
  %v12703 = vsel %vm32, %v12603, 0.0
  %v12704 = vadd.f32 %v12702, %v12703
  %v12705 = vsel %vm32, %v12604, 0.0
  %v12706 = vadd.f32 %v12704, %v12705
  %v12707 = vsel %vm32, %v12605, 0.0
  %v12708 = vadd.f32 %v12706, %v12707
  %v12709 = vsel %vm32, %v12606, 0.0
  %v12710 = vadd.f32 %v12708, %v12709
  %v12711 = vsel %vm32, %v12607, 0.0
  %v12712 = vadd.f32 %v12710, %v12711
  %v12713 = vsel %vm32, %v12608, 0.0
  %v12714 = vadd.f32 %v12712, %v12713
  %v12715 = vsel %vm32, %v12609, 0.0
  %v12716 = vadd.f32 %v12714, %v12715
  %v12717 = vsel %vm32, %v12610, 0.0
  %v12718 = vadd.f32 %v12716, %v12717
  %v12719 = vsel %vm32, %v12611, 0.0
  %v12720 = vadd.f32 %v12718, %v12719
  %v12721 = vsel %vm32, %v12612, 0.0
  %v12722 = vadd.f32 %v12720, %v12721
  %v12723 = vsel %vm32, %v12613, 0.0
  %v12724 = vadd.f32 %v12722, %v12723
  %v12725 = vsel %vm32, %v12614, 0.0
  %v12726 = vadd.f32 %v12724, %v12725
  %v12727 = vsel %vm32, %v12615, 0.0
  %v12728 = vadd.f32 %v12726, %v12727
  %v12729 = vsel %vm32, %v12616, 0.0
  %v12730 = vadd.f32 %v12728, %v12729
  %v12731 = vsel %vm32, %v12617, 0.0
  %v12732 = vadd.f32 %v12730, %v12731
  %v12733 = vsel %vm32, %v12618, 0.0
  %v12734 = vadd.f32 %v12732, %v12733
  %v12735 = vsel %vm32, %v12619, 0.0
  %v12736 = vadd.f32 %v12734, %v12735
  %v12737 = vsel %vm32, %v12620, 0.0
  %v12738 = vadd.f32 %v12736, %v12737
  %v12739 = vsel %vm32, %v12621, 0.0
  %v12740 = vadd.f32 %v12738, %v12739
  %v12741 = vsel %vm32, %v12622, 0.0
  %v12742 = vadd.f32 %v12740, %v12741
  %v12743 = vsel %vm32, %v12623, 0.0
  %v12744 = vadd.f32 %v12742, %v12743
  %v12745 = vsel %vm32, %v12624, 0.0
  %v12746 = vadd.f32 %v12744, %v12745
  %v12747 = vsel %vm32, %v12625, 0.0
  %v12748 = vadd.f32 %v12746, %v12747
  %v12749 = vsel %vm32, %v12626, 0.0
  %v12750 = vadd.f32 %v12748, %v12749
  %v12751 = vsel %vm32, %v12627, 0.0
  %v12752 = vadd.f32 %v12750, %v12751
  %v12753 = vsel %vm32, %v12628, 0.0
  %v12754 = vadd.f32 %v12752, %v12753
  %v12755 = vsel %vm32, %v12629, 0.0
  %v12756 = vadd.f32 %v12754, %v12755
  %v12757 = vrot.slane %v12756, 4
  %v12758 = vadd.f32 %v12756, %v12757
  %v12759 = vrot.slane %v12758, 2
  %v12760 = vadd.f32 %v12758, %v12759
  %v12761 = vrot.slane %v12760, 1
  %v12762 = vadd.f32 %v12760, %v12761
  %v12763 = vmul.f32 %v12762, %v4002
  %v12764 = vadd.f32 %v12763, 1e-05
  %v12765 = vrsqrt.pop %v12764
  %v12766 = vmul.f32 %v12765, %v12764
  %v12767 = vmul.f32 %v12766, %v12765
  %v12768 = vmul.f32 0.5, %v12767
  %v12769 = vsub.f32 1.5, %v12768
  %v12770 = vmul.f32 %v12765, %v12769
  %vm12771 = vweird.f32 %v12764
  %vm12772 = vweird.f32 %v12765
  %vm12773 = vmor %vm12771, %vm12772
  %v12774 = vsel %vm12773, %v12765, %v12770
  %v12775 = vmul.f32 %v12502, %v12774
  %v12776 = vmul.f32 %v12503, %v12774
  %v12777 = vmul.f32 %v12504, %v12774
  %v12778 = vmul.f32 %v12505, %v12774
  %v12779 = vmul.f32 %v12506, %v12774
  %v12780 = vmul.f32 %v12507, %v12774
  %v12781 = vmul.f32 %v12508, %v12774
  %v12782 = vmul.f32 %v12509, %v12774
  %v12783 = vmul.f32 %v12510, %v12774
  %v12784 = vmul.f32 %v12511, %v12774
  %v12785 = vmul.f32 %v12512, %v12774
  %v12786 = vmul.f32 %v12513, %v12774
  %v12787 = vmul.f32 %v12514, %v12774
  %v12788 = vmul.f32 %v12515, %v12774
  %v12789 = vmul.f32 %v12516, %v12774
  %v12790 = vmul.f32 %v12517, %v12774
  %v12791 = vmul.f32 %v12518, %v12774
  %v12792 = vmul.f32 %v12519, %v12774
  %v12793 = vmul.f32 %v12520, %v12774
  %v12794 = vmul.f32 %v12521, %v12774
  %v12795 = vmul.f32 %v12522, %v12774
  %v12796 = vmul.f32 %v12523, %v12774
  %v12797 = vmul.f32 %v12524, %v12774
  %v12798 = vmul.f32 %v12525, %v12774
  %v12799 = vmul.f32 %v12526, %v12774
  %v12800 = vmul.f32 %v12527, %v12774
  %v12801 = vmul.f32 %v12528, %v12774
  %v12802 = vmul.f32 %v12529, %v12774
  %v12803 = vmul.f32 %v12530, %v12774
  %v12804 = vmul.f32 %v12531, %v12774
  %v12805 = vmul.f32 %v12532, %v12774
  %v12806 = vmul.f32 %v12533, %v12774
  %v12807 = vmul.f32 %v12534, %v12774
  %v12808 = vmul.f32 %v12535, %v12774
  %v12809 = vmul.f32 %v12536, %v12774
  %v12810 = vmul.f32 %v12537, %v12774
  %v12811 = vmul.f32 %v12538, %v12774
  %v12812 = vmul.f32 %v12539, %v12774
  %v12813 = vmul.f32 %v12540, %v12774
  %v12814 = vmul.f32 %v12541, %v12774
  %v12815 = vmul.f32 %v12542, %v12774
  %v12816 = vmul.f32 %v12543, %v12774
  %v12817 = vmul.f32 %v12544, %v12774
  %v12818 = vmul.f32 %v12545, %v12774
  %v12819 = vmul.f32 %v12546, %v12774
  %v12820 = vmul.f32 %v12547, %v12774
  %v12821 = vmul.f32 %v12548, %v12774
  %v12822 = vmul.f32 %v12549, %v12774
  %v12823 = vmul.f32 %v12550, %v12774
  %v12824 = vmul.f32 %v12551, %v12774
  %v12825 = vmul.f32 %v12552, %v12774
  %v12826 = vmul.f32 %v12553, %v12774
  %v12827 = vmul.f32 %v12554, %v12774
  %v12828 = vmul.f32 %v12555, %v12774
  %v12829 = vmul.f32 %v12556, %v12774
  %v12830 = vmul.f32 %v12557, %v12774
  %v12831 = vmul.f32 %v12558, %v12774
  %v12832 = vmul.f32 %v12559, %v12774
  %v12833 = vmul.f32 %v12560, %v12774
  %v12834 = vmul.f32 %v12561, %v12774
  %v12835 = vmul.f32 %v12562, %v12774
  %v12836 = vmul.f32 %v12563, %v12774
  %v12837 = vmul.f32 %v12564, %v12774
  %v12838 = vmul.f32 %v12565, %v12774
  %v12839 = vld [vmem:[%s7] sm:$0x1]
  %v12841 = vperm.slane %v12839, 0
  %v12843 = vmul.f32 %v12775, %v12841
  %v12844 = vmul.f32 %v12776, %v12841
  %v12845 = vmul.f32 %v12777, %v12841
  %v12846 = vmul.f32 %v12778, %v12841
  %v12847 = vmul.f32 %v12779, %v12841
  %v12848 = vmul.f32 %v12780, %v12841
  %v12849 = vmul.f32 %v12781, %v12841
  %v12850 = vmul.f32 %v12782, %v12841
  %v12851 = vmul.f32 %v12783, %v12841
  %v12852 = vmul.f32 %v12784, %v12841
  %v12853 = vmul.f32 %v12785, %v12841
  %v12854 = vmul.f32 %v12786, %v12841
  %v12855 = vmul.f32 %v12787, %v12841
  %v12856 = vmul.f32 %v12788, %v12841
  %v12857 = vmul.f32 %v12789, %v12841
  %v12858 = vmul.f32 %v12790, %v12841
  %v12859 = vmul.f32 %v12791, %v12841
  %v12860 = vmul.f32 %v12792, %v12841
  %v12861 = vmul.f32 %v12793, %v12841
  %v12862 = vmul.f32 %v12794, %v12841
  %v12863 = vmul.f32 %v12795, %v12841
  %v12864 = vmul.f32 %v12796, %v12841
  %v12865 = vmul.f32 %v12797, %v12841
  %v12866 = vmul.f32 %v12798, %v12841
  %v12867 = vmul.f32 %v12799, %v12841
  %v12868 = vmul.f32 %v12800, %v12841
  %v12869 = vmul.f32 %v12801, %v12841
  %v12870 = vmul.f32 %v12802, %v12841
  %v12871 = vmul.f32 %v12803, %v12841
  %v12872 = vmul.f32 %v12804, %v12841
  %v12873 = vmul.f32 %v12805, %v12841
  %v12874 = vmul.f32 %v12806, %v12841
  %v12875 = vmul.f32 %v12807, %v12841
  %v12876 = vmul.f32 %v12808, %v12841
  %v12877 = vmul.f32 %v12809, %v12841
  %v12878 = vmul.f32 %v12810, %v12841
  %v12879 = vmul.f32 %v12811, %v12841
  %v12880 = vmul.f32 %v12812, %v12841
  %v12881 = vmul.f32 %v12813, %v12841
  %v12882 = vmul.f32 %v12814, %v12841
  %v12883 = vmul.f32 %v12815, %v12841
  %v12884 = vmul.f32 %v12816, %v12841
  %v12885 = vmul.f32 %v12817, %v12841
  %v12886 = vmul.f32 %v12818, %v12841
  %v12887 = vmul.f32 %v12819, %v12841
  %v12888 = vmul.f32 %v12820, %v12841
  %v12889 = vmul.f32 %v12821, %v12841
  %v12890 = vmul.f32 %v12822, %v12841
  %v12891 = vmul.f32 %v12823, %v12841
  %v12892 = vmul.f32 %v12824, %v12841
  %v12893 = vmul.f32 %v12825, %v12841
  %v12894 = vmul.f32 %v12826, %v12841
  %v12895 = vmul.f32 %v12827, %v12841
  %v12896 = vmul.f32 %v12828, %v12841
  %v12897 = vmul.f32 %v12829, %v12841
  %v12898 = vmul.f32 %v12830, %v12841
  %v12899 = vmul.f32 %v12831, %v12841
  %v12900 = vmul.f32 %v12832, %v12841
  %v12901 = vmul.f32 %v12833, %v12841
  %v12902 = vmul.f32 %v12834, %v12841
  %v12903 = vmul.f32 %v12835, %v12841
  %v12904 = vmul.f32 %v12836, %v12841
  %v12905 = vmul.f32 %v12837, %v12841
  %v12906 = vmul.f32 %v12838, %v12841
  %v12907 = vld [vmem:[%s8] sm:$0x1]
  %v12909 = vperm.slane %v12907, 0
  %v12911 = vadd.f32 %v12843, %v12909
  %v12912 = vadd.f32 %v12844, %v12909
  %v12913 = vadd.f32 %v12845, %v12909
  %v12914 = vadd.f32 %v12846, %v12909
  %v12915 = vadd.f32 %v12847, %v12909
  %v12916 = vadd.f32 %v12848, %v12909
  %v12917 = vadd.f32 %v12849, %v12909
  %v12918 = vadd.f32 %v12850, %v12909
  %v12919 = vadd.f32 %v12851, %v12909
  %v12920 = vadd.f32 %v12852, %v12909
  %v12921 = vadd.f32 %v12853, %v12909
  %v12922 = vadd.f32 %v12854, %v12909
  %v12923 = vadd.f32 %v12855, %v12909
  %v12924 = vadd.f32 %v12856, %v12909
  %v12925 = vadd.f32 %v12857, %v12909
  %v12926 = vadd.f32 %v12858, %v12909
  %v12927 = vadd.f32 %v12859, %v12909
  %v12928 = vadd.f32 %v12860, %v12909
  %v12929 = vadd.f32 %v12861, %v12909
  %v12930 = vadd.f32 %v12862, %v12909
  %v12931 = vadd.f32 %v12863, %v12909
  %v12932 = vadd.f32 %v12864, %v12909
  %v12933 = vadd.f32 %v12865, %v12909
  %v12934 = vadd.f32 %v12866, %v12909
  %v12935 = vadd.f32 %v12867, %v12909
  %v12936 = vadd.f32 %v12868, %v12909
  %v12937 = vadd.f32 %v12869, %v12909
  %v12938 = vadd.f32 %v12870, %v12909
  %v12939 = vadd.f32 %v12871, %v12909
  %v12940 = vadd.f32 %v12872, %v12909
  %v12941 = vadd.f32 %v12873, %v12909
  %v12942 = vadd.f32 %v12874, %v12909
  %v12943 = vadd.f32 %v12875, %v12909
  %v12944 = vadd.f32 %v12876, %v12909
  %v12945 = vadd.f32 %v12877, %v12909
  %v12946 = vadd.f32 %v12878, %v12909
  %v12947 = vadd.f32 %v12879, %v12909
  %v12948 = vadd.f32 %v12880, %v12909
  %v12949 = vadd.f32 %v12881, %v12909
  %v12950 = vadd.f32 %v12882, %v12909
  %v12951 = vadd.f32 %v12883, %v12909
  %v12952 = vadd.f32 %v12884, %v12909
  %v12953 = vadd.f32 %v12885, %v12909
  %v12954 = vadd.f32 %v12886, %v12909
  %v12955 = vadd.f32 %v12887, %v12909
  %v12956 = vadd.f32 %v12888, %v12909
  %v12957 = vadd.f32 %v12889, %v12909
  %v12958 = vadd.f32 %v12890, %v12909
  %v12959 = vadd.f32 %v12891, %v12909
  %v12960 = vadd.f32 %v12892, %v12909
  %v12961 = vadd.f32 %v12893, %v12909
  %v12962 = vadd.f32 %v12894, %v12909
  %v12963 = vadd.f32 %v12895, %v12909
  %v12964 = vadd.f32 %v12896, %v12909
  %v12965 = vadd.f32 %v12897, %v12909
  %v12966 = vadd.f32 %v12898, %v12909
  %v12967 = vadd.f32 %v12899, %v12909
  %v12968 = vadd.f32 %v12900, %v12909
  %v12969 = vadd.f32 %v12901, %v12909
  %v12970 = vadd.f32 %v12902, %v12909
  %v12971 = vadd.f32 %v12903, %v12909
  %v12972 = vadd.f32 %v12904, %v12909
  %v12973 = vadd.f32 %v12905, %v12909
  %v12974 = vadd.f32 %v12906, %v12909
  %v12975 = vld [vmem:[%s0] sm:$0xff]
  %v12976 = vld [vmem:[%s0 + $0x8] sm:$0xff]
  %v12977 = vld [vmem:[%s0 + $0x10] sm:$0xff]
  %v12978 = vld [vmem:[%s0 + $0x18] sm:$0xff]
  %v12979 = vld [vmem:[%s0 + $0x20] sm:$0xff]
  %v12980 = vld [vmem:[%s0 + $0x28] sm:$0xff]
  %v12981 = vld [vmem:[%s0 + $0x30] sm:$0xff]
  %v12982 = vld [vmem:[%s0 + $0x38] sm:$0xff]
  %v12983 = vld [vmem:[%s0 + $0x40] sm:$0xff]
  %v12984 = vld [vmem:[%s0 + $0x48] sm:$0xff]
  %v12985 = vld [vmem:[%s0 + $0x50] sm:$0xff]
  %v12986 = vld [vmem:[%s0 + $0x58] sm:$0xff]
  %v12987 = vld [vmem:[%s0 + $0x60] sm:$0xff]
  %v12988 = vld [vmem:[%s0 + $0x68] sm:$0xff]
  %v12989 = vld [vmem:[%s0 + $0x70] sm:$0xff]
  %v12990 = vld [vmem:[%s0 + $0x78] sm:$0xff]
  %v12991 = vld [vmem:[%s0 + $0x80] sm:$0xff]
  %v12992 = vld [vmem:[%s0 + $0x88] sm:$0xff]
  %v12993 = vld [vmem:[%s0 + $0x90] sm:$0xff]
  %v12994 = vld [vmem:[%s0 + $0x98] sm:$0xff]
  %v12995 = vld [vmem:[%s0 + $0xa0] sm:$0xff]
  %v12996 = vld [vmem:[%s0 + $0xa8] sm:$0xff]
  %v12997 = vld [vmem:[%s0 + $0xb0] sm:$0xff]
  %v12998 = vld [vmem:[%s0 + $0xb8] sm:$0xff]
  %v12999 = vld [vmem:[%s0 + $0xc0] sm:$0xff]
  %v13000 = vld [vmem:[%s0 + $0xc8] sm:$0xff]
  %v13001 = vld [vmem:[%s0 + $0xd0] sm:$0xff]
  %v13002 = vld [vmem:[%s0 + $0xd8] sm:$0xff]
  %v13003 = vld [vmem:[%s0 + $0xe0] sm:$0xff]
  %v13004 = vld [vmem:[%s0 + $0xe8] sm:$0xff]
  %v13005 = vld [vmem:[%s0 + $0xf0] sm:$0xff]
  %v13006 = vld [vmem:[%s0 + $0xf8] sm:$0xff]
  %v13007 = vld [vmem:[%s0 + $0x100] sm:$0xff]
  %v13008 = vld [vmem:[%s0 + $0x108] sm:$0xff]
  %v13009 = vld [vmem:[%s0 + $0x110] sm:$0xff]
  %v13010 = vld [vmem:[%s0 + $0x118] sm:$0xff]
  %v13011 = vld [vmem:[%s0 + $0x120] sm:$0xff]
  %v13012 = vld [vmem:[%s0 + $0x128] sm:$0xff]
  %v13013 = vld [vmem:[%s0 + $0x130] sm:$0xff]
  %v13014 = vld [vmem:[%s0 + $0x138] sm:$0xff]
  %v13015 = vld [vmem:[%s0 + $0x140] sm:$0xff]
  %v13016 = vld [vmem:[%s0 + $0x148] sm:$0xff]
  %v13017 = vld [vmem:[%s0 + $0x150] sm:$0xff]
  %v13018 = vld [vmem:[%s0 + $0x158] sm:$0xff]
  %v13019 = vld [vmem:[%s0 + $0x160] sm:$0xff]
  %v13020 = vld [vmem:[%s0 + $0x168] sm:$0xff]
  %v13021 = vld [vmem:[%s0 + $0x170] sm:$0xff]
  %v13022 = vld [vmem:[%s0 + $0x178] sm:$0xff]
  %v13023 = vld [vmem:[%s0 + $0x180] sm:$0xff]
  %v13024 = vld [vmem:[%s0 + $0x188] sm:$0xff]
  %v13025 = vld [vmem:[%s0 + $0x190] sm:$0xff]
  %v13026 = vld [vmem:[%s0 + $0x198] sm:$0xff]
  %v13027 = vld [vmem:[%s0 + $0x1a0] sm:$0xff]
  %v13028 = vld [vmem:[%s0 + $0x1a8] sm:$0xff]
  %v13029 = vld [vmem:[%s0 + $0x1b0] sm:$0xff]
  %v13030 = vld [vmem:[%s0 + $0x1b8] sm:$0xff]
  %v13031 = vld [vmem:[%s0 + $0x1c0] sm:$0xff]
  %v13032 = vld [vmem:[%s0 + $0x1c8] sm:$0xff]
  %v13033 = vld [vmem:[%s0 + $0x1d0] sm:$0xff]
  %v13034 = vld [vmem:[%s0 + $0x1d8] sm:$0xff]
  %v13035 = vld [vmem:[%s0 + $0x1e0] sm:$0xff]
  %v13036 = vld [vmem:[%s0 + $0x1e8] sm:$0xff]
  %v13037 = vld [vmem:[%s0 + $0x1f0] sm:$0xff]
  %v13038 = vld [vmem:[%s0 + $0x1f8] sm:$0xff]
  %v13039 = vld [vmem:[%s3] sm:$0xf]
  %v13040 = vld [vmem:[%s4] sm:$0x1]
  %v13042 = vperm.slane %v13040, 0
  %v13045 = vsel %vm243, %v12975, 0
  %v13048 = vsel %vm243, %v12976, 0
  %v13051 = vsel %vm243, %v12977, 0
  %v13054 = vsel %vm243, %v12978, 0
  %v13057 = vsel %vm243, %v12979, 0
  %v13060 = vsel %vm243, %v12980, 0
  %v13063 = vsel %vm243, %v12981, 0
  %v13066 = vsel %vm243, %v12982, 0
  %v13069 = vsel %vm243, %v12983, 0
  %v13072 = vsel %vm243, %v12984, 0
  %v13075 = vsel %vm243, %v12985, 0
  %v13078 = vsel %vm243, %v12986, 0
  %v13081 = vsel %vm243, %v12987, 0
  %v13084 = vsel %vm243, %v12988, 0
  %v13087 = vsel %vm243, %v12989, 0
  %v13090 = vsel %vm243, %v12990, 0
  %v13093 = vsel %vm243, %v12991, 0
  %v13096 = vsel %vm243, %v12992, 0
  %v13099 = vsel %vm243, %v12993, 0
  %v13102 = vsel %vm243, %v12994, 0
  %v13105 = vsel %vm243, %v12995, 0
  %v13108 = vsel %vm243, %v12996, 0
  %v13111 = vsel %vm243, %v12997, 0
  %v13114 = vsel %vm243, %v12998, 0
  %v13117 = vsel %vm243, %v12999, 0
  %v13120 = vsel %vm243, %v13000, 0
  %v13123 = vsel %vm243, %v13001, 0
  %v13126 = vsel %vm243, %v13002, 0
  %v13129 = vsel %vm243, %v13003, 0
  %v13132 = vsel %vm243, %v13004, 0
  %v13135 = vsel %vm243, %v13005, 0
  %v13138 = vsel %vm243, %v13006, 0
  %v13141 = vsel %vm243, %v13007, 0
  %v13144 = vsel %vm243, %v13008, 0
  %v13147 = vsel %vm243, %v13009, 0
  %v13150 = vsel %vm243, %v13010, 0
  %v13153 = vsel %vm243, %v13011, 0
  %v13156 = vsel %vm243, %v13012, 0
  %v13159 = vsel %vm243, %v13013, 0
  %v13162 = vsel %vm243, %v13014, 0
  %v13165 = vsel %vm243, %v13015, 0
  %v13168 = vsel %vm243, %v13016, 0
  %v13171 = vsel %vm243, %v13017, 0
  %v13174 = vsel %vm243, %v13018, 0
  %v13177 = vsel %vm243, %v13019, 0
  %v13180 = vsel %vm243, %v13020, 0
  %v13183 = vsel %vm243, %v13021, 0
  %v13186 = vsel %vm243, %v13022, 0
  %v13189 = vsel %vm243, %v13023, 0
  %v13192 = vsel %vm243, %v13024, 0
  %v13195 = vsel %vm243, %v13025, 0
  %v13198 = vsel %vm243, %v13026, 0
  %v13201 = vsel %vm243, %v13027, 0
  %v13204 = vsel %vm243, %v13028, 0
  %v13207 = vsel %vm243, %v13029, 0
  %v13210 = vsel %vm243, %v13030, 0
  %v13213 = vsel %vm243, %v13031, 0
  %v13216 = vsel %vm243, %v13032, 0
  %v13219 = vsel %vm243, %v13033, 0
  %v13222 = vsel %vm243, %v13034, 0
  %v13225 = vsel %vm243, %v13035, 0
  %v13228 = vsel %vm243, %v13036, 0
  %v13231 = vsel %vm243, %v13037, 0
  %v13234 = vsel %vm243, %v13038, 0
  %vm13236 = vcmask 1043456
  %v13238 = vsel %vm13236, %v13039, 0
  %13240 = vmatpush.msra.mxu0 0.0
  %13241 = vmatpush.msra.mxu0 0.0
  %13242 = vmatpush.msra.mxu0 0.0
  %13243 = vmatpush.msra.mxu0 0.0
  %13244 = vmatpush.msra.mxu0 0.0
  %13245 = vmatpush.msra.mxu0 0.0
  %13246 = vmatpush.msra.mxu0 0.0
  %13247 = vmatpush.msra.mxu0 0.0
  %13248 = vmatpush.msra.mxu0 0.0
  %13249 = vmatpush.msra.mxu0 0.0
  %13250 = vmatpush.msra.mxu0 0.0
  %13251 = vmatpush.msra.mxu0 0.0
  %13252 = vmatpush.msra.mxu0 0.0
  %13253 = vmatpush.msra.mxu0 0.0
  %13254 = vmatpush.msra.mxu0 0.0
  %13255 = vmatpush.msra.mxu0 %v13238
  %13256 = vmatmul.f32.gmra.mxu0 %v13045
  %v13257 = vpop.f32.mrf.mxu0
  %v13258 = vadd.f32 %v13042, %v13257
  %13259 = vmatmul.f32.gmra.mxu0 %v13048
  %v13260 = vpop.f32.mrf.mxu0
  %v13261 = vadd.f32 %v13042, %v13260
  %13262 = vmatmul.f32.gmra.mxu0 %v13051
  %v13263 = vpop.f32.mrf.mxu0
  %v13264 = vadd.f32 %v13042, %v13263
  %13265 = vmatmul.f32.gmra.mxu0 %v13054
  %v13266 = vpop.f32.mrf.mxu0
  %v13267 = vadd.f32 %v13042, %v13266
  %13268 = vmatmul.f32.gmra.mxu0 %v13057
  %v13269 = vpop.f32.mrf.mxu0
  %v13270 = vadd.f32 %v13042, %v13269
  %13271 = vmatmul.f32.gmra.mxu0 %v13060
  %v13272 = vpop.f32.mrf.mxu0
  %v13273 = vadd.f32 %v13042, %v13272
  %13274 = vmatmul.f32.gmra.mxu0 %v13063
  %v13275 = vpop.f32.mrf.mxu0
  %v13276 = vadd.f32 %v13042, %v13275
  %13277 = vmatmul.f32.gmra.mxu0 %v13066
  %v13278 = vpop.f32.mrf.mxu0
  %v13279 = vadd.f32 %v13042, %v13278
  %13280 = vmatmul.f32.gmra.mxu0 %v13069
  %v13281 = vpop.f32.mrf.mxu0
  %v13282 = vadd.f32 %v13042, %v13281
  %13283 = vmatmul.f32.gmra.mxu0 %v13072
  %v13284 = vpop.f32.mrf.mxu0
  %v13285 = vadd.f32 %v13042, %v13284
  %13286 = vmatmul.f32.gmra.mxu0 %v13075
  %v13287 = vpop.f32.mrf.mxu0
  %v13288 = vadd.f32 %v13042, %v13287
  %13289 = vmatmul.f32.gmra.mxu0 %v13078
  %v13290 = vpop.f32.mrf.mxu0
  %v13291 = vadd.f32 %v13042, %v13290
  %13292 = vmatmul.f32.gmra.mxu0 %v13081
  %v13293 = vpop.f32.mrf.mxu0
  %v13294 = vadd.f32 %v13042, %v13293
  %13295 = vmatmul.f32.gmra.mxu0 %v13084
  %v13296 = vpop.f32.mrf.mxu0
  %v13297 = vadd.f32 %v13042, %v13296
  %13298 = vmatmul.f32.gmra.mxu0 %v13087
  %v13299 = vpop.f32.mrf.mxu0
  %v13300 = vadd.f32 %v13042, %v13299
  %13301 = vmatmul.f32.gmra.mxu0 %v13090
  %v13302 = vpop.f32.mrf.mxu0
  %v13303 = vadd.f32 %v13042, %v13302
  %13304 = vmatmul.f32.gmra.mxu0 %v13093
  %v13305 = vpop.f32.mrf.mxu0
  %v13306 = vadd.f32 %v13042, %v13305
  %13307 = vmatmul.f32.gmra.mxu0 %v13096
  %v13308 = vpop.f32.mrf.mxu0
  %v13309 = vadd.f32 %v13042, %v13308
  %13310 = vmatmul.f32.gmra.mxu0 %v13099
  %v13311 = vpop.f32.mrf.mxu0
  %v13312 = vadd.f32 %v13042, %v13311
  %13313 = vmatmul.f32.gmra.mxu0 %v13102
  %v13314 = vpop.f32.mrf.mxu0
  %v13315 = vadd.f32 %v13042, %v13314
  %13316 = vmatmul.f32.gmra.mxu0 %v13105
  %v13317 = vpop.f32.mrf.mxu0
  %v13318 = vadd.f32 %v13042, %v13317
  %13319 = vmatmul.f32.gmra.mxu0 %v13108
  %v13320 = vpop.f32.mrf.mxu0
  %v13321 = vadd.f32 %v13042, %v13320
  %13322 = vmatmul.f32.gmra.mxu0 %v13111
  %v13323 = vpop.f32.mrf.mxu0
  %v13324 = vadd.f32 %v13042, %v13323
  %13325 = vmatmul.f32.gmra.mxu0 %v13114
  %v13326 = vpop.f32.mrf.mxu0
  %v13327 = vadd.f32 %v13042, %v13326
  %13328 = vmatmul.f32.gmra.mxu0 %v13117
  %v13329 = vpop.f32.mrf.mxu0
  %v13330 = vadd.f32 %v13042, %v13329
  %13331 = vmatmul.f32.gmra.mxu0 %v13120
  %v13332 = vpop.f32.mrf.mxu0
  %v13333 = vadd.f32 %v13042, %v13332
  %13334 = vmatmul.f32.gmra.mxu0 %v13123
  %v13335 = vpop.f32.mrf.mxu0
  %v13336 = vadd.f32 %v13042, %v13335
  %13337 = vmatmul.f32.gmra.mxu0 %v13126
  %v13338 = vpop.f32.mrf.mxu0
  %v13339 = vadd.f32 %v13042, %v13338
  %13340 = vmatmul.f32.gmra.mxu0 %v13129
  %v13341 = vpop.f32.mrf.mxu0
  %v13342 = vadd.f32 %v13042, %v13341
  %13343 = vmatmul.f32.gmra.mxu0 %v13132
  %v13344 = vpop.f32.mrf.mxu0
  %v13345 = vadd.f32 %v13042, %v13344
  %13346 = vmatmul.f32.gmra.mxu0 %v13135
  %v13347 = vpop.f32.mrf.mxu0
  %v13348 = vadd.f32 %v13042, %v13347
  %13349 = vmatmul.f32.gmra.mxu0 %v13138
  %v13350 = vpop.f32.mrf.mxu0
  %v13351 = vadd.f32 %v13042, %v13350
  %13352 = vmatmul.f32.gmra.mxu0 %v13141
  %v13353 = vpop.f32.mrf.mxu0
  %v13354 = vadd.f32 %v13042, %v13353
  %13355 = vmatmul.f32.gmra.mxu0 %v13144
  %v13356 = vpop.f32.mrf.mxu0
  %v13357 = vadd.f32 %v13042, %v13356
  %13358 = vmatmul.f32.gmra.mxu0 %v13147
  %v13359 = vpop.f32.mrf.mxu0
  %v13360 = vadd.f32 %v13042, %v13359
  %13361 = vmatmul.f32.gmra.mxu0 %v13150
  %v13362 = vpop.f32.mrf.mxu0
  %v13363 = vadd.f32 %v13042, %v13362
  %13364 = vmatmul.f32.gmra.mxu0 %v13153
  %v13365 = vpop.f32.mrf.mxu0
  %v13366 = vadd.f32 %v13042, %v13365
  %13367 = vmatmul.f32.gmra.mxu0 %v13156
  %v13368 = vpop.f32.mrf.mxu0
  %v13369 = vadd.f32 %v13042, %v13368
  %13370 = vmatmul.f32.gmra.mxu0 %v13159
  %v13371 = vpop.f32.mrf.mxu0
  %v13372 = vadd.f32 %v13042, %v13371
  %13373 = vmatmul.f32.gmra.mxu0 %v13162
  %v13374 = vpop.f32.mrf.mxu0
  %v13375 = vadd.f32 %v13042, %v13374
  %13376 = vmatmul.f32.gmra.mxu0 %v13165
  %v13377 = vpop.f32.mrf.mxu0
  %v13378 = vadd.f32 %v13042, %v13377
  %13379 = vmatmul.f32.gmra.mxu0 %v13168
  %v13380 = vpop.f32.mrf.mxu0
  %v13381 = vadd.f32 %v13042, %v13380
  %13382 = vmatmul.f32.gmra.mxu0 %v13171
  %v13383 = vpop.f32.mrf.mxu0
  %v13384 = vadd.f32 %v13042, %v13383
  %13385 = vmatmul.f32.gmra.mxu0 %v13174
  %v13386 = vpop.f32.mrf.mxu0
  %v13387 = vadd.f32 %v13042, %v13386
  %13388 = vmatmul.f32.gmra.mxu0 %v13177
  %v13389 = vpop.f32.mrf.mxu0
  %v13390 = vadd.f32 %v13042, %v13389
  %13391 = vmatmul.f32.gmra.mxu0 %v13180
  %v13392 = vpop.f32.mrf.mxu0
  %v13393 = vadd.f32 %v13042, %v13392
  %13394 = vmatmul.f32.gmra.mxu0 %v13183
  %v13395 = vpop.f32.mrf.mxu0
  %v13396 = vadd.f32 %v13042, %v13395
  %13397 = vmatmul.f32.gmra.mxu0 %v13186
  %v13398 = vpop.f32.mrf.mxu0
  %v13399 = vadd.f32 %v13042, %v13398
  %13400 = vmatmul.f32.gmra.mxu0 %v13189
  %v13401 = vpop.f32.mrf.mxu0
  %v13402 = vadd.f32 %v13042, %v13401
  %13403 = vmatmul.f32.gmra.mxu0 %v13192
  %v13404 = vpop.f32.mrf.mxu0
  %v13405 = vadd.f32 %v13042, %v13404
  %13406 = vmatmul.f32.gmra.mxu0 %v13195
  %v13407 = vpop.f32.mrf.mxu0
  %v13408 = vadd.f32 %v13042, %v13407
  %13409 = vmatmul.f32.gmra.mxu0 %v13198
  %v13410 = vpop.f32.mrf.mxu0
  %v13411 = vadd.f32 %v13042, %v13410
  %13412 = vmatmul.f32.gmra.mxu0 %v13201
  %v13413 = vpop.f32.mrf.mxu0
  %v13414 = vadd.f32 %v13042, %v13413
  %13415 = vmatmul.f32.gmra.mxu0 %v13204
  %v13416 = vpop.f32.mrf.mxu0
  %v13417 = vadd.f32 %v13042, %v13416
  %13418 = vmatmul.f32.gmra.mxu0 %v13207
  %v13419 = vpop.f32.mrf.mxu0
  %v13420 = vadd.f32 %v13042, %v13419
  %13421 = vmatmul.f32.gmra.mxu0 %v13210
  %v13422 = vpop.f32.mrf.mxu0
  %v13423 = vadd.f32 %v13042, %v13422
  %13424 = vmatmul.f32.gmra.mxu0 %v13213
  %v13425 = vpop.f32.mrf.mxu0
  %v13426 = vadd.f32 %v13042, %v13425
  %13427 = vmatmul.f32.gmra.mxu0 %v13216
  %v13428 = vpop.f32.mrf.mxu0
  %v13429 = vadd.f32 %v13042, %v13428
  %13430 = vmatmul.f32.gmra.mxu0 %v13219
  %v13431 = vpop.f32.mrf.mxu0
  %v13432 = vadd.f32 %v13042, %v13431
  %13433 = vmatmul.f32.gmra.mxu0 %v13222
  %v13434 = vpop.f32.mrf.mxu0
  %v13435 = vadd.f32 %v13042, %v13434
  %13436 = vmatmul.f32.gmra.mxu0 %v13225
  %v13437 = vpop.f32.mrf.mxu0
  %v13438 = vadd.f32 %v13042, %v13437
  %13439 = vmatmul.f32.gmra.mxu0 %v13228
  %v13440 = vpop.f32.mrf.mxu0
  %v13441 = vadd.f32 %v13042, %v13440
  %13442 = vmatmul.f32.gmra.mxu0 %v13231
  %v13443 = vpop.f32.mrf.mxu0
  %v13444 = vadd.f32 %v13042, %v13443
  %13445 = vmatmul.f32.gmra.mxu0 %v13234
  %v13446 = vpop.f32.mrf.mxu0
  %v13447 = vadd.f32 %v13042, %v13446
  %13448 = vdwg.mxu0
  %v13449 = vadd.f32 %v12911, %v13258
  %v13450 = vadd.f32 %v12912, %v13261
  %v13451 = vadd.f32 %v12913, %v13264
  %v13452 = vadd.f32 %v12914, %v13267
  %v13453 = vadd.f32 %v12915, %v13270
  %v13454 = vadd.f32 %v12916, %v13273
  %v13455 = vadd.f32 %v12917, %v13276
  %v13456 = vadd.f32 %v12918, %v13279
  %v13457 = vadd.f32 %v12919, %v13282
  %v13458 = vadd.f32 %v12920, %v13285
  %v13459 = vadd.f32 %v12921, %v13288
  %v13460 = vadd.f32 %v12922, %v13291
  %v13461 = vadd.f32 %v12923, %v13294
  %v13462 = vadd.f32 %v12924, %v13297
  %v13463 = vadd.f32 %v12925, %v13300
  %v13464 = vadd.f32 %v12926, %v13303
  %v13465 = vadd.f32 %v12927, %v13306
  %v13466 = vadd.f32 %v12928, %v13309
  %v13467 = vadd.f32 %v12929, %v13312
  %v13468 = vadd.f32 %v12930, %v13315
  %v13469 = vadd.f32 %v12931, %v13318
  %v13470 = vadd.f32 %v12932, %v13321
  %v13471 = vadd.f32 %v12933, %v13324
  %v13472 = vadd.f32 %v12934, %v13327
  %v13473 = vadd.f32 %v12935, %v13330
  %v13474 = vadd.f32 %v12936, %v13333
  %v13475 = vadd.f32 %v12937, %v13336
  %v13476 = vadd.f32 %v12938, %v13339
  %v13477 = vadd.f32 %v12939, %v13342
  %v13478 = vadd.f32 %v12940, %v13345
  %v13479 = vadd.f32 %v12941, %v13348
  %v13480 = vadd.f32 %v12942, %v13351
  %v13481 = vadd.f32 %v12943, %v13354
  %v13482 = vadd.f32 %v12944, %v13357
  %v13483 = vadd.f32 %v12945, %v13360
  %v13484 = vadd.f32 %v12946, %v13363
  %v13485 = vadd.f32 %v12947, %v13366
  %v13486 = vadd.f32 %v12948, %v13369
  %v13487 = vadd.f32 %v12949, %v13372
  %v13488 = vadd.f32 %v12950, %v13375
  %v13489 = vadd.f32 %v12951, %v13378
  %v13490 = vadd.f32 %v12952, %v13381
  %v13491 = vadd.f32 %v12953, %v13384
  %v13492 = vadd.f32 %v12954, %v13387
  %v13493 = vadd.f32 %v12955, %v13390
  %v13494 = vadd.f32 %v12956, %v13393
  %v13495 = vadd.f32 %v12957, %v13396
  %v13496 = vadd.f32 %v12958, %v13399
  %v13497 = vadd.f32 %v12959, %v13402
  %v13498 = vadd.f32 %v12960, %v13405
  %v13499 = vadd.f32 %v12961, %v13408
  %v13500 = vadd.f32 %v12962, %v13411
  %v13501 = vadd.f32 %v12963, %v13414
  %v13502 = vadd.f32 %v12964, %v13417
  %v13503 = vadd.f32 %v12965, %v13420
  %v13504 = vadd.f32 %v12966, %v13423
  %v13505 = vadd.f32 %v12967, %v13426
  %v13506 = vadd.f32 %v12968, %v13429
  %v13507 = vadd.f32 %v12969, %v13432
  %v13508 = vadd.f32 %v12970, %v13435
  %v13509 = vadd.f32 %v12971, %v13438
  %v13510 = vadd.f32 %v12972, %v13441
  %v13511 = vadd.f32 %v12973, %v13444
  %v13512 = vadd.f32 %v12974, %v13447
  %v13513 = vmax.f32 %v13449, 0.0
  %v13514 = vmax.f32 %v13450, 0.0
  %v13515 = vmax.f32 %v13451, 0.0
  %v13516 = vmax.f32 %v13452, 0.0
  %v13517 = vmax.f32 %v13453, 0.0
  %v13518 = vmax.f32 %v13454, 0.0
  %v13519 = vmax.f32 %v13455, 0.0
  %v13520 = vmax.f32 %v13456, 0.0
  %v13521 = vmax.f32 %v13457, 0.0
  %v13522 = vmax.f32 %v13458, 0.0
  %v13523 = vmax.f32 %v13459, 0.0
  %v13524 = vmax.f32 %v13460, 0.0
  %v13525 = vmax.f32 %v13461, 0.0
  %v13526 = vmax.f32 %v13462, 0.0
  %v13527 = vmax.f32 %v13463, 0.0
  %v13528 = vmax.f32 %v13464, 0.0
  %v13529 = vmax.f32 %v13465, 0.0
  %v13530 = vmax.f32 %v13466, 0.0
  %v13531 = vmax.f32 %v13467, 0.0
  %v13532 = vmax.f32 %v13468, 0.0
  %v13533 = vmax.f32 %v13469, 0.0
  %v13534 = vmax.f32 %v13470, 0.0
  %v13535 = vmax.f32 %v13471, 0.0
  %v13536 = vmax.f32 %v13472, 0.0
  %v13537 = vmax.f32 %v13473, 0.0
  %v13538 = vmax.f32 %v13474, 0.0
  %v13539 = vmax.f32 %v13475, 0.0
  %v13540 = vmax.f32 %v13476, 0.0
  %v13541 = vmax.f32 %v13477, 0.0
  %v13542 = vmax.f32 %v13478, 0.0
  %v13543 = vmax.f32 %v13479, 0.0
  %v13544 = vmax.f32 %v13480, 0.0
  %v13545 = vmax.f32 %v13481, 0.0
  %v13546 = vmax.f32 %v13482, 0.0
  %v13547 = vmax.f32 %v13483, 0.0
  %v13548 = vmax.f32 %v13484, 0.0
  %v13549 = vmax.f32 %v13485, 0.0
  %v13550 = vmax.f32 %v13486, 0.0
  %v13551 = vmax.f32 %v13487, 0.0
  %v13552 = vmax.f32 %v13488, 0.0
  %v13553 = vmax.f32 %v13489, 0.0
  %v13554 = vmax.f32 %v13490, 0.0
  %v13555 = vmax.f32 %v13491, 0.0
  %v13556 = vmax.f32 %v13492, 0.0
  %v13557 = vmax.f32 %v13493, 0.0
  %v13558 = vmax.f32 %v13494, 0.0
  %v13559 = vmax.f32 %v13495, 0.0
  %v13560 = vmax.f32 %v13496, 0.0
  %v13561 = vmax.f32 %v13497, 0.0
  %v13562 = vmax.f32 %v13498, 0.0
  %v13563 = vmax.f32 %v13499, 0.0
  %v13564 = vmax.f32 %v13500, 0.0
  %v13565 = vmax.f32 %v13501, 0.0
  %v13566 = vmax.f32 %v13502, 0.0
  %v13567 = vmax.f32 %v13503, 0.0
  %v13568 = vmax.f32 %v13504, 0.0
  %v13569 = vmax.f32 %v13505, 0.0
  %v13570 = vmax.f32 %v13506, 0.0
  %v13571 = vmax.f32 %v13507, 0.0
  %v13572 = vmax.f32 %v13508, 0.0
  %v13573 = vmax.f32 %v13509, 0.0
  %v13574 = vmax.f32 %v13510, 0.0
  %v13575 = vmax.f32 %v13511, 0.0
  %v13576 = vmax.f32 %v13512, 0.0
  %13577 = vst.msk [vmem:[%s9] sm:$0xff] %vm32, %v13513
  %13578 = vst.msk [vmem:[%s9 + $0x8] sm:$0xff] %vm32, %v13514
  %13579 = vst.msk [vmem:[%s9 + $0x10] sm:$0xff] %vm32, %v13515
  %13580 = vst.msk [vmem:[%s9 + $0x18] sm:$0xff] %vm32, %v13516
  %13581 = vst.msk [vmem:[%s9 + $0x20] sm:$0xff] %vm32, %v13517
  %13582 = vst.msk [vmem:[%s9 + $0x28] sm:$0xff] %vm32, %v13518
  %13583 = vst.msk [vmem:[%s9 + $0x30] sm:$0xff] %vm32, %v13519
  %13584 = vst.msk [vmem:[%s9 + $0x38] sm:$0xff] %vm32, %v13520
  %13585 = vst.msk [vmem:[%s9 + $0x40] sm:$0xff] %vm32, %v13521
  %13586 = vst.msk [vmem:[%s9 + $0x48] sm:$0xff] %vm32, %v13522
  %13587 = vst.msk [vmem:[%s9 + $0x50] sm:$0xff] %vm32, %v13523
  %13588 = vst.msk [vmem:[%s9 + $0x58] sm:$0xff] %vm32, %v13524
  %13589 = vst.msk [vmem:[%s9 + $0x60] sm:$0xff] %vm32, %v13525
  %13590 = vst.msk [vmem:[%s9 + $0x68] sm:$0xff] %vm32, %v13526
  %13591 = vst.msk [vmem:[%s9 + $0x70] sm:$0xff] %vm32, %v13527
  %13592 = vst.msk [vmem:[%s9 + $0x78] sm:$0xff] %vm32, %v13528
  %13593 = vst.msk [vmem:[%s9 + $0x80] sm:$0xff] %vm32, %v13529
  %13594 = vst.msk [vmem:[%s9 + $0x88] sm:$0xff] %vm32, %v13530
  %13595 = vst.msk [vmem:[%s9 + $0x90] sm:$0xff] %vm32, %v13531
  %13596 = vst.msk [vmem:[%s9 + $0x98] sm:$0xff] %vm32, %v13532
  %13597 = vst.msk [vmem:[%s9 + $0xa0] sm:$0xff] %vm32, %v13533
  %13598 = vst.msk [vmem:[%s9 + $0xa8] sm:$0xff] %vm32, %v13534
  %13599 = vst.msk [vmem:[%s9 + $0xb0] sm:$0xff] %vm32, %v13535
  %13600 = vst.msk [vmem:[%s9 + $0xb8] sm:$0xff] %vm32, %v13536
  %13601 = vst.msk [vmem:[%s9 + $0xc0] sm:$0xff] %vm32, %v13537
  %13602 = vst.msk [vmem:[%s9 + $0xc8] sm:$0xff] %vm32, %v13538
  %13603 = vst.msk [vmem:[%s9 + $0xd0] sm:$0xff] %vm32, %v13539
  %13604 = vst.msk [vmem:[%s9 + $0xd8] sm:$0xff] %vm32, %v13540
  %13605 = vst.msk [vmem:[%s9 + $0xe0] sm:$0xff] %vm32, %v13541
  %13606 = vst.msk [vmem:[%s9 + $0xe8] sm:$0xff] %vm32, %v13542
  %13607 = vst.msk [vmem:[%s9 + $0xf0] sm:$0xff] %vm32, %v13543
  %13608 = vst.msk [vmem:[%s9 + $0xf8] sm:$0xff] %vm32, %v13544
  %13609 = vst.msk [vmem:[%s9 + $0x100] sm:$0xff] %vm32, %v13545
  %13610 = vst.msk [vmem:[%s9 + $0x108] sm:$0xff] %vm32, %v13546
  %13611 = vst.msk [vmem:[%s9 + $0x110] sm:$0xff] %vm32, %v13547
  %13612 = vst.msk [vmem:[%s9 + $0x118] sm:$0xff] %vm32, %v13548
  %13613 = vst.msk [vmem:[%s9 + $0x120] sm:$0xff] %vm32, %v13549
  %13614 = vst.msk [vmem:[%s9 + $0x128] sm:$0xff] %vm32, %v13550
  %13615 = vst.msk [vmem:[%s9 + $0x130] sm:$0xff] %vm32, %v13551
  %13616 = vst.msk [vmem:[%s9 + $0x138] sm:$0xff] %vm32, %v13552
  %13617 = vst.msk [vmem:[%s9 + $0x140] sm:$0xff] %vm32, %v13553
  %13618 = vst.msk [vmem:[%s9 + $0x148] sm:$0xff] %vm32, %v13554
  %13619 = vst.msk [vmem:[%s9 + $0x150] sm:$0xff] %vm32, %v13555
  %13620 = vst.msk [vmem:[%s9 + $0x158] sm:$0xff] %vm32, %v13556
  %13621 = vst.msk [vmem:[%s9 + $0x160] sm:$0xff] %vm32, %v13557
  %13622 = vst.msk [vmem:[%s9 + $0x168] sm:$0xff] %vm32, %v13558
  %13623 = vst.msk [vmem:[%s9 + $0x170] sm:$0xff] %vm32, %v13559
  %13624 = vst.msk [vmem:[%s9 + $0x178] sm:$0xff] %vm32, %v13560
  %13625 = vst.msk [vmem:[%s9 + $0x180] sm:$0xff] %vm32, %v13561
  %13626 = vst.msk [vmem:[%s9 + $0x188] sm:$0xff] %vm32, %v13562
  %13627 = vst.msk [vmem:[%s9 + $0x190] sm:$0xff] %vm32, %v13563
  %13628 = vst.msk [vmem:[%s9 + $0x198] sm:$0xff] %vm32, %v13564
  %13629 = vst.msk [vmem:[%s9 + $0x1a0] sm:$0xff] %vm32, %v13565
  %13630 = vst.msk [vmem:[%s9 + $0x1a8] sm:$0xff] %vm32, %v13566
  %13631 = vst.msk [vmem:[%s9 + $0x1b0] sm:$0xff] %vm32, %v13567
  %13632 = vst.msk [vmem:[%s9 + $0x1b8] sm:$0xff] %vm32, %v13568
  %13633 = vst.msk [vmem:[%s9 + $0x1c0] sm:$0xff] %vm32, %v13569
  %13634 = vst.msk [vmem:[%s9 + $0x1c8] sm:$0xff] %vm32, %v13570
  %13635 = vst.msk [vmem:[%s9 + $0x1d0] sm:$0xff] %vm32, %v13571
  %13636 = vst.msk [vmem:[%s9 + $0x1d8] sm:$0xff] %vm32, %v13572
  %13637 = vst.msk [vmem:[%s9 + $0x1e0] sm:$0xff] %vm32, %v13573
  %13638 = vst.msk [vmem:[%s9 + $0x1e8] sm:$0xff] %vm32, %v13574
  %13639 = vst.msk [vmem:[%s9 + $0x1f0] sm:$0xff] %vm32, %v13575
  %13640 = vst.msk [vmem:[%s9 + $0x1f8] sm:$0xff] %vm32, %v13576
  // Predicated region
  $region38: #{tpu_custom_call.1} parent=0 // pred_check
    _
  $region39: #{tpu_custom_call.1} parent=0 // pred_check_branch
    %13642 = sbr.rel (0) target = $region41
  $region40: #{tpu_custom_call.1} parent=0 // pred_region
    _
  $region41: #{tpu_custom_call.1} parent=0 // pred_fallthru
    _
  // Predicated region
  $region42: #{tpu_custom_call.1} parent=0 // pred_check
    _
  $region43: #{tpu_custom_call.1} parent=0 // pred_check_branch
    %13644 = sbr.rel (0) target = $region45
  $region44: #{tpu_custom_call.1} parent=0 // pred_region
    _
  $region45: #{tpu_custom_call.1} parent=0 // pred_fallthru
    _

</llo_original>
